<compile_context>
chip_gen: v6e
topology: v6e:2x2x1
jax: 0.10.0
libtpu: 0.0.40
codegen_flags: <defaults>
</compile_context>

<pallas_src>
import jax
import jax.numpy as jnp
from jax.experimental import pallas as pl
from jax.experimental.pallas import tpu as pltpu

# ----- Model constants (from the PyTorch module) -----
DIM = 196                     # hiddenSize
NUM_HEADS = 7
HEAD_DIM = DIM // NUM_HEADS   # 28
SCALE = HEAD_DIM ** (-0.5)
LAYERS = 6
DEPTH = 4                     # sequence length N after x.view(1, 4, 196)
IMG_DIM = 14
HIDDEN = 4 * DIM              # 784 (FeedForward hidden)
LN_EPS = 1e-6

# ----- Padded kernel shapes (lane-dense) -----
C_PAD = 256                   # 196 -> 256
HID_PAD = 896                 # 784 -> 896
SEQ = DEPTH

_SQRT1_2 = 0.7071067811865476
# Abramowitz & Stegun 7.1.26 erf approximation (max abs err ~1.5e-7), exp-only.
_A1, _A2, _A3, _A4, _A5 = 0.254829592, -0.284496736, 1.421413741, -1.453152027, 1.061405429
_PP = 0.3275911


def _erf(z):
    az = jnp.abs(z)
    t = 1.0 / (1.0 + _PP * az)
    poly = t * (_A1 + t * (_A2 + t * (_A3 + t * (_A4 + t * _A5))))
    y = 1.0 - poly * jnp.exp(-az * az)
    return jnp.where(z < 0, -y, y)


def _gelu(x):
    # exact (erf) GELU, matching torch nn.GELU() default
    return 0.5 * x * (1.0 + _erf(x * _SQRT1_2))


def _transformer_layer_kernel(
        x_ref, wq_ref, wk_ref, wv_ref, wo_ref, bo_ref,
        w1_ref, b1_ref, w2_ref, b2_ref,
        g1_ref, be1_ref, g2_ref, be2_ref,
        o_ref, x_carry):
    l = pl.program_id(0)

    @pl.when(l == 0)
    def _():
        x_carry[...] = x_ref[...].astype(jnp.float32)

    x = x_carry[...]                                            # (N, C_PAD) f32

    # Lane mask over the real (unpadded) 196 channels, used by both LayerNorms.
    lane = jax.lax.broadcasted_iota(jnp.int32, (SEQ, C_PAD), 1)
    cmask = (lane < DIM).astype(jnp.float32)

    def layer_norm(y, gamma, beta):
        ym = y * cmask
        mean = jnp.sum(ym, axis=-1, keepdims=True) * (1.0 / DIM)
        cen = (ym - mean) * cmask                               # centered, padded lanes = 0
        var = jnp.sum(cen * cen, axis=-1, keepdims=True) * (1.0 / (DIM - 1))  # unbiased (torch .std)
        std = jnp.sqrt(var)
        return gamma * (cen / (std + LN_EPS)) + beta

    # ---------------- Attention(x) ----------------
    xb = jnp.broadcast_to(x, (NUM_HEADS, SEQ, C_PAD))           # (H, N, C_PAD)
    q = jnp.einsum('hnc,hcd->hnd', xb, wq_ref[0],
                   preferred_element_type=jnp.float32)          # scale pre-folded into wq
    k = jnp.einsum('hnc,hcd->hnd', xb, wk_ref[0],
                   preferred_element_type=jnp.float32)
    v = jnp.einsum('hnc,hcd->hnd', xb, wv_ref[0],
                   preferred_element_type=jnp.float32)

    s = jnp.einsum('hnd,hmd->hnm', q, k,
                   preferred_element_type=jnp.float32)          # (H, N, N)
    s = s - jnp.max(s, axis=-1, keepdims=True)
    probs = jnp.exp(s)
    probs = probs * pl.reciprocal(jnp.sum(probs, axis=-1, keepdims=True), approx=True)
    # attn_drop is Dropout(p=0.0) -> identity.

    ctx = jnp.einsum('hnm,hmd->hnd', probs, v,
                     preferred_element_type=jnp.float32)        # (H, N, hd)
    att_h = jnp.einsum('hnd,hdc->hnc', ctx, wo_ref[0],
                       preferred_element_type=jnp.float32)      # (H, N, C_PAD)
    att = jnp.sum(att_h, axis=0) + bo_ref[0]                    # head-sum == concat+proj
    # proj_drop / SGA dropout1 (p=0.1) -> identity in eval mode.

    h1 = layer_norm(x + att, g1_ref[0], be1_ref[0])

    # ---------------- FeedForward(h1) ----------------
    hid = jnp.dot(h1, w1_ref[0], preferred_element_type=jnp.float32) + b1_ref[0]
    hid = _gelu(hid)
    ff = jnp.dot(hid, w2_ref[0], preferred_element_type=jnp.float32) + b2_ref[0]
    # SGA dropout2 (p=0.1) -> identity in eval mode.

    h2 = layer_norm(h1 + ff, g2_ref[0], be2_ref[0])
    x_carry[...] = h2

    @pl.when(l == pl.num_programs(0) - 1)
    def _():
        o_ref[...] = h2.astype(o_ref.dtype)


def init_params(key):
    """Synthetic per-layer parameters in PyTorch layout."""
    params = []
    for lk in jax.random.split(key, LAYERS):
        ks = jax.random.split(lk, 11)
        params.append(dict(
            qkv_w=0.02 * jax.random.normal(ks[0], (3 * DIM, DIM), jnp.float32),  # qkv_bias=False
            proj_w=0.02 * jax.random.normal(ks[1], (DIM, DIM), jnp.float32),
            proj_b=0.02 * jax.random.normal(ks[2], (DIM,), jnp.float32),
            w1=0.02 * jax.random.normal(ks[3], (HIDDEN, DIM), jnp.float32),
            b1=1e-3 * jax.random.normal(ks[4], (HIDDEN,), jnp.float32),
            w2=0.02 * jax.random.normal(ks[5], (DIM, HIDDEN), jnp.float32),
            b2=1e-3 * jax.random.normal(ks[6], (DIM,), jnp.float32),
            g1=1.0 + 0.05 * jax.random.normal(ks[7], (DIM,), jnp.float32),
            be1=0.05 * jax.random.normal(ks[8], (DIM,), jnp.float32),
            g2=1.0 + 0.05 * jax.random.normal(ks[9], (DIM,), jnp.float32),
            be2=0.05 * jax.random.normal(ks[10], (DIM,), jnp.float32),
        ))
    return params


def pack_params(params):
    """Host-side layout plumbing: per-head weight structure + zero padding + layer stacking."""
    outs = {k: [] for k in
            ('wq', 'wk', 'wv', 'wo', 'bo', 'w1', 'b1', 'w2', 'b2', 'g1', 'be1', 'g2', 'be2')}
    pad_c_in = ((0, 0), (0, C_PAD - DIM), (0, 0))
    pad_vec = lambda v, n: jnp.pad(v, (0, n))[None, :]
    for p in params:
        qkv_w = p['qkv_w']                                       # (3C, C) torch layout
        # rows [0:C)=q, [C:2C)=k, [2C:3C)=v ; within each, head h owns rows h*hd:(h+1)*hd
        to_heads = lambda w: jnp.transpose(w.reshape(NUM_HEADS, HEAD_DIM, DIM), (0, 2, 1))  # (H,C,hd)
        outs['wq'].append(jnp.pad(to_heads(qkv_w[0:DIM]) * SCALE, pad_c_in))   # scale folded into q
        outs['wk'].append(jnp.pad(to_heads(qkv_w[DIM:2 * DIM]), pad_c_in))
        outs['wv'].append(jnp.pad(to_heads(qkv_w[2 * DIM:3 * DIM]), pad_c_in))
        wo = jnp.transpose(p['proj_w'].reshape(DIM, NUM_HEADS, HEAD_DIM), (1, 2, 0))        # (H,hd,C)
        outs['wo'].append(jnp.pad(wo, ((0, 0), (0, 0), (0, C_PAD - DIM))))
        outs['bo'].append(pad_vec(p['proj_b'], C_PAD - DIM))
        outs['w1'].append(jnp.pad(p['w1'].T, ((0, C_PAD - DIM), (0, HID_PAD - HIDDEN))))
        outs['b1'].append(pad_vec(p['b1'], HID_PAD - HIDDEN))
        outs['w2'].append(jnp.pad(p['w2'].T, ((0, HID_PAD - HIDDEN), (0, C_PAD - DIM))))
        outs['b2'].append(pad_vec(p['b2'], C_PAD - DIM))
        outs['g1'].append(pad_vec(p['g1'], C_PAD - DIM))
        outs['be1'].append(pad_vec(p['be1'], C_PAD - DIM))
        outs['g2'].append(pad_vec(p['g2'], C_PAD - DIM))
        outs['be2'].append(pad_vec(p['be2'], C_PAD - DIM))
    st = lambda k: jnp.stack(outs[k], axis=0)
    return (st('wq'), st('wk'), st('wv'), st('wo'), st('bo'),
            st('w1'), st('b1'), st('w2'), st('b2'),
            st('g1'), st('be1'), st('g2'), st('be2'))


def transformer_pallas(x_img, pos, packed):
    (wq, wk, wv, wo, bo, w1, b1, w2, b2, g1, be1, g2, be2) = packed
    # x.view(1, 4, 196) + pos_embedding[:, :4]; Dropout(0.1) is identity in eval mode.
    x = x_img.reshape(1, DEPTH, IMG_DIM * IMG_DIM) + pos[:, :DEPTH]
    xp = jnp.pad(x[0], ((0, 0), (0, C_PAD - DIM)))               # (4, 256), lane-dense

    wspec4 = lambda shape: pl.BlockSpec(shape, lambda l: (l, 0, 0, 0))
    wspec3 = lambda shape: pl.BlockSpec(shape, lambda l: (l, 0, 0))

    grid_spec = pltpu.PrefetchScalarGridSpec(
        num_scalar_prefetch=0,
        grid=(LAYERS,),
        in_specs=[
            pl.BlockSpec((SEQ, C_PAD), lambda l: (0, 0)),                      # x0 (read at l==0)
            wspec4((1, NUM_HEADS, C_PAD, HEAD_DIM)),                           # wq (scale folded)
            wspec4((1, NUM_HEADS, C_PAD, HEAD_DIM)),                           # wk
            wspec4((1, NUM_HEADS, C_PAD, HEAD_DIM)),                           # wv
            wspec4((1, NUM_HEADS, HEAD_DIM, C_PAD)),                           # wproj per-head
            wspec3((1, 1, C_PAD)),                                             # proj bias
            wspec3((1, C_PAD, HID_PAD)),                                       # FF w1
            wspec3((1, 1, HID_PAD)),                                           # FF b1
            wspec3((1, HID_PAD, C_PAD)),                                       # FF w2
            wspec3((1, 1, C_PAD)),                                             # FF b2
            wspec3((1, 1, C_PAD)),                                             # LN1 gamma
            wspec3((1, 1, C_PAD)),                                             # LN1 beta
            wspec3((1, 1, C_PAD)),                                             # LN2 gamma
            wspec3((1, 1, C_PAD)),                                             # LN2 beta
        ],
        out_specs=pl.BlockSpec((SEQ, C_PAD), lambda l: (0, 0)),
        scratch_shapes=[pltpu.VMEM((SEQ, C_PAD), jnp.float32)],                # carried activation
    )

    out = pl.pallas_call(
        _transformer_layer_kernel,
        out_shape=jax.ShapeDtypeStruct((SEQ, C_PAD), jnp.float32),
        grid_spec=grid_spec,
        compiler_params=pltpu.CompilerParams(
            dimension_semantics=("arbitrary",)),                 # layers are sequential
    )(xp, wq, wk, wv, wo, bo, w1, b1, w2, b2, g1, be1, g2, be2)

    return out[:, :DIM].reshape(1, DEPTH, IMG_DIM, IMG_DIM)


# ----------------- pure-JAX reference (matches the PyTorch forward) -----------------
def _layernorm_ref(x, g, b):
    mean = jnp.mean(x, axis=-1, keepdims=True)
    std = jnp.std(x, axis=-1, keepdims=True, ddof=1)             # torch .std is unbiased
    return g * (x - mean) / (std + LN_EPS) + b


def transformer_reference(x_img, pos, params):
    x = (x_img.reshape(1, DEPTH, IMG_DIM * IMG_DIM) + pos[:, :DEPTH])[0]
    for p in params:
        qkv = x @ p['qkv_w'].T                                   # (N, 3C)
        qkv = qkv.reshape(DEPTH, 3, NUM_HEADS, HEAD_DIM).transpose(1, 2, 0, 3)
        q, k, v = qkv[0], qkv[1], qkv[2]
        attn = jax.nn.softmax((q @ jnp.swapaxes(k, -1, -2)) * SCALE, axis=-1)
        ctx = jnp.transpose(attn @ v, (1, 0, 2)).reshape(DEPTH, DIM)
        att = ctx @ p['proj_w'].T + p['proj_b']
        x = _layernorm_ref(x + att, p['g1'], p['be1'])
        hid = jax.nn.gelu(x @ p['w1'].T + p['b1'], approximate=False)
        ff = hid @ p['w2'].T + p['b2']
        x = _layernorm_ref(x + ff, p['g2'], p['be2'])
    return x.reshape(1, DEPTH, IMG_DIM, IMG_DIM)


if __name__ == "__main__":
    key = jax.random.PRNGKey(0)
    k_x, k_pos, k_par = jax.random.split(key, 3)

    # Input shape implied by the forward: x.view(1, depth=4, 14*14)
    x_img = jax.random.normal(k_x, (1, DEPTH, IMG_DIM, IMG_DIM), dtype=jnp.float32)
    pos = jax.random.normal(k_pos, (1, DIM + 1, DIM), dtype=jnp.float32)
    params = init_params(k_par)
    packed = pack_params(params)

    out = transformer_pallas(x_img, pos, packed)
    out = jax.block_until_ready(out)

    with jax.default_matmul_precision("highest"):                # f32-accurate reference matmuls
        ref = transformer_reference(x_img, pos, params)

    assert out.shape == (1, DEPTH, IMG_DIM, IMG_DIM)
    max_err = float(jnp.max(jnp.abs(out - ref)))
    assert jnp.allclose(out, ref, atol=5e-3, rtol=5e-3), f"mismatch vs reference (max abs err {max_err})"

    print("KERNEL_OK")
</pallas_src>

<mosaic_0001>
module attributes {stable_mosaic.version = 11 : i64} {
  func.func @_transformer_layer_kernel(%arg0: i32, %arg1: memref<4x256xf32, #tpu.memory_space<vmem>>, %arg2: memref<1x7x256x28xf32, #tpu.memory_space<vmem>>, %arg3: memref<1x7x256x28xf32, #tpu.memory_space<vmem>>, %arg4: memref<1x7x256x28xf32, #tpu.memory_space<vmem>>, %arg5: memref<1x7x28x256xf32, #tpu.memory_space<vmem>>, %arg6: memref<1x1x256xf32, #tpu.memory_space<vmem>>, %arg7: memref<1x256x896xf32, #tpu.memory_space<vmem>>, %arg8: memref<1x1x896xf32, #tpu.memory_space<vmem>>, %arg9: memref<1x896x256xf32, #tpu.memory_space<vmem>>, %arg10: memref<1x1x256xf32, #tpu.memory_space<vmem>>, %arg11: memref<1x1x256xf32, #tpu.memory_space<vmem>>, %arg12: memref<1x1x256xf32, #tpu.memory_space<vmem>>, %arg13: memref<1x1x256xf32, #tpu.memory_space<vmem>>, %arg14: memref<1x1x256xf32, #tpu.memory_space<vmem>>, %arg15: memref<4x256xf32, #tpu.memory_space<vmem>>, %arg16: memref<4x256xf32, #tpu.memory_space<vmem>>) attributes {dimension_semantics = [#tpu.dimension_semantics<arbitrary>], iteration_bounds = array<i64: 6>, scalar_prefetch = 0 : i64, scratch_operands = 1 : i64, tpu.core_type = #tpu.core_type<tc>, window_params = [{pipeline_mode = #tpu.pipeline_mode<synchronous>, transform_indices = @transform_0, window_bounds = array<i64: 4, 256>}, {transform_indices = @transform_1, window_bounds = array<i64: 1, 7, 256, 28>}, {transform_indices = @transform_2, window_bounds = array<i64: 1, 7, 256, 28>}, {transform_indices = @transform_3, window_bounds = array<i64: 1, 7, 256, 28>}, {transform_indices = @transform_4, window_bounds = array<i64: 1, 7, 28, 256>}, {transform_indices = @transform_5, window_bounds = array<i64: 1, 1, 256>}, {transform_indices = @transform_6, window_bounds = array<i64: 1, 256, 896>}, {transform_indices = @transform_7, window_bounds = array<i64: 1, 1, 896>}, {transform_indices = @transform_8, window_bounds = array<i64: 1, 896, 256>}, {transform_indices = @transform_9, window_bounds = array<i64: 1, 1, 256>}, {transform_indices = @transform_10, window_bounds = array<i64: 1, 1, 256>}, {transform_indices = @transform_11, window_bounds = array<i64: 1, 1, 256>}, {transform_indices = @transform_12, window_bounds = array<i64: 1, 1, 256>}, {transform_indices = @transform_13, window_bounds = array<i64: 1, 1, 256>}, {pipeline_mode = #tpu.pipeline_mode<synchronous>, transform_indices = @transform_14, window_bounds = array<i64: 4, 256>}]} {
    %c0_i32 = arith.constant 0 : i32
    %0 = arith.cmpi eq, %arg0, %c0_i32 : i32
    %1 = arith.extui %0 : i1 to i32
    %c0_i32_0 = arith.constant 0 : i32
    %2 = arith.cmpi ne, %1, %c0_i32_0 : i32
    scf.if %2 {
      %c0_83 = arith.constant 0 : index
      %c0_84 = arith.constant 0 : index
      %152 = vector.load %arg1[%c0_83, %c0_84] : memref<4x256xf32, #tpu.memory_space<vmem>>, vector<4x256xf32>
      %c0_85 = arith.constant 0 : index
      %c0_86 = arith.constant 0 : index
      %153 = vector.load %arg16[%c0_85, %c0_86] : memref<4x256xf32, #tpu.memory_space<vmem>>, vector<4x256xf32>
      tpu.vector_store %arg16[%c0_85, %c0_86], %152 {strides = array<i32>} : memref<4x256xf32, #tpu.memory_space<vmem>>, vector<4x256xf32>,
    } else {
    }
    %c0 = arith.constant 0 : index
    %c0_1 = arith.constant 0 : index
    %3 = vector.load %arg16[%c0, %c0_1] : memref<4x256xf32, #tpu.memory_space<vmem>>, vector<4x256xf32>
    %4 = tpu.iota {dimensions = array<i32: 1>} : vector<4x256xi32>
    %c196_i32 = arith.constant 196 : i32
    %5 = vector.broadcast %c196_i32 : i32 to vector<4x256xi32>
    %6 = arith.cmpi slt, %4, %5 : vector<4x256xi32>
    %7 = arith.extui %6 : vector<4x256xi1> to vector<4x256xi32>
    %8 = arith.sitofp %7 : vector<4x256xi32> to vector<4x256xf32>
    %9 = vector.shape_cast %3 : vector<4x256xf32> to vector<1x4x256xf32>
    %10 = vector.broadcast %9 : vector<1x4x256xf32> to vector<7x4x256xf32>
    %c0_2 = arith.constant 0 : index
    %c0_3 = arith.constant 0 : index
    %c0_4 = arith.constant 0 : index
    %c0_5 = arith.constant 0 : index
    %11 = vector.load %arg2[%c0_2, %c0_3, %c0_4, %c0_5] : memref<1x7x256x28xf32, #tpu.memory_space<vmem>>, vector<1x7x256x28xf32>
    %12 = vector.shape_cast %11 : vector<1x7x256x28xf32> to vector<7x256x28xf32>
    "tpu.trace_start"() <{level = 10 : i32, message = "hnc,hcd->hnd"}> : () -> ()
    %cst = arith.constant dense<0.000000e+00> : vector<7x4x28xf32>
    %13 = tpu.matmul %10, %12, %cst {dimension_numbers = #tpu.dot_dimension_numbers<[2], [1], [1], [2], [0, 0, 0, 1, 1, 2], [0], [0]>} : vector<7x4x256xf32>, vector<7x256x28xf32>, vector<7x4x28xf32> -> vector<7x4x28xf32>
    "tpu.trace_stop"() : () -> ()
    %c0_6 = arith.constant 0 : index
    %c0_7 = arith.constant 0 : index
    %c0_8 = arith.constant 0 : index
    %c0_9 = arith.constant 0 : index
    %14 = vector.load %arg3[%c0_6, %c0_7, %c0_8, %c0_9] : memref<1x7x256x28xf32, #tpu.memory_space<vmem>>, vector<1x7x256x28xf32>
    %15 = vector.shape_cast %14 : vector<1x7x256x28xf32> to vector<7x256x28xf32>
    "tpu.trace_start"() <{level = 10 : i32, message = "hnc,hcd->hnd"}> : () -> ()
    %cst_10 = arith.constant dense<0.000000e+00> : vector<7x4x28xf32>
    %16 = tpu.matmul %10, %15, %cst_10 {dimension_numbers = #tpu.dot_dimension_numbers<[2], [1], [1], [2], [0, 0, 0, 1, 1, 2], [0], [0]>} : vector<7x4x256xf32>, vector<7x256x28xf32>, vector<7x4x28xf32> -> vector<7x4x28xf32>
    "tpu.trace_stop"() : () -> ()
    %c0_11 = arith.constant 0 : index
    %c0_12 = arith.constant 0 : index
    %c0_13 = arith.constant 0 : index
    %c0_14 = arith.constant 0 : index
    %17 = vector.load %arg4[%c0_11, %c0_12, %c0_13, %c0_14] : memref<1x7x256x28xf32, #tpu.memory_space<vmem>>, vector<1x7x256x28xf32>
    %18 = vector.shape_cast %17 : vector<1x7x256x28xf32> to vector<7x256x28xf32>
    "tpu.trace_start"() <{level = 10 : i32, message = "hnc,hcd->hnd"}> : () -> ()
    %cst_15 = arith.constant dense<0.000000e+00> : vector<7x4x28xf32>
    %19 = tpu.matmul %10, %18, %cst_15 {dimension_numbers = #tpu.dot_dimension_numbers<[2], [1], [1], [2], [0, 0, 0, 1, 1, 2], [0], [0]>} : vector<7x4x256xf32>, vector<7x256x28xf32>, vector<7x4x28xf32> -> vector<7x4x28xf32>
    "tpu.trace_stop"() : () -> ()
    "tpu.trace_start"() <{level = 10 : i32, message = "hnd,hmd->hnm"}> : () -> ()
    %cst_16 = arith.constant dense<0.000000e+00> : vector<7x4x4xf32>
    %20 = tpu.matmul %13, %16, %cst_16 {dimension_numbers = #tpu.dot_dimension_numbers<[2], [2], [1], [1], [0, 0, 0, 1, 1, 1], [0], [0]>} : vector<7x4x28xf32>, vector<7x4x28xf32>, vector<7x4x4xf32> -> vector<7x4x4xf32>
    "tpu.trace_stop"() : () -> ()
    %cst_17 = arith.constant dense<0xFF800000> : vector<7x4xf32>
    %21 = vector.multi_reduction <maximumf>, %20, %cst_17 [2] : vector<7x4x4xf32> to vector<7x4xf32>
    %22 = vector.shape_cast %21 : vector<7x4xf32> to vector<7x4x1xf32>
    %23 = vector.broadcast %22 : vector<7x4x1xf32> to vector<7x4x4xf32>
    %24 = arith.subf %20, %23 : vector<7x4x4xf32>
    %25 = math.exp %24 : vector<7x4x4xf32>
    %cst_18 = arith.constant dense<0.000000e+00> : vector<7x4xf32>
    %26 = vector.multi_reduction <add>, %25, %cst_18 [2] : vector<7x4x4xf32> to vector<7x4xf32>
    %27 = vector.shape_cast %26 : vector<7x4xf32> to vector<7x4x1xf32>
    %28 = tpu.reciprocal %27 {approx = true} : vector<7x4x1xf32> -> vector<7x4x1xf32>
    %29 = vector.broadcast %28 : vector<7x4x1xf32> to vector<7x4x4xf32>
    %30 = arith.mulf %25, %29 : vector<7x4x4xf32>
    "tpu.trace_start"() <{level = 10 : i32, message = "hnm,hmd->hnd"}> : () -> ()
    %cst_19 = arith.constant dense<0.000000e+00> : vector<7x4x28xf32>
    %31 = tpu.matmul %30, %19, %cst_19 {dimension_numbers = #tpu.dot_dimension_numbers<[2], [1], [1], [2], [0, 0, 0, 1, 1, 2], [0], [0]>} : vector<7x4x4xf32>, vector<7x4x28xf32>, vector<7x4x28xf32> -> vector<7x4x28xf32>
    "tpu.trace_stop"() : () -> ()
    %c0_20 = arith.constant 0 : index
    %c0_21 = arith.constant 0 : index
    %c0_22 = arith.constant 0 : index
    %c0_23 = arith.constant 0 : index
    %32 = vector.load %arg5[%c0_20, %c0_21, %c0_22, %c0_23] : memref<1x7x28x256xf32, #tpu.memory_space<vmem>>, vector<1x7x28x256xf32>
    %33 = vector.shape_cast %32 : vector<1x7x28x256xf32> to vector<7x28x256xf32>
    "tpu.trace_start"() <{level = 10 : i32, message = "hnd,hdc->hnc"}> : () -> ()
    %cst_24 = arith.constant dense<0.000000e+00> : vector<7x4x256xf32>
    %34 = tpu.matmul %31, %33, %cst_24 {dimension_numbers = #tpu.dot_dimension_numbers<[2], [1], [1], [2], [0, 0, 0, 1, 1, 2], [0], [0]>} : vector<7x4x28xf32>, vector<7x28x256xf32>, vector<7x4x256xf32> -> vector<7x4x256xf32>
    "tpu.trace_stop"() : () -> ()
    %cst_25 = arith.constant dense<0.000000e+00> : vector<4x256xf32>
    %35 = vector.multi_reduction <add>, %34, %cst_25 [0] : vector<7x4x256xf32> to vector<4x256xf32>
    %c0_26 = arith.constant 0 : index
    %c0_27 = arith.constant 0 : index
    %c0_28 = arith.constant 0 : index
    %36 = vector.load %arg6[%c0_26, %c0_27, %c0_28] : memref<1x1x256xf32, #tpu.memory_space<vmem>>, vector<1x1x256xf32>
    %37 = vector.shape_cast %36 : vector<1x1x256xf32> to vector<1x256xf32>
    %38 = vector.broadcast %37 : vector<1x256xf32> to vector<4x256xf32>
    %39 = arith.addf %35, %38 : vector<4x256xf32>
    %40 = arith.addf %3, %39 : vector<4x256xf32>
    %c0_29 = arith.constant 0 : index
    %c0_30 = arith.constant 0 : index
    %c0_31 = arith.constant 0 : index
    %41 = vector.load %arg11[%c0_29, %c0_30, %c0_31] : memref<1x1x256xf32, #tpu.memory_space<vmem>>, vector<1x1x256xf32>
    %42 = vector.shape_cast %41 : vector<1x1x256xf32> to vector<1x256xf32>
    %c0_32 = arith.constant 0 : index
    %c0_33 = arith.constant 0 : index
    %c0_34 = arith.constant 0 : index
    %43 = vector.load %arg12[%c0_32, %c0_33, %c0_34] : memref<1x1x256xf32, #tpu.memory_space<vmem>>, vector<1x1x256xf32>
    %44 = vector.shape_cast %43 : vector<1x1x256xf32> to vector<1x256xf32>
    %45 = arith.mulf %40, %8 : vector<4x256xf32>
    %cst_35 = arith.constant dense<0.000000e+00> : vector<4xf32>
    %46 = vector.multi_reduction <add>, %45, %cst_35 [1] : vector<4x256xf32> to vector<4xf32>
    %47 = vector.shape_cast %46 : vector<4xf32> to vector<4x1xf32>
    %cst_36 = arith.constant 0.00510204071 : f32
    %48 = vector.broadcast %cst_36 : f32 to vector<4x1xf32>
    %49 = arith.mulf %47, %48 : vector<4x1xf32>
    %50 = vector.broadcast %49 : vector<4x1xf32> to vector<4x256xf32>
    %51 = arith.subf %45, %50 : vector<4x256xf32>
    %52 = arith.mulf %51, %8 : vector<4x256xf32>
    %53 = arith.mulf %52, %52 : vector<4x256xf32>
    %cst_37 = arith.constant dense<0.000000e+00> : vector<4xf32>
    %54 = vector.multi_reduction <add>, %53, %cst_37 [1] : vector<4x256xf32> to vector<4xf32>
    %55 = vector.shape_cast %54 : vector<4xf32> to vector<4x1xf32>
    %cst_38 = arith.constant 0.00512820529 : f32
    %56 = vector.broadcast %cst_38 : f32 to vector<4x1xf32>
    %57 = arith.mulf %55, %56 : vector<4x1xf32>
    %58 = math.sqrt %57 : vector<4x1xf32>
    %cst_39 = arith.constant 9.99999997E-7 : f32
    %59 = vector.broadcast %cst_39 : f32 to vector<4x1xf32>
    %60 = arith.addf %58, %59 : vector<4x1xf32>
    %61 = vector.broadcast %60 : vector<4x1xf32> to vector<4x256xf32>
    %62 = arith.divf %52, %61 : vector<4x256xf32>
    %63 = vector.broadcast %42 : vector<1x256xf32> to vector<4x256xf32>
    %64 = arith.mulf %63, %62 : vector<4x256xf32>
    %65 = vector.broadcast %44 : vector<1x256xf32> to vector<4x256xf32>
    %66 = arith.addf %64, %65 : vector<4x256xf32>
    %c0_40 = arith.constant 0 : index
    %c0_41 = arith.constant 0 : index
    %c0_42 = arith.constant 0 : index
    %67 = vector.load %arg7[%c0_40, %c0_41, %c0_42] : memref<1x256x896xf32, #tpu.memory_space<vmem>>, vector<1x256x896xf32>
    %68 = vector.shape_cast %67 : vector<1x256x896xf32> to vector<256x896xf32>
    %cst_43 = arith.constant dense<0.000000e+00> : vector<4x896xf32>
    %69 = tpu.matmul %66, %68, %cst_43 {dimension_numbers = #tpu.dot_dimension_numbers<[1], [0], [0], [1], [0, 0, 1, 1], [], []>} : vector<4x256xf32>, vector<256x896xf32>, vector<4x896xf32> -> vector<4x896xf32>
    %c0_44 = arith.constant 0 : index
    %c0_45 = arith.constant 0 : index
    %c0_46 = arith.constant 0 : index
    %70 = vector.load %arg8[%c0_44, %c0_45, %c0_46] : memref<1x1x896xf32, #tpu.memory_space<vmem>>, vector<1x1x896xf32>
    %71 = vector.shape_cast %70 : vector<1x1x896xf32> to vector<1x896xf32>
    %72 = vector.broadcast %71 : vector<1x896xf32> to vector<4x896xf32>
    %73 = arith.addf %69, %72 : vector<4x896xf32>
    %cst_47 = arith.constant 5.000000e-01 : f32
    %74 = vector.broadcast %cst_47 : f32 to vector<4x896xf32>
    %75 = arith.mulf %74, %73 : vector<4x896xf32>
    %cst_48 = arith.constant 0.707106769 : f32
    %76 = vector.broadcast %cst_48 : f32 to vector<4x896xf32>
    %77 = arith.mulf %73, %76 : vector<4x896xf32>
    %78 = math.absf %77 : vector<4x896xf32>
    %cst_49 = arith.constant 0.327591091 : f32
    %79 = vector.broadcast %cst_49 : f32 to vector<4x896xf32>
    %80 = arith.mulf %79, %78 : vector<4x896xf32>
    %cst_50 = arith.constant 1.000000e+00 : f32
    %81 = vector.broadcast %cst_50 : f32 to vector<4x896xf32>
    %82 = arith.addf %81, %80 : vector<4x896xf32>
    %cst_51 = arith.constant 1.000000e+00 : f32
    %83 = vector.broadcast %cst_51 : f32 to vector<4x896xf32>
    %84 = arith.divf %83, %82 : vector<4x896xf32>
    %cst_52 = arith.constant 1.06140542 : f32
    %85 = vector.broadcast %cst_52 : f32 to vector<4x896xf32>
    %86 = arith.mulf %84, %85 : vector<4x896xf32>
    %cst_53 = arith.constant -1.45315206 : f32
    %87 = vector.broadcast %cst_53 : f32 to vector<4x896xf32>
    %88 = arith.addf %87, %86 : vector<4x896xf32>
    %89 = arith.mulf %84, %88 : vector<4x896xf32>
    %cst_54 = arith.constant 1.42141378 : f32
    %90 = vector.broadcast %cst_54 : f32 to vector<4x896xf32>
    %91 = arith.addf %90, %89 : vector<4x896xf32>
    %92 = arith.mulf %84, %91 : vector<4x896xf32>
    %cst_55 = arith.constant -0.284496725 : f32
    %93 = vector.broadcast %cst_55 : f32 to vector<4x896xf32>
    %94 = arith.addf %93, %92 : vector<4x896xf32>
    %95 = arith.mulf %84, %94 : vector<4x896xf32>
    %cst_56 = arith.constant 0.254829586 : f32
    %96 = vector.broadcast %cst_56 : f32 to vector<4x896xf32>
    %97 = arith.addf %96, %95 : vector<4x896xf32>
    %98 = arith.mulf %84, %97 : vector<4x896xf32>
    %cst_57 = arith.constant 0.000000e+00 : f32
    %99 = vector.broadcast %cst_57 : f32 to vector<4x896xf32>
    %100 = arith.subf %99, %78 : vector<4x896xf32>
    %101 = arith.mulf %100, %78 : vector<4x896xf32>
    %102 = math.exp %101 : vector<4x896xf32>
    %103 = arith.mulf %98, %102 : vector<4x896xf32>
    %cst_58 = arith.constant 1.000000e+00 : f32
    %104 = vector.broadcast %cst_58 : f32 to vector<4x896xf32>
    %105 = arith.subf %104, %103 : vector<4x896xf32>
    %cst_59 = arith.constant 0.000000e+00 : f32
    %106 = vector.broadcast %cst_59 : f32 to vector<4x896xf32>
    %107 = arith.cmpf olt, %77, %106 : vector<4x896xf32>
    %cst_60 = arith.constant 0.000000e+00 : f32
    %108 = vector.broadcast %cst_60 : f32 to vector<4x896xf32>
    %109 = arith.subf %108, %105 : vector<4x896xf32>
    %110 = arith.select %107, %109, %105 : vector<4x896xi1>, vector<4x896xf32>
    %cst_61 = arith.constant 1.000000e+00 : f32
    %111 = vector.broadcast %cst_61 : f32 to vector<4x896xf32>
    %112 = arith.addf %111, %110 : vector<4x896xf32>
    %113 = arith.mulf %75, %112 : vector<4x896xf32>
    %c0_62 = arith.constant 0 : index
    %c0_63 = arith.constant 0 : index
    %c0_64 = arith.constant 0 : index
    %114 = vector.load %arg9[%c0_62, %c0_63, %c0_64] : memref<1x896x256xf32, #tpu.memory_space<vmem>>, vector<1x896x256xf32>
    %115 = vector.shape_cast %114 : vector<1x896x256xf32> to vector<896x256xf32>
    %cst_65 = arith.constant dense<0.000000e+00> : vector<4x256xf32>
    %116 = tpu.matmul %113, %115, %cst_65 {dimension_numbers = #tpu.dot_dimension_numbers<[1], [0], [0], [1], [0, 0, 1, 1], [], []>} : vector<4x896xf32>, vector<896x256xf32>, vector<4x256xf32> -> vector<4x256xf32>
    %c0_66 = arith.constant 0 : index
    %c0_67 = arith.constant 0 : index
    %c0_68 = arith.constant 0 : index
    %117 = vector.load %arg10[%c0_66, %c0_67, %c0_68] : memref<1x1x256xf32, #tpu.memory_space<vmem>>, vector<1x1x256xf32>
    %118 = vector.shape_cast %117 : vector<1x1x256xf32> to vector<1x256xf32>
    %119 = vector.broadcast %118 : vector<1x256xf32> to vector<4x256xf32>
    %120 = arith.addf %116, %119 : vector<4x256xf32>
    %121 = arith.addf %66, %120 : vector<4x256xf32>
    %c0_69 = arith.constant 0 : index
    %c0_70 = arith.constant 0 : index
    %c0_71 = arith.constant 0 : index
    %122 = vector.load %arg13[%c0_69, %c0_70, %c0_71] : memref<1x1x256xf32, #tpu.memory_space<vmem>>, vector<1x1x256xf32>
    %123 = vector.shape_cast %122 : vector<1x1x256xf32> to vector<1x256xf32>
    %c0_72 = arith.constant 0 : index
    %c0_73 = arith.constant 0 : index
    %c0_74 = arith.constant 0 : index
    %124 = vector.load %arg14[%c0_72, %c0_73, %c0_74] : memref<1x1x256xf32, #tpu.memory_space<vmem>>, vector<1x1x256xf32>
    %125 = vector.shape_cast %124 : vector<1x1x256xf32> to vector<1x256xf32>
    %126 = arith.mulf %121, %8 : vector<4x256xf32>
    %cst_75 = arith.constant dense<0.000000e+00> : vector<4xf32>
    %127 = vector.multi_reduction <add>, %126, %cst_75 [1] : vector<4x256xf32> to vector<4xf32>
    %128 = vector.shape_cast %127 : vector<4xf32> to vector<4x1xf32>
    %cst_76 = arith.constant 0.00510204071 : f32
    %129 = vector.broadcast %cst_76 : f32 to vector<4x1xf32>
    %130 = arith.mulf %128, %129 : vector<4x1xf32>
    %131 = vector.broadcast %130 : vector<4x1xf32> to vector<4x256xf32>
    %132 = arith.subf %126, %131 : vector<4x256xf32>
    %133 = arith.mulf %132, %8 : vector<4x256xf32>
    %134 = arith.mulf %133, %133 : vector<4x256xf32>
    %cst_77 = arith.constant dense<0.000000e+00> : vector<4xf32>
    %135 = vector.multi_reduction <add>, %134, %cst_77 [1] : vector<4x256xf32> to vector<4xf32>
    %136 = vector.shape_cast %135 : vector<4xf32> to vector<4x1xf32>
    %cst_78 = arith.constant 0.00512820529 : f32
    %137 = vector.broadcast %cst_78 : f32 to vector<4x1xf32>
    %138 = arith.mulf %136, %137 : vector<4x1xf32>
    %139 = math.sqrt %138 : vector<4x1xf32>
    %cst_79 = arith.constant 9.99999997E-7 : f32
    %140 = vector.broadcast %cst_79 : f32 to vector<4x1xf32>
    %141 = arith.addf %139, %140 : vector<4x1xf32>
    %142 = vector.broadcast %141 : vector<4x1xf32> to vector<4x256xf32>
    %143 = arith.divf %133, %142 : vector<4x256xf32>
    %144 = vector.broadcast %123 : vector<1x256xf32> to vector<4x256xf32>
    %145 = arith.mulf %144, %143 : vector<4x256xf32>
    %146 = vector.broadcast %125 : vector<1x256xf32> to vector<4x256xf32>
    %147 = arith.addf %145, %146 : vector<4x256xf32>
    %c0_80 = arith.constant 0 : index
    %c0_81 = arith.constant 0 : index
    %148 = vector.load %arg16[%c0_80, %c0_81] : memref<4x256xf32, #tpu.memory_space<vmem>>, vector<4x256xf32>
    tpu.vector_store %arg16[%c0_80, %c0_81], %147 {strides = array<i32>} : memref<4x256xf32, #tpu.memory_space<vmem>>, vector<4x256xf32>,
    %c5_i32 = arith.constant 5 : i32
    %149 = arith.cmpi eq, %arg0, %c5_i32 : i32
    %150 = arith.extui %149 : i1 to i32
    %c0_i32_82 = arith.constant 0 : i32
    %151 = arith.cmpi ne, %150, %c0_i32_82 : i32
    scf.if %151 {
      %c0_83 = arith.constant 0 : index
      %c0_84 = arith.constant 0 : index
      %152 = vector.load %arg15[%c0_83, %c0_84] : memref<4x256xf32, #tpu.memory_space<vmem>>, vector<4x256xf32>
      tpu.vector_store %arg15[%c0_83, %c0_84], %147 {strides = array<i32>} : memref<4x256xf32, #tpu.memory_space<vmem>>, vector<4x256xf32>,
    } else {
    }
    return
  }
  func.func @transform_0(%arg0: i32) -> (i32, i32) {
    %c0_i32 = arith.constant 0 : i32
    %c0_i32_0 = arith.constant 0 : i32
    %c0_i32_1 = arith.constant 0 : i32
    return %c0_i32, %c0_i32_0 : i32, i32
  }
  func.func @transform_1(%arg0: i32) -> (i32, i32, i32, i32) {
    %c0_i32 = arith.constant 0 : i32
    %c0_i32_0 = arith.constant 0 : i32
    %c0_i32_1 = arith.constant 0 : i32
    %c0_i32_2 = arith.constant 0 : i32
    return %arg0, %c0_i32, %c0_i32_0, %c0_i32_1 : i32, i32, i32, i32
  }
  func.func @transform_2(%arg0: i32) -> (i32, i32, i32, i32) {
    %c0_i32 = arith.constant 0 : i32
    %c0_i32_0 = arith.constant 0 : i32
    %c0_i32_1 = arith.constant 0 : i32
    %c0_i32_2 = arith.constant 0 : i32
    return %arg0, %c0_i32, %c0_i32_0, %c0_i32_1 : i32, i32, i32, i32
  }
  func.func @transform_3(%arg0: i32) -> (i32, i32, i32, i32) {
    %c0_i32 = arith.constant 0 : i32
    %c0_i32_0 = arith.constant 0 : i32
    %c0_i32_1 = arith.constant 0 : i32
    %c0_i32_2 = arith.constant 0 : i32
    return %arg0, %c0_i32, %c0_i32_0, %c0_i32_1 : i32, i32, i32, i32
  }
  func.func @transform_4(%arg0: i32) -> (i32, i32, i32, i32) {
    %c0_i32 = arith.constant 0 : i32
    %c0_i32_0 = arith.constant 0 : i32
    %c0_i32_1 = arith.constant 0 : i32
    %c0_i32_2 = arith.constant 0 : i32
    return %arg0, %c0_i32, %c0_i32_0, %c0_i32_1 : i32, i32, i32, i32
  }
  func.func @transform_5(%arg0: i32) -> (i32, i32, i32) {
    %c0_i32 = arith.constant 0 : i32
    %c0_i32_0 = arith.constant 0 : i32
    %c0_i32_1 = arith.constant 0 : i32
    return %arg0, %c0_i32, %c0_i32_0 : i32, i32, i32
  }
  func.func @transform_6(%arg0: i32) -> (i32, i32, i32) {
    %c0_i32 = arith.constant 0 : i32
    %c0_i32_0 = arith.constant 0 : i32
    %c0_i32_1 = arith.constant 0 : i32
    return %arg0, %c0_i32, %c0_i32_0 : i32, i32, i32
  }
  func.func @transform_7(%arg0: i32) -> (i32, i32, i32) {
    %c0_i32 = arith.constant 0 : i32
    %c0_i32_0 = arith.constant 0 : i32
    %c0_i32_1 = arith.constant 0 : i32
    return %arg0, %c0_i32, %c0_i32_0 : i32, i32, i32
  }
  func.func @transform_8(%arg0: i32) -> (i32, i32, i32) {
    %c0_i32 = arith.constant 0 : i32
    %c0_i32_0 = arith.constant 0 : i32
    %c0_i32_1 = arith.constant 0 : i32
    return %arg0, %c0_i32, %c0_i32_0 : i32, i32, i32
  }
  func.func @transform_9(%arg0: i32) -> (i32, i32, i32) {
    %c0_i32 = arith.constant 0 : i32
    %c0_i32_0 = arith.constant 0 : i32
    %c0_i32_1 = arith.constant 0 : i32
    return %arg0, %c0_i32, %c0_i32_0 : i32, i32, i32
  }
  func.func @transform_10(%arg0: i32) -> (i32, i32, i32) {
    %c0_i32 = arith.constant 0 : i32
    %c0_i32_0 = arith.constant 0 : i32
    %c0_i32_1 = arith.constant 0 : i32
    return %arg0, %c0_i32, %c0_i32_0 : i32, i32, i32
  }
  func.func @transform_11(%arg0: i32) -> (i32, i32, i32) {
    %c0_i32 = arith.constant 0 : i32
    %c0_i32_0 = arith.constant 0 : i32
    %c0_i32_1 = arith.constant 0 : i32
    return %arg0, %c0_i32, %c0_i32_0 : i32, i32, i32
  }
  func.func @transform_12(%arg0: i32) -> (i32, i32, i32) {
    %c0_i32 = arith.constant 0 : i32
    %c0_i32_0 = arith.constant 0 : i32
    %c0_i32_1 = arith.constant 0 : i32
    return %arg0, %c0_i32, %c0_i32_0 : i32, i32, i32
  }
  func.func @transform_13(%arg0: i32) -> (i32, i32, i32) {
    %c0_i32 = arith.constant 0 : i32
    %c0_i32_0 = arith.constant 0 : i32
    %c0_i32_1 = arith.constant 0 : i32
    return %arg0, %c0_i32, %c0_i32_0 : i32, i32, i32
  }
  func.func @transform_14(%arg0: i32) -> (i32, i32) {
    %c0_i32 = arith.constant 0 : i32
    %c0_i32_0 = arith.constant 0 : i32
    %c0_i32_1 = arith.constant 0 : i32
    return %c0_i32, %c0_i32_0 : i32, i32
  }
}

</mosaic_0001>

<llo_original>
// kernel: tpu_custom_call.1
$region0: #{tpu_custom_call.1}
  #allocation0 [shape = 'u32[]', space=smem, size = 0x4, offset = 0x4, fixed_abs, tag = 'smem constant byte address 0x4 - core index']
  #allocation1 [shape = 'u32[144,128]{1,0:T(1,128)}', space=vmem, size = 0x12000, scoped, tag = 'internal scratch']
  #allocation2 [shape = 'f32[4,256]{1,0:T(4,128)}', space=vmem, size = 0x1000, scoped, tag = 'scratch operand']
  %s0 = inlined_call_operand.vmem [shape: f32[4,256], index: 0, kind: input, shape index: {}]
  %s1 = inlined_call_operand.vmem [shape: f32[6,7,256,28], index: 1, kind: input, shape index: {}]
  %s2 = inlined_call_operand.vmem [shape: f32[6,7,256,28], index: 2, kind: input, shape index: {}]
  %s3 = inlined_call_operand.vmem [shape: f32[6,7,256,28], index: 3, kind: input, shape index: {}]
  %s4 = inlined_call_operand.vmem [shape: f32[6,7,28,256], index: 4, kind: input, shape index: {}]
  %s5 = inlined_call_operand.vmem [shape: f32[6,1,256], index: 5, kind: input, shape index: {}]
  %s6 = inlined_call_operand.vmem [shape: f32[6,256,896], index: 6, kind: input, shape index: {}]
  %s7 = inlined_call_operand.vmem [shape: f32[6,1,896], index: 7, kind: input, shape index: {}]
  %s8 = inlined_call_operand.vmem [shape: f32[6,896,256], index: 8, kind: input, shape index: {}]
  %s9 = inlined_call_operand.vmem [shape: f32[6,1,256], index: 9, kind: input, shape index: {}]
  %s10 = inlined_call_operand.vmem [shape: f32[6,1,256], index: 10, kind: input, shape index: {}]
  %s11 = inlined_call_operand.vmem [shape: f32[6,1,256], index: 11, kind: input, shape index: {}]
  %s12 = inlined_call_operand.vmem [shape: f32[6,1,256], index: 12, kind: input, shape index: {}]
  %s13 = inlined_call_operand.vmem [shape: f32[6,1,256], index: 13, kind: input, shape index: {}]
  %s14 = inlined_call_operand.hbm [shape: f32[4,256], index: 14, kind: output, shape index: {}]
  %s15 = sld [smem:[#allocation0]]
  $region97: #{tpu_custom_call.1} parent=0
    _
  %s17 = ssub.s32 1, %s15
  %s18 = scalar_select 0, %s17, %s15
  $region1: #{tpu_custom_call.1} parent=0
    #allocation3 [shape = 'u8[4096]{0}', space=vmem, size = 0x1000, scoped, tag = 'output window, operand 0, single buffered']
    #allocation4 [shape = 's32[2]{0}', space=sflag, size = 0x8, scoped, tag = 'scoped memory for tpu_custom_call.1']
    %19 = vsyncpa [#allocation4], 0
    loop: start=0, step=1, limit=8
    $region2: #{tpu_custom_call.1} parent=1 // loop_pre_header
      _
    $region3: #{tpu_custom_call.1} parent=1 // loop_header
      %s21 = sphi 0, %s25
      %p22 = scmp.ge.s32.totalorder %s21, 8
      %s29 = sphi 0, %s29
      %s31 = sphi 0, %s29
      %s32 = sphi 0, %s31
      %s46 = sphi 0, %s32
      %s52 = sphi 0, %s54
      %s55 = sphi 0, %s52
      %s56 = sphi 0, %s55
      %s72 = sphi 0, %s56
      %s78 = sphi 0, %s80
      %s81 = sphi 0, %s78
      %s82 = sphi 0, %s81
      %s98 = sphi 0, %s82
      %s104 = sphi 0, %s106
      %s107 = sphi 0, %s104
      %s108 = sphi 0, %s107
      %s124 = sphi 0, %s108
      %s130 = sphi 0, %s132
      %s133 = sphi 0, %s130
      %s134 = sphi 0, %s133
      %s150 = sphi 0, %s134
      %s156 = sphi 0, %s158
      %s159 = sphi 0, %s156
      %s160 = sphi 0, %s159
      %s176 = sphi 0, %s160
      %s182 = sphi 0, %s184
      %s185 = sphi 0, %s182
      %s186 = sphi 0, %s185
      %s202 = sphi 0, %s186
      %s208 = sphi 0, %s210
      %s211 = sphi 0, %s208
      %s212 = sphi 0, %s211
      %s228 = sphi 0, %s212
      %s234 = sphi 0, %s236
      %s237 = sphi 0, %s234
      %s238 = sphi 0, %s237
      %s254 = sphi 0, %s238
      %s260 = sphi 0, %s262
      %s263 = sphi 0, %s260
      %s264 = sphi 0, %s263
      %s280 = sphi 0, %s264
      %s286 = sphi 0, %s288
      %s289 = sphi 0, %s286
      %s290 = sphi 0, %s289
      %s306 = sphi 0, %s290
      %s312 = sphi 0, %s314
      %s315 = sphi 0, %s312
      %s316 = sphi 0, %s315
      %s332 = sphi 0, %s316
      %s338 = sphi 0, %s340
      %s341 = sphi 0, %s338
      %s342 = sphi 0, %s341
      %s358 = sphi 0, %s342
      %s364 = sphi 0, %s366
      %s367 = sphi 0, %s364
      %s368 = sphi 0, %s367
      %s384 = sphi 0, %s368
      %s388 = sphi 0, %s388
      %s390 = sphi 0, %s388
      %s391 = sphi 0, %s390
      %s405 = sphi 0, %s391
    $region4: #{tpu_custom_call.1} parent=1 // loop_header_branch
      %24 = sbr.rel (%p22) target = $region8
    $region5: #{tpu_custom_call.1} parent=1 // loop_body
      %s26 = ssub.s32 %s21, 1
      %s27 = ssub.s32 %s21, 2
      %s28 = sadd.s32 %s21, 1
      %s30 = sadd.s32 %s29, 1
      %p33 = scmp.eq.s32.totalorder %s21, 5
      %p34 = scmp.ne.s32.totalorder %s29, %s31
      %p35 = scmp.eq.s32.totalorder %s21, 0
      %p36 = por %p34, %p35
      %p37 = scmp.ne.s32.totalorder %s29, %s31
      %p38 = scmp.eq.s32.totalorder %s26, 5
      %p39 = por %p37, %p38
      %p40 = scmp.ne.s32.totalorder %s31, %s32
      %p41 = scmp.eq.s32.totalorder %s26, 0
      %p42 = por %p40, %p41
      %p43 = scmp.ne.s32.totalorder %s31, %s32
      %p44 = scmp.eq.s32.totalorder %s27, 5
      %p45 = por %p43, %p44
      %p47 = scmp.ne.s32.totalorder %s32, %s46
      %p48 = scmp.eq.s32.totalorder %s27, 0
      %p49 = por %p47, %p48
      %s50 = ssub.s32 %s21, %s28
      %p51 = scmp.eq.s32.totalorder %s50, 0
      %s53 = sadd.s32 %s52, 1
      %s54 = scalar_select %p51, %s52, %s53
      %p57 = pneg %p51
      %p58 = scmp.eq.s32.totalorder %s21, 5
      %p59 = por %p57, %p58
      %p60 = scmp.ne.s32.totalorder %s52, %s55
      %p61 = scmp.eq.s32.totalorder %s21, 0
      %p62 = por %p60, %p61
      %p63 = scmp.ne.s32.totalorder %s52, %s55
      %p64 = scmp.eq.s32.totalorder %s26, 5
      %p65 = por %p63, %p64
      %p66 = scmp.ne.s32.totalorder %s55, %s56
      %p67 = scmp.eq.s32.totalorder %s26, 0
      %p68 = por %p66, %p67
      %p69 = scmp.ne.s32.totalorder %s55, %s56
      %p70 = scmp.eq.s32.totalorder %s27, 5
      %p71 = por %p69, %p70
      %p73 = scmp.ne.s32.totalorder %s56, %s72
      %p74 = scmp.eq.s32.totalorder %s27, 0
      %p75 = por %p73, %p74
      %s76 = ssub.s32 %s21, %s28
      %p77 = scmp.eq.s32.totalorder %s76, 0
      %s79 = sadd.s32 %s78, 1
      %s80 = scalar_select %p77, %s78, %s79
      %p83 = pneg %p77
      %p84 = scmp.eq.s32.totalorder %s21, 5
      %p85 = por %p83, %p84
      %p86 = scmp.ne.s32.totalorder %s78, %s81
      %p87 = scmp.eq.s32.totalorder %s21, 0
      %p88 = por %p86, %p87
      %p89 = scmp.ne.s32.totalorder %s78, %s81
      %p90 = scmp.eq.s32.totalorder %s26, 5
      %p91 = por %p89, %p90
      %p92 = scmp.ne.s32.totalorder %s81, %s82
      %p93 = scmp.eq.s32.totalorder %s26, 0
      %p94 = por %p92, %p93
      %p95 = scmp.ne.s32.totalorder %s81, %s82
      %p96 = scmp.eq.s32.totalorder %s27, 5
      %p97 = por %p95, %p96
      %p99 = scmp.ne.s32.totalorder %s82, %s98
      %p100 = scmp.eq.s32.totalorder %s27, 0
      %p101 = por %p99, %p100
      %s102 = ssub.s32 %s21, %s28
      %p103 = scmp.eq.s32.totalorder %s102, 0
      %s105 = sadd.s32 %s104, 1
      %s106 = scalar_select %p103, %s104, %s105
      %p109 = pneg %p103
      %p110 = scmp.eq.s32.totalorder %s21, 5
      %p111 = por %p109, %p110
      %p112 = scmp.ne.s32.totalorder %s104, %s107
      %p113 = scmp.eq.s32.totalorder %s21, 0
      %p114 = por %p112, %p113
      %p115 = scmp.ne.s32.totalorder %s104, %s107
      %p116 = scmp.eq.s32.totalorder %s26, 5
      %p117 = por %p115, %p116
      %p118 = scmp.ne.s32.totalorder %s107, %s108
      %p119 = scmp.eq.s32.totalorder %s26, 0
      %p120 = por %p118, %p119
      %p121 = scmp.ne.s32.totalorder %s107, %s108
      %p122 = scmp.eq.s32.totalorder %s27, 5
      %p123 = por %p121, %p122
      %p125 = scmp.ne.s32.totalorder %s108, %s124
      %p126 = scmp.eq.s32.totalorder %s27, 0
      %p127 = por %p125, %p126
      %s128 = ssub.s32 %s21, %s28
      %p129 = scmp.eq.s32.totalorder %s128, 0
      %s131 = sadd.s32 %s130, 1
      %s132 = scalar_select %p129, %s130, %s131
      %p135 = pneg %p129
      %p136 = scmp.eq.s32.totalorder %s21, 5
      %p137 = por %p135, %p136
      %p138 = scmp.ne.s32.totalorder %s130, %s133
      %p139 = scmp.eq.s32.totalorder %s21, 0
      %p140 = por %p138, %p139
      %p141 = scmp.ne.s32.totalorder %s130, %s133
      %p142 = scmp.eq.s32.totalorder %s26, 5
      %p143 = por %p141, %p142
      %p144 = scmp.ne.s32.totalorder %s133, %s134
      %p145 = scmp.eq.s32.totalorder %s26, 0
      %p146 = por %p144, %p145
      %p147 = scmp.ne.s32.totalorder %s133, %s134
      %p148 = scmp.eq.s32.totalorder %s27, 5
      %p149 = por %p147, %p148
      %p151 = scmp.ne.s32.totalorder %s134, %s150
      %p152 = scmp.eq.s32.totalorder %s27, 0
      %p153 = por %p151, %p152
      %s154 = ssub.s32 %s21, %s28
      %p155 = scmp.eq.s32.totalorder %s154, 0
      %s157 = sadd.s32 %s156, 1
      %s158 = scalar_select %p155, %s156, %s157
      %p161 = pneg %p155
      %p162 = scmp.eq.s32.totalorder %s21, 5
      %p163 = por %p161, %p162
      %p164 = scmp.ne.s32.totalorder %s156, %s159
      %p165 = scmp.eq.s32.totalorder %s21, 0
      %p166 = por %p164, %p165
      %p167 = scmp.ne.s32.totalorder %s156, %s159
      %p168 = scmp.eq.s32.totalorder %s26, 5
      %p169 = por %p167, %p168
      %p170 = scmp.ne.s32.totalorder %s159, %s160
      %p171 = scmp.eq.s32.totalorder %s26, 0
      %p172 = por %p170, %p171
      %p173 = scmp.ne.s32.totalorder %s159, %s160
      %p174 = scmp.eq.s32.totalorder %s27, 5
      %p175 = por %p173, %p174
      %p177 = scmp.ne.s32.totalorder %s160, %s176
      %p178 = scmp.eq.s32.totalorder %s27, 0
      %p179 = por %p177, %p178
      %s180 = ssub.s32 %s21, %s28
      %p181 = scmp.eq.s32.totalorder %s180, 0
      %s183 = sadd.s32 %s182, 1
      %s184 = scalar_select %p181, %s182, %s183
      %p187 = pneg %p181
      %p188 = scmp.eq.s32.totalorder %s21, 5
      %p189 = por %p187, %p188
      %p190 = scmp.ne.s32.totalorder %s182, %s185
      %p191 = scmp.eq.s32.totalorder %s21, 0
      %p192 = por %p190, %p191
      %p193 = scmp.ne.s32.totalorder %s182, %s185
      %p194 = scmp.eq.s32.totalorder %s26, 5
      %p195 = por %p193, %p194
      %p196 = scmp.ne.s32.totalorder %s185, %s186
      %p197 = scmp.eq.s32.totalorder %s26, 0
      %p198 = por %p196, %p197
      %p199 = scmp.ne.s32.totalorder %s185, %s186
      %p200 = scmp.eq.s32.totalorder %s27, 5
      %p201 = por %p199, %p200
      %p203 = scmp.ne.s32.totalorder %s186, %s202
      %p204 = scmp.eq.s32.totalorder %s27, 0
      %p205 = por %p203, %p204
      %s206 = ssub.s32 %s21, %s28
      %p207 = scmp.eq.s32.totalorder %s206, 0
      %s209 = sadd.s32 %s208, 1
      %s210 = scalar_select %p207, %s208, %s209
      %p213 = pneg %p207
      %p214 = scmp.eq.s32.totalorder %s21, 5
      %p215 = por %p213, %p214
      %p216 = scmp.ne.s32.totalorder %s208, %s211
      %p217 = scmp.eq.s32.totalorder %s21, 0
      %p218 = por %p216, %p217
      %p219 = scmp.ne.s32.totalorder %s208, %s211
      %p220 = scmp.eq.s32.totalorder %s26, 5
      %p221 = por %p219, %p220
      %p222 = scmp.ne.s32.totalorder %s211, %s212
      %p223 = scmp.eq.s32.totalorder %s26, 0
      %p224 = por %p222, %p223
      %p225 = scmp.ne.s32.totalorder %s211, %s212
      %p226 = scmp.eq.s32.totalorder %s27, 5
      %p227 = por %p225, %p226
      %p229 = scmp.ne.s32.totalorder %s212, %s228
      %p230 = scmp.eq.s32.totalorder %s27, 0
      %p231 = por %p229, %p230
      %s232 = ssub.s32 %s21, %s28
      %p233 = scmp.eq.s32.totalorder %s232, 0
      %s235 = sadd.s32 %s234, 1
      %s236 = scalar_select %p233, %s234, %s235
      %p239 = pneg %p233
      %p240 = scmp.eq.s32.totalorder %s21, 5
      %p241 = por %p239, %p240
      %p242 = scmp.ne.s32.totalorder %s234, %s237
      %p243 = scmp.eq.s32.totalorder %s21, 0
      %p244 = por %p242, %p243
      %p245 = scmp.ne.s32.totalorder %s234, %s237
      %p246 = scmp.eq.s32.totalorder %s26, 5
      %p247 = por %p245, %p246
      %p248 = scmp.ne.s32.totalorder %s237, %s238
      %p249 = scmp.eq.s32.totalorder %s26, 0
      %p250 = por %p248, %p249
      %p251 = scmp.ne.s32.totalorder %s237, %s238
      %p252 = scmp.eq.s32.totalorder %s27, 5
      %p253 = por %p251, %p252
      %p255 = scmp.ne.s32.totalorder %s238, %s254
      %p256 = scmp.eq.s32.totalorder %s27, 0
      %p257 = por %p255, %p256
      %s258 = ssub.s32 %s21, %s28
      %p259 = scmp.eq.s32.totalorder %s258, 0
      %s261 = sadd.s32 %s260, 1
      %s262 = scalar_select %p259, %s260, %s261
      %p265 = pneg %p259
      %p266 = scmp.eq.s32.totalorder %s21, 5
      %p267 = por %p265, %p266
      %p268 = scmp.ne.s32.totalorder %s260, %s263
      %p269 = scmp.eq.s32.totalorder %s21, 0
      %p270 = por %p268, %p269
      %p271 = scmp.ne.s32.totalorder %s260, %s263
      %p272 = scmp.eq.s32.totalorder %s26, 5
      %p273 = por %p271, %p272
      %p274 = scmp.ne.s32.totalorder %s263, %s264
      %p275 = scmp.eq.s32.totalorder %s26, 0
      %p276 = por %p274, %p275
      %p277 = scmp.ne.s32.totalorder %s263, %s264
      %p278 = scmp.eq.s32.totalorder %s27, 5
      %p279 = por %p277, %p278
      %p281 = scmp.ne.s32.totalorder %s264, %s280
      %p282 = scmp.eq.s32.totalorder %s27, 0
      %p283 = por %p281, %p282
      %s284 = ssub.s32 %s21, %s28
      %p285 = scmp.eq.s32.totalorder %s284, 0
      %s287 = sadd.s32 %s286, 1
      %s288 = scalar_select %p285, %s286, %s287
      %p291 = pneg %p285
      %p292 = scmp.eq.s32.totalorder %s21, 5
      %p293 = por %p291, %p292
      %p294 = scmp.ne.s32.totalorder %s286, %s289
      %p295 = scmp.eq.s32.totalorder %s21, 0
      %p296 = por %p294, %p295
      %p297 = scmp.ne.s32.totalorder %s286, %s289
      %p298 = scmp.eq.s32.totalorder %s26, 5
      %p299 = por %p297, %p298
      %p300 = scmp.ne.s32.totalorder %s289, %s290
      %p301 = scmp.eq.s32.totalorder %s26, 0
      %p302 = por %p300, %p301
      %p303 = scmp.ne.s32.totalorder %s289, %s290
      %p304 = scmp.eq.s32.totalorder %s27, 5
      %p305 = por %p303, %p304
      %p307 = scmp.ne.s32.totalorder %s290, %s306
      %p308 = scmp.eq.s32.totalorder %s27, 0
      %p309 = por %p307, %p308
      %s310 = ssub.s32 %s21, %s28
      %p311 = scmp.eq.s32.totalorder %s310, 0
      %s313 = sadd.s32 %s312, 1
      %s314 = scalar_select %p311, %s312, %s313
      %p317 = pneg %p311
      %p318 = scmp.eq.s32.totalorder %s21, 5
      %p319 = por %p317, %p318
      %p320 = scmp.ne.s32.totalorder %s312, %s315
      %p321 = scmp.eq.s32.totalorder %s21, 0
      %p322 = por %p320, %p321
      %p323 = scmp.ne.s32.totalorder %s312, %s315
      %p324 = scmp.eq.s32.totalorder %s26, 5
      %p325 = por %p323, %p324
      %p326 = scmp.ne.s32.totalorder %s315, %s316
      %p327 = scmp.eq.s32.totalorder %s26, 0
      %p328 = por %p326, %p327
      %p329 = scmp.ne.s32.totalorder %s315, %s316
      %p330 = scmp.eq.s32.totalorder %s27, 5
      %p331 = por %p329, %p330
      %p333 = scmp.ne.s32.totalorder %s316, %s332
      %p334 = scmp.eq.s32.totalorder %s27, 0
      %p335 = por %p333, %p334
      %s336 = ssub.s32 %s21, %s28
      %p337 = scmp.eq.s32.totalorder %s336, 0
      %s339 = sadd.s32 %s338, 1
      %s340 = scalar_select %p337, %s338, %s339
      %p343 = pneg %p337
      %p344 = scmp.eq.s32.totalorder %s21, 5
      %p345 = por %p343, %p344
      %p346 = scmp.ne.s32.totalorder %s338, %s341
      %p347 = scmp.eq.s32.totalorder %s21, 0
      %p348 = por %p346, %p347
      %p349 = scmp.ne.s32.totalorder %s338, %s341
      %p350 = scmp.eq.s32.totalorder %s26, 5
      %p351 = por %p349, %p350
      %p352 = scmp.ne.s32.totalorder %s341, %s342
      %p353 = scmp.eq.s32.totalorder %s26, 0
      %p354 = por %p352, %p353
      %p355 = scmp.ne.s32.totalorder %s341, %s342
      %p356 = scmp.eq.s32.totalorder %s27, 5
      %p357 = por %p355, %p356
      %p359 = scmp.ne.s32.totalorder %s342, %s358
      %p360 = scmp.eq.s32.totalorder %s27, 0
      %p361 = por %p359, %p360
      %s362 = ssub.s32 %s21, %s28
      %p363 = scmp.eq.s32.totalorder %s362, 0
      %s365 = sadd.s32 %s364, 1
      %s366 = scalar_select %p363, %s364, %s365
      %p369 = pneg %p363
      %p370 = scmp.eq.s32.totalorder %s21, 5
      %p371 = por %p369, %p370
      %p372 = scmp.ne.s32.totalorder %s364, %s367
      %p373 = scmp.eq.s32.totalorder %s21, 0
      %p374 = por %p372, %p373
      %p375 = scmp.ne.s32.totalorder %s364, %s367
      %p376 = scmp.eq.s32.totalorder %s26, 5
      %p377 = por %p375, %p376
      %p378 = scmp.ne.s32.totalorder %s367, %s368
      %p379 = scmp.eq.s32.totalorder %s26, 0
      %p380 = por %p378, %p379
      %p381 = scmp.ne.s32.totalorder %s367, %s368
      %p382 = scmp.eq.s32.totalorder %s27, 5
      %p383 = por %p381, %p382
      %p385 = scmp.ne.s32.totalorder %s368, %s384
      %p386 = scmp.eq.s32.totalorder %s27, 0
      %p387 = por %p385, %p386
      %s389 = sadd.s32 %s388, 1
      %p392 = scmp.eq.s32.totalorder %s21, 5
      %p393 = scmp.ne.s32.totalorder %s388, %s390
      %p394 = scmp.eq.s32.totalorder %s21, 0
      %p395 = por %p393, %p394
      %p396 = scmp.ne.s32.totalorder %s388, %s390
      %p397 = scmp.eq.s32.totalorder %s26, 5
      %p398 = por %p396, %p397
      %p399 = scmp.ne.s32.totalorder %s390, %s391
      %p400 = scmp.eq.s32.totalorder %s26, 0
      %p401 = por %p399, %p400
      %p402 = scmp.ne.s32.totalorder %s390, %s391
      %p403 = scmp.eq.s32.totalorder %s27, 5
      %p404 = por %p402, %p403
      %p406 = scmp.ne.s32.totalorder %s391, %s405
      %p407 = scmp.eq.s32.totalorder %s27, 0
      %p408 = por %p406, %p407
      %p409 = scmp.le.s32.totalorder 1, %s21
      %p410 = scmp.lt.s32.totalorder %s21, 7
      %p411 = pnand %p409, %p410
      %p412 = pneg %p411
      // Predicated region
      $region9: #{tpu_custom_call.1} parent=5 // pred_check
        _
      $region10: #{tpu_custom_call.1} parent=5 // pred_check_branch
        %414 = sbr.rel (%p411) target = $region12
      $region11: #{tpu_custom_call.1} parent=5 // pred_region
        %s415 = ssub.s32 %s21, 1
        // Predicated region
        $region13: #{tpu_custom_call.1} parent=11 // pred_check
          %p416 = pneg %p42
        $region14: #{tpu_custom_call.1} parent=11 // pred_check_branch
          %418 = sbr.rel (%p416) target = $region16
        $region15: #{tpu_custom_call.1} parent=11 // pred_region
          _
        $region16: #{tpu_custom_call.1} parent=11 // pred_fallthru
          _
      $region12: #{tpu_custom_call.1} parent=5 // pred_fallthru
        _
      %p419 = scmp.lt.s32.totalorder %s21, 6
      // Predicated region
      $region17: #{tpu_custom_call.1} parent=5 // pred_check
        %p420 = pneg %p419
      $region18: #{tpu_custom_call.1} parent=5 // pred_check_branch
        %422 = sbr.rel (%p420) target = $region20
      $region19: #{tpu_custom_call.1} parent=5 // pred_region
        // Predicated region
        $region21: #{tpu_custom_call.1} parent=19 // pred_check
          %p423 = pneg %p62
        $region22: #{tpu_custom_call.1} parent=19 // pred_check_branch
          %425 = sbr.rel (%p423) target = $region24
        $region23: #{tpu_custom_call.1} parent=19 // pred_region
          %p426 = scmp.lt.s32.totalorder %s21, 5
          %s427 = scalar_select %p426, %s21, 5
          %s428 = smul.addr %s427, 224
          %s429 = smul.addr %s428, 8
          %s430 = scalar_lea.vmem %s1, %s429
        $region24: #{tpu_custom_call.1} parent=19 // pred_fallthru
          _
        // Predicated region
        $region25: #{tpu_custom_call.1} parent=19 // pred_check
          %p431 = pneg %p88
        $region26: #{tpu_custom_call.1} parent=19 // pred_check_branch
          %433 = sbr.rel (%p431) target = $region28
        $region27: #{tpu_custom_call.1} parent=19 // pred_region
          %p434 = scmp.lt.s32.totalorder %s21, 5
          %s435 = scalar_select %p434, %s21, 5
          %s436 = smul.addr %s435, 224
          %s437 = smul.addr %s436, 8
          %s438 = scalar_lea.vmem %s2, %s437
        $region28: #{tpu_custom_call.1} parent=19 // pred_fallthru
          _
        // Predicated region
        $region29: #{tpu_custom_call.1} parent=19 // pred_check
          %p439 = pneg %p114
        $region30: #{tpu_custom_call.1} parent=19 // pred_check_branch
          %441 = sbr.rel (%p439) target = $region32
        $region31: #{tpu_custom_call.1} parent=19 // pred_region
          %p442 = scmp.lt.s32.totalorder %s21, 5
          %s443 = scalar_select %p442, %s21, 5
          %s444 = smul.addr %s443, 224
          %s445 = smul.addr %s444, 8
          %s446 = scalar_lea.vmem %s3, %s445
        $region32: #{tpu_custom_call.1} parent=19 // pred_fallthru
          _
        // Predicated region
        $region33: #{tpu_custom_call.1} parent=19 // pred_check
          %p447 = pneg %p140
        $region34: #{tpu_custom_call.1} parent=19 // pred_check_branch
          %449 = sbr.rel (%p447) target = $region36
        $region35: #{tpu_custom_call.1} parent=19 // pred_region
          %p450 = scmp.lt.s32.totalorder %s21, 5
          %s451 = scalar_select %p450, %s21, 5
          %s452 = smul.addr %s451, 56
          %s453 = smul.addr %s452, 8
          %s454 = scalar_lea.vmem %s4, %s453
        $region36: #{tpu_custom_call.1} parent=19 // pred_fallthru
          _
        // Predicated region
        $region37: #{tpu_custom_call.1} parent=19 // pred_check
          %p455 = pneg %p166
        $region38: #{tpu_custom_call.1} parent=19 // pred_check_branch
          %457 = sbr.rel (%p455) target = $region40
        $region39: #{tpu_custom_call.1} parent=19 // pred_region
          %p458 = scmp.lt.s32.totalorder %s21, 5
          %s459 = scalar_select %p458, %s21, 5
          %s460 = smul.addr %s459, 2
          %s461 = scalar_lea.vmem %s5, %s460
        $region40: #{tpu_custom_call.1} parent=19 // pred_fallthru
          _
        // Predicated region
        $region41: #{tpu_custom_call.1} parent=19 // pred_check
          %p462 = pneg %p192
        $region42: #{tpu_custom_call.1} parent=19 // pred_check_branch
          %464 = sbr.rel (%p462) target = $region44
        $region43: #{tpu_custom_call.1} parent=19 // pred_region
          %p465 = scmp.lt.s32.totalorder %s21, 5
          %s466 = scalar_select %p465, %s21, 5
          %s467 = smul.addr %s466, 224
          %s468 = smul.addr %s467, 8
          %s469 = scalar_lea.vmem %s6, %s468
        $region44: #{tpu_custom_call.1} parent=19 // pred_fallthru
          _
        // Predicated region
        $region45: #{tpu_custom_call.1} parent=19 // pred_check
          %p470 = pneg %p218
        $region46: #{tpu_custom_call.1} parent=19 // pred_check_branch
          %472 = sbr.rel (%p470) target = $region48
        $region47: #{tpu_custom_call.1} parent=19 // pred_region
          %p473 = scmp.lt.s32.totalorder %s21, 5
          %s474 = scalar_select %p473, %s21, 5
          %s475 = smul.addr %s474, 7
          %s476 = scalar_lea.vmem %s7, %s475
        $region48: #{tpu_custom_call.1} parent=19 // pred_fallthru
          _
        // Predicated region
        $region49: #{tpu_custom_call.1} parent=19 // pred_check
          %p477 = pneg %p244
        $region50: #{tpu_custom_call.1} parent=19 // pred_check_branch
          %479 = sbr.rel (%p477) target = $region52
        $region51: #{tpu_custom_call.1} parent=19 // pred_region
          %p480 = scmp.lt.s32.totalorder %s21, 5
          %s481 = scalar_select %p480, %s21, 5
          %s482 = smul.addr %s481, 224
          %s483 = smul.addr %s482, 8
          %s484 = scalar_lea.vmem %s8, %s483
        $region52: #{tpu_custom_call.1} parent=19 // pred_fallthru
          _
        // Predicated region
        $region53: #{tpu_custom_call.1} parent=19 // pred_check
          %p485 = pneg %p270
        $region54: #{tpu_custom_call.1} parent=19 // pred_check_branch
          %487 = sbr.rel (%p485) target = $region56
        $region55: #{tpu_custom_call.1} parent=19 // pred_region
          %p488 = scmp.lt.s32.totalorder %s21, 5
          %s489 = scalar_select %p488, %s21, 5
          %s490 = smul.addr %s489, 2
          %s491 = scalar_lea.vmem %s9, %s490
        $region56: #{tpu_custom_call.1} parent=19 // pred_fallthru
          _
        // Predicated region
        $region57: #{tpu_custom_call.1} parent=19 // pred_check
          %p492 = pneg %p296
        $region58: #{tpu_custom_call.1} parent=19 // pred_check_branch
          %494 = sbr.rel (%p492) target = $region60
        $region59: #{tpu_custom_call.1} parent=19 // pred_region
          %p495 = scmp.lt.s32.totalorder %s21, 5
          %s496 = scalar_select %p495, %s21, 5
          %s497 = smul.addr %s496, 2
          %s498 = scalar_lea.vmem %s10, %s497
        $region60: #{tpu_custom_call.1} parent=19 // pred_fallthru
          _
        // Predicated region
        $region61: #{tpu_custom_call.1} parent=19 // pred_check
          %p499 = pneg %p322
        $region62: #{tpu_custom_call.1} parent=19 // pred_check_branch
          %501 = sbr.rel (%p499) target = $region64
        $region63: #{tpu_custom_call.1} parent=19 // pred_region
          %p502 = scmp.lt.s32.totalorder %s21, 5
          %s503 = scalar_select %p502, %s21, 5
          %s504 = smul.addr %s503, 2
          %s505 = scalar_lea.vmem %s11, %s504
        $region64: #{tpu_custom_call.1} parent=19 // pred_fallthru
          _
        // Predicated region
        $region65: #{tpu_custom_call.1} parent=19 // pred_check
          %p506 = pneg %p348
        $region66: #{tpu_custom_call.1} parent=19 // pred_check_branch
          %508 = sbr.rel (%p506) target = $region68
        $region67: #{tpu_custom_call.1} parent=19 // pred_region
          %p509 = scmp.lt.s32.totalorder %s21, 5
          %s510 = scalar_select %p509, %s21, 5
          %s511 = smul.addr %s510, 2
          %s512 = scalar_lea.vmem %s12, %s511
        $region68: #{tpu_custom_call.1} parent=19 // pred_fallthru
          _
        // Predicated region
        $region69: #{tpu_custom_call.1} parent=19 // pred_check
          %p513 = pneg %p374
        $region70: #{tpu_custom_call.1} parent=19 // pred_check_branch
          %515 = sbr.rel (%p513) target = $region72
        $region71: #{tpu_custom_call.1} parent=19 // pred_region
          %p516 = scmp.lt.s32.totalorder %s21, 5
          %s517 = scalar_select %p516, %s21, 5
          %s518 = smul.addr %s517, 2
          %s519 = scalar_lea.vmem %s13, %s518
        $region72: #{tpu_custom_call.1} parent=19 // pred_fallthru
          _
      $region20: #{tpu_custom_call.1} parent=5 // pred_fallthru
        _
      %p520 = scmp.le.s32.totalorder 1, %s21
      %p521 = scmp.lt.s32.totalorder %s21, 7
      %p522 = pnand %p520, %p521
      %p523 = pneg %p522
      // Predicated region
      $region73: #{tpu_custom_call.1} parent=5 // pred_check
        _
      $region74: #{tpu_custom_call.1} parent=5 // pred_check_branch
        %525 = sbr.rel (%p522) target = $region76
      $region75: #{tpu_custom_call.1} parent=5 // pred_region
        %s526 = ssub.s32 %s21, 1
        %p527 = pneg %p42
        %p528 = pneg %p39
        %p529 = scmp.lt.s32.totalorder %s26, 5
        %s530 = scalar_select %p529, %s26, 5
        %s531 = smul.addr %s530, 224
        %s532 = smul.addr %s531, 8
        %s533 = scalar_lea.vmem %s1, %s532
        %p534 = pneg %p68
        %p535 = pneg %p65
        %p536 = scmp.lt.s32.totalorder %s26, 5
        %s537 = scalar_select %p536, %s26, 5
        %s538 = smul.addr %s537, 224
        %s539 = smul.addr %s538, 8
        %s540 = scalar_lea.vmem %s2, %s539
        %p541 = pneg %p94
        %p542 = pneg %p91
        %p543 = scmp.lt.s32.totalorder %s26, 5
        %s544 = scalar_select %p543, %s26, 5
        %s545 = smul.addr %s544, 224
        %s546 = smul.addr %s545, 8
        %s547 = scalar_lea.vmem %s3, %s546
        %p548 = pneg %p120
        %p549 = pneg %p117
        %p550 = scmp.lt.s32.totalorder %s26, 5
        %s551 = scalar_select %p550, %s26, 5
        %s552 = smul.addr %s551, 56
        %s553 = smul.addr %s552, 8
        %s554 = scalar_lea.vmem %s4, %s553
        %p555 = pneg %p146
        %p556 = pneg %p143
        %p557 = scmp.lt.s32.totalorder %s26, 5
        %s558 = scalar_select %p557, %s26, 5
        %s559 = smul.addr %s558, 2
        %s560 = scalar_lea.vmem %s5, %s559
        %p561 = pneg %p172
        %p562 = pneg %p169
        %p563 = scmp.lt.s32.totalorder %s26, 5
        %s564 = scalar_select %p563, %s26, 5
        %s565 = smul.addr %s564, 224
        %s566 = smul.addr %s565, 8
        %s567 = scalar_lea.vmem %s6, %s566
        %p568 = pneg %p198
        %p569 = pneg %p195
        %p570 = scmp.lt.s32.totalorder %s26, 5
        %s571 = scalar_select %p570, %s26, 5
        %s572 = smul.addr %s571, 7
        %s573 = scalar_lea.vmem %s7, %s572
        %p574 = pneg %p224
        %p575 = pneg %p221
        %p576 = scmp.lt.s32.totalorder %s26, 5
        %s577 = scalar_select %p576, %s26, 5
        %s578 = smul.addr %s577, 224
        %s579 = smul.addr %s578, 8
        %s580 = scalar_lea.vmem %s8, %s579
        %p581 = pneg %p250
        %p582 = pneg %p247
        %p583 = scmp.lt.s32.totalorder %s26, 5
        %s584 = scalar_select %p583, %s26, 5
        %s585 = smul.addr %s584, 2
        %s586 = scalar_lea.vmem %s9, %s585
        %p587 = pneg %p276
        %p588 = pneg %p273
        %p589 = scmp.lt.s32.totalorder %s26, 5
        %s590 = scalar_select %p589, %s26, 5
        %s591 = smul.addr %s590, 2
        %s592 = scalar_lea.vmem %s10, %s591
        %p593 = pneg %p302
        %p594 = pneg %p299
        %p595 = scmp.lt.s32.totalorder %s26, 5
        %s596 = scalar_select %p595, %s26, 5
        %s597 = smul.addr %s596, 2
        %s598 = scalar_lea.vmem %s11, %s597
        %p599 = pneg %p328
        %p600 = pneg %p325
        %p601 = scmp.lt.s32.totalorder %s26, 5
        %s602 = scalar_select %p601, %s26, 5
        %s603 = smul.addr %s602, 2
        %s604 = scalar_lea.vmem %s12, %s603
        %p605 = pneg %p354
        %p606 = pneg %p351
        %p607 = scmp.lt.s32.totalorder %s26, 5
        %s608 = scalar_select %p607, %s26, 5
        %s609 = smul.addr %s608, 2
        %s610 = scalar_lea.vmem %s13, %s609
        %p611 = pneg %p380
        %p612 = pneg %p377
        %p613 = pneg %p401
        %p614 = pneg %p398
        %p615 = scmp.lt.s32.totalorder %s26, 5
        %s616 = scalar_select %p615, %s26, 5
        %s617 = smul.addr %s616, 224
        %s618 = smul.addr %s617, 8
        %s619 = scalar_lea.vmem %s1, %s618
        %p620 = scmp.lt.s32.totalorder %s26, 5
        %s621 = scalar_select %p620, %s26, 5
        %s622 = smul.addr %s621, 224
        %s623 = smul.addr %s622, 8
        %s624 = scalar_lea.vmem %s2, %s623
        %p625 = scmp.lt.s32.totalorder %s26, 5
        %s626 = scalar_select %p625, %s26, 5
        %s627 = smul.addr %s626, 224
        %s628 = smul.addr %s627, 8
        %s629 = scalar_lea.vmem %s3, %s628
        %p630 = scmp.lt.s32.totalorder %s26, 5
        %s631 = scalar_select %p630, %s26, 5
        %s632 = smul.addr %s631, 56
        %s633 = smul.addr %s632, 8
        %s634 = scalar_lea.vmem %s4, %s633
        %p635 = scmp.lt.s32.totalorder %s26, 5
        %s636 = scalar_select %p635, %s26, 5
        %s637 = smul.addr %s636, 2
        %s638 = scalar_lea.vmem %s5, %s637
        %p639 = scmp.lt.s32.totalorder %s26, 5
        %s640 = scalar_select %p639, %s26, 5
        %s641 = smul.addr %s640, 224
        %s642 = smul.addr %s641, 8
        %s643 = scalar_lea.vmem %s6, %s642
        %p644 = scmp.lt.s32.totalorder %s26, 5
        %s645 = scalar_select %p644, %s26, 5
        %s646 = smul.addr %s645, 7
        %s647 = scalar_lea.vmem %s7, %s646
        %p648 = scmp.lt.s32.totalorder %s26, 5
        %s649 = scalar_select %p648, %s26, 5
        %s650 = smul.addr %s649, 224
        %s651 = smul.addr %s650, 8
        %s652 = scalar_lea.vmem %s8, %s651
        %p653 = scmp.lt.s32.totalorder %s26, 5
        %s654 = scalar_select %p653, %s26, 5
        %s655 = smul.addr %s654, 2
        %s656 = scalar_lea.vmem %s9, %s655
        %p657 = scmp.lt.s32.totalorder %s26, 5
        %s658 = scalar_select %p657, %s26, 5
        %s659 = smul.addr %s658, 2
        %s660 = scalar_lea.vmem %s10, %s659
        %p661 = scmp.lt.s32.totalorder %s26, 5
        %s662 = scalar_select %p661, %s26, 5
        %s663 = smul.addr %s662, 2
        %s664 = scalar_lea.vmem %s11, %s663
        %p665 = scmp.lt.s32.totalorder %s26, 5
        %s666 = scalar_select %p665, %s26, 5
        %s667 = smul.addr %s666, 2
        %s668 = scalar_lea.vmem %s12, %s667
        %p669 = scmp.lt.s32.totalorder %s26, 5
        %s670 = scalar_select %p669, %s26, 5
        %s671 = smul.addr %s670, 2
        %s672 = scalar_lea.vmem %s13, %s671
        %p673 = scmp.eq.s32.totalorder %s26, 0
        // Predicated region
        $region77: #{tpu_custom_call.1} parent=75 // pred_check
          %p674 = pneg %p673
        $region78: #{tpu_custom_call.1} parent=75 // pred_check_branch
          %676 = sbr.rel (%p674) target = $region80
        $region79: #{tpu_custom_call.1} parent=75 // pred_region
          %v677 = vld [vmem:[%s0] sm:$0xff]
          %678 = vst [vmem:[#allocation2] sm:$0xff] %v677
        $region80: #{tpu_custom_call.1} parent=75 // pred_fallthru
          _
        %v679 = vld [vmem:[#allocation2] sm:$0xff]
        %v680 = vlaneseq
        %v681 = vand.u32 %v680, 127
        %v682 = vadd.s32 %v681, 128
        %vm683 = vcmp.lt.s32.totalorder %v681, 196
        %vm684 = vcmp.lt.s32.totalorder %v682, 196
        %v685 = vsel %vm683, 1, 0
        %v686 = vsel %vm684, 1, 0
        %v687 = vcvt.s32.f32 %v685
        %v688 = vcvt.s32.f32 %v686
        %v689 = vld [vmem:[%s619] sm:$0xff]
        %v690 = vld [vmem:[%s619 + $0x8] sm:$0xff]
        %v691 = vld [vmem:[%s619 + $0x10] sm:$0xff]
        %v692 = vld [vmem:[%s619 + $0x18] sm:$0xff]
        %v693 = vld [vmem:[%s619 + $0x20] sm:$0xff]
        %v694 = vld [vmem:[%s619 + $0x28] sm:$0xff]
        %v695 = vld [vmem:[%s619 + $0x30] sm:$0xff]
        %v696 = vld [vmem:[%s619 + $0x38] sm:$0xff]
        %v697 = vld [vmem:[%s619 + $0x40] sm:$0xff]
        %v698 = vld [vmem:[%s619 + $0x48] sm:$0xff]
        %v699 = vld [vmem:[%s619 + $0x50] sm:$0xff]
        %v700 = vld [vmem:[%s619 + $0x58] sm:$0xff]
        %v701 = vld [vmem:[%s619 + $0x60] sm:$0xff]
        %v702 = vld [vmem:[%s619 + $0x68] sm:$0xff]
        %v703 = vld [vmem:[%s619 + $0x70] sm:$0xff]
        %v704 = vld [vmem:[%s619 + $0x78] sm:$0xff]
        %v705 = vld [vmem:[%s619 + $0x80] sm:$0xff]
        %v706 = vld [vmem:[%s619 + $0x88] sm:$0xff]
        %v707 = vld [vmem:[%s619 + $0x90] sm:$0xff]
        %v708 = vld [vmem:[%s619 + $0x98] sm:$0xff]
        %v709 = vld [vmem:[%s619 + $0xa0] sm:$0xff]
        %v710 = vld [vmem:[%s619 + $0xa8] sm:$0xff]
        %v711 = vld [vmem:[%s619 + $0xb0] sm:$0xff]
        %v712 = vld [vmem:[%s619 + $0xb8] sm:$0xff]
        %v713 = vld [vmem:[%s619 + $0xc0] sm:$0xff]
        %v714 = vld [vmem:[%s619 + $0xc8] sm:$0xff]
        %v715 = vld [vmem:[%s619 + $0xd0] sm:$0xff]
        %v716 = vld [vmem:[%s619 + $0xd8] sm:$0xff]
        %v717 = vld [vmem:[%s619 + $0xe0] sm:$0xff]
        %v718 = vld [vmem:[%s619 + $0xe8] sm:$0xff]
        %v719 = vld [vmem:[%s619 + $0xf0] sm:$0xff]
        %v720 = vld [vmem:[%s619 + $0xf8] sm:$0xff]
        %v721 = vld [vmem:[%s619 + $0x100] sm:$0xff]
        %v722 = vld [vmem:[%s619 + $0x108] sm:$0xff]
        %v723 = vld [vmem:[%s619 + $0x110] sm:$0xff]
        %v724 = vld [vmem:[%s619 + $0x118] sm:$0xff]
        %v725 = vld [vmem:[%s619 + $0x120] sm:$0xff]
        %v726 = vld [vmem:[%s619 + $0x128] sm:$0xff]
        %v727 = vld [vmem:[%s619 + $0x130] sm:$0xff]
        %v728 = vld [vmem:[%s619 + $0x138] sm:$0xff]
        %v729 = vld [vmem:[%s619 + $0x140] sm:$0xff]
        %v730 = vld [vmem:[%s619 + $0x148] sm:$0xff]
        %v731 = vld [vmem:[%s619 + $0x150] sm:$0xff]
        %v732 = vld [vmem:[%s619 + $0x158] sm:$0xff]
        %v733 = vld [vmem:[%s619 + $0x160] sm:$0xff]
        %v734 = vld [vmem:[%s619 + $0x168] sm:$0xff]
        %v735 = vld [vmem:[%s619 + $0x170] sm:$0xff]
        %v736 = vld [vmem:[%s619 + $0x178] sm:$0xff]
        %v737 = vld [vmem:[%s619 + $0x180] sm:$0xff]
        %v738 = vld [vmem:[%s619 + $0x188] sm:$0xff]
        %v739 = vld [vmem:[%s619 + $0x190] sm:$0xff]
        %v740 = vld [vmem:[%s619 + $0x198] sm:$0xff]
        %v741 = vld [vmem:[%s619 + $0x1a0] sm:$0xff]
        %v742 = vld [vmem:[%s619 + $0x1a8] sm:$0xff]
        %v743 = vld [vmem:[%s619 + $0x1b0] sm:$0xff]
        %v744 = vld [vmem:[%s619 + $0x1b8] sm:$0xff]
        %v745 = vld [vmem:[%s619 + $0x1c0] sm:$0xff]
        %v746 = vld [vmem:[%s619 + $0x1c8] sm:$0xff]
        %v747 = vld [vmem:[%s619 + $0x1d0] sm:$0xff]
        %v748 = vld [vmem:[%s619 + $0x1d8] sm:$0xff]
        %v749 = vld [vmem:[%s619 + $0x1e0] sm:$0xff]
        %v750 = vld [vmem:[%s619 + $0x1e8] sm:$0xff]
        %v751 = vld [vmem:[%s619 + $0x1f0] sm:$0xff]
        %v752 = vld [vmem:[%s619 + $0x1f8] sm:$0xff]
        %v753 = vld [vmem:[%s619 + $0x200] sm:$0xff]
        %v754 = vld [vmem:[%s619 + $0x208] sm:$0xff]
        %v755 = vld [vmem:[%s619 + $0x210] sm:$0xff]
        %v756 = vld [vmem:[%s619 + $0x218] sm:$0xff]
        %v757 = vld [vmem:[%s619 + $0x220] sm:$0xff]
        %v758 = vld [vmem:[%s619 + $0x228] sm:$0xff]
        %v759 = vld [vmem:[%s619 + $0x230] sm:$0xff]
        %v760 = vld [vmem:[%s619 + $0x238] sm:$0xff]
        %v761 = vld [vmem:[%s619 + $0x240] sm:$0xff]
        %v762 = vld [vmem:[%s619 + $0x248] sm:$0xff]
        %v763 = vld [vmem:[%s619 + $0x250] sm:$0xff]
        %v764 = vld [vmem:[%s619 + $0x258] sm:$0xff]
        %v765 = vld [vmem:[%s619 + $0x260] sm:$0xff]
        %v766 = vld [vmem:[%s619 + $0x268] sm:$0xff]
        %v767 = vld [vmem:[%s619 + $0x270] sm:$0xff]
        %v768 = vld [vmem:[%s619 + $0x278] sm:$0xff]
        %v769 = vld [vmem:[%s619 + $0x280] sm:$0xff]
        %v770 = vld [vmem:[%s619 + $0x288] sm:$0xff]
        %v771 = vld [vmem:[%s619 + $0x290] sm:$0xff]
        %v772 = vld [vmem:[%s619 + $0x298] sm:$0xff]
        %v773 = vld [vmem:[%s619 + $0x2a0] sm:$0xff]
        %v774 = vld [vmem:[%s619 + $0x2a8] sm:$0xff]
        %v775 = vld [vmem:[%s619 + $0x2b0] sm:$0xff]
        %v776 = vld [vmem:[%s619 + $0x2b8] sm:$0xff]
        %v777 = vld [vmem:[%s619 + $0x2c0] sm:$0xff]
        %v778 = vld [vmem:[%s619 + $0x2c8] sm:$0xff]
        %v779 = vld [vmem:[%s619 + $0x2d0] sm:$0xff]
        %v780 = vld [vmem:[%s619 + $0x2d8] sm:$0xff]
        %v781 = vld [vmem:[%s619 + $0x2e0] sm:$0xff]
        %v782 = vld [vmem:[%s619 + $0x2e8] sm:$0xff]
        %v783 = vld [vmem:[%s619 + $0x2f0] sm:$0xff]
        %v784 = vld [vmem:[%s619 + $0x2f8] sm:$0xff]
        %v785 = vld [vmem:[%s619 + $0x300] sm:$0xff]
        %v786 = vld [vmem:[%s619 + $0x308] sm:$0xff]
        %v787 = vld [vmem:[%s619 + $0x310] sm:$0xff]
        %v788 = vld [vmem:[%s619 + $0x318] sm:$0xff]
        %v789 = vld [vmem:[%s619 + $0x320] sm:$0xff]
        %v790 = vld [vmem:[%s619 + $0x328] sm:$0xff]
        %v791 = vld [vmem:[%s619 + $0x330] sm:$0xff]
        %v792 = vld [vmem:[%s619 + $0x338] sm:$0xff]
        %v793 = vld [vmem:[%s619 + $0x340] sm:$0xff]
        %v794 = vld [vmem:[%s619 + $0x348] sm:$0xff]
        %v795 = vld [vmem:[%s619 + $0x350] sm:$0xff]
        %v796 = vld [vmem:[%s619 + $0x358] sm:$0xff]
        %v797 = vld [vmem:[%s619 + $0x360] sm:$0xff]
        %v798 = vld [vmem:[%s619 + $0x368] sm:$0xff]
        %v799 = vld [vmem:[%s619 + $0x370] sm:$0xff]
        %v800 = vld [vmem:[%s619 + $0x378] sm:$0xff]
        %v801 = vld [vmem:[%s619 + $0x380] sm:$0xff]
        %v802 = vld [vmem:[%s619 + $0x388] sm:$0xff]
        %v803 = vld [vmem:[%s619 + $0x390] sm:$0xff]
        %v804 = vld [vmem:[%s619 + $0x398] sm:$0xff]
        %v805 = vld [vmem:[%s619 + $0x3a0] sm:$0xff]
        %v806 = vld [vmem:[%s619 + $0x3a8] sm:$0xff]
        %v807 = vld [vmem:[%s619 + $0x3b0] sm:$0xff]
        %v808 = vld [vmem:[%s619 + $0x3b8] sm:$0xff]
        %v809 = vld [vmem:[%s619 + $0x3c0] sm:$0xff]
        %v810 = vld [vmem:[%s619 + $0x3c8] sm:$0xff]
        %v811 = vld [vmem:[%s619 + $0x3d0] sm:$0xff]
        %v812 = vld [vmem:[%s619 + $0x3d8] sm:$0xff]
        %v813 = vld [vmem:[%s619 + $0x3e0] sm:$0xff]
        %v814 = vld [vmem:[%s619 + $0x3e8] sm:$0xff]
        %v815 = vld [vmem:[%s619 + $0x3f0] sm:$0xff]
        %v816 = vld [vmem:[%s619 + $0x3f8] sm:$0xff]
        %v817 = vld [vmem:[%s619 + $0x400] sm:$0xff]
        %v818 = vld [vmem:[%s619 + $0x408] sm:$0xff]
        %v819 = vld [vmem:[%s619 + $0x410] sm:$0xff]
        %v820 = vld [vmem:[%s619 + $0x418] sm:$0xff]
        %v821 = vld [vmem:[%s619 + $0x420] sm:$0xff]
        %v822 = vld [vmem:[%s619 + $0x428] sm:$0xff]
        %v823 = vld [vmem:[%s619 + $0x430] sm:$0xff]
        %v824 = vld [vmem:[%s619 + $0x438] sm:$0xff]
        %v825 = vld [vmem:[%s619 + $0x440] sm:$0xff]
        %v826 = vld [vmem:[%s619 + $0x448] sm:$0xff]
        %v827 = vld [vmem:[%s619 + $0x450] sm:$0xff]
        %v828 = vld [vmem:[%s619 + $0x458] sm:$0xff]
        %v829 = vld [vmem:[%s619 + $0x460] sm:$0xff]
        %v830 = vld [vmem:[%s619 + $0x468] sm:$0xff]
        %v831 = vld [vmem:[%s619 + $0x470] sm:$0xff]
        %v832 = vld [vmem:[%s619 + $0x478] sm:$0xff]
        %v833 = vld [vmem:[%s619 + $0x480] sm:$0xff]
        %v834 = vld [vmem:[%s619 + $0x488] sm:$0xff]
        %v835 = vld [vmem:[%s619 + $0x490] sm:$0xff]
        %v836 = vld [vmem:[%s619 + $0x498] sm:$0xff]
        %v837 = vld [vmem:[%s619 + $0x4a0] sm:$0xff]
        %v838 = vld [vmem:[%s619 + $0x4a8] sm:$0xff]
        %v839 = vld [vmem:[%s619 + $0x4b0] sm:$0xff]
        %v840 = vld [vmem:[%s619 + $0x4b8] sm:$0xff]
        %v841 = vld [vmem:[%s619 + $0x4c0] sm:$0xff]
        %v842 = vld [vmem:[%s619 + $0x4c8] sm:$0xff]
        %v843 = vld [vmem:[%s619 + $0x4d0] sm:$0xff]
        %v844 = vld [vmem:[%s619 + $0x4d8] sm:$0xff]
        %v845 = vld [vmem:[%s619 + $0x4e0] sm:$0xff]
        %v846 = vld [vmem:[%s619 + $0x4e8] sm:$0xff]
        %v847 = vld [vmem:[%s619 + $0x4f0] sm:$0xff]
        %v848 = vld [vmem:[%s619 + $0x4f8] sm:$0xff]
        %v849 = vld [vmem:[%s619 + $0x500] sm:$0xff]
        %v850 = vld [vmem:[%s619 + $0x508] sm:$0xff]
        %v851 = vld [vmem:[%s619 + $0x510] sm:$0xff]
        %v852 = vld [vmem:[%s619 + $0x518] sm:$0xff]
        %v853 = vld [vmem:[%s619 + $0x520] sm:$0xff]
        %v854 = vld [vmem:[%s619 + $0x528] sm:$0xff]
        %v855 = vld [vmem:[%s619 + $0x530] sm:$0xff]
        %v856 = vld [vmem:[%s619 + $0x538] sm:$0xff]
        %v857 = vld [vmem:[%s619 + $0x540] sm:$0xff]
        %v858 = vld [vmem:[%s619 + $0x548] sm:$0xff]
        %v859 = vld [vmem:[%s619 + $0x550] sm:$0xff]
        %v860 = vld [vmem:[%s619 + $0x558] sm:$0xff]
        %v861 = vld [vmem:[%s619 + $0x560] sm:$0xff]
        %v862 = vld [vmem:[%s619 + $0x568] sm:$0xff]
        %v863 = vld [vmem:[%s619 + $0x570] sm:$0xff]
        %v864 = vld [vmem:[%s619 + $0x578] sm:$0xff]
        %v865 = vld [vmem:[%s619 + $0x580] sm:$0xff]
        %v866 = vld [vmem:[%s619 + $0x588] sm:$0xff]
        %v867 = vld [vmem:[%s619 + $0x590] sm:$0xff]
        %v868 = vld [vmem:[%s619 + $0x598] sm:$0xff]
        %v869 = vld [vmem:[%s619 + $0x5a0] sm:$0xff]
        %v870 = vld [vmem:[%s619 + $0x5a8] sm:$0xff]
        %v871 = vld [vmem:[%s619 + $0x5b0] sm:$0xff]
        %v872 = vld [vmem:[%s619 + $0x5b8] sm:$0xff]
        %v873 = vld [vmem:[%s619 + $0x5c0] sm:$0xff]
        %v874 = vld [vmem:[%s619 + $0x5c8] sm:$0xff]
        %v875 = vld [vmem:[%s619 + $0x5d0] sm:$0xff]
        %v876 = vld [vmem:[%s619 + $0x5d8] sm:$0xff]
        %v877 = vld [vmem:[%s619 + $0x5e0] sm:$0xff]
        %v878 = vld [vmem:[%s619 + $0x5e8] sm:$0xff]
        %v879 = vld [vmem:[%s619 + $0x5f0] sm:$0xff]
        %v880 = vld [vmem:[%s619 + $0x5f8] sm:$0xff]
        %v881 = vld [vmem:[%s619 + $0x600] sm:$0xff]
        %v882 = vld [vmem:[%s619 + $0x608] sm:$0xff]
        %v883 = vld [vmem:[%s619 + $0x610] sm:$0xff]
        %v884 = vld [vmem:[%s619 + $0x618] sm:$0xff]
        %v885 = vld [vmem:[%s619 + $0x620] sm:$0xff]
        %v886 = vld [vmem:[%s619 + $0x628] sm:$0xff]
        %v887 = vld [vmem:[%s619 + $0x630] sm:$0xff]
        %v888 = vld [vmem:[%s619 + $0x638] sm:$0xff]
        %v889 = vld [vmem:[%s619 + $0x640] sm:$0xff]
        %v890 = vld [vmem:[%s619 + $0x648] sm:$0xff]
        %v891 = vld [vmem:[%s619 + $0x650] sm:$0xff]
        %v892 = vld [vmem:[%s619 + $0x658] sm:$0xff]
        %v893 = vld [vmem:[%s619 + $0x660] sm:$0xff]
        %v894 = vld [vmem:[%s619 + $0x668] sm:$0xff]
        %v895 = vld [vmem:[%s619 + $0x670] sm:$0xff]
        %v896 = vld [vmem:[%s619 + $0x678] sm:$0xff]
        %v897 = vld [vmem:[%s619 + $0x680] sm:$0xff]
        %v898 = vld [vmem:[%s619 + $0x688] sm:$0xff]
        %v899 = vld [vmem:[%s619 + $0x690] sm:$0xff]
        %v900 = vld [vmem:[%s619 + $0x698] sm:$0xff]
        %v901 = vld [vmem:[%s619 + $0x6a0] sm:$0xff]
        %v902 = vld [vmem:[%s619 + $0x6a8] sm:$0xff]
        %v903 = vld [vmem:[%s619 + $0x6b0] sm:$0xff]
        %v904 = vld [vmem:[%s619 + $0x6b8] sm:$0xff]
        %v905 = vld [vmem:[%s619 + $0x6c0] sm:$0xff]
        %v906 = vld [vmem:[%s619 + $0x6c8] sm:$0xff]
        %v907 = vld [vmem:[%s619 + $0x6d0] sm:$0xff]
        %v908 = vld [vmem:[%s619 + $0x6d8] sm:$0xff]
        %v909 = vld [vmem:[%s619 + $0x6e0] sm:$0xff]
        %v910 = vld [vmem:[%s619 + $0x6e8] sm:$0xff]
        %v911 = vld [vmem:[%s619 + $0x6f0] sm:$0xff]
        %v912 = vld [vmem:[%s619 + $0x6f8] sm:$0xff]
        %v914 = vcombine.high %v679, %v679
        %916 = vmatprep.subr.mxu0 0.0
        %917 = vmatpush1.msra.mxu0 %v704
        %918 = vmatprep.subr.mxu0 0.0
        %919 = vmatpush1.msra.mxu0 %v703
        %920 = vmatprep.subr.mxu0 0.0
        %921 = vmatpush1.msra.mxu0 %v702
        %922 = vmatprep.subr.mxu0 0.0
        %923 = vmatpush1.msra.mxu0 %v701
        %924 = vmatprep.subr.mxu0 0.0
        %925 = vmatpush1.msra.mxu0 %v700
        %926 = vmatprep.subr.mxu0 0.0
        %927 = vmatpush1.msra.mxu0 %v699
        %928 = vmatprep.subr.mxu0 0.0
        %929 = vmatpush1.msra.mxu0 %v698
        %930 = vmatprep.subr.mxu0 0.0
        %931 = vmatpush1.msra.mxu0 %v697
        %932 = vmatprep.subr.mxu0 0.0
        %933 = vmatpush1.msra.mxu0 %v696
        %934 = vmatprep.subr.mxu0 0.0
        %935 = vmatpush1.msra.mxu0 %v695
        %936 = vmatprep.subr.mxu0 0.0
        %937 = vmatpush1.msra.mxu0 %v694
        %938 = vmatprep.subr.mxu0 0.0
        %939 = vmatpush1.msra.mxu0 %v693
        %940 = vmatprep.subr.mxu0 0.0
        %941 = vmatpush1.msra.mxu0 %v692
        %942 = vmatprep.subr.mxu0 0.0
        %943 = vmatpush1.msra.mxu0 %v691
        %944 = vmatprep.subr.mxu0 0.0
        %945 = vmatpush1.msra.mxu0 %v690
        %946 = vmatprep.subr.mxu0 0.0
        %947 = vmatpush1.msra.mxu0 %v689
        %948 = vmatprep.subr.mxu0 0.0
        %949 = vmatpush2.msra.mxu0 %v720
        %950 = vmatprep.subr.mxu0 0.0
        %951 = vmatpush2.msra.mxu0 %v719
        %952 = vmatprep.subr.mxu0 0.0
        %953 = vmatpush2.msra.mxu0 %v718
        %954 = vmatprep.subr.mxu0 0.0
        %955 = vmatpush2.msra.mxu0 %v717
        %956 = vmatprep.subr.mxu0 0.0
        %957 = vmatpush2.msra.mxu0 %v716
        %958 = vmatprep.subr.mxu0 0.0
        %959 = vmatpush2.msra.mxu0 %v715
        %960 = vmatprep.subr.mxu0 0.0
        %961 = vmatpush2.msra.mxu0 %v714
        %962 = vmatprep.subr.mxu0 0.0
        %963 = vmatpush2.msra.mxu0 %v713
        %964 = vmatprep.subr.mxu0 0.0
        %965 = vmatpush2.msra.mxu0 %v712
        %966 = vmatprep.subr.mxu0 0.0
        %967 = vmatpush2.msra.mxu0 %v711
        %968 = vmatprep.subr.mxu0 0.0
        %969 = vmatpush2.msra.mxu0 %v710
        %970 = vmatprep.subr.mxu0 0.0
        %971 = vmatpush2.msra.mxu0 %v709
        %972 = vmatprep.subr.mxu0 0.0
        %973 = vmatpush2.msra.mxu0 %v708
        %974 = vmatprep.subr.mxu0 0.0
        %975 = vmatpush2.msra.mxu0 %v707
        %976 = vmatprep.subr.mxu0 0.0
        %977 = vmatpush2.msra.mxu0 %v706
        %978 = vmatprep.subr.mxu0 0.0
        %979 = vmatpush2.msra.mxu0 %v705
        %980 = vmatprep.mubr.f32.mxu0 %v914
        %981 = vmatmul.mubr.f32.gmra.mxu0 %v679
        %v982 = vpop.f32.mrf.mxu0
        %v983 = vadd.f32 0.0, %v982
        %v984 = vpop.f32.mrf.mxu0
        %985 = vdwg.mxu0
        %986 = vmatprep.subr.mxu0 0.0
        %987 = vmatpush1.msra.mxu0 %v736
        %988 = vmatprep.subr.mxu0 0.0
        %989 = vmatpush1.msra.mxu0 %v735
        %990 = vmatprep.subr.mxu0 0.0
        %991 = vmatpush1.msra.mxu0 %v734
        %992 = vmatprep.subr.mxu0 0.0
        %993 = vmatpush1.msra.mxu0 %v733
        %994 = vmatprep.subr.mxu0 0.0
        %995 = vmatpush1.msra.mxu0 %v732
        %996 = vmatprep.subr.mxu0 0.0
        %997 = vmatpush1.msra.mxu0 %v731
        %998 = vmatprep.subr.mxu0 0.0
        %999 = vmatpush1.msra.mxu0 %v730
        %1000 = vmatprep.subr.mxu0 0.0
        %1001 = vmatpush1.msra.mxu0 %v729
        %1002 = vmatprep.subr.mxu0 0.0
        %1003 = vmatpush1.msra.mxu0 %v728
        %1004 = vmatprep.subr.mxu0 0.0
        %1005 = vmatpush1.msra.mxu0 %v727
        %1006 = vmatprep.subr.mxu0 0.0
        %1007 = vmatpush1.msra.mxu0 %v726
        %1008 = vmatprep.subr.mxu0 0.0
        %1009 = vmatpush1.msra.mxu0 %v725
        %1010 = vmatprep.subr.mxu0 0.0
        %1011 = vmatpush1.msra.mxu0 %v724
        %1012 = vmatprep.subr.mxu0 0.0
        %1013 = vmatpush1.msra.mxu0 %v723
        %1014 = vmatprep.subr.mxu0 0.0
        %1015 = vmatpush1.msra.mxu0 %v722
        %1016 = vmatprep.subr.mxu0 0.0
        %1017 = vmatpush1.msra.mxu0 %v721
        %1018 = vmatprep.subr.mxu0 0.0
        %1019 = vmatpush2.msra.mxu0 %v752
        %1020 = vmatprep.subr.mxu0 0.0
        %1021 = vmatpush2.msra.mxu0 %v751
        %1022 = vmatprep.subr.mxu0 0.0
        %1023 = vmatpush2.msra.mxu0 %v750
        %1024 = vmatprep.subr.mxu0 0.0
        %1025 = vmatpush2.msra.mxu0 %v749
        %1026 = vmatprep.subr.mxu0 0.0
        %1027 = vmatpush2.msra.mxu0 %v748
        %1028 = vmatprep.subr.mxu0 0.0
        %1029 = vmatpush2.msra.mxu0 %v747
        %1030 = vmatprep.subr.mxu0 0.0
        %1031 = vmatpush2.msra.mxu0 %v746
        %1032 = vmatprep.subr.mxu0 0.0
        %1033 = vmatpush2.msra.mxu0 %v745
        %1034 = vmatprep.subr.mxu0 0.0
        %1035 = vmatpush2.msra.mxu0 %v744
        %1036 = vmatprep.subr.mxu0 0.0
        %1037 = vmatpush2.msra.mxu0 %v743
        %1038 = vmatprep.subr.mxu0 0.0
        %1039 = vmatpush2.msra.mxu0 %v742
        %1040 = vmatprep.subr.mxu0 0.0
        %1041 = vmatpush2.msra.mxu0 %v741
        %1042 = vmatprep.subr.mxu0 0.0
        %1043 = vmatpush2.msra.mxu0 %v740
        %1044 = vmatprep.subr.mxu0 0.0
        %1045 = vmatpush2.msra.mxu0 %v739
        %1046 = vmatprep.subr.mxu0 0.0
        %1047 = vmatpush2.msra.mxu0 %v738
        %1048 = vmatprep.subr.mxu0 0.0
        %1049 = vmatpush2.msra.mxu0 %v737
        %1050 = vmatprep.mubr.f32.mxu0 %v914
        %1051 = vmatmul.mubr.f32.gmra.mxu0 %v679
        %v1052 = vpop.f32.mrf.mxu0
        %v1053 = vadd.f32 0.0, %v1052
        %v1054 = vpop.f32.mrf.mxu0
        %1055 = vdwg.mxu0
        %1056 = vmatprep.subr.mxu0 0.0
        %1057 = vmatpush1.msra.mxu0 %v768
        %1058 = vmatprep.subr.mxu0 0.0
        %1059 = vmatpush1.msra.mxu0 %v767
        %1060 = vmatprep.subr.mxu0 0.0
        %1061 = vmatpush1.msra.mxu0 %v766
        %1062 = vmatprep.subr.mxu0 0.0
        %1063 = vmatpush1.msra.mxu0 %v765
        %1064 = vmatprep.subr.mxu0 0.0
        %1065 = vmatpush1.msra.mxu0 %v764
        %1066 = vmatprep.subr.mxu0 0.0
        %1067 = vmatpush1.msra.mxu0 %v763
        %1068 = vmatprep.subr.mxu0 0.0
        %1069 = vmatpush1.msra.mxu0 %v762
        %1070 = vmatprep.subr.mxu0 0.0
        %1071 = vmatpush1.msra.mxu0 %v761
        %1072 = vmatprep.subr.mxu0 0.0
        %1073 = vmatpush1.msra.mxu0 %v760
        %1074 = vmatprep.subr.mxu0 0.0
        %1075 = vmatpush1.msra.mxu0 %v759
        %1076 = vmatprep.subr.mxu0 0.0
        %1077 = vmatpush1.msra.mxu0 %v758
        %1078 = vmatprep.subr.mxu0 0.0
        %1079 = vmatpush1.msra.mxu0 %v757
        %1080 = vmatprep.subr.mxu0 0.0
        %1081 = vmatpush1.msra.mxu0 %v756
        %1082 = vmatprep.subr.mxu0 0.0
        %1083 = vmatpush1.msra.mxu0 %v755
        %1084 = vmatprep.subr.mxu0 0.0
        %1085 = vmatpush1.msra.mxu0 %v754
        %1086 = vmatprep.subr.mxu0 0.0
        %1087 = vmatpush1.msra.mxu0 %v753
        %1088 = vmatprep.subr.mxu0 0.0
        %1089 = vmatpush2.msra.mxu0 %v784
        %1090 = vmatprep.subr.mxu0 0.0
        %1091 = vmatpush2.msra.mxu0 %v783
        %1092 = vmatprep.subr.mxu0 0.0
        %1093 = vmatpush2.msra.mxu0 %v782
        %1094 = vmatprep.subr.mxu0 0.0
        %1095 = vmatpush2.msra.mxu0 %v781
        %1096 = vmatprep.subr.mxu0 0.0
        %1097 = vmatpush2.msra.mxu0 %v780
        %1098 = vmatprep.subr.mxu0 0.0
        %1099 = vmatpush2.msra.mxu0 %v779
        %1100 = vmatprep.subr.mxu0 0.0
        %1101 = vmatpush2.msra.mxu0 %v778
        %1102 = vmatprep.subr.mxu0 0.0
        %1103 = vmatpush2.msra.mxu0 %v777
        %1104 = vmatprep.subr.mxu0 0.0
        %1105 = vmatpush2.msra.mxu0 %v776
        %1106 = vmatprep.subr.mxu0 0.0
        %1107 = vmatpush2.msra.mxu0 %v775
        %1108 = vmatprep.subr.mxu0 0.0
        %1109 = vmatpush2.msra.mxu0 %v774
        %1110 = vmatprep.subr.mxu0 0.0
        %1111 = vmatpush2.msra.mxu0 %v773
        %1112 = vmatprep.subr.mxu0 0.0
        %1113 = vmatpush2.msra.mxu0 %v772
        %1114 = vmatprep.subr.mxu0 0.0
        %1115 = vmatpush2.msra.mxu0 %v771
        %1116 = vmatprep.subr.mxu0 0.0
        %1117 = vmatpush2.msra.mxu0 %v770
        %1118 = vmatprep.subr.mxu0 0.0
        %1119 = vmatpush2.msra.mxu0 %v769
        %1120 = vmatprep.mubr.f32.mxu0 %v914
        %1121 = vmatmul.mubr.f32.gmra.mxu0 %v679
        %v1122 = vpop.f32.mrf.mxu0
        %v1123 = vadd.f32 0.0, %v1122
        %v1124 = vpop.f32.mrf.mxu0
        %1125 = vdwg.mxu0
        %1126 = vmatprep.subr.mxu0 0.0
        %1127 = vmatpush1.msra.mxu0 %v800
        %1128 = vmatprep.subr.mxu0 0.0
        %1129 = vmatpush1.msra.mxu0 %v799
        %1130 = vmatprep.subr.mxu0 0.0
        %1131 = vmatpush1.msra.mxu0 %v798
        %1132 = vmatprep.subr.mxu0 0.0
        %1133 = vmatpush1.msra.mxu0 %v797
        %1134 = vmatprep.subr.mxu0 0.0
        %1135 = vmatpush1.msra.mxu0 %v796
        %1136 = vmatprep.subr.mxu0 0.0
        %1137 = vmatpush1.msra.mxu0 %v795
        %1138 = vmatprep.subr.mxu0 0.0
        %1139 = vmatpush1.msra.mxu0 %v794
        %1140 = vmatprep.subr.mxu0 0.0
        %1141 = vmatpush1.msra.mxu0 %v793
        %1142 = vmatprep.subr.mxu0 0.0
        %1143 = vmatpush1.msra.mxu0 %v792
        %1144 = vmatprep.subr.mxu0 0.0
        %1145 = vmatpush1.msra.mxu0 %v791
        %1146 = vmatprep.subr.mxu0 0.0
        %1147 = vmatpush1.msra.mxu0 %v790
        %1148 = vmatprep.subr.mxu0 0.0
        %1149 = vmatpush1.msra.mxu0 %v789
        %1150 = vmatprep.subr.mxu0 0.0
        %1151 = vmatpush1.msra.mxu0 %v788
        %1152 = vmatprep.subr.mxu0 0.0
        %1153 = vmatpush1.msra.mxu0 %v787
        %1154 = vmatprep.subr.mxu0 0.0
        %1155 = vmatpush1.msra.mxu0 %v786
        %1156 = vmatprep.subr.mxu0 0.0
        %1157 = vmatpush1.msra.mxu0 %v785
        %1158 = vmatprep.subr.mxu0 0.0
        %1159 = vmatpush2.msra.mxu0 %v816
        %1160 = vmatprep.subr.mxu0 0.0
        %1161 = vmatpush2.msra.mxu0 %v815
        %1162 = vmatprep.subr.mxu0 0.0
        %1163 = vmatpush2.msra.mxu0 %v814
        %1164 = vmatprep.subr.mxu0 0.0
        %1165 = vmatpush2.msra.mxu0 %v813
        %1166 = vmatprep.subr.mxu0 0.0
        %1167 = vmatpush2.msra.mxu0 %v812
        %1168 = vmatprep.subr.mxu0 0.0
        %1169 = vmatpush2.msra.mxu0 %v811
        %1170 = vmatprep.subr.mxu0 0.0
        %1171 = vmatpush2.msra.mxu0 %v810
        %1172 = vmatprep.subr.mxu0 0.0
        %1173 = vmatpush2.msra.mxu0 %v809
        %1174 = vmatprep.subr.mxu0 0.0
        %1175 = vmatpush2.msra.mxu0 %v808
        %1176 = vmatprep.subr.mxu0 0.0
        %1177 = vmatpush2.msra.mxu0 %v807
        %1178 = vmatprep.subr.mxu0 0.0
        %1179 = vmatpush2.msra.mxu0 %v806
        %1180 = vmatprep.subr.mxu0 0.0
        %1181 = vmatpush2.msra.mxu0 %v805
        %1182 = vmatprep.subr.mxu0 0.0
        %1183 = vmatpush2.msra.mxu0 %v804
        %1184 = vmatprep.subr.mxu0 0.0
        %1185 = vmatpush2.msra.mxu0 %v803
        %1186 = vmatprep.subr.mxu0 0.0
        %1187 = vmatpush2.msra.mxu0 %v802
        %1188 = vmatprep.subr.mxu0 0.0
        %1189 = vmatpush2.msra.mxu0 %v801
        %1190 = vmatprep.mubr.f32.mxu0 %v914
        %1191 = vmatmul.mubr.f32.gmra.mxu0 %v679
        %v1192 = vpop.f32.mrf.mxu0
        %v1193 = vadd.f32 0.0, %v1192
        %v1194 = vpop.f32.mrf.mxu0
        %1195 = vdwg.mxu0
        %1196 = vmatprep.subr.mxu0 0.0
        %1197 = vmatpush1.msra.mxu0 %v832
        %1198 = vmatprep.subr.mxu0 0.0
        %1199 = vmatpush1.msra.mxu0 %v831
        %1200 = vmatprep.subr.mxu0 0.0
        %1201 = vmatpush1.msra.mxu0 %v830
        %1202 = vmatprep.subr.mxu0 0.0
        %1203 = vmatpush1.msra.mxu0 %v829
        %1204 = vmatprep.subr.mxu0 0.0
        %1205 = vmatpush1.msra.mxu0 %v828
        %1206 = vmatprep.subr.mxu0 0.0
        %1207 = vmatpush1.msra.mxu0 %v827
        %1208 = vmatprep.subr.mxu0 0.0
        %1209 = vmatpush1.msra.mxu0 %v826
        %1210 = vmatprep.subr.mxu0 0.0
        %1211 = vmatpush1.msra.mxu0 %v825
        %1212 = vmatprep.subr.mxu0 0.0
        %1213 = vmatpush1.msra.mxu0 %v824
        %1214 = vmatprep.subr.mxu0 0.0
        %1215 = vmatpush1.msra.mxu0 %v823
        %1216 = vmatprep.subr.mxu0 0.0
        %1217 = vmatpush1.msra.mxu0 %v822
        %1218 = vmatprep.subr.mxu0 0.0
        %1219 = vmatpush1.msra.mxu0 %v821
        %1220 = vmatprep.subr.mxu0 0.0
        %1221 = vmatpush1.msra.mxu0 %v820
        %1222 = vmatprep.subr.mxu0 0.0
        %1223 = vmatpush1.msra.mxu0 %v819
        %1224 = vmatprep.subr.mxu0 0.0
        %1225 = vmatpush1.msra.mxu0 %v818
        %1226 = vmatprep.subr.mxu0 0.0
        %1227 = vmatpush1.msra.mxu0 %v817
        %1228 = vmatprep.subr.mxu0 0.0
        %1229 = vmatpush2.msra.mxu0 %v848
        %1230 = vmatprep.subr.mxu0 0.0
        %1231 = vmatpush2.msra.mxu0 %v847
        %1232 = vmatprep.subr.mxu0 0.0
        %1233 = vmatpush2.msra.mxu0 %v846
        %1234 = vmatprep.subr.mxu0 0.0
        %1235 = vmatpush2.msra.mxu0 %v845
        %1236 = vmatprep.subr.mxu0 0.0
        %1237 = vmatpush2.msra.mxu0 %v844
        %1238 = vmatprep.subr.mxu0 0.0
        %1239 = vmatpush2.msra.mxu0 %v843
        %1240 = vmatprep.subr.mxu0 0.0
        %1241 = vmatpush2.msra.mxu0 %v842
        %1242 = vmatprep.subr.mxu0 0.0
        %1243 = vmatpush2.msra.mxu0 %v841
        %1244 = vmatprep.subr.mxu0 0.0
        %1245 = vmatpush2.msra.mxu0 %v840
        %1246 = vmatprep.subr.mxu0 0.0
        %1247 = vmatpush2.msra.mxu0 %v839
        %1248 = vmatprep.subr.mxu0 0.0
        %1249 = vmatpush2.msra.mxu0 %v838
        %1250 = vmatprep.subr.mxu0 0.0
        %1251 = vmatpush2.msra.mxu0 %v837
        %1252 = vmatprep.subr.mxu0 0.0
        %1253 = vmatpush2.msra.mxu0 %v836
        %1254 = vmatprep.subr.mxu0 0.0
        %1255 = vmatpush2.msra.mxu0 %v835
        %1256 = vmatprep.subr.mxu0 0.0
        %1257 = vmatpush2.msra.mxu0 %v834
        %1258 = vmatprep.subr.mxu0 0.0
        %1259 = vmatpush2.msra.mxu0 %v833
        %1260 = vmatprep.mubr.f32.mxu0 %v914
        %1261 = vmatmul.mubr.f32.gmra.mxu0 %v679
        %v1262 = vpop.f32.mrf.mxu0
        %v1263 = vadd.f32 0.0, %v1262
        %v1264 = vpop.f32.mrf.mxu0
        %1265 = vdwg.mxu0
        %1266 = vmatprep.subr.mxu0 0.0
        %1267 = vmatpush1.msra.mxu0 %v864
        %1268 = vmatprep.subr.mxu0 0.0
        %1269 = vmatpush1.msra.mxu0 %v863
        %1270 = vmatprep.subr.mxu0 0.0
        %1271 = vmatpush1.msra.mxu0 %v862
        %1272 = vmatprep.subr.mxu0 0.0
        %1273 = vmatpush1.msra.mxu0 %v861
        %1274 = vmatprep.subr.mxu0 0.0
        %1275 = vmatpush1.msra.mxu0 %v860
        %1276 = vmatprep.subr.mxu0 0.0
        %1277 = vmatpush1.msra.mxu0 %v859
        %1278 = vmatprep.subr.mxu0 0.0
        %1279 = vmatpush1.msra.mxu0 %v858
        %1280 = vmatprep.subr.mxu0 0.0
        %1281 = vmatpush1.msra.mxu0 %v857
        %1282 = vmatprep.subr.mxu0 0.0
        %1283 = vmatpush1.msra.mxu0 %v856
        %1284 = vmatprep.subr.mxu0 0.0
        %1285 = vmatpush1.msra.mxu0 %v855
        %1286 = vmatprep.subr.mxu0 0.0
        %1287 = vmatpush1.msra.mxu0 %v854
        %1288 = vmatprep.subr.mxu0 0.0
        %1289 = vmatpush1.msra.mxu0 %v853
        %1290 = vmatprep.subr.mxu0 0.0
        %1291 = vmatpush1.msra.mxu0 %v852
        %1292 = vmatprep.subr.mxu0 0.0
        %1293 = vmatpush1.msra.mxu0 %v851
        %1294 = vmatprep.subr.mxu0 0.0
        %1295 = vmatpush1.msra.mxu0 %v850
        %1296 = vmatprep.subr.mxu0 0.0
        %1297 = vmatpush1.msra.mxu0 %v849
        %1298 = vmatprep.subr.mxu0 0.0
        %1299 = vmatpush2.msra.mxu0 %v880
        %1300 = vmatprep.subr.mxu0 0.0
        %1301 = vmatpush2.msra.mxu0 %v879
        %1302 = vmatprep.subr.mxu0 0.0
        %1303 = vmatpush2.msra.mxu0 %v878
        %1304 = vmatprep.subr.mxu0 0.0
        %1305 = vmatpush2.msra.mxu0 %v877
        %1306 = vmatprep.subr.mxu0 0.0
        %1307 = vmatpush2.msra.mxu0 %v876
        %1308 = vmatprep.subr.mxu0 0.0
        %1309 = vmatpush2.msra.mxu0 %v875
        %1310 = vmatprep.subr.mxu0 0.0
        %1311 = vmatpush2.msra.mxu0 %v874
        %1312 = vmatprep.subr.mxu0 0.0
        %1313 = vmatpush2.msra.mxu0 %v873
        %1314 = vmatprep.subr.mxu0 0.0
        %1315 = vmatpush2.msra.mxu0 %v872
        %1316 = vmatprep.subr.mxu0 0.0
        %1317 = vmatpush2.msra.mxu0 %v871
        %1318 = vmatprep.subr.mxu0 0.0
        %1319 = vmatpush2.msra.mxu0 %v870
        %1320 = vmatprep.subr.mxu0 0.0
        %1321 = vmatpush2.msra.mxu0 %v869
        %1322 = vmatprep.subr.mxu0 0.0
        %1323 = vmatpush2.msra.mxu0 %v868
        %1324 = vmatprep.subr.mxu0 0.0
        %1325 = vmatpush2.msra.mxu0 %v867
        %1326 = vmatprep.subr.mxu0 0.0
        %1327 = vmatpush2.msra.mxu0 %v866
        %1328 = vmatprep.subr.mxu0 0.0
        %1329 = vmatpush2.msra.mxu0 %v865
        %1330 = vmatprep.mubr.f32.mxu0 %v914
        %1331 = vmatmul.mubr.f32.gmra.mxu0 %v679
        %v1332 = vpop.f32.mrf.mxu0
        %v1333 = vadd.f32 0.0, %v1332
        %v1334 = vpop.f32.mrf.mxu0
        %1335 = vdwg.mxu0
        %1336 = vmatprep.subr.mxu0 0.0
        %1337 = vmatpush1.msra.mxu0 %v896
        %1338 = vmatprep.subr.mxu0 0.0
        %1339 = vmatpush1.msra.mxu0 %v895
        %1340 = vmatprep.subr.mxu0 0.0
        %1341 = vmatpush1.msra.mxu0 %v894
        %1342 = vmatprep.subr.mxu0 0.0
        %1343 = vmatpush1.msra.mxu0 %v893
        %1344 = vmatprep.subr.mxu0 0.0
        %1345 = vmatpush1.msra.mxu0 %v892
        %1346 = vmatprep.subr.mxu0 0.0
        %1347 = vmatpush1.msra.mxu0 %v891
        %1348 = vmatprep.subr.mxu0 0.0
        %1349 = vmatpush1.msra.mxu0 %v890
        %1350 = vmatprep.subr.mxu0 0.0
        %1351 = vmatpush1.msra.mxu0 %v889
        %1352 = vmatprep.subr.mxu0 0.0
        %1353 = vmatpush1.msra.mxu0 %v888
        %1354 = vmatprep.subr.mxu0 0.0
        %1355 = vmatpush1.msra.mxu0 %v887
        %1356 = vmatprep.subr.mxu0 0.0
        %1357 = vmatpush1.msra.mxu0 %v886
        %1358 = vmatprep.subr.mxu0 0.0
        %1359 = vmatpush1.msra.mxu0 %v885
        %1360 = vmatprep.subr.mxu0 0.0
        %1361 = vmatpush1.msra.mxu0 %v884
        %1362 = vmatprep.subr.mxu0 0.0
        %1363 = vmatpush1.msra.mxu0 %v883
        %1364 = vmatprep.subr.mxu0 0.0
        %1365 = vmatpush1.msra.mxu0 %v882
        %1366 = vmatprep.subr.mxu0 0.0
        %1367 = vmatpush1.msra.mxu0 %v881
        %1368 = vmatprep.subr.mxu0 0.0
        %1369 = vmatpush2.msra.mxu0 %v912
        %1370 = vmatprep.subr.mxu0 0.0
        %1371 = vmatpush2.msra.mxu0 %v911
        %1372 = vmatprep.subr.mxu0 0.0
        %1373 = vmatpush2.msra.mxu0 %v910
        %1374 = vmatprep.subr.mxu0 0.0
        %1375 = vmatpush2.msra.mxu0 %v909
        %1376 = vmatprep.subr.mxu0 0.0
        %1377 = vmatpush2.msra.mxu0 %v908
        %1378 = vmatprep.subr.mxu0 0.0
        %1379 = vmatpush2.msra.mxu0 %v907
        %1380 = vmatprep.subr.mxu0 0.0
        %1381 = vmatpush2.msra.mxu0 %v906
        %1382 = vmatprep.subr.mxu0 0.0
        %1383 = vmatpush2.msra.mxu0 %v905
        %1384 = vmatprep.subr.mxu0 0.0
        %1385 = vmatpush2.msra.mxu0 %v904
        %1386 = vmatprep.subr.mxu0 0.0
        %1387 = vmatpush2.msra.mxu0 %v903
        %1388 = vmatprep.subr.mxu0 0.0
        %1389 = vmatpush2.msra.mxu0 %v902
        %1390 = vmatprep.subr.mxu0 0.0
        %1391 = vmatpush2.msra.mxu0 %v901
        %1392 = vmatprep.subr.mxu0 0.0
        %1393 = vmatpush2.msra.mxu0 %v900
        %1394 = vmatprep.subr.mxu0 0.0
        %1395 = vmatpush2.msra.mxu0 %v899
        %1396 = vmatprep.subr.mxu0 0.0
        %1397 = vmatpush2.msra.mxu0 %v898
        %1398 = vmatprep.subr.mxu0 0.0
        %1399 = vmatpush2.msra.mxu0 %v897
        %1400 = vmatprep.mubr.f32.mxu0 %v914
        %1401 = vmatmul.mubr.f32.gmra.mxu0 %v679
        %v1402 = vpop.f32.mrf.mxu0
        %v1403 = vadd.f32 0.0, %v1402
        %v1404 = vpop.f32.mrf.mxu0
        %1405 = vdwg.mxu0
        %v1406 = vld [vmem:[%s624] sm:$0xff]
        %v1407 = vld [vmem:[%s624 + $0x8] sm:$0xff]
        %v1408 = vld [vmem:[%s624 + $0x10] sm:$0xff]
        %v1409 = vld [vmem:[%s624 + $0x18] sm:$0xff]
        %v1410 = vld [vmem:[%s624 + $0x20] sm:$0xff]
        %v1411 = vld [vmem:[%s624 + $0x28] sm:$0xff]
        %v1412 = vld [vmem:[%s624 + $0x30] sm:$0xff]
        %v1413 = vld [vmem:[%s624 + $0x38] sm:$0xff]
        %v1414 = vld [vmem:[%s624 + $0x40] sm:$0xff]
        %v1415 = vld [vmem:[%s624 + $0x48] sm:$0xff]
        %v1416 = vld [vmem:[%s624 + $0x50] sm:$0xff]
        %v1417 = vld [vmem:[%s624 + $0x58] sm:$0xff]
        %v1418 = vld [vmem:[%s624 + $0x60] sm:$0xff]
        %v1419 = vld [vmem:[%s624 + $0x68] sm:$0xff]
        %v1420 = vld [vmem:[%s624 + $0x70] sm:$0xff]
        %v1421 = vld [vmem:[%s624 + $0x78] sm:$0xff]
        %v1422 = vld [vmem:[%s624 + $0x80] sm:$0xff]
        %v1423 = vld [vmem:[%s624 + $0x88] sm:$0xff]
        %v1424 = vld [vmem:[%s624 + $0x90] sm:$0xff]
        %v1425 = vld [vmem:[%s624 + $0x98] sm:$0xff]
        %v1426 = vld [vmem:[%s624 + $0xa0] sm:$0xff]
        %v1427 = vld [vmem:[%s624 + $0xa8] sm:$0xff]
        %v1428 = vld [vmem:[%s624 + $0xb0] sm:$0xff]
        %v1429 = vld [vmem:[%s624 + $0xb8] sm:$0xff]
        %v1430 = vld [vmem:[%s624 + $0xc0] sm:$0xff]
        %v1431 = vld [vmem:[%s624 + $0xc8] sm:$0xff]
        %v1432 = vld [vmem:[%s624 + $0xd0] sm:$0xff]
        %v1433 = vld [vmem:[%s624 + $0xd8] sm:$0xff]
        %v1434 = vld [vmem:[%s624 + $0xe0] sm:$0xff]
        %v1435 = vld [vmem:[%s624 + $0xe8] sm:$0xff]
        %v1436 = vld [vmem:[%s624 + $0xf0] sm:$0xff]
        %v1437 = vld [vmem:[%s624 + $0xf8] sm:$0xff]
        %v1438 = vld [vmem:[%s624 + $0x100] sm:$0xff]
        %v1439 = vld [vmem:[%s624 + $0x108] sm:$0xff]
        %v1440 = vld [vmem:[%s624 + $0x110] sm:$0xff]
        %v1441 = vld [vmem:[%s624 + $0x118] sm:$0xff]
        %v1442 = vld [vmem:[%s624 + $0x120] sm:$0xff]
        %v1443 = vld [vmem:[%s624 + $0x128] sm:$0xff]
        %v1444 = vld [vmem:[%s624 + $0x130] sm:$0xff]
        %v1445 = vld [vmem:[%s624 + $0x138] sm:$0xff]
        %v1446 = vld [vmem:[%s624 + $0x140] sm:$0xff]
        %v1447 = vld [vmem:[%s624 + $0x148] sm:$0xff]
        %v1448 = vld [vmem:[%s624 + $0x150] sm:$0xff]
        %v1449 = vld [vmem:[%s624 + $0x158] sm:$0xff]
        %v1450 = vld [vmem:[%s624 + $0x160] sm:$0xff]
        %v1451 = vld [vmem:[%s624 + $0x168] sm:$0xff]
        %v1452 = vld [vmem:[%s624 + $0x170] sm:$0xff]
        %v1453 = vld [vmem:[%s624 + $0x178] sm:$0xff]
        %v1454 = vld [vmem:[%s624 + $0x180] sm:$0xff]
        %v1455 = vld [vmem:[%s624 + $0x188] sm:$0xff]
        %v1456 = vld [vmem:[%s624 + $0x190] sm:$0xff]
        %v1457 = vld [vmem:[%s624 + $0x198] sm:$0xff]
        %v1458 = vld [vmem:[%s624 + $0x1a0] sm:$0xff]
        %v1459 = vld [vmem:[%s624 + $0x1a8] sm:$0xff]
        %v1460 = vld [vmem:[%s624 + $0x1b0] sm:$0xff]
        %v1461 = vld [vmem:[%s624 + $0x1b8] sm:$0xff]
        %v1462 = vld [vmem:[%s624 + $0x1c0] sm:$0xff]
        %v1463 = vld [vmem:[%s624 + $0x1c8] sm:$0xff]
        %v1464 = vld [vmem:[%s624 + $0x1d0] sm:$0xff]
        %v1465 = vld [vmem:[%s624 + $0x1d8] sm:$0xff]
        %v1466 = vld [vmem:[%s624 + $0x1e0] sm:$0xff]
        %v1467 = vld [vmem:[%s624 + $0x1e8] sm:$0xff]
        %v1468 = vld [vmem:[%s624 + $0x1f0] sm:$0xff]
        %v1469 = vld [vmem:[%s624 + $0x1f8] sm:$0xff]
        %v1470 = vld [vmem:[%s624 + $0x200] sm:$0xff]
        %v1471 = vld [vmem:[%s624 + $0x208] sm:$0xff]
        %v1472 = vld [vmem:[%s624 + $0x210] sm:$0xff]
        %v1473 = vld [vmem:[%s624 + $0x218] sm:$0xff]
        %v1474 = vld [vmem:[%s624 + $0x220] sm:$0xff]
        %v1475 = vld [vmem:[%s624 + $0x228] sm:$0xff]
        %v1476 = vld [vmem:[%s624 + $0x230] sm:$0xff]
        %v1477 = vld [vmem:[%s624 + $0x238] sm:$0xff]
        %v1478 = vld [vmem:[%s624 + $0x240] sm:$0xff]
        %v1479 = vld [vmem:[%s624 + $0x248] sm:$0xff]
        %v1480 = vld [vmem:[%s624 + $0x250] sm:$0xff]
        %v1481 = vld [vmem:[%s624 + $0x258] sm:$0xff]
        %v1482 = vld [vmem:[%s624 + $0x260] sm:$0xff]
        %v1483 = vld [vmem:[%s624 + $0x268] sm:$0xff]
        %v1484 = vld [vmem:[%s624 + $0x270] sm:$0xff]
        %v1485 = vld [vmem:[%s624 + $0x278] sm:$0xff]
        %v1486 = vld [vmem:[%s624 + $0x280] sm:$0xff]
        %v1487 = vld [vmem:[%s624 + $0x288] sm:$0xff]
        %v1488 = vld [vmem:[%s624 + $0x290] sm:$0xff]
        %v1489 = vld [vmem:[%s624 + $0x298] sm:$0xff]
        %v1490 = vld [vmem:[%s624 + $0x2a0] sm:$0xff]
        %v1491 = vld [vmem:[%s624 + $0x2a8] sm:$0xff]
        %v1492 = vld [vmem:[%s624 + $0x2b0] sm:$0xff]
        %v1493 = vld [vmem:[%s624 + $0x2b8] sm:$0xff]
        %v1494 = vld [vmem:[%s624 + $0x2c0] sm:$0xff]
        %v1495 = vld [vmem:[%s624 + $0x2c8] sm:$0xff]
        %v1496 = vld [vmem:[%s624 + $0x2d0] sm:$0xff]
        %v1497 = vld [vmem:[%s624 + $0x2d8] sm:$0xff]
        %v1498 = vld [vmem:[%s624 + $0x2e0] sm:$0xff]
        %v1499 = vld [vmem:[%s624 + $0x2e8] sm:$0xff]
        %v1500 = vld [vmem:[%s624 + $0x2f0] sm:$0xff]
        %v1501 = vld [vmem:[%s624 + $0x2f8] sm:$0xff]
        %v1502 = vld [vmem:[%s624 + $0x300] sm:$0xff]
        %v1503 = vld [vmem:[%s624 + $0x308] sm:$0xff]
        %v1504 = vld [vmem:[%s624 + $0x310] sm:$0xff]
        %v1505 = vld [vmem:[%s624 + $0x318] sm:$0xff]
        %v1506 = vld [vmem:[%s624 + $0x320] sm:$0xff]
        %v1507 = vld [vmem:[%s624 + $0x328] sm:$0xff]
        %v1508 = vld [vmem:[%s624 + $0x330] sm:$0xff]
        %v1509 = vld [vmem:[%s624 + $0x338] sm:$0xff]
        %v1510 = vld [vmem:[%s624 + $0x340] sm:$0xff]
        %v1511 = vld [vmem:[%s624 + $0x348] sm:$0xff]
        %v1512 = vld [vmem:[%s624 + $0x350] sm:$0xff]
        %v1513 = vld [vmem:[%s624 + $0x358] sm:$0xff]
        %v1514 = vld [vmem:[%s624 + $0x360] sm:$0xff]
        %v1515 = vld [vmem:[%s624 + $0x368] sm:$0xff]
        %v1516 = vld [vmem:[%s624 + $0x370] sm:$0xff]
        %v1517 = vld [vmem:[%s624 + $0x378] sm:$0xff]
        %v1518 = vld [vmem:[%s624 + $0x380] sm:$0xff]
        %v1519 = vld [vmem:[%s624 + $0x388] sm:$0xff]
        %v1520 = vld [vmem:[%s624 + $0x390] sm:$0xff]
        %v1521 = vld [vmem:[%s624 + $0x398] sm:$0xff]
        %v1522 = vld [vmem:[%s624 + $0x3a0] sm:$0xff]
        %v1523 = vld [vmem:[%s624 + $0x3a8] sm:$0xff]
        %v1524 = vld [vmem:[%s624 + $0x3b0] sm:$0xff]
        %v1525 = vld [vmem:[%s624 + $0x3b8] sm:$0xff]
        %v1526 = vld [vmem:[%s624 + $0x3c0] sm:$0xff]
        %v1527 = vld [vmem:[%s624 + $0x3c8] sm:$0xff]
        %v1528 = vld [vmem:[%s624 + $0x3d0] sm:$0xff]
        %v1529 = vld [vmem:[%s624 + $0x3d8] sm:$0xff]
        %v1530 = vld [vmem:[%s624 + $0x3e0] sm:$0xff]
        %v1531 = vld [vmem:[%s624 + $0x3e8] sm:$0xff]
        %v1532 = vld [vmem:[%s624 + $0x3f0] sm:$0xff]
        %v1533 = vld [vmem:[%s624 + $0x3f8] sm:$0xff]
        %v1534 = vld [vmem:[%s624 + $0x400] sm:$0xff]
        %v1535 = vld [vmem:[%s624 + $0x408] sm:$0xff]
        %v1536 = vld [vmem:[%s624 + $0x410] sm:$0xff]
        %v1537 = vld [vmem:[%s624 + $0x418] sm:$0xff]
        %v1538 = vld [vmem:[%s624 + $0x420] sm:$0xff]
        %v1539 = vld [vmem:[%s624 + $0x428] sm:$0xff]
        %v1540 = vld [vmem:[%s624 + $0x430] sm:$0xff]
        %v1541 = vld [vmem:[%s624 + $0x438] sm:$0xff]
        %v1542 = vld [vmem:[%s624 + $0x440] sm:$0xff]
        %v1543 = vld [vmem:[%s624 + $0x448] sm:$0xff]
        %v1544 = vld [vmem:[%s624 + $0x450] sm:$0xff]
        %v1545 = vld [vmem:[%s624 + $0x458] sm:$0xff]
        %v1546 = vld [vmem:[%s624 + $0x460] sm:$0xff]
        %v1547 = vld [vmem:[%s624 + $0x468] sm:$0xff]
        %v1548 = vld [vmem:[%s624 + $0x470] sm:$0xff]
        %v1549 = vld [vmem:[%s624 + $0x478] sm:$0xff]
        %v1550 = vld [vmem:[%s624 + $0x480] sm:$0xff]
        %v1551 = vld [vmem:[%s624 + $0x488] sm:$0xff]
        %v1552 = vld [vmem:[%s624 + $0x490] sm:$0xff]
        %v1553 = vld [vmem:[%s624 + $0x498] sm:$0xff]
        %v1554 = vld [vmem:[%s624 + $0x4a0] sm:$0xff]
        %v1555 = vld [vmem:[%s624 + $0x4a8] sm:$0xff]
        %v1556 = vld [vmem:[%s624 + $0x4b0] sm:$0xff]
        %v1557 = vld [vmem:[%s624 + $0x4b8] sm:$0xff]
        %v1558 = vld [vmem:[%s624 + $0x4c0] sm:$0xff]
        %v1559 = vld [vmem:[%s624 + $0x4c8] sm:$0xff]
        %v1560 = vld [vmem:[%s624 + $0x4d0] sm:$0xff]
        %v1561 = vld [vmem:[%s624 + $0x4d8] sm:$0xff]
        %v1562 = vld [vmem:[%s624 + $0x4e0] sm:$0xff]
        %v1563 = vld [vmem:[%s624 + $0x4e8] sm:$0xff]
        %v1564 = vld [vmem:[%s624 + $0x4f0] sm:$0xff]
        %v1565 = vld [vmem:[%s624 + $0x4f8] sm:$0xff]
        %v1566 = vld [vmem:[%s624 + $0x500] sm:$0xff]
        %v1567 = vld [vmem:[%s624 + $0x508] sm:$0xff]
        %v1568 = vld [vmem:[%s624 + $0x510] sm:$0xff]
        %v1569 = vld [vmem:[%s624 + $0x518] sm:$0xff]
        %v1570 = vld [vmem:[%s624 + $0x520] sm:$0xff]
        %v1571 = vld [vmem:[%s624 + $0x528] sm:$0xff]
        %v1572 = vld [vmem:[%s624 + $0x530] sm:$0xff]
        %v1573 = vld [vmem:[%s624 + $0x538] sm:$0xff]
        %v1574 = vld [vmem:[%s624 + $0x540] sm:$0xff]
        %v1575 = vld [vmem:[%s624 + $0x548] sm:$0xff]
        %v1576 = vld [vmem:[%s624 + $0x550] sm:$0xff]
        %v1577 = vld [vmem:[%s624 + $0x558] sm:$0xff]
        %v1578 = vld [vmem:[%s624 + $0x560] sm:$0xff]
        %v1579 = vld [vmem:[%s624 + $0x568] sm:$0xff]
        %v1580 = vld [vmem:[%s624 + $0x570] sm:$0xff]
        %v1581 = vld [vmem:[%s624 + $0x578] sm:$0xff]
        %v1582 = vld [vmem:[%s624 + $0x580] sm:$0xff]
        %v1583 = vld [vmem:[%s624 + $0x588] sm:$0xff]
        %v1584 = vld [vmem:[%s624 + $0x590] sm:$0xff]
        %v1585 = vld [vmem:[%s624 + $0x598] sm:$0xff]
        %v1586 = vld [vmem:[%s624 + $0x5a0] sm:$0xff]
        %v1587 = vld [vmem:[%s624 + $0x5a8] sm:$0xff]
        %v1588 = vld [vmem:[%s624 + $0x5b0] sm:$0xff]
        %v1589 = vld [vmem:[%s624 + $0x5b8] sm:$0xff]
        %v1590 = vld [vmem:[%s624 + $0x5c0] sm:$0xff]
        %v1591 = vld [vmem:[%s624 + $0x5c8] sm:$0xff]
        %v1592 = vld [vmem:[%s624 + $0x5d0] sm:$0xff]
        %v1593 = vld [vmem:[%s624 + $0x5d8] sm:$0xff]
        %v1594 = vld [vmem:[%s624 + $0x5e0] sm:$0xff]
        %v1595 = vld [vmem:[%s624 + $0x5e8] sm:$0xff]
        %v1596 = vld [vmem:[%s624 + $0x5f0] sm:$0xff]
        %v1597 = vld [vmem:[%s624 + $0x5f8] sm:$0xff]
        %v1598 = vld [vmem:[%s624 + $0x600] sm:$0xff]
        %v1599 = vld [vmem:[%s624 + $0x608] sm:$0xff]
        %v1600 = vld [vmem:[%s624 + $0x610] sm:$0xff]
        %v1601 = vld [vmem:[%s624 + $0x618] sm:$0xff]
        %v1602 = vld [vmem:[%s624 + $0x620] sm:$0xff]
        %v1603 = vld [vmem:[%s624 + $0x628] sm:$0xff]
        %v1604 = vld [vmem:[%s624 + $0x630] sm:$0xff]
        %v1605 = vld [vmem:[%s624 + $0x638] sm:$0xff]
        %v1606 = vld [vmem:[%s624 + $0x640] sm:$0xff]
        %v1607 = vld [vmem:[%s624 + $0x648] sm:$0xff]
        %v1608 = vld [vmem:[%s624 + $0x650] sm:$0xff]
        %v1609 = vld [vmem:[%s624 + $0x658] sm:$0xff]
        %v1610 = vld [vmem:[%s624 + $0x660] sm:$0xff]
        %v1611 = vld [vmem:[%s624 + $0x668] sm:$0xff]
        %v1612 = vld [vmem:[%s624 + $0x670] sm:$0xff]
        %v1613 = vld [vmem:[%s624 + $0x678] sm:$0xff]
        %v1614 = vld [vmem:[%s624 + $0x680] sm:$0xff]
        %v1615 = vld [vmem:[%s624 + $0x688] sm:$0xff]
        %v1616 = vld [vmem:[%s624 + $0x690] sm:$0xff]
        %v1617 = vld [vmem:[%s624 + $0x698] sm:$0xff]
        %v1618 = vld [vmem:[%s624 + $0x6a0] sm:$0xff]
        %v1619 = vld [vmem:[%s624 + $0x6a8] sm:$0xff]
        %v1620 = vld [vmem:[%s624 + $0x6b0] sm:$0xff]
        %v1621 = vld [vmem:[%s624 + $0x6b8] sm:$0xff]
        %v1622 = vld [vmem:[%s624 + $0x6c0] sm:$0xff]
        %v1623 = vld [vmem:[%s624 + $0x6c8] sm:$0xff]
        %v1624 = vld [vmem:[%s624 + $0x6d0] sm:$0xff]
        %v1625 = vld [vmem:[%s624 + $0x6d8] sm:$0xff]
        %v1626 = vld [vmem:[%s624 + $0x6e0] sm:$0xff]
        %v1627 = vld [vmem:[%s624 + $0x6e8] sm:$0xff]
        %v1628 = vld [vmem:[%s624 + $0x6f0] sm:$0xff]
        %v1629 = vld [vmem:[%s624 + $0x6f8] sm:$0xff]
        %1630 = vmatprep.subr.mxu0 0.0
        %1631 = vmatpush1.msra.mxu0 %v1421
        %1632 = vmatprep.subr.mxu0 0.0
        %1633 = vmatpush1.msra.mxu0 %v1420
        %1634 = vmatprep.subr.mxu0 0.0
        %1635 = vmatpush1.msra.mxu0 %v1419
        %1636 = vmatprep.subr.mxu0 0.0
        %1637 = vmatpush1.msra.mxu0 %v1418
        %1638 = vmatprep.subr.mxu0 0.0
        %1639 = vmatpush1.msra.mxu0 %v1417
        %1640 = vmatprep.subr.mxu0 0.0
        %1641 = vmatpush1.msra.mxu0 %v1416
        %1642 = vmatprep.subr.mxu0 0.0
        %1643 = vmatpush1.msra.mxu0 %v1415
        %1644 = vmatprep.subr.mxu0 0.0
        %1645 = vmatpush1.msra.mxu0 %v1414
        %1646 = vmatprep.subr.mxu0 0.0
        %1647 = vmatpush1.msra.mxu0 %v1413
        %1648 = vmatprep.subr.mxu0 0.0
        %1649 = vmatpush1.msra.mxu0 %v1412
        %1650 = vmatprep.subr.mxu0 0.0
        %1651 = vmatpush1.msra.mxu0 %v1411
        %1652 = vmatprep.subr.mxu0 0.0
        %1653 = vmatpush1.msra.mxu0 %v1410
        %1654 = vmatprep.subr.mxu0 0.0
        %1655 = vmatpush1.msra.mxu0 %v1409
        %1656 = vmatprep.subr.mxu0 0.0
        %1657 = vmatpush1.msra.mxu0 %v1408
        %1658 = vmatprep.subr.mxu0 0.0
        %1659 = vmatpush1.msra.mxu0 %v1407
        %1660 = vmatprep.subr.mxu0 0.0
        %1661 = vmatpush1.msra.mxu0 %v1406
        %1662 = vmatprep.subr.mxu0 0.0
        %1663 = vmatpush2.msra.mxu0 %v1437
        %1664 = vmatprep.subr.mxu0 0.0
        %1665 = vmatpush2.msra.mxu0 %v1436
        %1666 = vmatprep.subr.mxu0 0.0
        %1667 = vmatpush2.msra.mxu0 %v1435
        %1668 = vmatprep.subr.mxu0 0.0
        %1669 = vmatpush2.msra.mxu0 %v1434
        %1670 = vmatprep.subr.mxu0 0.0
        %1671 = vmatpush2.msra.mxu0 %v1433
        %1672 = vmatprep.subr.mxu0 0.0
        %1673 = vmatpush2.msra.mxu0 %v1432
        %1674 = vmatprep.subr.mxu0 0.0
        %1675 = vmatpush2.msra.mxu0 %v1431
        %1676 = vmatprep.subr.mxu0 0.0
        %1677 = vmatpush2.msra.mxu0 %v1430
        %1678 = vmatprep.subr.mxu0 0.0
        %1679 = vmatpush2.msra.mxu0 %v1429
        %1680 = vmatprep.subr.mxu0 0.0
        %1681 = vmatpush2.msra.mxu0 %v1428
        %1682 = vmatprep.subr.mxu0 0.0
        %1683 = vmatpush2.msra.mxu0 %v1427
        %1684 = vmatprep.subr.mxu0 0.0
        %1685 = vmatpush2.msra.mxu0 %v1426
        %1686 = vmatprep.subr.mxu0 0.0
        %1687 = vmatpush2.msra.mxu0 %v1425
        %1688 = vmatprep.subr.mxu0 0.0
        %1689 = vmatpush2.msra.mxu0 %v1424
        %1690 = vmatprep.subr.mxu0 0.0
        %1691 = vmatpush2.msra.mxu0 %v1423
        %1692 = vmatprep.subr.mxu0 0.0
        %1693 = vmatpush2.msra.mxu0 %v1422
        %1694 = vmatprep.mubr.f32.mxu0 %v914
        %1695 = vmatmul.mubr.f32.gmra.mxu0 %v679
        %v1696 = vpop.f32.mrf.mxu0
        %v1697 = vadd.f32 0.0, %v1696
        %v1698 = vpop.f32.mrf.mxu0
        %1699 = vdwg.mxu0
        %1700 = vmatprep.subr.mxu0 0.0
        %1701 = vmatpush1.msra.mxu0 %v1453
        %1702 = vmatprep.subr.mxu0 0.0
        %1703 = vmatpush1.msra.mxu0 %v1452
        %1704 = vmatprep.subr.mxu0 0.0
        %1705 = vmatpush1.msra.mxu0 %v1451
        %1706 = vmatprep.subr.mxu0 0.0
        %1707 = vmatpush1.msra.mxu0 %v1450
        %1708 = vmatprep.subr.mxu0 0.0
        %1709 = vmatpush1.msra.mxu0 %v1449
        %1710 = vmatprep.subr.mxu0 0.0
        %1711 = vmatpush1.msra.mxu0 %v1448
        %1712 = vmatprep.subr.mxu0 0.0
        %1713 = vmatpush1.msra.mxu0 %v1447
        %1714 = vmatprep.subr.mxu0 0.0
        %1715 = vmatpush1.msra.mxu0 %v1446
        %1716 = vmatprep.subr.mxu0 0.0
        %1717 = vmatpush1.msra.mxu0 %v1445
        %1718 = vmatprep.subr.mxu0 0.0
        %1719 = vmatpush1.msra.mxu0 %v1444
        %1720 = vmatprep.subr.mxu0 0.0
        %1721 = vmatpush1.msra.mxu0 %v1443
        %1722 = vmatprep.subr.mxu0 0.0
        %1723 = vmatpush1.msra.mxu0 %v1442
        %1724 = vmatprep.subr.mxu0 0.0
        %1725 = vmatpush1.msra.mxu0 %v1441
        %1726 = vmatprep.subr.mxu0 0.0
        %1727 = vmatpush1.msra.mxu0 %v1440
        %1728 = vmatprep.subr.mxu0 0.0
        %1729 = vmatpush1.msra.mxu0 %v1439
        %1730 = vmatprep.subr.mxu0 0.0
        %1731 = vmatpush1.msra.mxu0 %v1438
        %1732 = vmatprep.subr.mxu0 0.0
        %1733 = vmatpush2.msra.mxu0 %v1469
        %1734 = vmatprep.subr.mxu0 0.0
        %1735 = vmatpush2.msra.mxu0 %v1468
        %1736 = vmatprep.subr.mxu0 0.0
        %1737 = vmatpush2.msra.mxu0 %v1467
        %1738 = vmatprep.subr.mxu0 0.0
        %1739 = vmatpush2.msra.mxu0 %v1466
        %1740 = vmatprep.subr.mxu0 0.0
        %1741 = vmatpush2.msra.mxu0 %v1465
        %1742 = vmatprep.subr.mxu0 0.0
        %1743 = vmatpush2.msra.mxu0 %v1464
        %1744 = vmatprep.subr.mxu0 0.0
        %1745 = vmatpush2.msra.mxu0 %v1463
        %1746 = vmatprep.subr.mxu0 0.0
        %1747 = vmatpush2.msra.mxu0 %v1462
        %1748 = vmatprep.subr.mxu0 0.0
        %1749 = vmatpush2.msra.mxu0 %v1461
        %1750 = vmatprep.subr.mxu0 0.0
        %1751 = vmatpush2.msra.mxu0 %v1460
        %1752 = vmatprep.subr.mxu0 0.0
        %1753 = vmatpush2.msra.mxu0 %v1459
        %1754 = vmatprep.subr.mxu0 0.0
        %1755 = vmatpush2.msra.mxu0 %v1458
        %1756 = vmatprep.subr.mxu0 0.0
        %1757 = vmatpush2.msra.mxu0 %v1457
        %1758 = vmatprep.subr.mxu0 0.0
        %1759 = vmatpush2.msra.mxu0 %v1456
        %1760 = vmatprep.subr.mxu0 0.0
        %1761 = vmatpush2.msra.mxu0 %v1455
        %1762 = vmatprep.subr.mxu0 0.0
        %1763 = vmatpush2.msra.mxu0 %v1454
        %1764 = vmatprep.mubr.f32.mxu0 %v914
        %1765 = vmatmul.mubr.f32.gmra.mxu0 %v679
        %v1766 = vpop.f32.mrf.mxu0
        %v1767 = vadd.f32 0.0, %v1766
        %v1768 = vpop.f32.mrf.mxu0
        %1769 = vdwg.mxu0
        %1770 = vmatprep.subr.mxu0 0.0
        %1771 = vmatpush1.msra.mxu0 %v1485
        %1772 = vmatprep.subr.mxu0 0.0
        %1773 = vmatpush1.msra.mxu0 %v1484
        %1774 = vmatprep.subr.mxu0 0.0
        %1775 = vmatpush1.msra.mxu0 %v1483
        %1776 = vmatprep.subr.mxu0 0.0
        %1777 = vmatpush1.msra.mxu0 %v1482
        %1778 = vmatprep.subr.mxu0 0.0
        %1779 = vmatpush1.msra.mxu0 %v1481
        %1780 = vmatprep.subr.mxu0 0.0
        %1781 = vmatpush1.msra.mxu0 %v1480
        %1782 = vmatprep.subr.mxu0 0.0
        %1783 = vmatpush1.msra.mxu0 %v1479
        %1784 = vmatprep.subr.mxu0 0.0
        %1785 = vmatpush1.msra.mxu0 %v1478
        %1786 = vmatprep.subr.mxu0 0.0
        %1787 = vmatpush1.msra.mxu0 %v1477
        %1788 = vmatprep.subr.mxu0 0.0
        %1789 = vmatpush1.msra.mxu0 %v1476
        %1790 = vmatprep.subr.mxu0 0.0
        %1791 = vmatpush1.msra.mxu0 %v1475
        %1792 = vmatprep.subr.mxu0 0.0
        %1793 = vmatpush1.msra.mxu0 %v1474
        %1794 = vmatprep.subr.mxu0 0.0
        %1795 = vmatpush1.msra.mxu0 %v1473
        %1796 = vmatprep.subr.mxu0 0.0
        %1797 = vmatpush1.msra.mxu0 %v1472
        %1798 = vmatprep.subr.mxu0 0.0
        %1799 = vmatpush1.msra.mxu0 %v1471
        %1800 = vmatprep.subr.mxu0 0.0
        %1801 = vmatpush1.msra.mxu0 %v1470
        %1802 = vmatprep.subr.mxu0 0.0
        %1803 = vmatpush2.msra.mxu0 %v1501
        %1804 = vmatprep.subr.mxu0 0.0
        %1805 = vmatpush2.msra.mxu0 %v1500
        %1806 = vmatprep.subr.mxu0 0.0
        %1807 = vmatpush2.msra.mxu0 %v1499
        %1808 = vmatprep.subr.mxu0 0.0
        %1809 = vmatpush2.msra.mxu0 %v1498
        %1810 = vmatprep.subr.mxu0 0.0
        %1811 = vmatpush2.msra.mxu0 %v1497
        %1812 = vmatprep.subr.mxu0 0.0
        %1813 = vmatpush2.msra.mxu0 %v1496
        %1814 = vmatprep.subr.mxu0 0.0
        %1815 = vmatpush2.msra.mxu0 %v1495
        %1816 = vmatprep.subr.mxu0 0.0
        %1817 = vmatpush2.msra.mxu0 %v1494
        %1818 = vmatprep.subr.mxu0 0.0
        %1819 = vmatpush2.msra.mxu0 %v1493
        %1820 = vmatprep.subr.mxu0 0.0
        %1821 = vmatpush2.msra.mxu0 %v1492
        %1822 = vmatprep.subr.mxu0 0.0
        %1823 = vmatpush2.msra.mxu0 %v1491
        %1824 = vmatprep.subr.mxu0 0.0
        %1825 = vmatpush2.msra.mxu0 %v1490
        %1826 = vmatprep.subr.mxu0 0.0
        %1827 = vmatpush2.msra.mxu0 %v1489
        %1828 = vmatprep.subr.mxu0 0.0
        %1829 = vmatpush2.msra.mxu0 %v1488
        %1830 = vmatprep.subr.mxu0 0.0
        %1831 = vmatpush2.msra.mxu0 %v1487
        %1832 = vmatprep.subr.mxu0 0.0
        %1833 = vmatpush2.msra.mxu0 %v1486
        %1834 = vmatprep.mubr.f32.mxu0 %v914
        %1835 = vmatmul.mubr.f32.gmra.mxu0 %v679
        %v1836 = vpop.f32.mrf.mxu0
        %v1837 = vadd.f32 0.0, %v1836
        %v1838 = vpop.f32.mrf.mxu0
        %1839 = vdwg.mxu0
        %1840 = vmatprep.subr.mxu0 0.0
        %1841 = vmatpush1.msra.mxu0 %v1517
        %1842 = vmatprep.subr.mxu0 0.0
        %1843 = vmatpush1.msra.mxu0 %v1516
        %1844 = vmatprep.subr.mxu0 0.0
        %1845 = vmatpush1.msra.mxu0 %v1515
        %1846 = vmatprep.subr.mxu0 0.0
        %1847 = vmatpush1.msra.mxu0 %v1514
        %1848 = vmatprep.subr.mxu0 0.0
        %1849 = vmatpush1.msra.mxu0 %v1513
        %1850 = vmatprep.subr.mxu0 0.0
        %1851 = vmatpush1.msra.mxu0 %v1512
        %1852 = vmatprep.subr.mxu0 0.0
        %1853 = vmatpush1.msra.mxu0 %v1511
        %1854 = vmatprep.subr.mxu0 0.0
        %1855 = vmatpush1.msra.mxu0 %v1510
        %1856 = vmatprep.subr.mxu0 0.0
        %1857 = vmatpush1.msra.mxu0 %v1509
        %1858 = vmatprep.subr.mxu0 0.0
        %1859 = vmatpush1.msra.mxu0 %v1508
        %1860 = vmatprep.subr.mxu0 0.0
        %1861 = vmatpush1.msra.mxu0 %v1507
        %1862 = vmatprep.subr.mxu0 0.0
        %1863 = vmatpush1.msra.mxu0 %v1506
        %1864 = vmatprep.subr.mxu0 0.0
        %1865 = vmatpush1.msra.mxu0 %v1505
        %1866 = vmatprep.subr.mxu0 0.0
        %1867 = vmatpush1.msra.mxu0 %v1504
        %1868 = vmatprep.subr.mxu0 0.0
        %1869 = vmatpush1.msra.mxu0 %v1503
        %1870 = vmatprep.subr.mxu0 0.0
        %1871 = vmatpush1.msra.mxu0 %v1502
        %1872 = vmatprep.subr.mxu0 0.0
        %1873 = vmatpush2.msra.mxu0 %v1533
        %1874 = vmatprep.subr.mxu0 0.0
        %1875 = vmatpush2.msra.mxu0 %v1532
        %1876 = vmatprep.subr.mxu0 0.0
        %1877 = vmatpush2.msra.mxu0 %v1531
        %1878 = vmatprep.subr.mxu0 0.0
        %1879 = vmatpush2.msra.mxu0 %v1530
        %1880 = vmatprep.subr.mxu0 0.0
        %1881 = vmatpush2.msra.mxu0 %v1529
        %1882 = vmatprep.subr.mxu0 0.0
        %1883 = vmatpush2.msra.mxu0 %v1528
        %1884 = vmatprep.subr.mxu0 0.0
        %1885 = vmatpush2.msra.mxu0 %v1527
        %1886 = vmatprep.subr.mxu0 0.0
        %1887 = vmatpush2.msra.mxu0 %v1526
        %1888 = vmatprep.subr.mxu0 0.0
        %1889 = vmatpush2.msra.mxu0 %v1525
        %1890 = vmatprep.subr.mxu0 0.0
        %1891 = vmatpush2.msra.mxu0 %v1524
        %1892 = vmatprep.subr.mxu0 0.0
        %1893 = vmatpush2.msra.mxu0 %v1523
        %1894 = vmatprep.subr.mxu0 0.0
        %1895 = vmatpush2.msra.mxu0 %v1522
        %1896 = vmatprep.subr.mxu0 0.0
        %1897 = vmatpush2.msra.mxu0 %v1521
        %1898 = vmatprep.subr.mxu0 0.0
        %1899 = vmatpush2.msra.mxu0 %v1520
        %1900 = vmatprep.subr.mxu0 0.0
        %1901 = vmatpush2.msra.mxu0 %v1519
        %1902 = vmatprep.subr.mxu0 0.0
        %1903 = vmatpush2.msra.mxu0 %v1518
        %1904 = vmatprep.mubr.f32.mxu0 %v914
        %1905 = vmatmul.mubr.f32.gmra.mxu0 %v679
        %v1906 = vpop.f32.mrf.mxu0
        %v1907 = vadd.f32 0.0, %v1906
        %v1908 = vpop.f32.mrf.mxu0
        %1909 = vdwg.mxu0
        %1910 = vmatprep.subr.mxu0 0.0
        %1911 = vmatpush1.msra.mxu0 %v1549
        %1912 = vmatprep.subr.mxu0 0.0
        %1913 = vmatpush1.msra.mxu0 %v1548
        %1914 = vmatprep.subr.mxu0 0.0
        %1915 = vmatpush1.msra.mxu0 %v1547
        %1916 = vmatprep.subr.mxu0 0.0
        %1917 = vmatpush1.msra.mxu0 %v1546
        %1918 = vmatprep.subr.mxu0 0.0
        %1919 = vmatpush1.msra.mxu0 %v1545
        %1920 = vmatprep.subr.mxu0 0.0
        %1921 = vmatpush1.msra.mxu0 %v1544
        %1922 = vmatprep.subr.mxu0 0.0
        %1923 = vmatpush1.msra.mxu0 %v1543
        %1924 = vmatprep.subr.mxu0 0.0
        %1925 = vmatpush1.msra.mxu0 %v1542
        %1926 = vmatprep.subr.mxu0 0.0
        %1927 = vmatpush1.msra.mxu0 %v1541
        %1928 = vmatprep.subr.mxu0 0.0
        %1929 = vmatpush1.msra.mxu0 %v1540
        %1930 = vmatprep.subr.mxu0 0.0
        %1931 = vmatpush1.msra.mxu0 %v1539
        %1932 = vmatprep.subr.mxu0 0.0
        %1933 = vmatpush1.msra.mxu0 %v1538
        %1934 = vmatprep.subr.mxu0 0.0
        %1935 = vmatpush1.msra.mxu0 %v1537
        %1936 = vmatprep.subr.mxu0 0.0
        %1937 = vmatpush1.msra.mxu0 %v1536
        %1938 = vmatprep.subr.mxu0 0.0
        %1939 = vmatpush1.msra.mxu0 %v1535
        %1940 = vmatprep.subr.mxu0 0.0
        %1941 = vmatpush1.msra.mxu0 %v1534
        %1942 = vmatprep.subr.mxu0 0.0
        %1943 = vmatpush2.msra.mxu0 %v1565
        %1944 = vmatprep.subr.mxu0 0.0
        %1945 = vmatpush2.msra.mxu0 %v1564
        %1946 = vmatprep.subr.mxu0 0.0
        %1947 = vmatpush2.msra.mxu0 %v1563
        %1948 = vmatprep.subr.mxu0 0.0
        %1949 = vmatpush2.msra.mxu0 %v1562
        %1950 = vmatprep.subr.mxu0 0.0
        %1951 = vmatpush2.msra.mxu0 %v1561
        %1952 = vmatprep.subr.mxu0 0.0
        %1953 = vmatpush2.msra.mxu0 %v1560
        %1954 = vmatprep.subr.mxu0 0.0
        %1955 = vmatpush2.msra.mxu0 %v1559
        %1956 = vmatprep.subr.mxu0 0.0
        %1957 = vmatpush2.msra.mxu0 %v1558
        %1958 = vmatprep.subr.mxu0 0.0
        %1959 = vmatpush2.msra.mxu0 %v1557
        %1960 = vmatprep.subr.mxu0 0.0
        %1961 = vmatpush2.msra.mxu0 %v1556
        %1962 = vmatprep.subr.mxu0 0.0
        %1963 = vmatpush2.msra.mxu0 %v1555
        %1964 = vmatprep.subr.mxu0 0.0
        %1965 = vmatpush2.msra.mxu0 %v1554
        %1966 = vmatprep.subr.mxu0 0.0
        %1967 = vmatpush2.msra.mxu0 %v1553
        %1968 = vmatprep.subr.mxu0 0.0
        %1969 = vmatpush2.msra.mxu0 %v1552
        %1970 = vmatprep.subr.mxu0 0.0
        %1971 = vmatpush2.msra.mxu0 %v1551
        %1972 = vmatprep.subr.mxu0 0.0
        %1973 = vmatpush2.msra.mxu0 %v1550
        %1974 = vmatprep.mubr.f32.mxu0 %v914
        %1975 = vmatmul.mubr.f32.gmra.mxu0 %v679
        %v1976 = vpop.f32.mrf.mxu0
        %v1977 = vadd.f32 0.0, %v1976
        %v1978 = vpop.f32.mrf.mxu0
        %1979 = vdwg.mxu0
        %1980 = vmatprep.subr.mxu0 0.0
        %1981 = vmatpush1.msra.mxu0 %v1581
        %1982 = vmatprep.subr.mxu0 0.0
        %1983 = vmatpush1.msra.mxu0 %v1580
        %1984 = vmatprep.subr.mxu0 0.0
        %1985 = vmatpush1.msra.mxu0 %v1579
        %1986 = vmatprep.subr.mxu0 0.0
        %1987 = vmatpush1.msra.mxu0 %v1578
        %1988 = vmatprep.subr.mxu0 0.0
        %1989 = vmatpush1.msra.mxu0 %v1577
        %1990 = vmatprep.subr.mxu0 0.0
        %1991 = vmatpush1.msra.mxu0 %v1576
        %1992 = vmatprep.subr.mxu0 0.0
        %1993 = vmatpush1.msra.mxu0 %v1575
        %1994 = vmatprep.subr.mxu0 0.0
        %1995 = vmatpush1.msra.mxu0 %v1574
        %1996 = vmatprep.subr.mxu0 0.0
        %1997 = vmatpush1.msra.mxu0 %v1573
        %1998 = vmatprep.subr.mxu0 0.0
        %1999 = vmatpush1.msra.mxu0 %v1572
        %2000 = vmatprep.subr.mxu0 0.0
        %2001 = vmatpush1.msra.mxu0 %v1571
        %2002 = vmatprep.subr.mxu0 0.0
        %2003 = vmatpush1.msra.mxu0 %v1570
        %2004 = vmatprep.subr.mxu0 0.0
        %2005 = vmatpush1.msra.mxu0 %v1569
        %2006 = vmatprep.subr.mxu0 0.0
        %2007 = vmatpush1.msra.mxu0 %v1568
        %2008 = vmatprep.subr.mxu0 0.0
        %2009 = vmatpush1.msra.mxu0 %v1567
        %2010 = vmatprep.subr.mxu0 0.0
        %2011 = vmatpush1.msra.mxu0 %v1566
        %2012 = vmatprep.subr.mxu0 0.0
        %2013 = vmatpush2.msra.mxu0 %v1597
        %2014 = vmatprep.subr.mxu0 0.0
        %2015 = vmatpush2.msra.mxu0 %v1596
        %2016 = vmatprep.subr.mxu0 0.0
        %2017 = vmatpush2.msra.mxu0 %v1595
        %2018 = vmatprep.subr.mxu0 0.0
        %2019 = vmatpush2.msra.mxu0 %v1594
        %2020 = vmatprep.subr.mxu0 0.0
        %2021 = vmatpush2.msra.mxu0 %v1593
        %2022 = vmatprep.subr.mxu0 0.0
        %2023 = vmatpush2.msra.mxu0 %v1592
        %2024 = vmatprep.subr.mxu0 0.0
        %2025 = vmatpush2.msra.mxu0 %v1591
        %2026 = vmatprep.subr.mxu0 0.0
        %2027 = vmatpush2.msra.mxu0 %v1590
        %2028 = vmatprep.subr.mxu0 0.0
        %2029 = vmatpush2.msra.mxu0 %v1589
        %2030 = vmatprep.subr.mxu0 0.0
        %2031 = vmatpush2.msra.mxu0 %v1588
        %2032 = vmatprep.subr.mxu0 0.0
        %2033 = vmatpush2.msra.mxu0 %v1587
        %2034 = vmatprep.subr.mxu0 0.0
        %2035 = vmatpush2.msra.mxu0 %v1586
        %2036 = vmatprep.subr.mxu0 0.0
        %2037 = vmatpush2.msra.mxu0 %v1585
        %2038 = vmatprep.subr.mxu0 0.0
        %2039 = vmatpush2.msra.mxu0 %v1584
        %2040 = vmatprep.subr.mxu0 0.0
        %2041 = vmatpush2.msra.mxu0 %v1583
        %2042 = vmatprep.subr.mxu0 0.0
        %2043 = vmatpush2.msra.mxu0 %v1582
        %2044 = vmatprep.mubr.f32.mxu0 %v914
        %2045 = vmatmul.mubr.f32.gmra.mxu0 %v679
        %v2046 = vpop.f32.mrf.mxu0
        %v2047 = vadd.f32 0.0, %v2046
        %v2048 = vpop.f32.mrf.mxu0
        %2049 = vdwg.mxu0
        %2050 = vmatprep.subr.mxu0 0.0
        %2051 = vmatpush1.msra.mxu0 %v1613
        %2052 = vmatprep.subr.mxu0 0.0
        %2053 = vmatpush1.msra.mxu0 %v1612
        %2054 = vmatprep.subr.mxu0 0.0
        %2055 = vmatpush1.msra.mxu0 %v1611
        %2056 = vmatprep.subr.mxu0 0.0
        %2057 = vmatpush1.msra.mxu0 %v1610
        %2058 = vmatprep.subr.mxu0 0.0
        %2059 = vmatpush1.msra.mxu0 %v1609
        %2060 = vmatprep.subr.mxu0 0.0
        %2061 = vmatpush1.msra.mxu0 %v1608
        %2062 = vmatprep.subr.mxu0 0.0
        %2063 = vmatpush1.msra.mxu0 %v1607
        %2064 = vmatprep.subr.mxu0 0.0
        %2065 = vmatpush1.msra.mxu0 %v1606
        %2066 = vmatprep.subr.mxu0 0.0
        %2067 = vmatpush1.msra.mxu0 %v1605
        %2068 = vmatprep.subr.mxu0 0.0
        %2069 = vmatpush1.msra.mxu0 %v1604
        %2070 = vmatprep.subr.mxu0 0.0
        %2071 = vmatpush1.msra.mxu0 %v1603
        %2072 = vmatprep.subr.mxu0 0.0
        %2073 = vmatpush1.msra.mxu0 %v1602
        %2074 = vmatprep.subr.mxu0 0.0
        %2075 = vmatpush1.msra.mxu0 %v1601
        %2076 = vmatprep.subr.mxu0 0.0
        %2077 = vmatpush1.msra.mxu0 %v1600
        %2078 = vmatprep.subr.mxu0 0.0
        %2079 = vmatpush1.msra.mxu0 %v1599
        %2080 = vmatprep.subr.mxu0 0.0
        %2081 = vmatpush1.msra.mxu0 %v1598
        %2082 = vmatprep.subr.mxu0 0.0
        %2083 = vmatpush2.msra.mxu0 %v1629
        %2084 = vmatprep.subr.mxu0 0.0
        %2085 = vmatpush2.msra.mxu0 %v1628
        %2086 = vmatprep.subr.mxu0 0.0
        %2087 = vmatpush2.msra.mxu0 %v1627
        %2088 = vmatprep.subr.mxu0 0.0
        %2089 = vmatpush2.msra.mxu0 %v1626
        %2090 = vmatprep.subr.mxu0 0.0
        %2091 = vmatpush2.msra.mxu0 %v1625
        %2092 = vmatprep.subr.mxu0 0.0
        %2093 = vmatpush2.msra.mxu0 %v1624
        %2094 = vmatprep.subr.mxu0 0.0
        %2095 = vmatpush2.msra.mxu0 %v1623
        %2096 = vmatprep.subr.mxu0 0.0
        %2097 = vmatpush2.msra.mxu0 %v1622
        %2098 = vmatprep.subr.mxu0 0.0
        %2099 = vmatpush2.msra.mxu0 %v1621
        %2100 = vmatprep.subr.mxu0 0.0
        %2101 = vmatpush2.msra.mxu0 %v1620
        %2102 = vmatprep.subr.mxu0 0.0
        %2103 = vmatpush2.msra.mxu0 %v1619
        %2104 = vmatprep.subr.mxu0 0.0
        %2105 = vmatpush2.msra.mxu0 %v1618
        %2106 = vmatprep.subr.mxu0 0.0
        %2107 = vmatpush2.msra.mxu0 %v1617
        %2108 = vmatprep.subr.mxu0 0.0
        %2109 = vmatpush2.msra.mxu0 %v1616
        %2110 = vmatprep.subr.mxu0 0.0
        %2111 = vmatpush2.msra.mxu0 %v1615
        %2112 = vmatprep.subr.mxu0 0.0
        %2113 = vmatpush2.msra.mxu0 %v1614
        %2114 = vmatprep.mubr.f32.mxu0 %v914
        %2115 = vmatmul.mubr.f32.gmra.mxu0 %v679
        %v2116 = vpop.f32.mrf.mxu0
        %v2117 = vadd.f32 0.0, %v2116
        %v2118 = vpop.f32.mrf.mxu0
        %2119 = vdwg.mxu0
        %v2120 = vld [vmem:[%s629] sm:$0xff]
        %v2121 = vld [vmem:[%s629 + $0x8] sm:$0xff]
        %v2122 = vld [vmem:[%s629 + $0x10] sm:$0xff]
        %v2123 = vld [vmem:[%s629 + $0x18] sm:$0xff]
        %v2124 = vld [vmem:[%s629 + $0x20] sm:$0xff]
        %v2125 = vld [vmem:[%s629 + $0x28] sm:$0xff]
        %v2126 = vld [vmem:[%s629 + $0x30] sm:$0xff]
        %v2127 = vld [vmem:[%s629 + $0x38] sm:$0xff]
        %v2128 = vld [vmem:[%s629 + $0x40] sm:$0xff]
        %v2129 = vld [vmem:[%s629 + $0x48] sm:$0xff]
        %v2130 = vld [vmem:[%s629 + $0x50] sm:$0xff]
        %v2131 = vld [vmem:[%s629 + $0x58] sm:$0xff]
        %v2132 = vld [vmem:[%s629 + $0x60] sm:$0xff]
        %v2133 = vld [vmem:[%s629 + $0x68] sm:$0xff]
        %v2134 = vld [vmem:[%s629 + $0x70] sm:$0xff]
        %v2135 = vld [vmem:[%s629 + $0x78] sm:$0xff]
        %v2136 = vld [vmem:[%s629 + $0x80] sm:$0xff]
        %v2137 = vld [vmem:[%s629 + $0x88] sm:$0xff]
        %v2138 = vld [vmem:[%s629 + $0x90] sm:$0xff]
        %v2139 = vld [vmem:[%s629 + $0x98] sm:$0xff]
        %v2140 = vld [vmem:[%s629 + $0xa0] sm:$0xff]
        %v2141 = vld [vmem:[%s629 + $0xa8] sm:$0xff]
        %v2142 = vld [vmem:[%s629 + $0xb0] sm:$0xff]
        %v2143 = vld [vmem:[%s629 + $0xb8] sm:$0xff]
        %v2144 = vld [vmem:[%s629 + $0xc0] sm:$0xff]
        %v2145 = vld [vmem:[%s629 + $0xc8] sm:$0xff]
        %v2146 = vld [vmem:[%s629 + $0xd0] sm:$0xff]
        %v2147 = vld [vmem:[%s629 + $0xd8] sm:$0xff]
        %v2148 = vld [vmem:[%s629 + $0xe0] sm:$0xff]
        %v2149 = vld [vmem:[%s629 + $0xe8] sm:$0xff]
        %v2150 = vld [vmem:[%s629 + $0xf0] sm:$0xff]
        %v2151 = vld [vmem:[%s629 + $0xf8] sm:$0xff]
        %v2152 = vld [vmem:[%s629 + $0x100] sm:$0xff]
        %v2153 = vld [vmem:[%s629 + $0x108] sm:$0xff]
        %v2154 = vld [vmem:[%s629 + $0x110] sm:$0xff]
        %v2155 = vld [vmem:[%s629 + $0x118] sm:$0xff]
        %v2156 = vld [vmem:[%s629 + $0x120] sm:$0xff]
        %v2157 = vld [vmem:[%s629 + $0x128] sm:$0xff]
        %v2158 = vld [vmem:[%s629 + $0x130] sm:$0xff]
        %v2159 = vld [vmem:[%s629 + $0x138] sm:$0xff]
        %v2160 = vld [vmem:[%s629 + $0x140] sm:$0xff]
        %v2161 = vld [vmem:[%s629 + $0x148] sm:$0xff]
        %v2162 = vld [vmem:[%s629 + $0x150] sm:$0xff]
        %v2163 = vld [vmem:[%s629 + $0x158] sm:$0xff]
        %v2164 = vld [vmem:[%s629 + $0x160] sm:$0xff]
        %v2165 = vld [vmem:[%s629 + $0x168] sm:$0xff]
        %v2166 = vld [vmem:[%s629 + $0x170] sm:$0xff]
        %v2167 = vld [vmem:[%s629 + $0x178] sm:$0xff]
        %v2168 = vld [vmem:[%s629 + $0x180] sm:$0xff]
        %v2169 = vld [vmem:[%s629 + $0x188] sm:$0xff]
        %v2170 = vld [vmem:[%s629 + $0x190] sm:$0xff]
        %v2171 = vld [vmem:[%s629 + $0x198] sm:$0xff]
        %v2172 = vld [vmem:[%s629 + $0x1a0] sm:$0xff]
        %v2173 = vld [vmem:[%s629 + $0x1a8] sm:$0xff]
        %v2174 = vld [vmem:[%s629 + $0x1b0] sm:$0xff]
        %v2175 = vld [vmem:[%s629 + $0x1b8] sm:$0xff]
        %v2176 = vld [vmem:[%s629 + $0x1c0] sm:$0xff]
        %v2177 = vld [vmem:[%s629 + $0x1c8] sm:$0xff]
        %v2178 = vld [vmem:[%s629 + $0x1d0] sm:$0xff]
        %v2179 = vld [vmem:[%s629 + $0x1d8] sm:$0xff]
        %v2180 = vld [vmem:[%s629 + $0x1e0] sm:$0xff]
        %v2181 = vld [vmem:[%s629 + $0x1e8] sm:$0xff]
        %v2182 = vld [vmem:[%s629 + $0x1f0] sm:$0xff]
        %v2183 = vld [vmem:[%s629 + $0x1f8] sm:$0xff]
        %v2184 = vld [vmem:[%s629 + $0x200] sm:$0xff]
        %v2185 = vld [vmem:[%s629 + $0x208] sm:$0xff]
        %v2186 = vld [vmem:[%s629 + $0x210] sm:$0xff]
        %v2187 = vld [vmem:[%s629 + $0x218] sm:$0xff]
        %v2188 = vld [vmem:[%s629 + $0x220] sm:$0xff]
        %v2189 = vld [vmem:[%s629 + $0x228] sm:$0xff]
        %v2190 = vld [vmem:[%s629 + $0x230] sm:$0xff]
        %v2191 = vld [vmem:[%s629 + $0x238] sm:$0xff]
        %v2192 = vld [vmem:[%s629 + $0x240] sm:$0xff]
        %v2193 = vld [vmem:[%s629 + $0x248] sm:$0xff]
        %v2194 = vld [vmem:[%s629 + $0x250] sm:$0xff]
        %v2195 = vld [vmem:[%s629 + $0x258] sm:$0xff]
        %v2196 = vld [vmem:[%s629 + $0x260] sm:$0xff]
        %v2197 = vld [vmem:[%s629 + $0x268] sm:$0xff]
        %v2198 = vld [vmem:[%s629 + $0x270] sm:$0xff]
        %v2199 = vld [vmem:[%s629 + $0x278] sm:$0xff]
        %v2200 = vld [vmem:[%s629 + $0x280] sm:$0xff]
        %v2201 = vld [vmem:[%s629 + $0x288] sm:$0xff]
        %v2202 = vld [vmem:[%s629 + $0x290] sm:$0xff]
        %v2203 = vld [vmem:[%s629 + $0x298] sm:$0xff]
        %v2204 = vld [vmem:[%s629 + $0x2a0] sm:$0xff]
        %v2205 = vld [vmem:[%s629 + $0x2a8] sm:$0xff]
        %v2206 = vld [vmem:[%s629 + $0x2b0] sm:$0xff]
        %v2207 = vld [vmem:[%s629 + $0x2b8] sm:$0xff]
        %v2208 = vld [vmem:[%s629 + $0x2c0] sm:$0xff]
        %v2209 = vld [vmem:[%s629 + $0x2c8] sm:$0xff]
        %v2210 = vld [vmem:[%s629 + $0x2d0] sm:$0xff]
        %v2211 = vld [vmem:[%s629 + $0x2d8] sm:$0xff]
        %v2212 = vld [vmem:[%s629 + $0x2e0] sm:$0xff]
        %v2213 = vld [vmem:[%s629 + $0x2e8] sm:$0xff]
        %v2214 = vld [vmem:[%s629 + $0x2f0] sm:$0xff]
        %v2215 = vld [vmem:[%s629 + $0x2f8] sm:$0xff]
        %v2216 = vld [vmem:[%s629 + $0x300] sm:$0xff]
        %v2217 = vld [vmem:[%s629 + $0x308] sm:$0xff]
        %v2218 = vld [vmem:[%s629 + $0x310] sm:$0xff]
        %v2219 = vld [vmem:[%s629 + $0x318] sm:$0xff]
        %v2220 = vld [vmem:[%s629 + $0x320] sm:$0xff]
        %v2221 = vld [vmem:[%s629 + $0x328] sm:$0xff]
        %v2222 = vld [vmem:[%s629 + $0x330] sm:$0xff]
        %v2223 = vld [vmem:[%s629 + $0x338] sm:$0xff]
        %v2224 = vld [vmem:[%s629 + $0x340] sm:$0xff]
        %v2225 = vld [vmem:[%s629 + $0x348] sm:$0xff]
        %v2226 = vld [vmem:[%s629 + $0x350] sm:$0xff]
        %v2227 = vld [vmem:[%s629 + $0x358] sm:$0xff]
        %v2228 = vld [vmem:[%s629 + $0x360] sm:$0xff]
        %v2229 = vld [vmem:[%s629 + $0x368] sm:$0xff]
        %v2230 = vld [vmem:[%s629 + $0x370] sm:$0xff]
        %v2231 = vld [vmem:[%s629 + $0x378] sm:$0xff]
        %v2232 = vld [vmem:[%s629 + $0x380] sm:$0xff]
        %v2233 = vld [vmem:[%s629 + $0x388] sm:$0xff]
        %v2234 = vld [vmem:[%s629 + $0x390] sm:$0xff]
        %v2235 = vld [vmem:[%s629 + $0x398] sm:$0xff]
        %v2236 = vld [vmem:[%s629 + $0x3a0] sm:$0xff]
        %v2237 = vld [vmem:[%s629 + $0x3a8] sm:$0xff]
        %v2238 = vld [vmem:[%s629 + $0x3b0] sm:$0xff]
        %v2239 = vld [vmem:[%s629 + $0x3b8] sm:$0xff]
        %v2240 = vld [vmem:[%s629 + $0x3c0] sm:$0xff]
        %v2241 = vld [vmem:[%s629 + $0x3c8] sm:$0xff]
        %v2242 = vld [vmem:[%s629 + $0x3d0] sm:$0xff]
        %v2243 = vld [vmem:[%s629 + $0x3d8] sm:$0xff]
        %v2244 = vld [vmem:[%s629 + $0x3e0] sm:$0xff]
        %v2245 = vld [vmem:[%s629 + $0x3e8] sm:$0xff]
        %v2246 = vld [vmem:[%s629 + $0x3f0] sm:$0xff]
        %v2247 = vld [vmem:[%s629 + $0x3f8] sm:$0xff]
        %v2248 = vld [vmem:[%s629 + $0x400] sm:$0xff]
        %v2249 = vld [vmem:[%s629 + $0x408] sm:$0xff]
        %v2250 = vld [vmem:[%s629 + $0x410] sm:$0xff]
        %v2251 = vld [vmem:[%s629 + $0x418] sm:$0xff]
        %v2252 = vld [vmem:[%s629 + $0x420] sm:$0xff]
        %v2253 = vld [vmem:[%s629 + $0x428] sm:$0xff]
        %v2254 = vld [vmem:[%s629 + $0x430] sm:$0xff]
        %v2255 = vld [vmem:[%s629 + $0x438] sm:$0xff]
        %v2256 = vld [vmem:[%s629 + $0x440] sm:$0xff]
        %v2257 = vld [vmem:[%s629 + $0x448] sm:$0xff]
        %v2258 = vld [vmem:[%s629 + $0x450] sm:$0xff]
        %v2259 = vld [vmem:[%s629 + $0x458] sm:$0xff]
        %v2260 = vld [vmem:[%s629 + $0x460] sm:$0xff]
        %v2261 = vld [vmem:[%s629 + $0x468] sm:$0xff]
        %v2262 = vld [vmem:[%s629 + $0x470] sm:$0xff]
        %v2263 = vld [vmem:[%s629 + $0x478] sm:$0xff]
        %v2264 = vld [vmem:[%s629 + $0x480] sm:$0xff]
        %v2265 = vld [vmem:[%s629 + $0x488] sm:$0xff]
        %v2266 = vld [vmem:[%s629 + $0x490] sm:$0xff]
        %v2267 = vld [vmem:[%s629 + $0x498] sm:$0xff]
        %v2268 = vld [vmem:[%s629 + $0x4a0] sm:$0xff]
        %v2269 = vld [vmem:[%s629 + $0x4a8] sm:$0xff]
        %v2270 = vld [vmem:[%s629 + $0x4b0] sm:$0xff]
        %v2271 = vld [vmem:[%s629 + $0x4b8] sm:$0xff]
        %v2272 = vld [vmem:[%s629 + $0x4c0] sm:$0xff]
        %v2273 = vld [vmem:[%s629 + $0x4c8] sm:$0xff]
        %v2274 = vld [vmem:[%s629 + $0x4d0] sm:$0xff]
        %v2275 = vld [vmem:[%s629 + $0x4d8] sm:$0xff]
        %v2276 = vld [vmem:[%s629 + $0x4e0] sm:$0xff]
        %v2277 = vld [vmem:[%s629 + $0x4e8] sm:$0xff]
        %v2278 = vld [vmem:[%s629 + $0x4f0] sm:$0xff]
        %v2279 = vld [vmem:[%s629 + $0x4f8] sm:$0xff]
        %v2280 = vld [vmem:[%s629 + $0x500] sm:$0xff]
        %v2281 = vld [vmem:[%s629 + $0x508] sm:$0xff]
        %v2282 = vld [vmem:[%s629 + $0x510] sm:$0xff]
        %v2283 = vld [vmem:[%s629 + $0x518] sm:$0xff]
        %v2284 = vld [vmem:[%s629 + $0x520] sm:$0xff]
        %v2285 = vld [vmem:[%s629 + $0x528] sm:$0xff]
        %v2286 = vld [vmem:[%s629 + $0x530] sm:$0xff]
        %v2287 = vld [vmem:[%s629 + $0x538] sm:$0xff]
        %v2288 = vld [vmem:[%s629 + $0x540] sm:$0xff]
        %v2289 = vld [vmem:[%s629 + $0x548] sm:$0xff]
        %v2290 = vld [vmem:[%s629 + $0x550] sm:$0xff]
        %v2291 = vld [vmem:[%s629 + $0x558] sm:$0xff]
        %v2292 = vld [vmem:[%s629 + $0x560] sm:$0xff]
        %v2293 = vld [vmem:[%s629 + $0x568] sm:$0xff]
        %v2294 = vld [vmem:[%s629 + $0x570] sm:$0xff]
        %v2295 = vld [vmem:[%s629 + $0x578] sm:$0xff]
        %v2296 = vld [vmem:[%s629 + $0x580] sm:$0xff]
        %v2297 = vld [vmem:[%s629 + $0x588] sm:$0xff]
        %v2298 = vld [vmem:[%s629 + $0x590] sm:$0xff]
        %v2299 = vld [vmem:[%s629 + $0x598] sm:$0xff]
        %v2300 = vld [vmem:[%s629 + $0x5a0] sm:$0xff]
        %v2301 = vld [vmem:[%s629 + $0x5a8] sm:$0xff]
        %v2302 = vld [vmem:[%s629 + $0x5b0] sm:$0xff]
        %v2303 = vld [vmem:[%s629 + $0x5b8] sm:$0xff]
        %v2304 = vld [vmem:[%s629 + $0x5c0] sm:$0xff]
        %v2305 = vld [vmem:[%s629 + $0x5c8] sm:$0xff]
        %v2306 = vld [vmem:[%s629 + $0x5d0] sm:$0xff]
        %v2307 = vld [vmem:[%s629 + $0x5d8] sm:$0xff]
        %v2308 = vld [vmem:[%s629 + $0x5e0] sm:$0xff]
        %v2309 = vld [vmem:[%s629 + $0x5e8] sm:$0xff]
        %v2310 = vld [vmem:[%s629 + $0x5f0] sm:$0xff]
        %v2311 = vld [vmem:[%s629 + $0x5f8] sm:$0xff]
        %v2312 = vld [vmem:[%s629 + $0x600] sm:$0xff]
        %v2313 = vld [vmem:[%s629 + $0x608] sm:$0xff]
        %v2314 = vld [vmem:[%s629 + $0x610] sm:$0xff]
        %v2315 = vld [vmem:[%s629 + $0x618] sm:$0xff]
        %v2316 = vld [vmem:[%s629 + $0x620] sm:$0xff]
        %v2317 = vld [vmem:[%s629 + $0x628] sm:$0xff]
        %v2318 = vld [vmem:[%s629 + $0x630] sm:$0xff]
        %v2319 = vld [vmem:[%s629 + $0x638] sm:$0xff]
        %v2320 = vld [vmem:[%s629 + $0x640] sm:$0xff]
        %v2321 = vld [vmem:[%s629 + $0x648] sm:$0xff]
        %v2322 = vld [vmem:[%s629 + $0x650] sm:$0xff]
        %v2323 = vld [vmem:[%s629 + $0x658] sm:$0xff]
        %v2324 = vld [vmem:[%s629 + $0x660] sm:$0xff]
        %v2325 = vld [vmem:[%s629 + $0x668] sm:$0xff]
        %v2326 = vld [vmem:[%s629 + $0x670] sm:$0xff]
        %v2327 = vld [vmem:[%s629 + $0x678] sm:$0xff]
        %v2328 = vld [vmem:[%s629 + $0x680] sm:$0xff]
        %v2329 = vld [vmem:[%s629 + $0x688] sm:$0xff]
        %v2330 = vld [vmem:[%s629 + $0x690] sm:$0xff]
        %v2331 = vld [vmem:[%s629 + $0x698] sm:$0xff]
        %v2332 = vld [vmem:[%s629 + $0x6a0] sm:$0xff]
        %v2333 = vld [vmem:[%s629 + $0x6a8] sm:$0xff]
        %v2334 = vld [vmem:[%s629 + $0x6b0] sm:$0xff]
        %v2335 = vld [vmem:[%s629 + $0x6b8] sm:$0xff]
        %v2336 = vld [vmem:[%s629 + $0x6c0] sm:$0xff]
        %v2337 = vld [vmem:[%s629 + $0x6c8] sm:$0xff]
        %v2338 = vld [vmem:[%s629 + $0x6d0] sm:$0xff]
        %v2339 = vld [vmem:[%s629 + $0x6d8] sm:$0xff]
        %v2340 = vld [vmem:[%s629 + $0x6e0] sm:$0xff]
        %v2341 = vld [vmem:[%s629 + $0x6e8] sm:$0xff]
        %v2342 = vld [vmem:[%s629 + $0x6f0] sm:$0xff]
        %v2343 = vld [vmem:[%s629 + $0x6f8] sm:$0xff]
        %2344 = vmatprep.subr.mxu0 0.0
        %2345 = vmatpush1.msra.mxu0 %v2135
        %2346 = vmatprep.subr.mxu0 0.0
        %2347 = vmatpush1.msra.mxu0 %v2134
        %2348 = vmatprep.subr.mxu0 0.0
        %2349 = vmatpush1.msra.mxu0 %v2133
        %2350 = vmatprep.subr.mxu0 0.0
        %2351 = vmatpush1.msra.mxu0 %v2132
        %2352 = vmatprep.subr.mxu0 0.0
        %2353 = vmatpush1.msra.mxu0 %v2131
        %2354 = vmatprep.subr.mxu0 0.0
        %2355 = vmatpush1.msra.mxu0 %v2130
        %2356 = vmatprep.subr.mxu0 0.0
        %2357 = vmatpush1.msra.mxu0 %v2129
        %2358 = vmatprep.subr.mxu0 0.0
        %2359 = vmatpush1.msra.mxu0 %v2128
        %2360 = vmatprep.subr.mxu0 0.0
        %2361 = vmatpush1.msra.mxu0 %v2127
        %2362 = vmatprep.subr.mxu0 0.0
        %2363 = vmatpush1.msra.mxu0 %v2126
        %2364 = vmatprep.subr.mxu0 0.0
        %2365 = vmatpush1.msra.mxu0 %v2125
        %2366 = vmatprep.subr.mxu0 0.0
        %2367 = vmatpush1.msra.mxu0 %v2124
        %2368 = vmatprep.subr.mxu0 0.0
        %2369 = vmatpush1.msra.mxu0 %v2123
        %2370 = vmatprep.subr.mxu0 0.0
        %2371 = vmatpush1.msra.mxu0 %v2122
        %2372 = vmatprep.subr.mxu0 0.0
        %2373 = vmatpush1.msra.mxu0 %v2121
        %2374 = vmatprep.subr.mxu0 0.0
        %2375 = vmatpush1.msra.mxu0 %v2120
        %2376 = vmatprep.subr.mxu0 0.0
        %2377 = vmatpush2.msra.mxu0 %v2151
        %2378 = vmatprep.subr.mxu0 0.0
        %2379 = vmatpush2.msra.mxu0 %v2150
        %2380 = vmatprep.subr.mxu0 0.0
        %2381 = vmatpush2.msra.mxu0 %v2149
        %2382 = vmatprep.subr.mxu0 0.0
        %2383 = vmatpush2.msra.mxu0 %v2148
        %2384 = vmatprep.subr.mxu0 0.0
        %2385 = vmatpush2.msra.mxu0 %v2147
        %2386 = vmatprep.subr.mxu0 0.0
        %2387 = vmatpush2.msra.mxu0 %v2146
        %2388 = vmatprep.subr.mxu0 0.0
        %2389 = vmatpush2.msra.mxu0 %v2145
        %2390 = vmatprep.subr.mxu0 0.0
        %2391 = vmatpush2.msra.mxu0 %v2144
        %2392 = vmatprep.subr.mxu0 0.0
        %2393 = vmatpush2.msra.mxu0 %v2143
        %2394 = vmatprep.subr.mxu0 0.0
        %2395 = vmatpush2.msra.mxu0 %v2142
        %2396 = vmatprep.subr.mxu0 0.0
        %2397 = vmatpush2.msra.mxu0 %v2141
        %2398 = vmatprep.subr.mxu0 0.0
        %2399 = vmatpush2.msra.mxu0 %v2140
        %2400 = vmatprep.subr.mxu0 0.0
        %2401 = vmatpush2.msra.mxu0 %v2139
        %2402 = vmatprep.subr.mxu0 0.0
        %2403 = vmatpush2.msra.mxu0 %v2138
        %2404 = vmatprep.subr.mxu0 0.0
        %2405 = vmatpush2.msra.mxu0 %v2137
        %2406 = vmatprep.subr.mxu0 0.0
        %2407 = vmatpush2.msra.mxu0 %v2136
        %2408 = vmatprep.mubr.f32.mxu0 %v914
        %2409 = vmatmul.mubr.f32.gmra.mxu0 %v679
        %v2410 = vpop.f32.mrf.mxu0
        %v2411 = vadd.f32 0.0, %v2410
        %v2412 = vpop.f32.mrf.mxu0
        %2413 = vdwg.mxu0
        %2414 = vmatprep.subr.mxu0 0.0
        %2415 = vmatpush1.msra.mxu0 %v2167
        %2416 = vmatprep.subr.mxu0 0.0
        %2417 = vmatpush1.msra.mxu0 %v2166
        %2418 = vmatprep.subr.mxu0 0.0
        %2419 = vmatpush1.msra.mxu0 %v2165
        %2420 = vmatprep.subr.mxu0 0.0
        %2421 = vmatpush1.msra.mxu0 %v2164
        %2422 = vmatprep.subr.mxu0 0.0
        %2423 = vmatpush1.msra.mxu0 %v2163
        %2424 = vmatprep.subr.mxu0 0.0
        %2425 = vmatpush1.msra.mxu0 %v2162
        %2426 = vmatprep.subr.mxu0 0.0
        %2427 = vmatpush1.msra.mxu0 %v2161
        %2428 = vmatprep.subr.mxu0 0.0
        %2429 = vmatpush1.msra.mxu0 %v2160
        %2430 = vmatprep.subr.mxu0 0.0
        %2431 = vmatpush1.msra.mxu0 %v2159
        %2432 = vmatprep.subr.mxu0 0.0
        %2433 = vmatpush1.msra.mxu0 %v2158
        %2434 = vmatprep.subr.mxu0 0.0
        %2435 = vmatpush1.msra.mxu0 %v2157
        %2436 = vmatprep.subr.mxu0 0.0
        %2437 = vmatpush1.msra.mxu0 %v2156
        %2438 = vmatprep.subr.mxu0 0.0
        %2439 = vmatpush1.msra.mxu0 %v2155
        %2440 = vmatprep.subr.mxu0 0.0
        %2441 = vmatpush1.msra.mxu0 %v2154
        %2442 = vmatprep.subr.mxu0 0.0
        %2443 = vmatpush1.msra.mxu0 %v2153
        %2444 = vmatprep.subr.mxu0 0.0
        %2445 = vmatpush1.msra.mxu0 %v2152
        %2446 = vmatprep.subr.mxu0 0.0
        %2447 = vmatpush2.msra.mxu0 %v2183
        %2448 = vmatprep.subr.mxu0 0.0
        %2449 = vmatpush2.msra.mxu0 %v2182
        %2450 = vmatprep.subr.mxu0 0.0
        %2451 = vmatpush2.msra.mxu0 %v2181
        %2452 = vmatprep.subr.mxu0 0.0
        %2453 = vmatpush2.msra.mxu0 %v2180
        %2454 = vmatprep.subr.mxu0 0.0
        %2455 = vmatpush2.msra.mxu0 %v2179
        %2456 = vmatprep.subr.mxu0 0.0
        %2457 = vmatpush2.msra.mxu0 %v2178
        %2458 = vmatprep.subr.mxu0 0.0
        %2459 = vmatpush2.msra.mxu0 %v2177
        %2460 = vmatprep.subr.mxu0 0.0
        %2461 = vmatpush2.msra.mxu0 %v2176
        %2462 = vmatprep.subr.mxu0 0.0
        %2463 = vmatpush2.msra.mxu0 %v2175
        %2464 = vmatprep.subr.mxu0 0.0
        %2465 = vmatpush2.msra.mxu0 %v2174
        %2466 = vmatprep.subr.mxu0 0.0
        %2467 = vmatpush2.msra.mxu0 %v2173
        %2468 = vmatprep.subr.mxu0 0.0
        %2469 = vmatpush2.msra.mxu0 %v2172
        %2470 = vmatprep.subr.mxu0 0.0
        %2471 = vmatpush2.msra.mxu0 %v2171
        %2472 = vmatprep.subr.mxu0 0.0
        %2473 = vmatpush2.msra.mxu0 %v2170
        %2474 = vmatprep.subr.mxu0 0.0
        %2475 = vmatpush2.msra.mxu0 %v2169
        %2476 = vmatprep.subr.mxu0 0.0
        %2477 = vmatpush2.msra.mxu0 %v2168
        %2478 = vmatprep.mubr.f32.mxu0 %v914
        %2479 = vmatmul.mubr.f32.gmra.mxu0 %v679
        %v2480 = vpop.f32.mrf.mxu0
        %v2481 = vadd.f32 0.0, %v2480
        %v2482 = vpop.f32.mrf.mxu0
        %2483 = vdwg.mxu0
        %2484 = vmatprep.subr.mxu0 0.0
        %2485 = vmatpush1.msra.mxu0 %v2199
        %2486 = vmatprep.subr.mxu0 0.0
        %2487 = vmatpush1.msra.mxu0 %v2198
        %2488 = vmatprep.subr.mxu0 0.0
        %2489 = vmatpush1.msra.mxu0 %v2197
        %2490 = vmatprep.subr.mxu0 0.0
        %2491 = vmatpush1.msra.mxu0 %v2196
        %2492 = vmatprep.subr.mxu0 0.0
        %2493 = vmatpush1.msra.mxu0 %v2195
        %2494 = vmatprep.subr.mxu0 0.0
        %2495 = vmatpush1.msra.mxu0 %v2194
        %2496 = vmatprep.subr.mxu0 0.0
        %2497 = vmatpush1.msra.mxu0 %v2193
        %2498 = vmatprep.subr.mxu0 0.0
        %2499 = vmatpush1.msra.mxu0 %v2192
        %2500 = vmatprep.subr.mxu0 0.0
        %2501 = vmatpush1.msra.mxu0 %v2191
        %2502 = vmatprep.subr.mxu0 0.0
        %2503 = vmatpush1.msra.mxu0 %v2190
        %2504 = vmatprep.subr.mxu0 0.0
        %2505 = vmatpush1.msra.mxu0 %v2189
        %2506 = vmatprep.subr.mxu0 0.0
        %2507 = vmatpush1.msra.mxu0 %v2188
        %2508 = vmatprep.subr.mxu0 0.0
        %2509 = vmatpush1.msra.mxu0 %v2187
        %2510 = vmatprep.subr.mxu0 0.0
        %2511 = vmatpush1.msra.mxu0 %v2186
        %2512 = vmatprep.subr.mxu0 0.0
        %2513 = vmatpush1.msra.mxu0 %v2185
        %2514 = vmatprep.subr.mxu0 0.0
        %2515 = vmatpush1.msra.mxu0 %v2184
        %2516 = vmatprep.subr.mxu0 0.0
        %2517 = vmatpush2.msra.mxu0 %v2215
        %2518 = vmatprep.subr.mxu0 0.0
        %2519 = vmatpush2.msra.mxu0 %v2214
        %2520 = vmatprep.subr.mxu0 0.0
        %2521 = vmatpush2.msra.mxu0 %v2213
        %2522 = vmatprep.subr.mxu0 0.0
        %2523 = vmatpush2.msra.mxu0 %v2212
        %2524 = vmatprep.subr.mxu0 0.0
        %2525 = vmatpush2.msra.mxu0 %v2211
        %2526 = vmatprep.subr.mxu0 0.0
        %2527 = vmatpush2.msra.mxu0 %v2210
        %2528 = vmatprep.subr.mxu0 0.0
        %2529 = vmatpush2.msra.mxu0 %v2209
        %2530 = vmatprep.subr.mxu0 0.0
        %2531 = vmatpush2.msra.mxu0 %v2208
        %2532 = vmatprep.subr.mxu0 0.0
        %2533 = vmatpush2.msra.mxu0 %v2207
        %2534 = vmatprep.subr.mxu0 0.0
        %2535 = vmatpush2.msra.mxu0 %v2206
        %2536 = vmatprep.subr.mxu0 0.0
        %2537 = vmatpush2.msra.mxu0 %v2205
        %2538 = vmatprep.subr.mxu0 0.0
        %2539 = vmatpush2.msra.mxu0 %v2204
        %2540 = vmatprep.subr.mxu0 0.0
        %2541 = vmatpush2.msra.mxu0 %v2203
        %2542 = vmatprep.subr.mxu0 0.0
        %2543 = vmatpush2.msra.mxu0 %v2202
        %2544 = vmatprep.subr.mxu0 0.0
        %2545 = vmatpush2.msra.mxu0 %v2201
        %2546 = vmatprep.subr.mxu0 0.0
        %2547 = vmatpush2.msra.mxu0 %v2200
        %2548 = vmatprep.mubr.f32.mxu0 %v914
        %2549 = vmatmul.mubr.f32.gmra.mxu0 %v679
        %v2550 = vpop.f32.mrf.mxu0
        %v2551 = vadd.f32 0.0, %v2550
        %v2552 = vpop.f32.mrf.mxu0
        %2553 = vdwg.mxu0
        %2554 = vmatprep.subr.mxu0 0.0
        %2555 = vmatpush1.msra.mxu0 %v2231
        %2556 = vmatprep.subr.mxu0 0.0
        %2557 = vmatpush1.msra.mxu0 %v2230
        %2558 = vmatprep.subr.mxu0 0.0
        %2559 = vmatpush1.msra.mxu0 %v2229
        %2560 = vmatprep.subr.mxu0 0.0
        %2561 = vmatpush1.msra.mxu0 %v2228
        %2562 = vmatprep.subr.mxu0 0.0
        %2563 = vmatpush1.msra.mxu0 %v2227
        %2564 = vmatprep.subr.mxu0 0.0
        %2565 = vmatpush1.msra.mxu0 %v2226
        %2566 = vmatprep.subr.mxu0 0.0
        %2567 = vmatpush1.msra.mxu0 %v2225
        %2568 = vmatprep.subr.mxu0 0.0
        %2569 = vmatpush1.msra.mxu0 %v2224
        %2570 = vmatprep.subr.mxu0 0.0
        %2571 = vmatpush1.msra.mxu0 %v2223
        %2572 = vmatprep.subr.mxu0 0.0
        %2573 = vmatpush1.msra.mxu0 %v2222
        %2574 = vmatprep.subr.mxu0 0.0
        %2575 = vmatpush1.msra.mxu0 %v2221
        %2576 = vmatprep.subr.mxu0 0.0
        %2577 = vmatpush1.msra.mxu0 %v2220
        %2578 = vmatprep.subr.mxu0 0.0
        %2579 = vmatpush1.msra.mxu0 %v2219
        %2580 = vmatprep.subr.mxu0 0.0
        %2581 = vmatpush1.msra.mxu0 %v2218
        %2582 = vmatprep.subr.mxu0 0.0
        %2583 = vmatpush1.msra.mxu0 %v2217
        %2584 = vmatprep.subr.mxu0 0.0
        %2585 = vmatpush1.msra.mxu0 %v2216
        %2586 = vmatprep.subr.mxu0 0.0
        %2587 = vmatpush2.msra.mxu0 %v2247
        %2588 = vmatprep.subr.mxu0 0.0
        %2589 = vmatpush2.msra.mxu0 %v2246
        %2590 = vmatprep.subr.mxu0 0.0
        %2591 = vmatpush2.msra.mxu0 %v2245
        %2592 = vmatprep.subr.mxu0 0.0
        %2593 = vmatpush2.msra.mxu0 %v2244
        %2594 = vmatprep.subr.mxu0 0.0
        %2595 = vmatpush2.msra.mxu0 %v2243
        %2596 = vmatprep.subr.mxu0 0.0
        %2597 = vmatpush2.msra.mxu0 %v2242
        %2598 = vmatprep.subr.mxu0 0.0
        %2599 = vmatpush2.msra.mxu0 %v2241
        %2600 = vmatprep.subr.mxu0 0.0
        %2601 = vmatpush2.msra.mxu0 %v2240
        %2602 = vmatprep.subr.mxu0 0.0
        %2603 = vmatpush2.msra.mxu0 %v2239
        %2604 = vmatprep.subr.mxu0 0.0
        %2605 = vmatpush2.msra.mxu0 %v2238
        %2606 = vmatprep.subr.mxu0 0.0
        %2607 = vmatpush2.msra.mxu0 %v2237
        %2608 = vmatprep.subr.mxu0 0.0
        %2609 = vmatpush2.msra.mxu0 %v2236
        %2610 = vmatprep.subr.mxu0 0.0
        %2611 = vmatpush2.msra.mxu0 %v2235
        %2612 = vmatprep.subr.mxu0 0.0
        %2613 = vmatpush2.msra.mxu0 %v2234
        %2614 = vmatprep.subr.mxu0 0.0
        %2615 = vmatpush2.msra.mxu0 %v2233
        %2616 = vmatprep.subr.mxu0 0.0
        %2617 = vmatpush2.msra.mxu0 %v2232
        %2618 = vmatprep.mubr.f32.mxu0 %v914
        %2619 = vmatmul.mubr.f32.gmra.mxu0 %v679
        %v2620 = vpop.f32.mrf.mxu0
        %v2621 = vadd.f32 0.0, %v2620
        %v2622 = vpop.f32.mrf.mxu0
        %2623 = vdwg.mxu0
        %2624 = vmatprep.subr.mxu0 0.0
        %2625 = vmatpush1.msra.mxu0 %v2263
        %2626 = vmatprep.subr.mxu0 0.0
        %2627 = vmatpush1.msra.mxu0 %v2262
        %2628 = vmatprep.subr.mxu0 0.0
        %2629 = vmatpush1.msra.mxu0 %v2261
        %2630 = vmatprep.subr.mxu0 0.0
        %2631 = vmatpush1.msra.mxu0 %v2260
        %2632 = vmatprep.subr.mxu0 0.0
        %2633 = vmatpush1.msra.mxu0 %v2259
        %2634 = vmatprep.subr.mxu0 0.0
        %2635 = vmatpush1.msra.mxu0 %v2258
        %2636 = vmatprep.subr.mxu0 0.0
        %2637 = vmatpush1.msra.mxu0 %v2257
        %2638 = vmatprep.subr.mxu0 0.0
        %2639 = vmatpush1.msra.mxu0 %v2256
        %2640 = vmatprep.subr.mxu0 0.0
        %2641 = vmatpush1.msra.mxu0 %v2255
        %2642 = vmatprep.subr.mxu0 0.0
        %2643 = vmatpush1.msra.mxu0 %v2254
        %2644 = vmatprep.subr.mxu0 0.0
        %2645 = vmatpush1.msra.mxu0 %v2253
        %2646 = vmatprep.subr.mxu0 0.0
        %2647 = vmatpush1.msra.mxu0 %v2252
        %2648 = vmatprep.subr.mxu0 0.0
        %2649 = vmatpush1.msra.mxu0 %v2251
        %2650 = vmatprep.subr.mxu0 0.0
        %2651 = vmatpush1.msra.mxu0 %v2250
        %2652 = vmatprep.subr.mxu0 0.0
        %2653 = vmatpush1.msra.mxu0 %v2249
        %2654 = vmatprep.subr.mxu0 0.0
        %2655 = vmatpush1.msra.mxu0 %v2248
        %2656 = vmatprep.subr.mxu0 0.0
        %2657 = vmatpush2.msra.mxu0 %v2279
        %2658 = vmatprep.subr.mxu0 0.0
        %2659 = vmatpush2.msra.mxu0 %v2278
        %2660 = vmatprep.subr.mxu0 0.0
        %2661 = vmatpush2.msra.mxu0 %v2277
        %2662 = vmatprep.subr.mxu0 0.0
        %2663 = vmatpush2.msra.mxu0 %v2276
        %2664 = vmatprep.subr.mxu0 0.0
        %2665 = vmatpush2.msra.mxu0 %v2275
        %2666 = vmatprep.subr.mxu0 0.0
        %2667 = vmatpush2.msra.mxu0 %v2274
        %2668 = vmatprep.subr.mxu0 0.0
        %2669 = vmatpush2.msra.mxu0 %v2273
        %2670 = vmatprep.subr.mxu0 0.0
        %2671 = vmatpush2.msra.mxu0 %v2272
        %2672 = vmatprep.subr.mxu0 0.0
        %2673 = vmatpush2.msra.mxu0 %v2271
        %2674 = vmatprep.subr.mxu0 0.0
        %2675 = vmatpush2.msra.mxu0 %v2270
        %2676 = vmatprep.subr.mxu0 0.0
        %2677 = vmatpush2.msra.mxu0 %v2269
        %2678 = vmatprep.subr.mxu0 0.0
        %2679 = vmatpush2.msra.mxu0 %v2268
        %2680 = vmatprep.subr.mxu0 0.0
        %2681 = vmatpush2.msra.mxu0 %v2267
        %2682 = vmatprep.subr.mxu0 0.0
        %2683 = vmatpush2.msra.mxu0 %v2266
        %2684 = vmatprep.subr.mxu0 0.0
        %2685 = vmatpush2.msra.mxu0 %v2265
        %2686 = vmatprep.subr.mxu0 0.0
        %2687 = vmatpush2.msra.mxu0 %v2264
        %2688 = vmatprep.mubr.f32.mxu0 %v914
        %2689 = vmatmul.mubr.f32.gmra.mxu0 %v679
        %v2690 = vpop.f32.mrf.mxu0
        %v2691 = vadd.f32 0.0, %v2690
        %v2692 = vpop.f32.mrf.mxu0
        %2693 = vdwg.mxu0
        %2694 = vmatprep.subr.mxu0 0.0
        %2695 = vmatpush1.msra.mxu0 %v2295
        %2696 = vmatprep.subr.mxu0 0.0
        %2697 = vmatpush1.msra.mxu0 %v2294
        %2698 = vmatprep.subr.mxu0 0.0
        %2699 = vmatpush1.msra.mxu0 %v2293
        %2700 = vmatprep.subr.mxu0 0.0
        %2701 = vmatpush1.msra.mxu0 %v2292
        %2702 = vmatprep.subr.mxu0 0.0
        %2703 = vmatpush1.msra.mxu0 %v2291
        %2704 = vmatprep.subr.mxu0 0.0
        %2705 = vmatpush1.msra.mxu0 %v2290
        %2706 = vmatprep.subr.mxu0 0.0
        %2707 = vmatpush1.msra.mxu0 %v2289
        %2708 = vmatprep.subr.mxu0 0.0
        %2709 = vmatpush1.msra.mxu0 %v2288
        %2710 = vmatprep.subr.mxu0 0.0
        %2711 = vmatpush1.msra.mxu0 %v2287
        %2712 = vmatprep.subr.mxu0 0.0
        %2713 = vmatpush1.msra.mxu0 %v2286
        %2714 = vmatprep.subr.mxu0 0.0
        %2715 = vmatpush1.msra.mxu0 %v2285
        %2716 = vmatprep.subr.mxu0 0.0
        %2717 = vmatpush1.msra.mxu0 %v2284
        %2718 = vmatprep.subr.mxu0 0.0
        %2719 = vmatpush1.msra.mxu0 %v2283
        %2720 = vmatprep.subr.mxu0 0.0
        %2721 = vmatpush1.msra.mxu0 %v2282
        %2722 = vmatprep.subr.mxu0 0.0
        %2723 = vmatpush1.msra.mxu0 %v2281
        %2724 = vmatprep.subr.mxu0 0.0
        %2725 = vmatpush1.msra.mxu0 %v2280
        %2726 = vmatprep.subr.mxu0 0.0
        %2727 = vmatpush2.msra.mxu0 %v2311
        %2728 = vmatprep.subr.mxu0 0.0
        %2729 = vmatpush2.msra.mxu0 %v2310
        %2730 = vmatprep.subr.mxu0 0.0
        %2731 = vmatpush2.msra.mxu0 %v2309
        %2732 = vmatprep.subr.mxu0 0.0
        %2733 = vmatpush2.msra.mxu0 %v2308
        %2734 = vmatprep.subr.mxu0 0.0
        %2735 = vmatpush2.msra.mxu0 %v2307
        %2736 = vmatprep.subr.mxu0 0.0
        %2737 = vmatpush2.msra.mxu0 %v2306
        %2738 = vmatprep.subr.mxu0 0.0
        %2739 = vmatpush2.msra.mxu0 %v2305
        %2740 = vmatprep.subr.mxu0 0.0
        %2741 = vmatpush2.msra.mxu0 %v2304
        %2742 = vmatprep.subr.mxu0 0.0
        %2743 = vmatpush2.msra.mxu0 %v2303
        %2744 = vmatprep.subr.mxu0 0.0
        %2745 = vmatpush2.msra.mxu0 %v2302
        %2746 = vmatprep.subr.mxu0 0.0
        %2747 = vmatpush2.msra.mxu0 %v2301
        %2748 = vmatprep.subr.mxu0 0.0
        %2749 = vmatpush2.msra.mxu0 %v2300
        %2750 = vmatprep.subr.mxu0 0.0
        %2751 = vmatpush2.msra.mxu0 %v2299
        %2752 = vmatprep.subr.mxu0 0.0
        %2753 = vmatpush2.msra.mxu0 %v2298
        %2754 = vmatprep.subr.mxu0 0.0
        %2755 = vmatpush2.msra.mxu0 %v2297
        %2756 = vmatprep.subr.mxu0 0.0
        %2757 = vmatpush2.msra.mxu0 %v2296
        %2758 = vmatprep.mubr.f32.mxu0 %v914
        %2759 = vmatmul.mubr.f32.gmra.mxu0 %v679
        %v2760 = vpop.f32.mrf.mxu0
        %v2761 = vadd.f32 0.0, %v2760
        %v2762 = vpop.f32.mrf.mxu0
        %2763 = vdwg.mxu0
        %2764 = vmatprep.subr.mxu0 0.0
        %2765 = vmatpush1.msra.mxu0 %v2327
        %2766 = vmatprep.subr.mxu0 0.0
        %2767 = vmatpush1.msra.mxu0 %v2326
        %2768 = vmatprep.subr.mxu0 0.0
        %2769 = vmatpush1.msra.mxu0 %v2325
        %2770 = vmatprep.subr.mxu0 0.0
        %2771 = vmatpush1.msra.mxu0 %v2324
        %2772 = vmatprep.subr.mxu0 0.0
        %2773 = vmatpush1.msra.mxu0 %v2323
        %2774 = vmatprep.subr.mxu0 0.0
        %2775 = vmatpush1.msra.mxu0 %v2322
        %2776 = vmatprep.subr.mxu0 0.0
        %2777 = vmatpush1.msra.mxu0 %v2321
        %2778 = vmatprep.subr.mxu0 0.0
        %2779 = vmatpush1.msra.mxu0 %v2320
        %2780 = vmatprep.subr.mxu0 0.0
        %2781 = vmatpush1.msra.mxu0 %v2319
        %2782 = vmatprep.subr.mxu0 0.0
        %2783 = vmatpush1.msra.mxu0 %v2318
        %2784 = vmatprep.subr.mxu0 0.0
        %2785 = vmatpush1.msra.mxu0 %v2317
        %2786 = vmatprep.subr.mxu0 0.0
        %2787 = vmatpush1.msra.mxu0 %v2316
        %2788 = vmatprep.subr.mxu0 0.0
        %2789 = vmatpush1.msra.mxu0 %v2315
        %2790 = vmatprep.subr.mxu0 0.0
        %2791 = vmatpush1.msra.mxu0 %v2314
        %2792 = vmatprep.subr.mxu0 0.0
        %2793 = vmatpush1.msra.mxu0 %v2313
        %2794 = vmatprep.subr.mxu0 0.0
        %2795 = vmatpush1.msra.mxu0 %v2312
        %2796 = vmatprep.subr.mxu0 0.0
        %2797 = vmatpush2.msra.mxu0 %v2343
        %2798 = vmatprep.subr.mxu0 0.0
        %2799 = vmatpush2.msra.mxu0 %v2342
        %2800 = vmatprep.subr.mxu0 0.0
        %2801 = vmatpush2.msra.mxu0 %v2341
        %2802 = vmatprep.subr.mxu0 0.0
        %2803 = vmatpush2.msra.mxu0 %v2340
        %2804 = vmatprep.subr.mxu0 0.0
        %2805 = vmatpush2.msra.mxu0 %v2339
        %2806 = vmatprep.subr.mxu0 0.0
        %2807 = vmatpush2.msra.mxu0 %v2338
        %2808 = vmatprep.subr.mxu0 0.0
        %2809 = vmatpush2.msra.mxu0 %v2337
        %2810 = vmatprep.subr.mxu0 0.0
        %2811 = vmatpush2.msra.mxu0 %v2336
        %2812 = vmatprep.subr.mxu0 0.0
        %2813 = vmatpush2.msra.mxu0 %v2335
        %2814 = vmatprep.subr.mxu0 0.0
        %2815 = vmatpush2.msra.mxu0 %v2334
        %2816 = vmatprep.subr.mxu0 0.0
        %2817 = vmatpush2.msra.mxu0 %v2333
        %2818 = vmatprep.subr.mxu0 0.0
        %2819 = vmatpush2.msra.mxu0 %v2332
        %2820 = vmatprep.subr.mxu0 0.0
        %2821 = vmatpush2.msra.mxu0 %v2331
        %2822 = vmatprep.subr.mxu0 0.0
        %2823 = vmatpush2.msra.mxu0 %v2330
        %2824 = vmatprep.subr.mxu0 0.0
        %2825 = vmatpush2.msra.mxu0 %v2329
        %2826 = vmatprep.subr.mxu0 0.0
        %2827 = vmatpush2.msra.mxu0 %v2328
        %2828 = vmatprep.mubr.f32.mxu0 %v914
        %2829 = vmatmul.mubr.f32.gmra.mxu0 %v679
        %v2830 = vpop.f32.mrf.mxu0
        %v2831 = vadd.f32 0.0, %v2830
        %v2832 = vpop.f32.mrf.mxu0
        %2833 = vdwg.mxu0
        %vm2834 = vcmask 228352
        %v2836 = vsel %vm2834, %v983, 0
        %v2839 = vsel %vm2834, %v1697, 0
        %2841 = vmatprep.subr.mxu0 0.0
        %2842 = vmatpush1.xpose.msra.mxu0 0.0
        %2843 = vmatprep.subr.mxu0 0.0
        %2844 = vmatpush1.xpose.msra.mxu0 0.0
        %2845 = vmatprep.subr.mxu0 0.0
        %2846 = vmatpush1.xpose.msra.mxu0 0.0
        %2847 = vmatprep.subr.mxu0 0.0
        %2848 = vmatpush1.xpose.msra.mxu0 0.0
        %2849 = vmatprep.subr.mxu0 0.0
        %2850 = vmatpush1.xpose.msra.mxu0 0.0
        %2851 = vmatprep.subr.mxu0 0.0
        %2852 = vmatpush1.xpose.msra.mxu0 0.0
        %2853 = vmatprep.subr.mxu0 0.0
        %2854 = vmatpush1.xpose.msra.mxu0 0.0
        %2855 = vmatprep.subr.mxu0 0.0
        %2856 = vmatpush1.xpose.msra.mxu0 0.0
        %2857 = vmatprep.subr.mxu0 0.0
        %2858 = vmatpush1.xpose.msra.mxu0 0.0
        %2859 = vmatprep.subr.mxu0 0.0
        %2860 = vmatpush1.xpose.msra.mxu0 0.0
        %2861 = vmatprep.subr.mxu0 0.0
        %2862 = vmatpush1.xpose.msra.mxu0 0.0
        %2863 = vmatprep.subr.mxu0 0.0
        %2864 = vmatpush1.xpose.msra.mxu0 0.0
        %2865 = vmatprep.subr.mxu0 0.0
        %2866 = vmatpush1.xpose.msra.mxu0 0.0
        %2867 = vmatprep.subr.mxu0 0.0
        %2868 = vmatpush1.xpose.msra.mxu0 0.0
        %2869 = vmatprep.subr.mxu0 0.0
        %2870 = vmatpush1.xpose.msra.mxu0 0.0
        %2871 = vmatprep.subr.mxu0 0.0
        %2872 = vmatpush1.xpose.msra.mxu0 %v2839
        %2873 = vmatprep.subr.mxu0 0.0
        %2874 = vmatpush2.xpose.msra.mxu0 0.0
        %2875 = vmatprep.subr.mxu0 0.0
        %2876 = vmatpush2.xpose.msra.mxu0 0.0
        %2877 = vmatprep.subr.mxu0 0.0
        %2878 = vmatpush2.xpose.msra.mxu0 0.0
        %2879 = vmatprep.subr.mxu0 0.0
        %2880 = vmatpush2.xpose.msra.mxu0 0.0
        %2881 = vmatprep.subr.mxu0 0.0
        %2882 = vmatpush2.xpose.msra.mxu0 0.0
        %2883 = vmatprep.subr.mxu0 0.0
        %2884 = vmatpush2.xpose.msra.mxu0 0.0
        %2885 = vmatprep.subr.mxu0 0.0
        %2886 = vmatpush2.xpose.msra.mxu0 0.0
        %2887 = vmatprep.subr.mxu0 0.0
        %2888 = vmatpush2.xpose.msra.mxu0 0.0
        %2889 = vmatprep.subr.mxu0 0.0
        %2890 = vmatpush2.xpose.msra.mxu0 0.0
        %2891 = vmatprep.subr.mxu0 0.0
        %2892 = vmatpush2.xpose.msra.mxu0 0.0
        %2893 = vmatprep.subr.mxu0 0.0
        %2894 = vmatpush2.xpose.msra.mxu0 0.0
        %2895 = vmatprep.subr.mxu0 0.0
        %2896 = vmatpush2.xpose.msra.mxu0 0.0
        %2897 = vmatprep.subr.mxu0 0.0
        %2898 = vmatpush2.xpose.msra.mxu0 0.0
        %2899 = vmatprep.subr.mxu0 0.0
        %2900 = vmatpush2.xpose.msra.mxu0 0.0
        %2901 = vmatprep.subr.mxu0 0.0
        %2902 = vmatpush2.xpose.msra.mxu0 0.0
        %2903 = vmatprep.subr.mxu0 0.0
        %2904 = vmatpush2.xpose.msra.mxu0 0.0
        %2905 = vmatprep.mubr.f32.mxu0 0.0
        %2906 = vmatmul.mubr.f32.gmra.mxu0 %v2836
        %v2907 = vpop.f32.mrf.mxu0
        %v2908 = vadd.f32 0.0, %v2907
        %v2909 = vpop.f32.mrf.mxu0
        %2910 = vdwg.mxu0
        %v2912 = vsel %vm2834, %v1053, 0
        %v2915 = vsel %vm2834, %v1767, 0
        %2917 = vmatprep.subr.mxu0 0.0
        %2918 = vmatpush1.xpose.msra.mxu0 0.0
        %2919 = vmatprep.subr.mxu0 0.0
        %2920 = vmatpush1.xpose.msra.mxu0 0.0
        %2921 = vmatprep.subr.mxu0 0.0
        %2922 = vmatpush1.xpose.msra.mxu0 0.0
        %2923 = vmatprep.subr.mxu0 0.0
        %2924 = vmatpush1.xpose.msra.mxu0 0.0
        %2925 = vmatprep.subr.mxu0 0.0
        %2926 = vmatpush1.xpose.msra.mxu0 0.0
        %2927 = vmatprep.subr.mxu0 0.0
        %2928 = vmatpush1.xpose.msra.mxu0 0.0
        %2929 = vmatprep.subr.mxu0 0.0
        %2930 = vmatpush1.xpose.msra.mxu0 0.0
        %2931 = vmatprep.subr.mxu0 0.0
        %2932 = vmatpush1.xpose.msra.mxu0 0.0
        %2933 = vmatprep.subr.mxu0 0.0
        %2934 = vmatpush1.xpose.msra.mxu0 0.0
        %2935 = vmatprep.subr.mxu0 0.0
        %2936 = vmatpush1.xpose.msra.mxu0 0.0
        %2937 = vmatprep.subr.mxu0 0.0
        %2938 = vmatpush1.xpose.msra.mxu0 0.0
        %2939 = vmatprep.subr.mxu0 0.0
        %2940 = vmatpush1.xpose.msra.mxu0 0.0
        %2941 = vmatprep.subr.mxu0 0.0
        %2942 = vmatpush1.xpose.msra.mxu0 0.0
        %2943 = vmatprep.subr.mxu0 0.0
        %2944 = vmatpush1.xpose.msra.mxu0 0.0
        %2945 = vmatprep.subr.mxu0 0.0
        %2946 = vmatpush1.xpose.msra.mxu0 0.0
        %2947 = vmatprep.subr.mxu0 0.0
        %2948 = vmatpush1.xpose.msra.mxu0 %v2915
        %2949 = vmatprep.subr.mxu0 0.0
        %2950 = vmatpush2.xpose.msra.mxu0 0.0
        %2951 = vmatprep.subr.mxu0 0.0
        %2952 = vmatpush2.xpose.msra.mxu0 0.0
        %2953 = vmatprep.subr.mxu0 0.0
        %2954 = vmatpush2.xpose.msra.mxu0 0.0
        %2955 = vmatprep.subr.mxu0 0.0
        %2956 = vmatpush2.xpose.msra.mxu0 0.0
        %2957 = vmatprep.subr.mxu0 0.0
        %2958 = vmatpush2.xpose.msra.mxu0 0.0
        %2959 = vmatprep.subr.mxu0 0.0
        %2960 = vmatpush2.xpose.msra.mxu0 0.0
        %2961 = vmatprep.subr.mxu0 0.0
        %2962 = vmatpush2.xpose.msra.mxu0 0.0
        %2963 = vmatprep.subr.mxu0 0.0
        %2964 = vmatpush2.xpose.msra.mxu0 0.0
        %2965 = vmatprep.subr.mxu0 0.0
        %2966 = vmatpush2.xpose.msra.mxu0 0.0
        %2967 = vmatprep.subr.mxu0 0.0
        %2968 = vmatpush2.xpose.msra.mxu0 0.0
        %2969 = vmatprep.subr.mxu0 0.0
        %2970 = vmatpush2.xpose.msra.mxu0 0.0
        %2971 = vmatprep.subr.mxu0 0.0
        %2972 = vmatpush2.xpose.msra.mxu0 0.0
        %2973 = vmatprep.subr.mxu0 0.0
        %2974 = vmatpush2.xpose.msra.mxu0 0.0
        %2975 = vmatprep.subr.mxu0 0.0
        %2976 = vmatpush2.xpose.msra.mxu0 0.0
        %2977 = vmatprep.subr.mxu0 0.0
        %2978 = vmatpush2.xpose.msra.mxu0 0.0
        %2979 = vmatprep.subr.mxu0 0.0
        %2980 = vmatpush2.xpose.msra.mxu0 0.0
        %2981 = vmatprep.mubr.f32.mxu0 0.0
        %2982 = vmatmul.mubr.f32.gmra.mxu0 %v2912
        %v2983 = vpop.f32.mrf.mxu0
        %v2984 = vadd.f32 0.0, %v2983
        %v2985 = vpop.f32.mrf.mxu0
        %2986 = vdwg.mxu0
        %v2988 = vsel %vm2834, %v1123, 0
        %v2991 = vsel %vm2834, %v1837, 0
        %2993 = vmatprep.subr.mxu0 0.0
        %2994 = vmatpush1.xpose.msra.mxu0 0.0
        %2995 = vmatprep.subr.mxu0 0.0
        %2996 = vmatpush1.xpose.msra.mxu0 0.0
        %2997 = vmatprep.subr.mxu0 0.0
        %2998 = vmatpush1.xpose.msra.mxu0 0.0
        %2999 = vmatprep.subr.mxu0 0.0
        %3000 = vmatpush1.xpose.msra.mxu0 0.0
        %3001 = vmatprep.subr.mxu0 0.0
        %3002 = vmatpush1.xpose.msra.mxu0 0.0
        %3003 = vmatprep.subr.mxu0 0.0
        %3004 = vmatpush1.xpose.msra.mxu0 0.0
        %3005 = vmatprep.subr.mxu0 0.0
        %3006 = vmatpush1.xpose.msra.mxu0 0.0
        %3007 = vmatprep.subr.mxu0 0.0
        %3008 = vmatpush1.xpose.msra.mxu0 0.0
        %3009 = vmatprep.subr.mxu0 0.0
        %3010 = vmatpush1.xpose.msra.mxu0 0.0
        %3011 = vmatprep.subr.mxu0 0.0
        %3012 = vmatpush1.xpose.msra.mxu0 0.0
        %3013 = vmatprep.subr.mxu0 0.0
        %3014 = vmatpush1.xpose.msra.mxu0 0.0
        %3015 = vmatprep.subr.mxu0 0.0
        %3016 = vmatpush1.xpose.msra.mxu0 0.0
        %3017 = vmatprep.subr.mxu0 0.0
        %3018 = vmatpush1.xpose.msra.mxu0 0.0
        %3019 = vmatprep.subr.mxu0 0.0
        %3020 = vmatpush1.xpose.msra.mxu0 0.0
        %3021 = vmatprep.subr.mxu0 0.0
        %3022 = vmatpush1.xpose.msra.mxu0 0.0
        %3023 = vmatprep.subr.mxu0 0.0
        %3024 = vmatpush1.xpose.msra.mxu0 %v2991
        %3025 = vmatprep.subr.mxu0 0.0
        %3026 = vmatpush2.xpose.msra.mxu0 0.0
        %3027 = vmatprep.subr.mxu0 0.0
        %3028 = vmatpush2.xpose.msra.mxu0 0.0
        %3029 = vmatprep.subr.mxu0 0.0
        %3030 = vmatpush2.xpose.msra.mxu0 0.0
        %3031 = vmatprep.subr.mxu0 0.0
        %3032 = vmatpush2.xpose.msra.mxu0 0.0
        %3033 = vmatprep.subr.mxu0 0.0
        %3034 = vmatpush2.xpose.msra.mxu0 0.0
        %3035 = vmatprep.subr.mxu0 0.0
        %3036 = vmatpush2.xpose.msra.mxu0 0.0
        %3037 = vmatprep.subr.mxu0 0.0
        %3038 = vmatpush2.xpose.msra.mxu0 0.0
        %3039 = vmatprep.subr.mxu0 0.0
        %3040 = vmatpush2.xpose.msra.mxu0 0.0
        %3041 = vmatprep.subr.mxu0 0.0
        %3042 = vmatpush2.xpose.msra.mxu0 0.0
        %3043 = vmatprep.subr.mxu0 0.0
        %3044 = vmatpush2.xpose.msra.mxu0 0.0
        %3045 = vmatprep.subr.mxu0 0.0
        %3046 = vmatpush2.xpose.msra.mxu0 0.0
        %3047 = vmatprep.subr.mxu0 0.0
        %3048 = vmatpush2.xpose.msra.mxu0 0.0
        %3049 = vmatprep.subr.mxu0 0.0
        %3050 = vmatpush2.xpose.msra.mxu0 0.0
        %3051 = vmatprep.subr.mxu0 0.0
        %3052 = vmatpush2.xpose.msra.mxu0 0.0
        %3053 = vmatprep.subr.mxu0 0.0
        %3054 = vmatpush2.xpose.msra.mxu0 0.0
        %3055 = vmatprep.subr.mxu0 0.0
        %3056 = vmatpush2.xpose.msra.mxu0 0.0
        %3057 = vmatprep.mubr.f32.mxu0 0.0
        %3058 = vmatmul.mubr.f32.gmra.mxu0 %v2988
        %v3059 = vpop.f32.mrf.mxu0
        %v3060 = vadd.f32 0.0, %v3059
        %v3061 = vpop.f32.mrf.mxu0
        %3062 = vdwg.mxu0
        %v3064 = vsel %vm2834, %v1193, 0
        %v3067 = vsel %vm2834, %v1907, 0
        %3069 = vmatprep.subr.mxu0 0.0
        %3070 = vmatpush1.xpose.msra.mxu0 0.0
        %3071 = vmatprep.subr.mxu0 0.0
        %3072 = vmatpush1.xpose.msra.mxu0 0.0
        %3073 = vmatprep.subr.mxu0 0.0
        %3074 = vmatpush1.xpose.msra.mxu0 0.0
        %3075 = vmatprep.subr.mxu0 0.0
        %3076 = vmatpush1.xpose.msra.mxu0 0.0
        %3077 = vmatprep.subr.mxu0 0.0
        %3078 = vmatpush1.xpose.msra.mxu0 0.0
        %3079 = vmatprep.subr.mxu0 0.0
        %3080 = vmatpush1.xpose.msra.mxu0 0.0
        %3081 = vmatprep.subr.mxu0 0.0
        %3082 = vmatpush1.xpose.msra.mxu0 0.0
        %3083 = vmatprep.subr.mxu0 0.0
        %3084 = vmatpush1.xpose.msra.mxu0 0.0
        %3085 = vmatprep.subr.mxu0 0.0
        %3086 = vmatpush1.xpose.msra.mxu0 0.0
        %3087 = vmatprep.subr.mxu0 0.0
        %3088 = vmatpush1.xpose.msra.mxu0 0.0
        %3089 = vmatprep.subr.mxu0 0.0
        %3090 = vmatpush1.xpose.msra.mxu0 0.0
        %3091 = vmatprep.subr.mxu0 0.0
        %3092 = vmatpush1.xpose.msra.mxu0 0.0
        %3093 = vmatprep.subr.mxu0 0.0
        %3094 = vmatpush1.xpose.msra.mxu0 0.0
        %3095 = vmatprep.subr.mxu0 0.0
        %3096 = vmatpush1.xpose.msra.mxu0 0.0
        %3097 = vmatprep.subr.mxu0 0.0
        %3098 = vmatpush1.xpose.msra.mxu0 0.0
        %3099 = vmatprep.subr.mxu0 0.0
        %3100 = vmatpush1.xpose.msra.mxu0 %v3067
        %3101 = vmatprep.subr.mxu0 0.0
        %3102 = vmatpush2.xpose.msra.mxu0 0.0
        %3103 = vmatprep.subr.mxu0 0.0
        %3104 = vmatpush2.xpose.msra.mxu0 0.0
        %3105 = vmatprep.subr.mxu0 0.0
        %3106 = vmatpush2.xpose.msra.mxu0 0.0
        %3107 = vmatprep.subr.mxu0 0.0
        %3108 = vmatpush2.xpose.msra.mxu0 0.0
        %3109 = vmatprep.subr.mxu0 0.0
        %3110 = vmatpush2.xpose.msra.mxu0 0.0
        %3111 = vmatprep.subr.mxu0 0.0
        %3112 = vmatpush2.xpose.msra.mxu0 0.0
        %3113 = vmatprep.subr.mxu0 0.0
        %3114 = vmatpush2.xpose.msra.mxu0 0.0
        %3115 = vmatprep.subr.mxu0 0.0
        %3116 = vmatpush2.xpose.msra.mxu0 0.0
        %3117 = vmatprep.subr.mxu0 0.0
        %3118 = vmatpush2.xpose.msra.mxu0 0.0
        %3119 = vmatprep.subr.mxu0 0.0
        %3120 = vmatpush2.xpose.msra.mxu0 0.0
        %3121 = vmatprep.subr.mxu0 0.0
        %3122 = vmatpush2.xpose.msra.mxu0 0.0
        %3123 = vmatprep.subr.mxu0 0.0
        %3124 = vmatpush2.xpose.msra.mxu0 0.0
        %3125 = vmatprep.subr.mxu0 0.0
        %3126 = vmatpush2.xpose.msra.mxu0 0.0
        %3127 = vmatprep.subr.mxu0 0.0
        %3128 = vmatpush2.xpose.msra.mxu0 0.0
        %3129 = vmatprep.subr.mxu0 0.0
        %3130 = vmatpush2.xpose.msra.mxu0 0.0
        %3131 = vmatprep.subr.mxu0 0.0
        %3132 = vmatpush2.xpose.msra.mxu0 0.0
        %3133 = vmatprep.mubr.f32.mxu0 0.0
        %3134 = vmatmul.mubr.f32.gmra.mxu0 %v3064
        %v3135 = vpop.f32.mrf.mxu0
        %v3136 = vadd.f32 0.0, %v3135
        %v3137 = vpop.f32.mrf.mxu0
        %3138 = vdwg.mxu0
        %v3140 = vsel %vm2834, %v1263, 0
        %v3143 = vsel %vm2834, %v1977, 0
        %3145 = vmatprep.subr.mxu0 0.0
        %3146 = vmatpush1.xpose.msra.mxu0 0.0
        %3147 = vmatprep.subr.mxu0 0.0
        %3148 = vmatpush1.xpose.msra.mxu0 0.0
        %3149 = vmatprep.subr.mxu0 0.0
        %3150 = vmatpush1.xpose.msra.mxu0 0.0
        %3151 = vmatprep.subr.mxu0 0.0
        %3152 = vmatpush1.xpose.msra.mxu0 0.0
        %3153 = vmatprep.subr.mxu0 0.0
        %3154 = vmatpush1.xpose.msra.mxu0 0.0
        %3155 = vmatprep.subr.mxu0 0.0
        %3156 = vmatpush1.xpose.msra.mxu0 0.0
        %3157 = vmatprep.subr.mxu0 0.0
        %3158 = vmatpush1.xpose.msra.mxu0 0.0
        %3159 = vmatprep.subr.mxu0 0.0
        %3160 = vmatpush1.xpose.msra.mxu0 0.0
        %3161 = vmatprep.subr.mxu0 0.0
        %3162 = vmatpush1.xpose.msra.mxu0 0.0
        %3163 = vmatprep.subr.mxu0 0.0
        %3164 = vmatpush1.xpose.msra.mxu0 0.0
        %3165 = vmatprep.subr.mxu0 0.0
        %3166 = vmatpush1.xpose.msra.mxu0 0.0
        %3167 = vmatprep.subr.mxu0 0.0
        %3168 = vmatpush1.xpose.msra.mxu0 0.0
        %3169 = vmatprep.subr.mxu0 0.0
        %3170 = vmatpush1.xpose.msra.mxu0 0.0
        %3171 = vmatprep.subr.mxu0 0.0
        %3172 = vmatpush1.xpose.msra.mxu0 0.0
        %3173 = vmatprep.subr.mxu0 0.0
        %3174 = vmatpush1.xpose.msra.mxu0 0.0
        %3175 = vmatprep.subr.mxu0 0.0
        %3176 = vmatpush1.xpose.msra.mxu0 %v3143
        %3177 = vmatprep.subr.mxu0 0.0
        %3178 = vmatpush2.xpose.msra.mxu0 0.0
        %3179 = vmatprep.subr.mxu0 0.0
        %3180 = vmatpush2.xpose.msra.mxu0 0.0
        %3181 = vmatprep.subr.mxu0 0.0
        %3182 = vmatpush2.xpose.msra.mxu0 0.0
        %3183 = vmatprep.subr.mxu0 0.0
        %3184 = vmatpush2.xpose.msra.mxu0 0.0
        %3185 = vmatprep.subr.mxu0 0.0
        %3186 = vmatpush2.xpose.msra.mxu0 0.0
        %3187 = vmatprep.subr.mxu0 0.0
        %3188 = vmatpush2.xpose.msra.mxu0 0.0
        %3189 = vmatprep.subr.mxu0 0.0
        %3190 = vmatpush2.xpose.msra.mxu0 0.0
        %3191 = vmatprep.subr.mxu0 0.0
        %3192 = vmatpush2.xpose.msra.mxu0 0.0
        %3193 = vmatprep.subr.mxu0 0.0
        %3194 = vmatpush2.xpose.msra.mxu0 0.0
        %3195 = vmatprep.subr.mxu0 0.0
        %3196 = vmatpush2.xpose.msra.mxu0 0.0
        %3197 = vmatprep.subr.mxu0 0.0
        %3198 = vmatpush2.xpose.msra.mxu0 0.0
        %3199 = vmatprep.subr.mxu0 0.0
        %3200 = vmatpush2.xpose.msra.mxu0 0.0
        %3201 = vmatprep.subr.mxu0 0.0
        %3202 = vmatpush2.xpose.msra.mxu0 0.0
        %3203 = vmatprep.subr.mxu0 0.0
        %3204 = vmatpush2.xpose.msra.mxu0 0.0
        %3205 = vmatprep.subr.mxu0 0.0
        %3206 = vmatpush2.xpose.msra.mxu0 0.0
        %3207 = vmatprep.subr.mxu0 0.0
        %3208 = vmatpush2.xpose.msra.mxu0 0.0
        %3209 = vmatprep.mubr.f32.mxu0 0.0
        %3210 = vmatmul.mubr.f32.gmra.mxu0 %v3140
        %v3211 = vpop.f32.mrf.mxu0
        %v3212 = vadd.f32 0.0, %v3211
        %v3213 = vpop.f32.mrf.mxu0
        %3214 = vdwg.mxu0
        %v3216 = vsel %vm2834, %v1333, 0
        %v3219 = vsel %vm2834, %v2047, 0
        %3221 = vmatprep.subr.mxu0 0.0
        %3222 = vmatpush1.xpose.msra.mxu0 0.0
        %3223 = vmatprep.subr.mxu0 0.0
        %3224 = vmatpush1.xpose.msra.mxu0 0.0
        %3225 = vmatprep.subr.mxu0 0.0
        %3226 = vmatpush1.xpose.msra.mxu0 0.0
        %3227 = vmatprep.subr.mxu0 0.0
        %3228 = vmatpush1.xpose.msra.mxu0 0.0
        %3229 = vmatprep.subr.mxu0 0.0
        %3230 = vmatpush1.xpose.msra.mxu0 0.0
        %3231 = vmatprep.subr.mxu0 0.0
        %3232 = vmatpush1.xpose.msra.mxu0 0.0
        %3233 = vmatprep.subr.mxu0 0.0
        %3234 = vmatpush1.xpose.msra.mxu0 0.0
        %3235 = vmatprep.subr.mxu0 0.0
        %3236 = vmatpush1.xpose.msra.mxu0 0.0
        %3237 = vmatprep.subr.mxu0 0.0
        %3238 = vmatpush1.xpose.msra.mxu0 0.0
        %3239 = vmatprep.subr.mxu0 0.0
        %3240 = vmatpush1.xpose.msra.mxu0 0.0
        %3241 = vmatprep.subr.mxu0 0.0
        %3242 = vmatpush1.xpose.msra.mxu0 0.0
        %3243 = vmatprep.subr.mxu0 0.0
        %3244 = vmatpush1.xpose.msra.mxu0 0.0
        %3245 = vmatprep.subr.mxu0 0.0
        %3246 = vmatpush1.xpose.msra.mxu0 0.0
        %3247 = vmatprep.subr.mxu0 0.0
        %3248 = vmatpush1.xpose.msra.mxu0 0.0
        %3249 = vmatprep.subr.mxu0 0.0
        %3250 = vmatpush1.xpose.msra.mxu0 0.0
        %3251 = vmatprep.subr.mxu0 0.0
        %3252 = vmatpush1.xpose.msra.mxu0 %v3219
        %3253 = vmatprep.subr.mxu0 0.0
        %3254 = vmatpush2.xpose.msra.mxu0 0.0
        %3255 = vmatprep.subr.mxu0 0.0
        %3256 = vmatpush2.xpose.msra.mxu0 0.0
        %3257 = vmatprep.subr.mxu0 0.0
        %3258 = vmatpush2.xpose.msra.mxu0 0.0
        %3259 = vmatprep.subr.mxu0 0.0
        %3260 = vmatpush2.xpose.msra.mxu0 0.0
        %3261 = vmatprep.subr.mxu0 0.0
        %3262 = vmatpush2.xpose.msra.mxu0 0.0
        %3263 = vmatprep.subr.mxu0 0.0
        %3264 = vmatpush2.xpose.msra.mxu0 0.0
        %3265 = vmatprep.subr.mxu0 0.0
        %3266 = vmatpush2.xpose.msra.mxu0 0.0
        %3267 = vmatprep.subr.mxu0 0.0
        %3268 = vmatpush2.xpose.msra.mxu0 0.0
        %3269 = vmatprep.subr.mxu0 0.0
        %3270 = vmatpush2.xpose.msra.mxu0 0.0
        %3271 = vmatprep.subr.mxu0 0.0
        %3272 = vmatpush2.xpose.msra.mxu0 0.0
        %3273 = vmatprep.subr.mxu0 0.0
        %3274 = vmatpush2.xpose.msra.mxu0 0.0
        %3275 = vmatprep.subr.mxu0 0.0
        %3276 = vmatpush2.xpose.msra.mxu0 0.0
        %3277 = vmatprep.subr.mxu0 0.0
        %3278 = vmatpush2.xpose.msra.mxu0 0.0
        %3279 = vmatprep.subr.mxu0 0.0
        %3280 = vmatpush2.xpose.msra.mxu0 0.0
        %3281 = vmatprep.subr.mxu0 0.0
        %3282 = vmatpush2.xpose.msra.mxu0 0.0
        %3283 = vmatprep.subr.mxu0 0.0
        %3284 = vmatpush2.xpose.msra.mxu0 0.0
        %3285 = vmatprep.mubr.f32.mxu0 0.0
        %3286 = vmatmul.mubr.f32.gmra.mxu0 %v3216
        %v3287 = vpop.f32.mrf.mxu0
        %v3288 = vadd.f32 0.0, %v3287
        %v3289 = vpop.f32.mrf.mxu0
        %3290 = vdwg.mxu0
        %v3292 = vsel %vm2834, %v1403, 0
        %v3295 = vsel %vm2834, %v2117, 0
        %3297 = vmatprep.subr.mxu0 0.0
        %3298 = vmatpush1.xpose.msra.mxu0 0.0
        %3299 = vmatprep.subr.mxu0 0.0
        %3300 = vmatpush1.xpose.msra.mxu0 0.0
        %3301 = vmatprep.subr.mxu0 0.0
        %3302 = vmatpush1.xpose.msra.mxu0 0.0
        %3303 = vmatprep.subr.mxu0 0.0
        %3304 = vmatpush1.xpose.msra.mxu0 0.0
        %3305 = vmatprep.subr.mxu0 0.0
        %3306 = vmatpush1.xpose.msra.mxu0 0.0
        %3307 = vmatprep.subr.mxu0 0.0
        %3308 = vmatpush1.xpose.msra.mxu0 0.0
        %3309 = vmatprep.subr.mxu0 0.0
        %3310 = vmatpush1.xpose.msra.mxu0 0.0
        %3311 = vmatprep.subr.mxu0 0.0
        %3312 = vmatpush1.xpose.msra.mxu0 0.0
        %3313 = vmatprep.subr.mxu0 0.0
        %3314 = vmatpush1.xpose.msra.mxu0 0.0
        %3315 = vmatprep.subr.mxu0 0.0
        %3316 = vmatpush1.xpose.msra.mxu0 0.0
        %3317 = vmatprep.subr.mxu0 0.0
        %3318 = vmatpush1.xpose.msra.mxu0 0.0
        %3319 = vmatprep.subr.mxu0 0.0
        %3320 = vmatpush1.xpose.msra.mxu0 0.0
        %3321 = vmatprep.subr.mxu0 0.0
        %3322 = vmatpush1.xpose.msra.mxu0 0.0
        %3323 = vmatprep.subr.mxu0 0.0
        %3324 = vmatpush1.xpose.msra.mxu0 0.0
        %3325 = vmatprep.subr.mxu0 0.0
        %3326 = vmatpush1.xpose.msra.mxu0 0.0
        %3327 = vmatprep.subr.mxu0 0.0
        %3328 = vmatpush1.xpose.msra.mxu0 %v3295
        %3329 = vmatprep.subr.mxu0 0.0
        %3330 = vmatpush2.xpose.msra.mxu0 0.0
        %3331 = vmatprep.subr.mxu0 0.0
        %3332 = vmatpush2.xpose.msra.mxu0 0.0
        %3333 = vmatprep.subr.mxu0 0.0
        %3334 = vmatpush2.xpose.msra.mxu0 0.0
        %3335 = vmatprep.subr.mxu0 0.0
        %3336 = vmatpush2.xpose.msra.mxu0 0.0
        %3337 = vmatprep.subr.mxu0 0.0
        %3338 = vmatpush2.xpose.msra.mxu0 0.0
        %3339 = vmatprep.subr.mxu0 0.0
        %3340 = vmatpush2.xpose.msra.mxu0 0.0
        %3341 = vmatprep.subr.mxu0 0.0
        %3342 = vmatpush2.xpose.msra.mxu0 0.0
        %3343 = vmatprep.subr.mxu0 0.0
        %3344 = vmatpush2.xpose.msra.mxu0 0.0
        %3345 = vmatprep.subr.mxu0 0.0
        %3346 = vmatpush2.xpose.msra.mxu0 0.0
        %3347 = vmatprep.subr.mxu0 0.0
        %3348 = vmatpush2.xpose.msra.mxu0 0.0
        %3349 = vmatprep.subr.mxu0 0.0
        %3350 = vmatpush2.xpose.msra.mxu0 0.0
        %3351 = vmatprep.subr.mxu0 0.0
        %3352 = vmatpush2.xpose.msra.mxu0 0.0
        %3353 = vmatprep.subr.mxu0 0.0
        %3354 = vmatpush2.xpose.msra.mxu0 0.0
        %3355 = vmatprep.subr.mxu0 0.0
        %3356 = vmatpush2.xpose.msra.mxu0 0.0
        %3357 = vmatprep.subr.mxu0 0.0
        %3358 = vmatpush2.xpose.msra.mxu0 0.0
        %3359 = vmatprep.subr.mxu0 0.0
        %3360 = vmatpush2.xpose.msra.mxu0 0.0
        %3361 = vmatprep.mubr.f32.mxu0 0.0
        %3362 = vmatmul.mubr.f32.gmra.mxu0 %v3292
        %v3363 = vpop.f32.mrf.mxu0
        %v3364 = vadd.f32 0.0, %v3363
        %v3365 = vpop.f32.mrf.mxu0
        %3366 = vdwg.mxu0
        %vm3367 = vcmask 27648
        %v3368 = vsel %vm3367, %v2908, -inf
        %3369 = vmax.xlane.f32.xlu0 %v3368
        %v3370 = vpop.xlane.xlu0 %3369
        %v3371 = vsel %vm3367, %v2984, -inf
        %3372 = vmax.xlane.f32.xlu0 %v3371
        %v3373 = vpop.xlane.xlu0 %3372
        %v3374 = vsel %vm3367, %v3060, -inf
        %3375 = vmax.xlane.f32.xlu0 %v3374
        %v3376 = vpop.xlane.xlu0 %3375
        %v3377 = vsel %vm3367, %v3136, -inf
        %3378 = vmax.xlane.f32.xlu0 %v3377
        %v3379 = vpop.xlane.xlu0 %3378
        %v3380 = vsel %vm3367, %v3212, -inf
        %3381 = vmax.xlane.f32.xlu0 %v3380
        %v3382 = vpop.xlane.xlu0 %3381
        %v3383 = vsel %vm3367, %v3288, -inf
        %3384 = vmax.xlane.f32.xlu0 %v3383
        %v3385 = vpop.xlane.xlu0 %3384
        %v3386 = vsel %vm3367, %v3364, -inf
        %3387 = vmax.xlane.f32.xlu0 %v3386
        %v3388 = vpop.xlane.xlu0 %3387
        %v3389 = vsub.f32 %v2908, %v3370
        %v3390 = vsub.f32 %v2984, %v3373
        %v3391 = vsub.f32 %v3060, %v3376
        %v3392 = vsub.f32 %v3136, %v3379
        %v3393 = vsub.f32 %v3212, %v3382
        %v3394 = vsub.f32 %v3288, %v3385
        %v3395 = vsub.f32 %v3364, %v3388
        %v3396 = vmul.f32 %v3389, 1.442695
        %v3397 = vpow.pop %v3396
        %v3398 = vmul.f32 %v3390, 1.442695
        %v3399 = vpow.pop %v3398
        %v3400 = vmul.f32 %v3391, 1.442695
        %v3401 = vpow.pop %v3400
        %v3402 = vmul.f32 %v3392, 1.442695
        %v3403 = vpow.pop %v3402
        %v3404 = vmul.f32 %v3393, 1.442695
        %v3405 = vpow.pop %v3404
        %v3406 = vmul.f32 %v3394, 1.442695
        %v3407 = vpow.pop %v3406
        %v3408 = vmul.f32 %v3395, 1.442695
        %v3409 = vpow.pop %v3408
        %v3410 = vsel %vm3367, %v3397, 0.0
        %3411 = vadd.xlane.f32.xlu0 %v3410
        %v3412 = vpop.xlane.xlu0 %3411
        %v3413 = vsel %vm3367, %v3399, 0.0
        %3414 = vadd.xlane.f32.xlu0 %v3413
        %v3415 = vpop.xlane.xlu0 %3414
        %v3416 = vsel %vm3367, %v3401, 0.0
        %3417 = vadd.xlane.f32.xlu0 %v3416
        %v3418 = vpop.xlane.xlu0 %3417
        %v3419 = vsel %vm3367, %v3403, 0.0
        %3420 = vadd.xlane.f32.xlu0 %v3419
        %v3421 = vpop.xlane.xlu0 %3420
        %v3422 = vsel %vm3367, %v3405, 0.0
        %3423 = vadd.xlane.f32.xlu0 %v3422
        %v3424 = vpop.xlane.xlu0 %3423
        %v3425 = vsel %vm3367, %v3407, 0.0
        %3426 = vadd.xlane.f32.xlu0 %v3425
        %v3427 = vpop.xlane.xlu0 %3426
        %v3428 = vsel %vm3367, %v3409, 0.0
        %3429 = vadd.xlane.f32.xlu0 %v3428
        %v3430 = vpop.xlane.xlu0 %3429
        %v3431 = vrcp.pop %v3412
        %v3432 = vrcp.pop %v3415
        %v3433 = vrcp.pop %v3418
        %v3434 = vrcp.pop %v3421
        %v3435 = vrcp.pop %v3424
        %v3436 = vrcp.pop %v3427
        %v3437 = vrcp.pop %v3430
        %v3438 = vmul.f32 %v3397, %v3431
        %v3439 = vmul.f32 %v3399, %v3432
        %v3440 = vmul.f32 %v3401, %v3433
        %v3441 = vmul.f32 %v3403, %v3434
        %v3442 = vmul.f32 %v3405, %v3435
        %v3443 = vmul.f32 %v3407, %v3436
        %v3444 = vmul.f32 %v3409, %v3437
        %vm3445 = vcmask 31744
        %v3447 = vsel %vm3445, %v3438, 0
        %vm3449 = vcmask 1043456
        %v3451 = vsel %vm3449, %v2411, 0
        %3453 = vmatprep.subr.mxu0 0.0
        %3454 = vmatpush1.msra.mxu0 0.0
        %3455 = vmatprep.subr.mxu0 0.0
        %3456 = vmatpush1.msra.mxu0 0.0
        %3457 = vmatprep.subr.mxu0 0.0
        %3458 = vmatpush1.msra.mxu0 0.0
        %3459 = vmatprep.subr.mxu0 0.0
        %3460 = vmatpush1.msra.mxu0 0.0
        %3461 = vmatprep.subr.mxu0 0.0
        %3462 = vmatpush1.msra.mxu0 0.0
        %3463 = vmatprep.subr.mxu0 0.0
        %3464 = vmatpush1.msra.mxu0 0.0
        %3465 = vmatprep.subr.mxu0 0.0
        %3466 = vmatpush1.msra.mxu0 0.0
        %3467 = vmatprep.subr.mxu0 0.0
        %3468 = vmatpush1.msra.mxu0 0.0
        %3469 = vmatprep.subr.mxu0 0.0
        %3470 = vmatpush1.msra.mxu0 0.0
        %3471 = vmatprep.subr.mxu0 0.0
        %3472 = vmatpush1.msra.mxu0 0.0
        %3473 = vmatprep.subr.mxu0 0.0
        %3474 = vmatpush1.msra.mxu0 0.0
        %3475 = vmatprep.subr.mxu0 0.0
        %3476 = vmatpush1.msra.mxu0 0.0
        %3477 = vmatprep.subr.mxu0 0.0
        %3478 = vmatpush1.msra.mxu0 0.0
        %3479 = vmatprep.subr.mxu0 0.0
        %3480 = vmatpush1.msra.mxu0 0.0
        %3481 = vmatprep.subr.mxu0 0.0
        %3482 = vmatpush1.msra.mxu0 0.0
        %3483 = vmatprep.subr.mxu0 0.0
        %3484 = vmatpush1.msra.mxu0 %v3451
        %3485 = vmatprep.subr.mxu0 0.0
        %3486 = vmatpush2.msra.mxu0 0.0
        %3487 = vmatprep.subr.mxu0 0.0
        %3488 = vmatpush2.msra.mxu0 0.0
        %3489 = vmatprep.subr.mxu0 0.0
        %3490 = vmatpush2.msra.mxu0 0.0
        %3491 = vmatprep.subr.mxu0 0.0
        %3492 = vmatpush2.msra.mxu0 0.0
        %3493 = vmatprep.subr.mxu0 0.0
        %3494 = vmatpush2.msra.mxu0 0.0
        %3495 = vmatprep.subr.mxu0 0.0
        %3496 = vmatpush2.msra.mxu0 0.0
        %3497 = vmatprep.subr.mxu0 0.0
        %3498 = vmatpush2.msra.mxu0 0.0
        %3499 = vmatprep.subr.mxu0 0.0
        %3500 = vmatpush2.msra.mxu0 0.0
        %3501 = vmatprep.subr.mxu0 0.0
        %3502 = vmatpush2.msra.mxu0 0.0
        %3503 = vmatprep.subr.mxu0 0.0
        %3504 = vmatpush2.msra.mxu0 0.0
        %3505 = vmatprep.subr.mxu0 0.0
        %3506 = vmatpush2.msra.mxu0 0.0
        %3507 = vmatprep.subr.mxu0 0.0
        %3508 = vmatpush2.msra.mxu0 0.0
        %3509 = vmatprep.subr.mxu0 0.0
        %3510 = vmatpush2.msra.mxu0 0.0
        %3511 = vmatprep.subr.mxu0 0.0
        %3512 = vmatpush2.msra.mxu0 0.0
        %3513 = vmatprep.subr.mxu0 0.0
        %3514 = vmatpush2.msra.mxu0 0.0
        %3515 = vmatprep.subr.mxu0 0.0
        %3516 = vmatpush2.msra.mxu0 0.0
        %3517 = vmatprep.mubr.f32.mxu0 0.0
        %3518 = vmatmul.mubr.f32.gmra.mxu0 %v3447
        %v3519 = vpop.f32.mrf.mxu0
        %v3520 = vadd.f32 0.0, %v3519
        %v3521 = vpop.f32.mrf.mxu0
        %3522 = vdwg.mxu0
        %v3524 = vsel %vm3445, %v3439, 0
        %v3527 = vsel %vm3449, %v2481, 0
        %3529 = vmatprep.subr.mxu0 0.0
        %3530 = vmatpush1.msra.mxu0 0.0
        %3531 = vmatprep.subr.mxu0 0.0
        %3532 = vmatpush1.msra.mxu0 0.0
        %3533 = vmatprep.subr.mxu0 0.0
        %3534 = vmatpush1.msra.mxu0 0.0
        %3535 = vmatprep.subr.mxu0 0.0
        %3536 = vmatpush1.msra.mxu0 0.0
        %3537 = vmatprep.subr.mxu0 0.0
        %3538 = vmatpush1.msra.mxu0 0.0
        %3539 = vmatprep.subr.mxu0 0.0
        %3540 = vmatpush1.msra.mxu0 0.0
        %3541 = vmatprep.subr.mxu0 0.0
        %3542 = vmatpush1.msra.mxu0 0.0
        %3543 = vmatprep.subr.mxu0 0.0
        %3544 = vmatpush1.msra.mxu0 0.0
        %3545 = vmatprep.subr.mxu0 0.0
        %3546 = vmatpush1.msra.mxu0 0.0
        %3547 = vmatprep.subr.mxu0 0.0
        %3548 = vmatpush1.msra.mxu0 0.0
        %3549 = vmatprep.subr.mxu0 0.0
        %3550 = vmatpush1.msra.mxu0 0.0
        %3551 = vmatprep.subr.mxu0 0.0
        %3552 = vmatpush1.msra.mxu0 0.0
        %3553 = vmatprep.subr.mxu0 0.0
        %3554 = vmatpush1.msra.mxu0 0.0
        %3555 = vmatprep.subr.mxu0 0.0
        %3556 = vmatpush1.msra.mxu0 0.0
        %3557 = vmatprep.subr.mxu0 0.0
        %3558 = vmatpush1.msra.mxu0 0.0
        %3559 = vmatprep.subr.mxu0 0.0
        %3560 = vmatpush1.msra.mxu0 %v3527
        %3561 = vmatprep.subr.mxu0 0.0
        %3562 = vmatpush2.msra.mxu0 0.0
        %3563 = vmatprep.subr.mxu0 0.0
        %3564 = vmatpush2.msra.mxu0 0.0
        %3565 = vmatprep.subr.mxu0 0.0
        %3566 = vmatpush2.msra.mxu0 0.0
        %3567 = vmatprep.subr.mxu0 0.0
        %3568 = vmatpush2.msra.mxu0 0.0
        %3569 = vmatprep.subr.mxu0 0.0
        %3570 = vmatpush2.msra.mxu0 0.0
        %3571 = vmatprep.subr.mxu0 0.0
        %3572 = vmatpush2.msra.mxu0 0.0
        %3573 = vmatprep.subr.mxu0 0.0
        %3574 = vmatpush2.msra.mxu0 0.0
        %3575 = vmatprep.subr.mxu0 0.0
        %3576 = vmatpush2.msra.mxu0 0.0
        %3577 = vmatprep.subr.mxu0 0.0
        %3578 = vmatpush2.msra.mxu0 0.0
        %3579 = vmatprep.subr.mxu0 0.0
        %3580 = vmatpush2.msra.mxu0 0.0
        %3581 = vmatprep.subr.mxu0 0.0
        %3582 = vmatpush2.msra.mxu0 0.0
        %3583 = vmatprep.subr.mxu0 0.0
        %3584 = vmatpush2.msra.mxu0 0.0
        %3585 = vmatprep.subr.mxu0 0.0
        %3586 = vmatpush2.msra.mxu0 0.0
        %3587 = vmatprep.subr.mxu0 0.0
        %3588 = vmatpush2.msra.mxu0 0.0
        %3589 = vmatprep.subr.mxu0 0.0
        %3590 = vmatpush2.msra.mxu0 0.0
        %3591 = vmatprep.subr.mxu0 0.0
        %3592 = vmatpush2.msra.mxu0 0.0
        %3593 = vmatprep.mubr.f32.mxu0 0.0
        %3594 = vmatmul.mubr.f32.gmra.mxu0 %v3524
        %v3595 = vpop.f32.mrf.mxu0
        %v3596 = vadd.f32 0.0, %v3595
        %v3597 = vpop.f32.mrf.mxu0
        %3598 = vdwg.mxu0
        %v3600 = vsel %vm3445, %v3440, 0
        %v3603 = vsel %vm3449, %v2551, 0
        %3605 = vmatprep.subr.mxu0 0.0
        %3606 = vmatpush1.msra.mxu0 0.0
        %3607 = vmatprep.subr.mxu0 0.0
        %3608 = vmatpush1.msra.mxu0 0.0
        %3609 = vmatprep.subr.mxu0 0.0
        %3610 = vmatpush1.msra.mxu0 0.0
        %3611 = vmatprep.subr.mxu0 0.0
        %3612 = vmatpush1.msra.mxu0 0.0
        %3613 = vmatprep.subr.mxu0 0.0
        %3614 = vmatpush1.msra.mxu0 0.0
        %3615 = vmatprep.subr.mxu0 0.0
        %3616 = vmatpush1.msra.mxu0 0.0
        %3617 = vmatprep.subr.mxu0 0.0
        %3618 = vmatpush1.msra.mxu0 0.0
        %3619 = vmatprep.subr.mxu0 0.0
        %3620 = vmatpush1.msra.mxu0 0.0
        %3621 = vmatprep.subr.mxu0 0.0
        %3622 = vmatpush1.msra.mxu0 0.0
        %3623 = vmatprep.subr.mxu0 0.0
        %3624 = vmatpush1.msra.mxu0 0.0
        %3625 = vmatprep.subr.mxu0 0.0
        %3626 = vmatpush1.msra.mxu0 0.0
        %3627 = vmatprep.subr.mxu0 0.0
        %3628 = vmatpush1.msra.mxu0 0.0
        %3629 = vmatprep.subr.mxu0 0.0
        %3630 = vmatpush1.msra.mxu0 0.0
        %3631 = vmatprep.subr.mxu0 0.0
        %3632 = vmatpush1.msra.mxu0 0.0
        %3633 = vmatprep.subr.mxu0 0.0
        %3634 = vmatpush1.msra.mxu0 0.0
        %3635 = vmatprep.subr.mxu0 0.0
        %3636 = vmatpush1.msra.mxu0 %v3603
        %3637 = vmatprep.subr.mxu0 0.0
        %3638 = vmatpush2.msra.mxu0 0.0
        %3639 = vmatprep.subr.mxu0 0.0
        %3640 = vmatpush2.msra.mxu0 0.0
        %3641 = vmatprep.subr.mxu0 0.0
        %3642 = vmatpush2.msra.mxu0 0.0
        %3643 = vmatprep.subr.mxu0 0.0
        %3644 = vmatpush2.msra.mxu0 0.0
        %3645 = vmatprep.subr.mxu0 0.0
        %3646 = vmatpush2.msra.mxu0 0.0
        %3647 = vmatprep.subr.mxu0 0.0
        %3648 = vmatpush2.msra.mxu0 0.0
        %3649 = vmatprep.subr.mxu0 0.0
        %3650 = vmatpush2.msra.mxu0 0.0
        %3651 = vmatprep.subr.mxu0 0.0
        %3652 = vmatpush2.msra.mxu0 0.0
        %3653 = vmatprep.subr.mxu0 0.0
        %3654 = vmatpush2.msra.mxu0 0.0
        %3655 = vmatprep.subr.mxu0 0.0
        %3656 = vmatpush2.msra.mxu0 0.0
        %3657 = vmatprep.subr.mxu0 0.0
        %3658 = vmatpush2.msra.mxu0 0.0
        %3659 = vmatprep.subr.mxu0 0.0
        %3660 = vmatpush2.msra.mxu0 0.0
        %3661 = vmatprep.subr.mxu0 0.0
        %3662 = vmatpush2.msra.mxu0 0.0
        %3663 = vmatprep.subr.mxu0 0.0
        %3664 = vmatpush2.msra.mxu0 0.0
        %3665 = vmatprep.subr.mxu0 0.0
        %3666 = vmatpush2.msra.mxu0 0.0
        %3667 = vmatprep.subr.mxu0 0.0
        %3668 = vmatpush2.msra.mxu0 0.0
        %3669 = vmatprep.mubr.f32.mxu0 0.0
        %3670 = vmatmul.mubr.f32.gmra.mxu0 %v3600
        %v3671 = vpop.f32.mrf.mxu0
        %v3672 = vadd.f32 0.0, %v3671
        %v3673 = vpop.f32.mrf.mxu0
        %3674 = vdwg.mxu0
        %v3676 = vsel %vm3445, %v3441, 0
        %v3679 = vsel %vm3449, %v2621, 0
        %3681 = vmatprep.subr.mxu0 0.0
        %3682 = vmatpush1.msra.mxu0 0.0
        %3683 = vmatprep.subr.mxu0 0.0
        %3684 = vmatpush1.msra.mxu0 0.0
        %3685 = vmatprep.subr.mxu0 0.0
        %3686 = vmatpush1.msra.mxu0 0.0
        %3687 = vmatprep.subr.mxu0 0.0
        %3688 = vmatpush1.msra.mxu0 0.0
        %3689 = vmatprep.subr.mxu0 0.0
        %3690 = vmatpush1.msra.mxu0 0.0
        %3691 = vmatprep.subr.mxu0 0.0
        %3692 = vmatpush1.msra.mxu0 0.0
        %3693 = vmatprep.subr.mxu0 0.0
        %3694 = vmatpush1.msra.mxu0 0.0
        %3695 = vmatprep.subr.mxu0 0.0
        %3696 = vmatpush1.msra.mxu0 0.0
        %3697 = vmatprep.subr.mxu0 0.0
        %3698 = vmatpush1.msra.mxu0 0.0
        %3699 = vmatprep.subr.mxu0 0.0
        %3700 = vmatpush1.msra.mxu0 0.0
        %3701 = vmatprep.subr.mxu0 0.0
        %3702 = vmatpush1.msra.mxu0 0.0
        %3703 = vmatprep.subr.mxu0 0.0
        %3704 = vmatpush1.msra.mxu0 0.0
        %3705 = vmatprep.subr.mxu0 0.0
        %3706 = vmatpush1.msra.mxu0 0.0
        %3707 = vmatprep.subr.mxu0 0.0
        %3708 = vmatpush1.msra.mxu0 0.0
        %3709 = vmatprep.subr.mxu0 0.0
        %3710 = vmatpush1.msra.mxu0 0.0
        %3711 = vmatprep.subr.mxu0 0.0
        %3712 = vmatpush1.msra.mxu0 %v3679
        %3713 = vmatprep.subr.mxu0 0.0
        %3714 = vmatpush2.msra.mxu0 0.0
        %3715 = vmatprep.subr.mxu0 0.0
        %3716 = vmatpush2.msra.mxu0 0.0
        %3717 = vmatprep.subr.mxu0 0.0
        %3718 = vmatpush2.msra.mxu0 0.0
        %3719 = vmatprep.subr.mxu0 0.0
        %3720 = vmatpush2.msra.mxu0 0.0
        %3721 = vmatprep.subr.mxu0 0.0
        %3722 = vmatpush2.msra.mxu0 0.0
        %3723 = vmatprep.subr.mxu0 0.0
        %3724 = vmatpush2.msra.mxu0 0.0
        %3725 = vmatprep.subr.mxu0 0.0
        %3726 = vmatpush2.msra.mxu0 0.0
        %3727 = vmatprep.subr.mxu0 0.0
        %3728 = vmatpush2.msra.mxu0 0.0
        %3729 = vmatprep.subr.mxu0 0.0
        %3730 = vmatpush2.msra.mxu0 0.0
        %3731 = vmatprep.subr.mxu0 0.0
        %3732 = vmatpush2.msra.mxu0 0.0
        %3733 = vmatprep.subr.mxu0 0.0
        %3734 = vmatpush2.msra.mxu0 0.0
        %3735 = vmatprep.subr.mxu0 0.0
        %3736 = vmatpush2.msra.mxu0 0.0
        %3737 = vmatprep.subr.mxu0 0.0
        %3738 = vmatpush2.msra.mxu0 0.0
        %3739 = vmatprep.subr.mxu0 0.0
        %3740 = vmatpush2.msra.mxu0 0.0
        %3741 = vmatprep.subr.mxu0 0.0
        %3742 = vmatpush2.msra.mxu0 0.0
        %3743 = vmatprep.subr.mxu0 0.0
        %3744 = vmatpush2.msra.mxu0 0.0
        %3745 = vmatprep.mubr.f32.mxu0 0.0
        %3746 = vmatmul.mubr.f32.gmra.mxu0 %v3676
        %v3747 = vpop.f32.mrf.mxu0
        %v3748 = vadd.f32 0.0, %v3747
        %v3749 = vpop.f32.mrf.mxu0
        %3750 = vdwg.mxu0
        %v3752 = vsel %vm3445, %v3442, 0
        %v3755 = vsel %vm3449, %v2691, 0
        %3757 = vmatprep.subr.mxu0 0.0
        %3758 = vmatpush1.msra.mxu0 0.0
        %3759 = vmatprep.subr.mxu0 0.0
        %3760 = vmatpush1.msra.mxu0 0.0
        %3761 = vmatprep.subr.mxu0 0.0
        %3762 = vmatpush1.msra.mxu0 0.0
        %3763 = vmatprep.subr.mxu0 0.0
        %3764 = vmatpush1.msra.mxu0 0.0
        %3765 = vmatprep.subr.mxu0 0.0
        %3766 = vmatpush1.msra.mxu0 0.0
        %3767 = vmatprep.subr.mxu0 0.0
        %3768 = vmatpush1.msra.mxu0 0.0
        %3769 = vmatprep.subr.mxu0 0.0
        %3770 = vmatpush1.msra.mxu0 0.0
        %3771 = vmatprep.subr.mxu0 0.0
        %3772 = vmatpush1.msra.mxu0 0.0
        %3773 = vmatprep.subr.mxu0 0.0
        %3774 = vmatpush1.msra.mxu0 0.0
        %3775 = vmatprep.subr.mxu0 0.0
        %3776 = vmatpush1.msra.mxu0 0.0
        %3777 = vmatprep.subr.mxu0 0.0
        %3778 = vmatpush1.msra.mxu0 0.0
        %3779 = vmatprep.subr.mxu0 0.0
        %3780 = vmatpush1.msra.mxu0 0.0
        %3781 = vmatprep.subr.mxu0 0.0
        %3782 = vmatpush1.msra.mxu0 0.0
        %3783 = vmatprep.subr.mxu0 0.0
        %3784 = vmatpush1.msra.mxu0 0.0
        %3785 = vmatprep.subr.mxu0 0.0
        %3786 = vmatpush1.msra.mxu0 0.0
        %3787 = vmatprep.subr.mxu0 0.0
        %3788 = vmatpush1.msra.mxu0 %v3755
        %3789 = vmatprep.subr.mxu0 0.0
        %3790 = vmatpush2.msra.mxu0 0.0
        %3791 = vmatprep.subr.mxu0 0.0
        %3792 = vmatpush2.msra.mxu0 0.0
        %3793 = vmatprep.subr.mxu0 0.0
        %3794 = vmatpush2.msra.mxu0 0.0
        %3795 = vmatprep.subr.mxu0 0.0
        %3796 = vmatpush2.msra.mxu0 0.0
        %3797 = vmatprep.subr.mxu0 0.0
        %3798 = vmatpush2.msra.mxu0 0.0
        %3799 = vmatprep.subr.mxu0 0.0
        %3800 = vmatpush2.msra.mxu0 0.0
        %3801 = vmatprep.subr.mxu0 0.0
        %3802 = vmatpush2.msra.mxu0 0.0
        %3803 = vmatprep.subr.mxu0 0.0
        %3804 = vmatpush2.msra.mxu0 0.0
        %3805 = vmatprep.subr.mxu0 0.0
        %3806 = vmatpush2.msra.mxu0 0.0
        %3807 = vmatprep.subr.mxu0 0.0
        %3808 = vmatpush2.msra.mxu0 0.0
        %3809 = vmatprep.subr.mxu0 0.0
        %3810 = vmatpush2.msra.mxu0 0.0
        %3811 = vmatprep.subr.mxu0 0.0
        %3812 = vmatpush2.msra.mxu0 0.0
        %3813 = vmatprep.subr.mxu0 0.0
        %3814 = vmatpush2.msra.mxu0 0.0
        %3815 = vmatprep.subr.mxu0 0.0
        %3816 = vmatpush2.msra.mxu0 0.0
        %3817 = vmatprep.subr.mxu0 0.0
        %3818 = vmatpush2.msra.mxu0 0.0
        %3819 = vmatprep.subr.mxu0 0.0
        %3820 = vmatpush2.msra.mxu0 0.0
        %3821 = vmatprep.mubr.f32.mxu0 0.0
        %3822 = vmatmul.mubr.f32.gmra.mxu0 %v3752
        %v3823 = vpop.f32.mrf.mxu0
        %v3824 = vadd.f32 0.0, %v3823
        %v3825 = vpop.f32.mrf.mxu0
        %3826 = vdwg.mxu0
        %v3828 = vsel %vm3445, %v3443, 0
        %v3831 = vsel %vm3449, %v2761, 0
        %3833 = vmatprep.subr.mxu0 0.0
        %3834 = vmatpush1.msra.mxu0 0.0
        %3835 = vmatprep.subr.mxu0 0.0
        %3836 = vmatpush1.msra.mxu0 0.0
        %3837 = vmatprep.subr.mxu0 0.0
        %3838 = vmatpush1.msra.mxu0 0.0
        %3839 = vmatprep.subr.mxu0 0.0
        %3840 = vmatpush1.msra.mxu0 0.0
        %3841 = vmatprep.subr.mxu0 0.0
        %3842 = vmatpush1.msra.mxu0 0.0
        %3843 = vmatprep.subr.mxu0 0.0
        %3844 = vmatpush1.msra.mxu0 0.0
        %3845 = vmatprep.subr.mxu0 0.0
        %3846 = vmatpush1.msra.mxu0 0.0
        %3847 = vmatprep.subr.mxu0 0.0
        %3848 = vmatpush1.msra.mxu0 0.0
        %3849 = vmatprep.subr.mxu0 0.0
        %3850 = vmatpush1.msra.mxu0 0.0
        %3851 = vmatprep.subr.mxu0 0.0
        %3852 = vmatpush1.msra.mxu0 0.0
        %3853 = vmatprep.subr.mxu0 0.0
        %3854 = vmatpush1.msra.mxu0 0.0
        %3855 = vmatprep.subr.mxu0 0.0
        %3856 = vmatpush1.msra.mxu0 0.0
        %3857 = vmatprep.subr.mxu0 0.0
        %3858 = vmatpush1.msra.mxu0 0.0
        %3859 = vmatprep.subr.mxu0 0.0
        %3860 = vmatpush1.msra.mxu0 0.0
        %3861 = vmatprep.subr.mxu0 0.0
        %3862 = vmatpush1.msra.mxu0 0.0
        %3863 = vmatprep.subr.mxu0 0.0
        %3864 = vmatpush1.msra.mxu0 %v3831
        %3865 = vmatprep.subr.mxu0 0.0
        %3866 = vmatpush2.msra.mxu0 0.0
        %3867 = vmatprep.subr.mxu0 0.0
        %3868 = vmatpush2.msra.mxu0 0.0
        %3869 = vmatprep.subr.mxu0 0.0
        %3870 = vmatpush2.msra.mxu0 0.0
        %3871 = vmatprep.subr.mxu0 0.0
        %3872 = vmatpush2.msra.mxu0 0.0
        %3873 = vmatprep.subr.mxu0 0.0
        %3874 = vmatpush2.msra.mxu0 0.0
        %3875 = vmatprep.subr.mxu0 0.0
        %3876 = vmatpush2.msra.mxu0 0.0
        %3877 = vmatprep.subr.mxu0 0.0
        %3878 = vmatpush2.msra.mxu0 0.0
        %3879 = vmatprep.subr.mxu0 0.0
        %3880 = vmatpush2.msra.mxu0 0.0
        %3881 = vmatprep.subr.mxu0 0.0
        %3882 = vmatpush2.msra.mxu0 0.0
        %3883 = vmatprep.subr.mxu0 0.0
        %3884 = vmatpush2.msra.mxu0 0.0
        %3885 = vmatprep.subr.mxu0 0.0
        %3886 = vmatpush2.msra.mxu0 0.0
        %3887 = vmatprep.subr.mxu0 0.0
        %3888 = vmatpush2.msra.mxu0 0.0
        %3889 = vmatprep.subr.mxu0 0.0
        %3890 = vmatpush2.msra.mxu0 0.0
        %3891 = vmatprep.subr.mxu0 0.0
        %3892 = vmatpush2.msra.mxu0 0.0
        %3893 = vmatprep.subr.mxu0 0.0
        %3894 = vmatpush2.msra.mxu0 0.0
        %3895 = vmatprep.subr.mxu0 0.0
        %3896 = vmatpush2.msra.mxu0 0.0
        %3897 = vmatprep.mubr.f32.mxu0 0.0
        %3898 = vmatmul.mubr.f32.gmra.mxu0 %v3828
        %v3899 = vpop.f32.mrf.mxu0
        %v3900 = vadd.f32 0.0, %v3899
        %v3901 = vpop.f32.mrf.mxu0
        %3902 = vdwg.mxu0
        %v3904 = vsel %vm3445, %v3444, 0
        %v3907 = vsel %vm3449, %v2831, 0
        %3909 = vmatprep.subr.mxu0 0.0
        %3910 = vmatpush1.msra.mxu0 0.0
        %3911 = vmatprep.subr.mxu0 0.0
        %3912 = vmatpush1.msra.mxu0 0.0
        %3913 = vmatprep.subr.mxu0 0.0
        %3914 = vmatpush1.msra.mxu0 0.0
        %3915 = vmatprep.subr.mxu0 0.0
        %3916 = vmatpush1.msra.mxu0 0.0
        %3917 = vmatprep.subr.mxu0 0.0
        %3918 = vmatpush1.msra.mxu0 0.0
        %3919 = vmatprep.subr.mxu0 0.0
        %3920 = vmatpush1.msra.mxu0 0.0
        %3921 = vmatprep.subr.mxu0 0.0
        %3922 = vmatpush1.msra.mxu0 0.0
        %3923 = vmatprep.subr.mxu0 0.0
        %3924 = vmatpush1.msra.mxu0 0.0
        %3925 = vmatprep.subr.mxu0 0.0
        %3926 = vmatpush1.msra.mxu0 0.0
        %3927 = vmatprep.subr.mxu0 0.0
        %3928 = vmatpush1.msra.mxu0 0.0
        %3929 = vmatprep.subr.mxu0 0.0
        %3930 = vmatpush1.msra.mxu0 0.0
        %3931 = vmatprep.subr.mxu0 0.0
        %3932 = vmatpush1.msra.mxu0 0.0
        %3933 = vmatprep.subr.mxu0 0.0
        %3934 = vmatpush1.msra.mxu0 0.0
        %3935 = vmatprep.subr.mxu0 0.0
        %3936 = vmatpush1.msra.mxu0 0.0
        %3937 = vmatprep.subr.mxu0 0.0
        %3938 = vmatpush1.msra.mxu0 0.0
        %3939 = vmatprep.subr.mxu0 0.0
        %3940 = vmatpush1.msra.mxu0 %v3907
        %3941 = vmatprep.subr.mxu0 0.0
        %3942 = vmatpush2.msra.mxu0 0.0
        %3943 = vmatprep.subr.mxu0 0.0
        %3944 = vmatpush2.msra.mxu0 0.0
        %3945 = vmatprep.subr.mxu0 0.0
        %3946 = vmatpush2.msra.mxu0 0.0
        %3947 = vmatprep.subr.mxu0 0.0
        %3948 = vmatpush2.msra.mxu0 0.0
        %3949 = vmatprep.subr.mxu0 0.0
        %3950 = vmatpush2.msra.mxu0 0.0
        %3951 = vmatprep.subr.mxu0 0.0
        %3952 = vmatpush2.msra.mxu0 0.0
        %3953 = vmatprep.subr.mxu0 0.0
        %3954 = vmatpush2.msra.mxu0 0.0
        %3955 = vmatprep.subr.mxu0 0.0
        %3956 = vmatpush2.msra.mxu0 0.0
        %3957 = vmatprep.subr.mxu0 0.0
        %3958 = vmatpush2.msra.mxu0 0.0
        %3959 = vmatprep.subr.mxu0 0.0
        %3960 = vmatpush2.msra.mxu0 0.0
        %3961 = vmatprep.subr.mxu0 0.0
        %3962 = vmatpush2.msra.mxu0 0.0
        %3963 = vmatprep.subr.mxu0 0.0
        %3964 = vmatpush2.msra.mxu0 0.0
        %3965 = vmatprep.subr.mxu0 0.0
        %3966 = vmatpush2.msra.mxu0 0.0
        %3967 = vmatprep.subr.mxu0 0.0
        %3968 = vmatpush2.msra.mxu0 0.0
        %3969 = vmatprep.subr.mxu0 0.0
        %3970 = vmatpush2.msra.mxu0 0.0
        %3971 = vmatprep.subr.mxu0 0.0
        %3972 = vmatpush2.msra.mxu0 0.0
        %3973 = vmatprep.mubr.f32.mxu0 0.0
        %3974 = vmatmul.mubr.f32.gmra.mxu0 %v3904
        %v3975 = vpop.f32.mrf.mxu0
        %v3976 = vadd.f32 0.0, %v3975
        %v3977 = vpop.f32.mrf.mxu0
        %3978 = vdwg.mxu0
        %v3979 = vld [vmem:[%s634] sm:$0xff]
        %v3980 = vld [vmem:[%s634 + $0x8] sm:$0xff]
        %v3981 = vld [vmem:[%s634 + $0x10] sm:$0xff]
        %v3982 = vld [vmem:[%s634 + $0x18] sm:$0xff]
        %v3983 = vld [vmem:[%s634 + $0x20] sm:$0xff]
        %v3984 = vld [vmem:[%s634 + $0x28] sm:$0xff]
        %v3985 = vld [vmem:[%s634 + $0x30] sm:$0xf]
        %v3986 = vld [vmem:[%s634 + $0x38] sm:$0xf]
        %v3987 = vld [vmem:[%s634 + $0x40] sm:$0xff]
        %v3988 = vld [vmem:[%s634 + $0x48] sm:$0xff]
        %v3989 = vld [vmem:[%s634 + $0x50] sm:$0xff]
        %v3990 = vld [vmem:[%s634 + $0x58] sm:$0xff]
        %v3991 = vld [vmem:[%s634 + $0x60] sm:$0xff]
        %v3992 = vld [vmem:[%s634 + $0x68] sm:$0xff]
        %v3993 = vld [vmem:[%s634 + $0x70] sm:$0xf]
        %v3994 = vld [vmem:[%s634 + $0x78] sm:$0xf]
        %v3995 = vld [vmem:[%s634 + $0x80] sm:$0xff]
        %v3996 = vld [vmem:[%s634 + $0x88] sm:$0xff]
        %v3997 = vld [vmem:[%s634 + $0x90] sm:$0xff]
        %v3998 = vld [vmem:[%s634 + $0x98] sm:$0xff]
        %v3999 = vld [vmem:[%s634 + $0xa0] sm:$0xff]
        %v4000 = vld [vmem:[%s634 + $0xa8] sm:$0xff]
        %v4001 = vld [vmem:[%s634 + $0xb0] sm:$0xf]
        %v4002 = vld [vmem:[%s634 + $0xb8] sm:$0xf]
        %v4003 = vld [vmem:[%s634 + $0xc0] sm:$0xff]
        %v4004 = vld [vmem:[%s634 + $0xc8] sm:$0xff]
        %v4005 = vld [vmem:[%s634 + $0xd0] sm:$0xff]
        %v4006 = vld [vmem:[%s634 + $0xd8] sm:$0xff]
        %v4007 = vld [vmem:[%s634 + $0xe0] sm:$0xff]
        %v4008 = vld [vmem:[%s634 + $0xe8] sm:$0xff]
        %v4009 = vld [vmem:[%s634 + $0xf0] sm:$0xf]
        %v4010 = vld [vmem:[%s634 + $0xf8] sm:$0xf]
        %v4011 = vld [vmem:[%s634 + $0x100] sm:$0xff]
        %v4012 = vld [vmem:[%s634 + $0x108] sm:$0xff]
        %v4013 = vld [vmem:[%s634 + $0x110] sm:$0xff]
        %v4014 = vld [vmem:[%s634 + $0x118] sm:$0xff]
        %v4015 = vld [vmem:[%s634 + $0x120] sm:$0xff]
        %v4016 = vld [vmem:[%s634 + $0x128] sm:$0xff]
        %v4017 = vld [vmem:[%s634 + $0x130] sm:$0xf]
        %v4018 = vld [vmem:[%s634 + $0x138] sm:$0xf]
        %v4019 = vld [vmem:[%s634 + $0x140] sm:$0xff]
        %v4020 = vld [vmem:[%s634 + $0x148] sm:$0xff]
        %v4021 = vld [vmem:[%s634 + $0x150] sm:$0xff]
        %v4022 = vld [vmem:[%s634 + $0x158] sm:$0xff]
        %v4023 = vld [vmem:[%s634 + $0x160] sm:$0xff]
        %v4024 = vld [vmem:[%s634 + $0x168] sm:$0xff]
        %v4025 = vld [vmem:[%s634 + $0x170] sm:$0xf]
        %v4026 = vld [vmem:[%s634 + $0x178] sm:$0xf]
        %v4027 = vld [vmem:[%s634 + $0x180] sm:$0xff]
        %v4028 = vld [vmem:[%s634 + $0x188] sm:$0xff]
        %v4029 = vld [vmem:[%s634 + $0x190] sm:$0xff]
        %v4030 = vld [vmem:[%s634 + $0x198] sm:$0xff]
        %v4031 = vld [vmem:[%s634 + $0x1a0] sm:$0xff]
        %v4032 = vld [vmem:[%s634 + $0x1a8] sm:$0xff]
        %v4033 = vld [vmem:[%s634 + $0x1b0] sm:$0xf]
        %v4034 = vld [vmem:[%s634 + $0x1b8] sm:$0xf]
        %v4036 = vsel %vm2834, %v3520, 0
        %v4039 = vsel %vm3449, %v3985, 0
        %v4042 = vsel %vm3449, %v3986, 0
        %4044 = vmatprep.subr.mxu0 0.0
        %4045 = vmatpush1.msra.mxu0 0.0
        %4046 = vmatprep.subr.mxu0 0.0
        %4047 = vmatpush1.msra.mxu0 0.0
        %4048 = vmatprep.subr.mxu0 0.0
        %4049 = vmatpush1.msra.mxu0 0.0
        %4050 = vmatprep.subr.mxu0 0.0
        %4051 = vmatpush1.msra.mxu0 0.0
        %4052 = vmatprep.subr.mxu0 0.0
        %4053 = vmatpush1.msra.mxu0 0.0
        %4054 = vmatprep.subr.mxu0 0.0
        %4055 = vmatpush1.msra.mxu0 0.0
        %4056 = vmatprep.subr.mxu0 0.0
        %4057 = vmatpush1.msra.mxu0 0.0
        %4058 = vmatprep.subr.mxu0 0.0
        %4059 = vmatpush1.msra.mxu0 0.0
        %4060 = vmatprep.subr.mxu0 0.0
        %4061 = vmatpush1.msra.mxu0 0.0
        %4062 = vmatprep.subr.mxu0 0.0
        %4063 = vmatpush1.msra.mxu0 0.0
        %4064 = vmatprep.subr.mxu0 0.0
        %4065 = vmatpush1.msra.mxu0 0.0
        %4066 = vmatprep.subr.mxu0 0.0
        %4067 = vmatpush1.msra.mxu0 0.0
        %4068 = vmatprep.subr.mxu0 %v4042
        %4069 = vmatpush1.msra.mxu0 %v4039
        %4070 = vmatprep.subr.mxu0 %v3984
        %4071 = vmatpush1.msra.mxu0 %v3983
        %4072 = vmatprep.subr.mxu0 %v3982
        %4073 = vmatpush1.msra.mxu0 %v3981
        %4074 = vmatprep.subr.mxu0 %v3980
        %4075 = vmatpush1.msra.mxu0 %v3979
        %4076 = vmatprep.subr.mxu0 0.0
        %4077 = vmatpush2.msra.mxu0 0.0
        %4078 = vmatprep.subr.mxu0 0.0
        %4079 = vmatpush2.msra.mxu0 0.0
        %4080 = vmatprep.subr.mxu0 0.0
        %4081 = vmatpush2.msra.mxu0 0.0
        %4082 = vmatprep.subr.mxu0 0.0
        %4083 = vmatpush2.msra.mxu0 0.0
        %4084 = vmatprep.subr.mxu0 0.0
        %4085 = vmatpush2.msra.mxu0 0.0
        %4086 = vmatprep.subr.mxu0 0.0
        %4087 = vmatpush2.msra.mxu0 0.0
        %4088 = vmatprep.subr.mxu0 0.0
        %4089 = vmatpush2.msra.mxu0 0.0
        %4090 = vmatprep.subr.mxu0 0.0
        %4091 = vmatpush2.msra.mxu0 0.0
        %4092 = vmatprep.subr.mxu0 0.0
        %4093 = vmatpush2.msra.mxu0 0.0
        %4094 = vmatprep.subr.mxu0 0.0
        %4095 = vmatpush2.msra.mxu0 0.0
        %4096 = vmatprep.subr.mxu0 0.0
        %4097 = vmatpush2.msra.mxu0 0.0
        %4098 = vmatprep.subr.mxu0 0.0
        %4099 = vmatpush2.msra.mxu0 0.0
        %4100 = vmatprep.subr.mxu0 0.0
        %4101 = vmatpush2.msra.mxu0 0.0
        %4102 = vmatprep.subr.mxu0 0.0
        %4103 = vmatpush2.msra.mxu0 0.0
        %4104 = vmatprep.subr.mxu0 0.0
        %4105 = vmatpush2.msra.mxu0 0.0
        %4106 = vmatprep.subr.mxu0 0.0
        %4107 = vmatpush2.msra.mxu0 0.0
        %4108 = vmatprep.mubr.f32.mxu0 0.0
        %4109 = vmatmul.mubr.f32.gmra.mxu0 %v4036
        %v4110 = vpop.f32.mrf.mxu0
        %v4111 = vadd.f32 0.0, %v4110
        %v4112 = vpop.f32.mrf.mxu0
        %v4113 = vadd.f32 0.0, %v4112
        %4114 = vdwg.mxu0
        %v4116 = vsel %vm2834, %v3596, 0
        %v4119 = vsel %vm3449, %v3993, 0
        %v4122 = vsel %vm3449, %v3994, 0
        %4124 = vmatprep.subr.mxu0 0.0
        %4125 = vmatpush1.msra.mxu0 0.0
        %4126 = vmatprep.subr.mxu0 0.0
        %4127 = vmatpush1.msra.mxu0 0.0
        %4128 = vmatprep.subr.mxu0 0.0
        %4129 = vmatpush1.msra.mxu0 0.0
        %4130 = vmatprep.subr.mxu0 0.0
        %4131 = vmatpush1.msra.mxu0 0.0
        %4132 = vmatprep.subr.mxu0 0.0
        %4133 = vmatpush1.msra.mxu0 0.0
        %4134 = vmatprep.subr.mxu0 0.0
        %4135 = vmatpush1.msra.mxu0 0.0
        %4136 = vmatprep.subr.mxu0 0.0
        %4137 = vmatpush1.msra.mxu0 0.0
        %4138 = vmatprep.subr.mxu0 0.0
        %4139 = vmatpush1.msra.mxu0 0.0
        %4140 = vmatprep.subr.mxu0 0.0
        %4141 = vmatpush1.msra.mxu0 0.0
        %4142 = vmatprep.subr.mxu0 0.0
        %4143 = vmatpush1.msra.mxu0 0.0
        %4144 = vmatprep.subr.mxu0 0.0
        %4145 = vmatpush1.msra.mxu0 0.0
        %4146 = vmatprep.subr.mxu0 0.0
        %4147 = vmatpush1.msra.mxu0 0.0
        %4148 = vmatprep.subr.mxu0 %v4122
        %4149 = vmatpush1.msra.mxu0 %v4119
        %4150 = vmatprep.subr.mxu0 %v3992
        %4151 = vmatpush1.msra.mxu0 %v3991
        %4152 = vmatprep.subr.mxu0 %v3990
        %4153 = vmatpush1.msra.mxu0 %v3989
        %4154 = vmatprep.subr.mxu0 %v3988
        %4155 = vmatpush1.msra.mxu0 %v3987
        %4156 = vmatprep.subr.mxu0 0.0
        %4157 = vmatpush2.msra.mxu0 0.0
        %4158 = vmatprep.subr.mxu0 0.0
        %4159 = vmatpush2.msra.mxu0 0.0
        %4160 = vmatprep.subr.mxu0 0.0
        %4161 = vmatpush2.msra.mxu0 0.0
        %4162 = vmatprep.subr.mxu0 0.0
        %4163 = vmatpush2.msra.mxu0 0.0
        %4164 = vmatprep.subr.mxu0 0.0
        %4165 = vmatpush2.msra.mxu0 0.0
        %4166 = vmatprep.subr.mxu0 0.0
        %4167 = vmatpush2.msra.mxu0 0.0
        %4168 = vmatprep.subr.mxu0 0.0
        %4169 = vmatpush2.msra.mxu0 0.0
        %4170 = vmatprep.subr.mxu0 0.0
        %4171 = vmatpush2.msra.mxu0 0.0
        %4172 = vmatprep.subr.mxu0 0.0
        %4173 = vmatpush2.msra.mxu0 0.0
        %4174 = vmatprep.subr.mxu0 0.0
        %4175 = vmatpush2.msra.mxu0 0.0
        %4176 = vmatprep.subr.mxu0 0.0
        %4177 = vmatpush2.msra.mxu0 0.0
        %4178 = vmatprep.subr.mxu0 0.0
        %4179 = vmatpush2.msra.mxu0 0.0
        %4180 = vmatprep.subr.mxu0 0.0
        %4181 = vmatpush2.msra.mxu0 0.0
        %4182 = vmatprep.subr.mxu0 0.0
        %4183 = vmatpush2.msra.mxu0 0.0
        %4184 = vmatprep.subr.mxu0 0.0
        %4185 = vmatpush2.msra.mxu0 0.0
        %4186 = vmatprep.subr.mxu0 0.0
        %4187 = vmatpush2.msra.mxu0 0.0
        %4188 = vmatprep.mubr.f32.mxu0 0.0
        %4189 = vmatmul.mubr.f32.gmra.mxu0 %v4116
        %v4190 = vpop.f32.mrf.mxu0
        %v4191 = vadd.f32 0.0, %v4190
        %v4192 = vpop.f32.mrf.mxu0
        %v4193 = vadd.f32 0.0, %v4192
        %4194 = vdwg.mxu0
        %v4196 = vsel %vm2834, %v3672, 0
        %v4199 = vsel %vm3449, %v4001, 0
        %v4202 = vsel %vm3449, %v4002, 0
        %4204 = vmatprep.subr.mxu0 0.0
        %4205 = vmatpush1.msra.mxu0 0.0
        %4206 = vmatprep.subr.mxu0 0.0
        %4207 = vmatpush1.msra.mxu0 0.0
        %4208 = vmatprep.subr.mxu0 0.0
        %4209 = vmatpush1.msra.mxu0 0.0
        %4210 = vmatprep.subr.mxu0 0.0
        %4211 = vmatpush1.msra.mxu0 0.0
        %4212 = vmatprep.subr.mxu0 0.0
        %4213 = vmatpush1.msra.mxu0 0.0
        %4214 = vmatprep.subr.mxu0 0.0
        %4215 = vmatpush1.msra.mxu0 0.0
        %4216 = vmatprep.subr.mxu0 0.0
        %4217 = vmatpush1.msra.mxu0 0.0
        %4218 = vmatprep.subr.mxu0 0.0
        %4219 = vmatpush1.msra.mxu0 0.0
        %4220 = vmatprep.subr.mxu0 0.0
        %4221 = vmatpush1.msra.mxu0 0.0
        %4222 = vmatprep.subr.mxu0 0.0
        %4223 = vmatpush1.msra.mxu0 0.0
        %4224 = vmatprep.subr.mxu0 0.0
        %4225 = vmatpush1.msra.mxu0 0.0
        %4226 = vmatprep.subr.mxu0 0.0
        %4227 = vmatpush1.msra.mxu0 0.0
        %4228 = vmatprep.subr.mxu0 %v4202
        %4229 = vmatpush1.msra.mxu0 %v4199
        %4230 = vmatprep.subr.mxu0 %v4000
        %4231 = vmatpush1.msra.mxu0 %v3999
        %4232 = vmatprep.subr.mxu0 %v3998
        %4233 = vmatpush1.msra.mxu0 %v3997
        %4234 = vmatprep.subr.mxu0 %v3996
        %4235 = vmatpush1.msra.mxu0 %v3995
        %4236 = vmatprep.subr.mxu0 0.0
        %4237 = vmatpush2.msra.mxu0 0.0
        %4238 = vmatprep.subr.mxu0 0.0
        %4239 = vmatpush2.msra.mxu0 0.0
        %4240 = vmatprep.subr.mxu0 0.0
        %4241 = vmatpush2.msra.mxu0 0.0
        %4242 = vmatprep.subr.mxu0 0.0
        %4243 = vmatpush2.msra.mxu0 0.0
        %4244 = vmatprep.subr.mxu0 0.0
        %4245 = vmatpush2.msra.mxu0 0.0
        %4246 = vmatprep.subr.mxu0 0.0
        %4247 = vmatpush2.msra.mxu0 0.0
        %4248 = vmatprep.subr.mxu0 0.0
        %4249 = vmatpush2.msra.mxu0 0.0
        %4250 = vmatprep.subr.mxu0 0.0
        %4251 = vmatpush2.msra.mxu0 0.0
        %4252 = vmatprep.subr.mxu0 0.0
        %4253 = vmatpush2.msra.mxu0 0.0
        %4254 = vmatprep.subr.mxu0 0.0
        %4255 = vmatpush2.msra.mxu0 0.0
        %4256 = vmatprep.subr.mxu0 0.0
        %4257 = vmatpush2.msra.mxu0 0.0
        %4258 = vmatprep.subr.mxu0 0.0
        %4259 = vmatpush2.msra.mxu0 0.0
        %4260 = vmatprep.subr.mxu0 0.0
        %4261 = vmatpush2.msra.mxu0 0.0
        %4262 = vmatprep.subr.mxu0 0.0
        %4263 = vmatpush2.msra.mxu0 0.0
        %4264 = vmatprep.subr.mxu0 0.0
        %4265 = vmatpush2.msra.mxu0 0.0
        %4266 = vmatprep.subr.mxu0 0.0
        %4267 = vmatpush2.msra.mxu0 0.0
        %4268 = vmatprep.mubr.f32.mxu0 0.0
        %4269 = vmatmul.mubr.f32.gmra.mxu0 %v4196
        %v4270 = vpop.f32.mrf.mxu0
        %v4271 = vadd.f32 0.0, %v4270
        %v4272 = vpop.f32.mrf.mxu0
        %v4273 = vadd.f32 0.0, %v4272
        %4274 = vdwg.mxu0
        %v4276 = vsel %vm2834, %v3748, 0
        %v4279 = vsel %vm3449, %v4009, 0
        %v4282 = vsel %vm3449, %v4010, 0
        %4284 = vmatprep.subr.mxu0 0.0
        %4285 = vmatpush1.msra.mxu0 0.0
        %4286 = vmatprep.subr.mxu0 0.0
        %4287 = vmatpush1.msra.mxu0 0.0
        %4288 = vmatprep.subr.mxu0 0.0
        %4289 = vmatpush1.msra.mxu0 0.0
        %4290 = vmatprep.subr.mxu0 0.0
        %4291 = vmatpush1.msra.mxu0 0.0
        %4292 = vmatprep.subr.mxu0 0.0
        %4293 = vmatpush1.msra.mxu0 0.0
        %4294 = vmatprep.subr.mxu0 0.0
        %4295 = vmatpush1.msra.mxu0 0.0
        %4296 = vmatprep.subr.mxu0 0.0
        %4297 = vmatpush1.msra.mxu0 0.0
        %4298 = vmatprep.subr.mxu0 0.0
        %4299 = vmatpush1.msra.mxu0 0.0
        %4300 = vmatprep.subr.mxu0 0.0
        %4301 = vmatpush1.msra.mxu0 0.0
        %4302 = vmatprep.subr.mxu0 0.0
        %4303 = vmatpush1.msra.mxu0 0.0
        %4304 = vmatprep.subr.mxu0 0.0
        %4305 = vmatpush1.msra.mxu0 0.0
        %4306 = vmatprep.subr.mxu0 0.0
        %4307 = vmatpush1.msra.mxu0 0.0
        %4308 = vmatprep.subr.mxu0 %v4282
        %4309 = vmatpush1.msra.mxu0 %v4279
        %4310 = vmatprep.subr.mxu0 %v4008
        %4311 = vmatpush1.msra.mxu0 %v4007
        %4312 = vmatprep.subr.mxu0 %v4006
        %4313 = vmatpush1.msra.mxu0 %v4005
        %4314 = vmatprep.subr.mxu0 %v4004
        %4315 = vmatpush1.msra.mxu0 %v4003
        %4316 = vmatprep.subr.mxu0 0.0
        %4317 = vmatpush2.msra.mxu0 0.0
        %4318 = vmatprep.subr.mxu0 0.0
        %4319 = vmatpush2.msra.mxu0 0.0
        %4320 = vmatprep.subr.mxu0 0.0
        %4321 = vmatpush2.msra.mxu0 0.0
        %4322 = vmatprep.subr.mxu0 0.0
        %4323 = vmatpush2.msra.mxu0 0.0
        %4324 = vmatprep.subr.mxu0 0.0
        %4325 = vmatpush2.msra.mxu0 0.0
        %4326 = vmatprep.subr.mxu0 0.0
        %4327 = vmatpush2.msra.mxu0 0.0
        %4328 = vmatprep.subr.mxu0 0.0
        %4329 = vmatpush2.msra.mxu0 0.0
        %4330 = vmatprep.subr.mxu0 0.0
        %4331 = vmatpush2.msra.mxu0 0.0
        %4332 = vmatprep.subr.mxu0 0.0
        %4333 = vmatpush2.msra.mxu0 0.0
        %4334 = vmatprep.subr.mxu0 0.0
        %4335 = vmatpush2.msra.mxu0 0.0
        %4336 = vmatprep.subr.mxu0 0.0
        %4337 = vmatpush2.msra.mxu0 0.0
        %4338 = vmatprep.subr.mxu0 0.0
        %4339 = vmatpush2.msra.mxu0 0.0
        %4340 = vmatprep.subr.mxu0 0.0
        %4341 = vmatpush2.msra.mxu0 0.0
        %4342 = vmatprep.subr.mxu0 0.0
        %4343 = vmatpush2.msra.mxu0 0.0
        %4344 = vmatprep.subr.mxu0 0.0
        %4345 = vmatpush2.msra.mxu0 0.0
        %4346 = vmatprep.subr.mxu0 0.0
        %4347 = vmatpush2.msra.mxu0 0.0
        %4348 = vmatprep.mubr.f32.mxu0 0.0
        %4349 = vmatmul.mubr.f32.gmra.mxu0 %v4276
        %v4350 = vpop.f32.mrf.mxu0
        %v4351 = vadd.f32 0.0, %v4350
        %v4352 = vpop.f32.mrf.mxu0
        %v4353 = vadd.f32 0.0, %v4352
        %4354 = vdwg.mxu0
        %v4356 = vsel %vm2834, %v3824, 0
        %v4359 = vsel %vm3449, %v4017, 0
        %v4362 = vsel %vm3449, %v4018, 0
        %4364 = vmatprep.subr.mxu0 0.0
        %4365 = vmatpush1.msra.mxu0 0.0
        %4366 = vmatprep.subr.mxu0 0.0
        %4367 = vmatpush1.msra.mxu0 0.0
        %4368 = vmatprep.subr.mxu0 0.0
        %4369 = vmatpush1.msra.mxu0 0.0
        %4370 = vmatprep.subr.mxu0 0.0
        %4371 = vmatpush1.msra.mxu0 0.0
        %4372 = vmatprep.subr.mxu0 0.0
        %4373 = vmatpush1.msra.mxu0 0.0
        %4374 = vmatprep.subr.mxu0 0.0
        %4375 = vmatpush1.msra.mxu0 0.0
        %4376 = vmatprep.subr.mxu0 0.0
        %4377 = vmatpush1.msra.mxu0 0.0
        %4378 = vmatprep.subr.mxu0 0.0
        %4379 = vmatpush1.msra.mxu0 0.0
        %4380 = vmatprep.subr.mxu0 0.0
        %4381 = vmatpush1.msra.mxu0 0.0
        %4382 = vmatprep.subr.mxu0 0.0
        %4383 = vmatpush1.msra.mxu0 0.0
        %4384 = vmatprep.subr.mxu0 0.0
        %4385 = vmatpush1.msra.mxu0 0.0
        %4386 = vmatprep.subr.mxu0 0.0
        %4387 = vmatpush1.msra.mxu0 0.0
        %4388 = vmatprep.subr.mxu0 %v4362
        %4389 = vmatpush1.msra.mxu0 %v4359
        %4390 = vmatprep.subr.mxu0 %v4016
        %4391 = vmatpush1.msra.mxu0 %v4015
        %4392 = vmatprep.subr.mxu0 %v4014
        %4393 = vmatpush1.msra.mxu0 %v4013
        %4394 = vmatprep.subr.mxu0 %v4012
        %4395 = vmatpush1.msra.mxu0 %v4011
        %4396 = vmatprep.subr.mxu0 0.0
        %4397 = vmatpush2.msra.mxu0 0.0
        %4398 = vmatprep.subr.mxu0 0.0
        %4399 = vmatpush2.msra.mxu0 0.0
        %4400 = vmatprep.subr.mxu0 0.0
        %4401 = vmatpush2.msra.mxu0 0.0
        %4402 = vmatprep.subr.mxu0 0.0
        %4403 = vmatpush2.msra.mxu0 0.0
        %4404 = vmatprep.subr.mxu0 0.0
        %4405 = vmatpush2.msra.mxu0 0.0
        %4406 = vmatprep.subr.mxu0 0.0
        %4407 = vmatpush2.msra.mxu0 0.0
        %4408 = vmatprep.subr.mxu0 0.0
        %4409 = vmatpush2.msra.mxu0 0.0
        %4410 = vmatprep.subr.mxu0 0.0
        %4411 = vmatpush2.msra.mxu0 0.0
        %4412 = vmatprep.subr.mxu0 0.0
        %4413 = vmatpush2.msra.mxu0 0.0
        %4414 = vmatprep.subr.mxu0 0.0
        %4415 = vmatpush2.msra.mxu0 0.0
        %4416 = vmatprep.subr.mxu0 0.0
        %4417 = vmatpush2.msra.mxu0 0.0
        %4418 = vmatprep.subr.mxu0 0.0
        %4419 = vmatpush2.msra.mxu0 0.0
        %4420 = vmatprep.subr.mxu0 0.0
        %4421 = vmatpush2.msra.mxu0 0.0
        %4422 = vmatprep.subr.mxu0 0.0
        %4423 = vmatpush2.msra.mxu0 0.0
        %4424 = vmatprep.subr.mxu0 0.0
        %4425 = vmatpush2.msra.mxu0 0.0
        %4426 = vmatprep.subr.mxu0 0.0
        %4427 = vmatpush2.msra.mxu0 0.0
        %4428 = vmatprep.mubr.f32.mxu0 0.0
        %4429 = vmatmul.mubr.f32.gmra.mxu0 %v4356
        %v4430 = vpop.f32.mrf.mxu0
        %v4431 = vadd.f32 0.0, %v4430
        %v4432 = vpop.f32.mrf.mxu0
        %v4433 = vadd.f32 0.0, %v4432
        %4434 = vdwg.mxu0
        %v4436 = vsel %vm2834, %v3900, 0
        %v4439 = vsel %vm3449, %v4025, 0
        %v4442 = vsel %vm3449, %v4026, 0
        %4444 = vmatprep.subr.mxu0 0.0
        %4445 = vmatpush1.msra.mxu0 0.0
        %4446 = vmatprep.subr.mxu0 0.0
        %4447 = vmatpush1.msra.mxu0 0.0
        %4448 = vmatprep.subr.mxu0 0.0
        %4449 = vmatpush1.msra.mxu0 0.0
        %4450 = vmatprep.subr.mxu0 0.0
        %4451 = vmatpush1.msra.mxu0 0.0
        %4452 = vmatprep.subr.mxu0 0.0
        %4453 = vmatpush1.msra.mxu0 0.0
        %4454 = vmatprep.subr.mxu0 0.0
        %4455 = vmatpush1.msra.mxu0 0.0
        %4456 = vmatprep.subr.mxu0 0.0
        %4457 = vmatpush1.msra.mxu0 0.0
        %4458 = vmatprep.subr.mxu0 0.0
        %4459 = vmatpush1.msra.mxu0 0.0
        %4460 = vmatprep.subr.mxu0 0.0
        %4461 = vmatpush1.msra.mxu0 0.0
        %4462 = vmatprep.subr.mxu0 0.0
        %4463 = vmatpush1.msra.mxu0 0.0
        %4464 = vmatprep.subr.mxu0 0.0
        %4465 = vmatpush1.msra.mxu0 0.0
        %4466 = vmatprep.subr.mxu0 0.0
        %4467 = vmatpush1.msra.mxu0 0.0
        %4468 = vmatprep.subr.mxu0 %v4442
        %4469 = vmatpush1.msra.mxu0 %v4439
        %4470 = vmatprep.subr.mxu0 %v4024
        %4471 = vmatpush1.msra.mxu0 %v4023
        %4472 = vmatprep.subr.mxu0 %v4022
        %4473 = vmatpush1.msra.mxu0 %v4021
        %4474 = vmatprep.subr.mxu0 %v4020
        %4475 = vmatpush1.msra.mxu0 %v4019
        %4476 = vmatprep.subr.mxu0 0.0
        %4477 = vmatpush2.msra.mxu0 0.0
        %4478 = vmatprep.subr.mxu0 0.0
        %4479 = vmatpush2.msra.mxu0 0.0
        %4480 = vmatprep.subr.mxu0 0.0
        %4481 = vmatpush2.msra.mxu0 0.0
        %4482 = vmatprep.subr.mxu0 0.0
        %4483 = vmatpush2.msra.mxu0 0.0
        %4484 = vmatprep.subr.mxu0 0.0
        %4485 = vmatpush2.msra.mxu0 0.0
        %4486 = vmatprep.subr.mxu0 0.0
        %4487 = vmatpush2.msra.mxu0 0.0
        %4488 = vmatprep.subr.mxu0 0.0
        %4489 = vmatpush2.msra.mxu0 0.0
        %4490 = vmatprep.subr.mxu0 0.0
        %4491 = vmatpush2.msra.mxu0 0.0
        %4492 = vmatprep.subr.mxu0 0.0
        %4493 = vmatpush2.msra.mxu0 0.0
        %4494 = vmatprep.subr.mxu0 0.0
        %4495 = vmatpush2.msra.mxu0 0.0
        %4496 = vmatprep.subr.mxu0 0.0
        %4497 = vmatpush2.msra.mxu0 0.0
        %4498 = vmatprep.subr.mxu0 0.0
        %4499 = vmatpush2.msra.mxu0 0.0
        %4500 = vmatprep.subr.mxu0 0.0
        %4501 = vmatpush2.msra.mxu0 0.0
        %4502 = vmatprep.subr.mxu0 0.0
        %4503 = vmatpush2.msra.mxu0 0.0
        %4504 = vmatprep.subr.mxu0 0.0
        %4505 = vmatpush2.msra.mxu0 0.0
        %4506 = vmatprep.subr.mxu0 0.0
        %4507 = vmatpush2.msra.mxu0 0.0
        %4508 = vmatprep.mubr.f32.mxu0 0.0
        %4509 = vmatmul.mubr.f32.gmra.mxu0 %v4436
        %v4510 = vpop.f32.mrf.mxu0
        %v4511 = vadd.f32 0.0, %v4510
        %v4512 = vpop.f32.mrf.mxu0
        %v4513 = vadd.f32 0.0, %v4512
        %4514 = vdwg.mxu0
        %v4516 = vsel %vm2834, %v3976, 0
        %v4519 = vsel %vm3449, %v4033, 0
        %v4522 = vsel %vm3449, %v4034, 0
        %4524 = vmatprep.subr.mxu0 0.0
        %4525 = vmatpush1.msra.mxu0 0.0
        %4526 = vmatprep.subr.mxu0 0.0
        %4527 = vmatpush1.msra.mxu0 0.0
        %4528 = vmatprep.subr.mxu0 0.0
        %4529 = vmatpush1.msra.mxu0 0.0
        %4530 = vmatprep.subr.mxu0 0.0
        %4531 = vmatpush1.msra.mxu0 0.0
        %4532 = vmatprep.subr.mxu0 0.0
        %4533 = vmatpush1.msra.mxu0 0.0
        %4534 = vmatprep.subr.mxu0 0.0
        %4535 = vmatpush1.msra.mxu0 0.0
        %4536 = vmatprep.subr.mxu0 0.0
        %4537 = vmatpush1.msra.mxu0 0.0
        %4538 = vmatprep.subr.mxu0 0.0
        %4539 = vmatpush1.msra.mxu0 0.0
        %4540 = vmatprep.subr.mxu0 0.0
        %4541 = vmatpush1.msra.mxu0 0.0
        %4542 = vmatprep.subr.mxu0 0.0
        %4543 = vmatpush1.msra.mxu0 0.0
        %4544 = vmatprep.subr.mxu0 0.0
        %4545 = vmatpush1.msra.mxu0 0.0
        %4546 = vmatprep.subr.mxu0 0.0
        %4547 = vmatpush1.msra.mxu0 0.0
        %4548 = vmatprep.subr.mxu0 %v4522
        %4549 = vmatpush1.msra.mxu0 %v4519
        %4550 = vmatprep.subr.mxu0 %v4032
        %4551 = vmatpush1.msra.mxu0 %v4031
        %4552 = vmatprep.subr.mxu0 %v4030
        %4553 = vmatpush1.msra.mxu0 %v4029
        %4554 = vmatprep.subr.mxu0 %v4028
        %4555 = vmatpush1.msra.mxu0 %v4027
        %4556 = vmatprep.subr.mxu0 0.0
        %4557 = vmatpush2.msra.mxu0 0.0
        %4558 = vmatprep.subr.mxu0 0.0
        %4559 = vmatpush2.msra.mxu0 0.0
        %4560 = vmatprep.subr.mxu0 0.0
        %4561 = vmatpush2.msra.mxu0 0.0
        %4562 = vmatprep.subr.mxu0 0.0
        %4563 = vmatpush2.msra.mxu0 0.0
        %4564 = vmatprep.subr.mxu0 0.0
        %4565 = vmatpush2.msra.mxu0 0.0
        %4566 = vmatprep.subr.mxu0 0.0
        %4567 = vmatpush2.msra.mxu0 0.0
        %4568 = vmatprep.subr.mxu0 0.0
        %4569 = vmatpush2.msra.mxu0 0.0
        %4570 = vmatprep.subr.mxu0 0.0
        %4571 = vmatpush2.msra.mxu0 0.0
        %4572 = vmatprep.subr.mxu0 0.0
        %4573 = vmatpush2.msra.mxu0 0.0
        %4574 = vmatprep.subr.mxu0 0.0
        %4575 = vmatpush2.msra.mxu0 0.0
        %4576 = vmatprep.subr.mxu0 0.0
        %4577 = vmatpush2.msra.mxu0 0.0
        %4578 = vmatprep.subr.mxu0 0.0
        %4579 = vmatpush2.msra.mxu0 0.0
        %4580 = vmatprep.subr.mxu0 0.0
        %4581 = vmatpush2.msra.mxu0 0.0
        %4582 = vmatprep.subr.mxu0 0.0
        %4583 = vmatpush2.msra.mxu0 0.0
        %4584 = vmatprep.subr.mxu0 0.0
        %4585 = vmatpush2.msra.mxu0 0.0
        %4586 = vmatprep.subr.mxu0 0.0
        %4587 = vmatpush2.msra.mxu0 0.0
        %4588 = vmatprep.mubr.f32.mxu0 0.0
        %4589 = vmatmul.mubr.f32.gmra.mxu0 %v4516
        %v4590 = vpop.f32.mrf.mxu0
        %v4591 = vadd.f32 0.0, %v4590
        %v4592 = vpop.f32.mrf.mxu0
        %v4593 = vadd.f32 0.0, %v4592
        %4594 = vdwg.mxu0
        %v4595 = vsel %vm3449, %v4111, 0.0
        %v4596 = vsel %vm3449, %v4191, 0.0
        %v4597 = vadd.f32 %v4595, %v4596
        %v4598 = vsel %vm3449, %v4271, 0.0
        %v4599 = vadd.f32 %v4597, %v4598
        %v4600 = vsel %vm3449, %v4351, 0.0
        %v4601 = vadd.f32 %v4599, %v4600
        %v4602 = vsel %vm3449, %v4431, 0.0
        %v4603 = vadd.f32 %v4601, %v4602
        %v4604 = vsel %vm3449, %v4511, 0.0
        %v4605 = vadd.f32 %v4603, %v4604
        %v4606 = vsel %vm3449, %v4591, 0.0
        %v4607 = vadd.f32 %v4605, %v4606
        %v4608 = vsel %vm3449, %v4113, 0.0
        %v4609 = vsel %vm3449, %v4193, 0.0
        %v4610 = vadd.f32 %v4608, %v4609
        %v4611 = vsel %vm3449, %v4273, 0.0
        %v4612 = vadd.f32 %v4610, %v4611
        %v4613 = vsel %vm3449, %v4353, 0.0
        %v4614 = vadd.f32 %v4612, %v4613
        %v4615 = vsel %vm3449, %v4433, 0.0
        %v4616 = vadd.f32 %v4614, %v4615
        %v4617 = vsel %vm3449, %v4513, 0.0
        %v4618 = vadd.f32 %v4616, %v4617
        %v4619 = vsel %vm3449, %v4593, 0.0
        %v4620 = vadd.f32 %v4618, %v4619
        %v4621 = vld [vmem:[%s638] sm:$0x3]
        %v4623 = vlaneseq
        %v4624 = vshrl.u32 %v4623, 7
        %v4625 = vsub.s32 0, %v4624
        %v4626 = vrot.slane %v4621, %v4625
        %v4627 = vlaneseq
        %v4628 = vshrl.u32 %v4627, 7
        %v4629 = vsub.s32 1, %v4628
        %v4630 = vrot.slane %v4621, %v4629
        %v4633 = vadd.f32 %v4607, %v4626
        %v4634 = vadd.f32 %v4620, %v4630
        %v4637 = vcombine.low %v4633, %v4634
        %v4639 = vadd.f32 %v679, %v4637
        %v4640 = vld [vmem:[%s660] sm:$0x3]
        %v4641 = vld [vmem:[%s664] sm:$0x3]
        %v4644 = vcombine.low %v687, %v688
        %v4646 = vmul.f32 %v4639, %v4644
        %v4648 = vcombine.high %v4646, %v4646
        %v4650 = vsel %vm3449, %v4646, 0.0
        %v4651 = vsel %vm3449, %v4648, 0.0
        %v4652 = vadd.f32 %v4650, %v4651
        %4653 = vadd.xlane.f32.xlu0 %v4652
        %v4654 = vpop.xlane.xlu0 %4653
        %v4655 = vmul.f32 %v4654, 0.0051020407
        %v4658 = vunpack.c.l.s4 839922192
        %v4659 = vunpack.c.0.s8 %v4658
        %v4660 = vlaneseq
        %v4661 = vshrl.u32 %v4660, 7
        %v4662 = vsub.s32 %v4659, %v4661
        %v4663 = vrot.slane %v4655, %v4662
        %v4665 = vsub.f32 %v4646, %v4663
        %v4666 = vmul.f32 %v4665, %v4644
        %v4667 = vmul.f32 %v4666, %v4666
        %v4669 = vcombine.high %v4667, %v4667
        %v4671 = vsel %vm3449, %v4667, 0.0
        %v4672 = vsel %vm3449, %v4669, 0.0
        %v4673 = vadd.f32 %v4671, %v4672
        %4674 = vadd.xlane.f32.xlu0 %v4673
        %v4675 = vpop.xlane.xlu0 %4674
        %v4676 = vmul.f32 %v4675, 0.0051282053
        %v4677 = vrsqrt.pop %v4676
        %v4678 = vmul.f32 %v4676, %v4677
        %vm4679 = vcmp.eq.f32.partialorder %v4676, inf
        %v4680 = vsel %vm4679, %v4676, %v4678
        %vm4681 = vcmp.eq.f32.partialorder %v4676, 0.0
        %v4682 = vand.u32 %v4676, 2147483648
        %v4683 = vsel %vm4681, %v4682, %v4680
        %v4684 = vadd.f32 %v4683, 1e-06
        %v4687 = vunpack.c.l.s4 839922192
        %v4688 = vunpack.c.0.s8 %v4687
        %v4689 = vlaneseq
        %v4690 = vshrl.u32 %v4689, 7
        %v4691 = vsub.s32 %v4688, %v4690
        %v4692 = vrot.slane %v4684, %v4691
        %v4694 = vrcp.pop %v4692
        %v4695 = vmul.f32 %v4666, %v4694
        %v4697 = vlaneseq
        %v4698 = vshrl.u32 %v4697, 7
        %v4699 = vsub.s32 0, %v4698
        %v4700 = vrot.slane %v4640, %v4699
        %v4701 = vlaneseq
        %v4702 = vshrl.u32 %v4701, 7
        %v4703 = vsub.s32 1, %v4702
        %v4704 = vrot.slane %v4640, %v4703
        %v4708 = vcombine.high %v4695, %v4695
        %v4710 = vmul.f32 %v4700, %v4695
        %v4711 = vmul.f32 %v4704, %v4708
        %v4713 = vlaneseq
        %v4714 = vshrl.u32 %v4713, 7
        %v4715 = vsub.s32 0, %v4714
        %v4716 = vrot.slane %v4641, %v4715
        %v4717 = vlaneseq
        %v4718 = vshrl.u32 %v4717, 7
        %v4719 = vsub.s32 1, %v4718
        %v4720 = vrot.slane %v4641, %v4719
        %v4723 = vadd.f32 %v4710, %v4716
        %v4724 = vadd.f32 %v4711, %v4720
        %v4725 = vld [vmem:[%s643] sm:$0xff]
        %v4726 = vld [vmem:[%s643 + $0x8] sm:$0xff]
        %v4727 = vld [vmem:[%s643 + $0x10] sm:$0xff]
        %v4728 = vld [vmem:[%s643 + $0x18] sm:$0xff]
        %v4729 = vld [vmem:[%s643 + $0x20] sm:$0xff]
        %v4730 = vld [vmem:[%s643 + $0x28] sm:$0xff]
        %v4731 = vld [vmem:[%s643 + $0x30] sm:$0xff]
        %v4732 = vld [vmem:[%s643 + $0x38] sm:$0xff]
        %v4733 = vld [vmem:[%s643 + $0x40] sm:$0xff]
        %v4734 = vld [vmem:[%s643 + $0x48] sm:$0xff]
        %v4735 = vld [vmem:[%s643 + $0x50] sm:$0xff]
        %v4736 = vld [vmem:[%s643 + $0x58] sm:$0xff]
        %v4737 = vld [vmem:[%s643 + $0x60] sm:$0xff]
        %v4738 = vld [vmem:[%s643 + $0x68] sm:$0xff]
        %v4739 = vld [vmem:[%s643 + $0x70] sm:$0xff]
        %v4740 = vld [vmem:[%s643 + $0x78] sm:$0xff]
        %v4741 = vld [vmem:[%s643 + $0x80] sm:$0xff]
        %v4742 = vld [vmem:[%s643 + $0x88] sm:$0xff]
        %v4743 = vld [vmem:[%s643 + $0x90] sm:$0xff]
        %v4744 = vld [vmem:[%s643 + $0x98] sm:$0xff]
        %v4745 = vld [vmem:[%s643 + $0xa0] sm:$0xff]
        %v4746 = vld [vmem:[%s643 + $0xa8] sm:$0xff]
        %v4747 = vld [vmem:[%s643 + $0xb0] sm:$0xff]
        %v4748 = vld [vmem:[%s643 + $0xb8] sm:$0xff]
        %v4749 = vld [vmem:[%s643 + $0xc0] sm:$0xff]
        %v4750 = vld [vmem:[%s643 + $0xc8] sm:$0xff]
        %v4751 = vld [vmem:[%s643 + $0xd0] sm:$0xff]
        %v4752 = vld [vmem:[%s643 + $0xd8] sm:$0xff]
        %v4753 = vld [vmem:[%s643 + $0xe0] sm:$0xff]
        %v4754 = vld [vmem:[%s643 + $0xe8] sm:$0xff]
        %v4755 = vld [vmem:[%s643 + $0xf0] sm:$0xff]
        %v4756 = vld [vmem:[%s643 + $0xf8] sm:$0xff]
        %v4757 = vld [vmem:[%s643 + $0x100] sm:$0xff]
        %v4758 = vld [vmem:[%s643 + $0x108] sm:$0xff]
        %v4759 = vld [vmem:[%s643 + $0x110] sm:$0xff]
        %v4760 = vld [vmem:[%s643 + $0x118] sm:$0xff]
        %v4761 = vld [vmem:[%s643 + $0x120] sm:$0xff]
        %v4762 = vld [vmem:[%s643 + $0x128] sm:$0xff]
        %v4763 = vld [vmem:[%s643 + $0x130] sm:$0xff]
        %v4764 = vld [vmem:[%s643 + $0x138] sm:$0xff]
        %v4765 = vld [vmem:[%s643 + $0x140] sm:$0xff]
        %v4766 = vld [vmem:[%s643 + $0x148] sm:$0xff]
        %v4767 = vld [vmem:[%s643 + $0x150] sm:$0xff]
        %v4768 = vld [vmem:[%s643 + $0x158] sm:$0xff]
        %v4769 = vld [vmem:[%s643 + $0x160] sm:$0xff]
        %v4770 = vld [vmem:[%s643 + $0x168] sm:$0xff]
        %v4771 = vld [vmem:[%s643 + $0x170] sm:$0xff]
        %v4772 = vld [vmem:[%s643 + $0x178] sm:$0xff]
        %v4773 = vld [vmem:[%s643 + $0x180] sm:$0xff]
        %v4774 = vld [vmem:[%s643 + $0x188] sm:$0xff]
        %v4775 = vld [vmem:[%s643 + $0x190] sm:$0xff]
        %v4776 = vld [vmem:[%s643 + $0x198] sm:$0xff]
        %v4777 = vld [vmem:[%s643 + $0x1a0] sm:$0xff]
        %v4778 = vld [vmem:[%s643 + $0x1a8] sm:$0xff]
        %v4779 = vld [vmem:[%s643 + $0x1b0] sm:$0xff]
        %v4780 = vld [vmem:[%s643 + $0x1b8] sm:$0xff]
        %v4781 = vld [vmem:[%s643 + $0x1c0] sm:$0xff]
        %v4782 = vld [vmem:[%s643 + $0x1c8] sm:$0xff]
        %v4783 = vld [vmem:[%s643 + $0x1d0] sm:$0xff]
        %v4784 = vld [vmem:[%s643 + $0x1d8] sm:$0xff]
        %v4785 = vld [vmem:[%s643 + $0x1e0] sm:$0xff]
        %v4786 = vld [vmem:[%s643 + $0x1e8] sm:$0xff]
        %v4787 = vld [vmem:[%s643 + $0x1f0] sm:$0xff]
        %v4788 = vld [vmem:[%s643 + $0x1f8] sm:$0xff]
        %v4789 = vld [vmem:[%s643 + $0x200] sm:$0xff]
        %v4790 = vld [vmem:[%s643 + $0x208] sm:$0xff]
        %v4791 = vld [vmem:[%s643 + $0x210] sm:$0xff]
        %v4792 = vld [vmem:[%s643 + $0x218] sm:$0xff]
        %v4793 = vld [vmem:[%s643 + $0x220] sm:$0xff]
        %v4794 = vld [vmem:[%s643 + $0x228] sm:$0xff]
        %v4795 = vld [vmem:[%s643 + $0x230] sm:$0xff]
        %v4796 = vld [vmem:[%s643 + $0x238] sm:$0xff]
        %v4797 = vld [vmem:[%s643 + $0x240] sm:$0xff]
        %v4798 = vld [vmem:[%s643 + $0x248] sm:$0xff]
        %v4799 = vld [vmem:[%s643 + $0x250] sm:$0xff]
        %v4800 = vld [vmem:[%s643 + $0x258] sm:$0xff]
        %v4801 = vld [vmem:[%s643 + $0x260] sm:$0xff]
        %v4802 = vld [vmem:[%s643 + $0x268] sm:$0xff]
        %v4803 = vld [vmem:[%s643 + $0x270] sm:$0xff]
        %v4804 = vld [vmem:[%s643 + $0x278] sm:$0xff]
        %v4805 = vld [vmem:[%s643 + $0x280] sm:$0xff]
        %v4806 = vld [vmem:[%s643 + $0x288] sm:$0xff]
        %v4807 = vld [vmem:[%s643 + $0x290] sm:$0xff]
        %v4808 = vld [vmem:[%s643 + $0x298] sm:$0xff]
        %v4809 = vld [vmem:[%s643 + $0x2a0] sm:$0xff]
        %v4810 = vld [vmem:[%s643 + $0x2a8] sm:$0xff]
        %v4811 = vld [vmem:[%s643 + $0x2b0] sm:$0xff]
        %v4812 = vld [vmem:[%s643 + $0x2b8] sm:$0xff]
        %v4813 = vld [vmem:[%s643 + $0x2c0] sm:$0xff]
        %v4814 = vld [vmem:[%s643 + $0x2c8] sm:$0xff]
        %v4815 = vld [vmem:[%s643 + $0x2d0] sm:$0xff]
        %v4816 = vld [vmem:[%s643 + $0x2d8] sm:$0xff]
        %v4817 = vld [vmem:[%s643 + $0x2e0] sm:$0xff]
        %v4818 = vld [vmem:[%s643 + $0x2e8] sm:$0xff]
        %v4819 = vld [vmem:[%s643 + $0x2f0] sm:$0xff]
        %v4820 = vld [vmem:[%s643 + $0x2f8] sm:$0xff]
        %v4821 = vld [vmem:[%s643 + $0x300] sm:$0xff]
        %v4822 = vld [vmem:[%s643 + $0x308] sm:$0xff]
        %v4823 = vld [vmem:[%s643 + $0x310] sm:$0xff]
        %v4824 = vld [vmem:[%s643 + $0x318] sm:$0xff]
        %v4825 = vld [vmem:[%s643 + $0x320] sm:$0xff]
        %v4826 = vld [vmem:[%s643 + $0x328] sm:$0xff]
        %v4827 = vld [vmem:[%s643 + $0x330] sm:$0xff]
        %v4828 = vld [vmem:[%s643 + $0x338] sm:$0xff]
        %v4829 = vld [vmem:[%s643 + $0x340] sm:$0xff]
        %v4830 = vld [vmem:[%s643 + $0x348] sm:$0xff]
        %v4831 = vld [vmem:[%s643 + $0x350] sm:$0xff]
        %v4832 = vld [vmem:[%s643 + $0x358] sm:$0xff]
        %v4833 = vld [vmem:[%s643 + $0x360] sm:$0xff]
        %v4834 = vld [vmem:[%s643 + $0x368] sm:$0xff]
        %v4835 = vld [vmem:[%s643 + $0x370] sm:$0xff]
        %v4836 = vld [vmem:[%s643 + $0x378] sm:$0xff]
        %v4837 = vld [vmem:[%s643 + $0x380] sm:$0xff]
        %v4838 = vld [vmem:[%s643 + $0x388] sm:$0xff]
        %v4839 = vld [vmem:[%s643 + $0x390] sm:$0xff]
        %v4840 = vld [vmem:[%s643 + $0x398] sm:$0xff]
        %v4841 = vld [vmem:[%s643 + $0x3a0] sm:$0xff]
        %v4842 = vld [vmem:[%s643 + $0x3a8] sm:$0xff]
        %v4843 = vld [vmem:[%s643 + $0x3b0] sm:$0xff]
        %v4844 = vld [vmem:[%s643 + $0x3b8] sm:$0xff]
        %v4845 = vld [vmem:[%s643 + $0x3c0] sm:$0xff]
        %v4846 = vld [vmem:[%s643 + $0x3c8] sm:$0xff]
        %v4847 = vld [vmem:[%s643 + $0x3d0] sm:$0xff]
        %v4848 = vld [vmem:[%s643 + $0x3d8] sm:$0xff]
        %v4849 = vld [vmem:[%s643 + $0x3e0] sm:$0xff]
        %v4850 = vld [vmem:[%s643 + $0x3e8] sm:$0xff]
        %v4851 = vld [vmem:[%s643 + $0x3f0] sm:$0xff]
        %v4852 = vld [vmem:[%s643 + $0x3f8] sm:$0xff]
        %v4853 = vld [vmem:[%s643 + $0x400] sm:$0xff]
        %v4854 = vld [vmem:[%s643 + $0x408] sm:$0xff]
        %v4855 = vld [vmem:[%s643 + $0x410] sm:$0xff]
        %v4856 = vld [vmem:[%s643 + $0x418] sm:$0xff]
        %v4857 = vld [vmem:[%s643 + $0x420] sm:$0xff]
        %v4858 = vld [vmem:[%s643 + $0x428] sm:$0xff]
        %v4859 = vld [vmem:[%s643 + $0x430] sm:$0xff]
        %v4860 = vld [vmem:[%s643 + $0x438] sm:$0xff]
        %v4861 = vld [vmem:[%s643 + $0x440] sm:$0xff]
        %v4862 = vld [vmem:[%s643 + $0x448] sm:$0xff]
        %v4863 = vld [vmem:[%s643 + $0x450] sm:$0xff]
        %v4864 = vld [vmem:[%s643 + $0x458] sm:$0xff]
        %v4865 = vld [vmem:[%s643 + $0x460] sm:$0xff]
        %v4866 = vld [vmem:[%s643 + $0x468] sm:$0xff]
        %v4867 = vld [vmem:[%s643 + $0x470] sm:$0xff]
        %v4868 = vld [vmem:[%s643 + $0x478] sm:$0xff]
        %v4869 = vld [vmem:[%s643 + $0x480] sm:$0xff]
        %v4870 = vld [vmem:[%s643 + $0x488] sm:$0xff]
        %v4871 = vld [vmem:[%s643 + $0x490] sm:$0xff]
        %v4872 = vld [vmem:[%s643 + $0x498] sm:$0xff]
        %v4873 = vld [vmem:[%s643 + $0x4a0] sm:$0xff]
        %v4874 = vld [vmem:[%s643 + $0x4a8] sm:$0xff]
        %v4875 = vld [vmem:[%s643 + $0x4b0] sm:$0xff]
        %v4876 = vld [vmem:[%s643 + $0x4b8] sm:$0xff]
        %v4877 = vld [vmem:[%s643 + $0x4c0] sm:$0xff]
        %v4878 = vld [vmem:[%s643 + $0x4c8] sm:$0xff]
        %v4879 = vld [vmem:[%s643 + $0x4d0] sm:$0xff]
        %v4880 = vld [vmem:[%s643 + $0x4d8] sm:$0xff]
        %v4881 = vld [vmem:[%s643 + $0x4e0] sm:$0xff]
        %v4882 = vld [vmem:[%s643 + $0x4e8] sm:$0xff]
        %v4883 = vld [vmem:[%s643 + $0x4f0] sm:$0xff]
        %v4884 = vld [vmem:[%s643 + $0x4f8] sm:$0xff]
        %v4885 = vld [vmem:[%s643 + $0x500] sm:$0xff]
        %v4886 = vld [vmem:[%s643 + $0x508] sm:$0xff]
        %v4887 = vld [vmem:[%s643 + $0x510] sm:$0xff]
        %v4888 = vld [vmem:[%s643 + $0x518] sm:$0xff]
        %v4889 = vld [vmem:[%s643 + $0x520] sm:$0xff]
        %v4890 = vld [vmem:[%s643 + $0x528] sm:$0xff]
        %v4891 = vld [vmem:[%s643 + $0x530] sm:$0xff]
        %v4892 = vld [vmem:[%s643 + $0x538] sm:$0xff]
        %v4893 = vld [vmem:[%s643 + $0x540] sm:$0xff]
        %v4894 = vld [vmem:[%s643 + $0x548] sm:$0xff]
        %v4895 = vld [vmem:[%s643 + $0x550] sm:$0xff]
        %v4896 = vld [vmem:[%s643 + $0x558] sm:$0xff]
        %v4897 = vld [vmem:[%s643 + $0x560] sm:$0xff]
        %v4898 = vld [vmem:[%s643 + $0x568] sm:$0xff]
        %v4899 = vld [vmem:[%s643 + $0x570] sm:$0xff]
        %v4900 = vld [vmem:[%s643 + $0x578] sm:$0xff]
        %v4901 = vld [vmem:[%s643 + $0x580] sm:$0xff]
        %v4902 = vld [vmem:[%s643 + $0x588] sm:$0xff]
        %v4903 = vld [vmem:[%s643 + $0x590] sm:$0xff]
        %v4904 = vld [vmem:[%s643 + $0x598] sm:$0xff]
        %v4905 = vld [vmem:[%s643 + $0x5a0] sm:$0xff]
        %v4906 = vld [vmem:[%s643 + $0x5a8] sm:$0xff]
        %v4907 = vld [vmem:[%s643 + $0x5b0] sm:$0xff]
        %v4908 = vld [vmem:[%s643 + $0x5b8] sm:$0xff]
        %v4909 = vld [vmem:[%s643 + $0x5c0] sm:$0xff]
        %v4910 = vld [vmem:[%s643 + $0x5c8] sm:$0xff]
        %v4911 = vld [vmem:[%s643 + $0x5d0] sm:$0xff]
        %v4912 = vld [vmem:[%s643 + $0x5d8] sm:$0xff]
        %v4913 = vld [vmem:[%s643 + $0x5e0] sm:$0xff]
        %v4914 = vld [vmem:[%s643 + $0x5e8] sm:$0xff]
        %v4915 = vld [vmem:[%s643 + $0x5f0] sm:$0xff]
        %v4916 = vld [vmem:[%s643 + $0x5f8] sm:$0xff]
        %v4917 = vld [vmem:[%s643 + $0x600] sm:$0xff]
        %v4918 = vld [vmem:[%s643 + $0x608] sm:$0xff]
        %v4919 = vld [vmem:[%s643 + $0x610] sm:$0xff]
        %v4920 = vld [vmem:[%s643 + $0x618] sm:$0xff]
        %v4921 = vld [vmem:[%s643 + $0x620] sm:$0xff]
        %v4922 = vld [vmem:[%s643 + $0x628] sm:$0xff]
        %v4923 = vld [vmem:[%s643 + $0x630] sm:$0xff]
        %v4924 = vld [vmem:[%s643 + $0x638] sm:$0xff]
        %v4925 = vld [vmem:[%s643 + $0x640] sm:$0xff]
        %v4926 = vld [vmem:[%s643 + $0x648] sm:$0xff]
        %v4927 = vld [vmem:[%s643 + $0x650] sm:$0xff]
        %v4928 = vld [vmem:[%s643 + $0x658] sm:$0xff]
        %v4929 = vld [vmem:[%s643 + $0x660] sm:$0xff]
        %v4930 = vld [vmem:[%s643 + $0x668] sm:$0xff]
        %v4931 = vld [vmem:[%s643 + $0x670] sm:$0xff]
        %v4932 = vld [vmem:[%s643 + $0x678] sm:$0xff]
        %v4933 = vld [vmem:[%s643 + $0x680] sm:$0xff]
        %v4934 = vld [vmem:[%s643 + $0x688] sm:$0xff]
        %v4935 = vld [vmem:[%s643 + $0x690] sm:$0xff]
        %v4936 = vld [vmem:[%s643 + $0x698] sm:$0xff]
        %v4937 = vld [vmem:[%s643 + $0x6a0] sm:$0xff]
        %v4938 = vld [vmem:[%s643 + $0x6a8] sm:$0xff]
        %v4939 = vld [vmem:[%s643 + $0x6b0] sm:$0xff]
        %v4940 = vld [vmem:[%s643 + $0x6b8] sm:$0xff]
        %v4941 = vld [vmem:[%s643 + $0x6c0] sm:$0xff]
        %v4942 = vld [vmem:[%s643 + $0x6c8] sm:$0xff]
        %v4943 = vld [vmem:[%s643 + $0x6d0] sm:$0xff]
        %v4944 = vld [vmem:[%s643 + $0x6d8] sm:$0xff]
        %v4945 = vld [vmem:[%s643 + $0x6e0] sm:$0xff]
        %v4946 = vld [vmem:[%s643 + $0x6e8] sm:$0xff]
        %v4947 = vld [vmem:[%s643 + $0x6f0] sm:$0xff]
        %v4948 = vld [vmem:[%s643 + $0x6f8] sm:$0xff]
        %v4949 = vld [vmem:[%s647] sm:$0xff]
        %v4951 = vlaneseq
        %v4952 = vshrl.u32 %v4951, 7
        %v4953 = vsub.s32 0, %v4952
        %v4954 = vrot.slane %v4949, %v4953
        %v4955 = vlaneseq
        %v4956 = vshrl.u32 %v4955, 7
        %v4957 = vsub.s32 1, %v4956
        %v4958 = vrot.slane %v4949, %v4957
        %v4959 = vlaneseq
        %v4960 = vshrl.u32 %v4959, 7
        %v4961 = vsub.s32 2, %v4960
        %v4962 = vrot.slane %v4949, %v4961
        %v4963 = vlaneseq
        %v4964 = vshrl.u32 %v4963, 7
        %v4965 = vsub.s32 3, %v4964
        %v4966 = vrot.slane %v4949, %v4965
        %v4967 = vlaneseq
        %v4968 = vshrl.u32 %v4967, 7
        %v4969 = vsub.s32 4, %v4968
        %v4970 = vrot.slane %v4949, %v4969
        %v4971 = vlaneseq
        %v4972 = vshrl.u32 %v4971, 7
        %v4973 = vsub.s32 5, %v4972
        %v4974 = vrot.slane %v4949, %v4973
        %v4975 = vlaneseq
        %v4976 = vshrl.u32 %v4975, 7
        %v4977 = vsub.s32 6, %v4976
        %v4978 = vrot.slane %v4949, %v4977
        %4986 = vmatprep.subr.mxu0 %v4831
        %4987 = vmatpush1.msra.mxu0 %v4830
        %4988 = vmatprep.subr.mxu0 %v4824
        %4989 = vmatpush1.msra.mxu0 %v4823
        %4990 = vmatprep.subr.mxu0 %v4817
        %4991 = vmatpush1.msra.mxu0 %v4816
        %4992 = vmatprep.subr.mxu0 %v4810
        %4993 = vmatpush1.msra.mxu0 %v4809
        %4994 = vmatprep.subr.mxu0 %v4803
        %4995 = vmatpush1.msra.mxu0 %v4802
        %4996 = vmatprep.subr.mxu0 %v4796
        %4997 = vmatpush1.msra.mxu0 %v4795
        %4998 = vmatprep.subr.mxu0 %v4789
        %4999 = vmatpush1.msra.mxu0 %v4788
        %5000 = vmatprep.subr.mxu0 %v4782
        %5001 = vmatpush1.msra.mxu0 %v4781
        %5002 = vmatprep.subr.mxu0 %v4775
        %5003 = vmatpush1.msra.mxu0 %v4774
        %5004 = vmatprep.subr.mxu0 %v4768
        %5005 = vmatpush1.msra.mxu0 %v4767
        %5006 = vmatprep.subr.mxu0 %v4761
        %5007 = vmatpush1.msra.mxu0 %v4760
        %5008 = vmatprep.subr.mxu0 %v4754
        %5009 = vmatpush1.msra.mxu0 %v4753
        %5010 = vmatprep.subr.mxu0 %v4747
        %5011 = vmatpush1.msra.mxu0 %v4746
        %5012 = vmatprep.subr.mxu0 %v4740
        %5013 = vmatpush1.msra.mxu0 %v4739
        %5014 = vmatprep.subr.mxu0 %v4733
        %5015 = vmatpush1.msra.mxu0 %v4732
        %5016 = vmatprep.subr.mxu0 %v4726
        %5017 = vmatpush1.msra.mxu0 %v4725
        %5018 = vmatprep.subr.mxu0 %v4943
        %5019 = vmatpush2.msra.mxu0 %v4942
        %5020 = vmatprep.subr.mxu0 %v4936
        %5021 = vmatpush2.msra.mxu0 %v4935
        %5022 = vmatprep.subr.mxu0 %v4929
        %5023 = vmatpush2.msra.mxu0 %v4928
        %5024 = vmatprep.subr.mxu0 %v4922
        %5025 = vmatpush2.msra.mxu0 %v4921
        %5026 = vmatprep.subr.mxu0 %v4915
        %5027 = vmatpush2.msra.mxu0 %v4914
        %5028 = vmatprep.subr.mxu0 %v4908
        %5029 = vmatpush2.msra.mxu0 %v4907
        %5030 = vmatprep.subr.mxu0 %v4901
        %5031 = vmatpush2.msra.mxu0 %v4900
        %5032 = vmatprep.subr.mxu0 %v4894
        %5033 = vmatpush2.msra.mxu0 %v4893
        %5034 = vmatprep.subr.mxu0 %v4887
        %5035 = vmatpush2.msra.mxu0 %v4886
        %5036 = vmatprep.subr.mxu0 %v4880
        %5037 = vmatpush2.msra.mxu0 %v4879
        %5038 = vmatprep.subr.mxu0 %v4873
        %5039 = vmatpush2.msra.mxu0 %v4872
        %5040 = vmatprep.subr.mxu0 %v4866
        %5041 = vmatpush2.msra.mxu0 %v4865
        %5042 = vmatprep.subr.mxu0 %v4859
        %5043 = vmatpush2.msra.mxu0 %v4858
        %5044 = vmatprep.subr.mxu0 %v4852
        %5045 = vmatpush2.msra.mxu0 %v4851
        %5046 = vmatprep.subr.mxu0 %v4845
        %5047 = vmatpush2.msra.mxu0 %v4844
        %5048 = vmatprep.subr.mxu0 %v4838
        %5049 = vmatpush2.msra.mxu0 %v4837
        %5050 = vmatprep.mubr.f32.mxu0 %v4724
        %5051 = vmatmul.mubr.f32.gmra.mxu0 %v4723
        %v5052 = vpop.f32.mrf.mxu0
        %v5053 = vadd.f32 %v4954, %v5052
        %v5054 = vpop.f32.mrf.mxu0
        %v5055 = vadd.f32 %v4958, %v5054
        %5056 = vdwg.mxu0
        %5057 = vmatprep.subr.mxu0 %v4833
        %5058 = vmatpush1.msra.mxu0 %v4832
        %5059 = vmatprep.subr.mxu0 %v4826
        %5060 = vmatpush1.msra.mxu0 %v4825
        %5061 = vmatprep.subr.mxu0 %v4819
        %5062 = vmatpush1.msra.mxu0 %v4818
        %5063 = vmatprep.subr.mxu0 %v4812
        %5064 = vmatpush1.msra.mxu0 %v4811
        %5065 = vmatprep.subr.mxu0 %v4805
        %5066 = vmatpush1.msra.mxu0 %v4804
        %5067 = vmatprep.subr.mxu0 %v4798
        %5068 = vmatpush1.msra.mxu0 %v4797
        %5069 = vmatprep.subr.mxu0 %v4791
        %5070 = vmatpush1.msra.mxu0 %v4790
        %5071 = vmatprep.subr.mxu0 %v4784
        %5072 = vmatpush1.msra.mxu0 %v4783
        %5073 = vmatprep.subr.mxu0 %v4777
        %5074 = vmatpush1.msra.mxu0 %v4776
        %5075 = vmatprep.subr.mxu0 %v4770
        %5076 = vmatpush1.msra.mxu0 %v4769
        %5077 = vmatprep.subr.mxu0 %v4763
        %5078 = vmatpush1.msra.mxu0 %v4762
        %5079 = vmatprep.subr.mxu0 %v4756
        %5080 = vmatpush1.msra.mxu0 %v4755
        %5081 = vmatprep.subr.mxu0 %v4749
        %5082 = vmatpush1.msra.mxu0 %v4748
        %5083 = vmatprep.subr.mxu0 %v4742
        %5084 = vmatpush1.msra.mxu0 %v4741
        %5085 = vmatprep.subr.mxu0 %v4735
        %5086 = vmatpush1.msra.mxu0 %v4734
        %5087 = vmatprep.subr.mxu0 %v4728
        %5088 = vmatpush1.msra.mxu0 %v4727
        %5089 = vmatprep.subr.mxu0 %v4945
        %5090 = vmatpush2.msra.mxu0 %v4944
        %5091 = vmatprep.subr.mxu0 %v4938
        %5092 = vmatpush2.msra.mxu0 %v4937
        %5093 = vmatprep.subr.mxu0 %v4931
        %5094 = vmatpush2.msra.mxu0 %v4930
        %5095 = vmatprep.subr.mxu0 %v4924
        %5096 = vmatpush2.msra.mxu0 %v4923
        %5097 = vmatprep.subr.mxu0 %v4917
        %5098 = vmatpush2.msra.mxu0 %v4916
        %5099 = vmatprep.subr.mxu0 %v4910
        %5100 = vmatpush2.msra.mxu0 %v4909
        %5101 = vmatprep.subr.mxu0 %v4903
        %5102 = vmatpush2.msra.mxu0 %v4902
        %5103 = vmatprep.subr.mxu0 %v4896
        %5104 = vmatpush2.msra.mxu0 %v4895
        %5105 = vmatprep.subr.mxu0 %v4889
        %5106 = vmatpush2.msra.mxu0 %v4888
        %5107 = vmatprep.subr.mxu0 %v4882
        %5108 = vmatpush2.msra.mxu0 %v4881
        %5109 = vmatprep.subr.mxu0 %v4875
        %5110 = vmatpush2.msra.mxu0 %v4874
        %5111 = vmatprep.subr.mxu0 %v4868
        %5112 = vmatpush2.msra.mxu0 %v4867
        %5113 = vmatprep.subr.mxu0 %v4861
        %5114 = vmatpush2.msra.mxu0 %v4860
        %5115 = vmatprep.subr.mxu0 %v4854
        %5116 = vmatpush2.msra.mxu0 %v4853
        %5117 = vmatprep.subr.mxu0 %v4847
        %5118 = vmatpush2.msra.mxu0 %v4846
        %5119 = vmatprep.subr.mxu0 %v4840
        %5120 = vmatpush2.msra.mxu0 %v4839
        %5121 = vmatprep.mubr.f32.mxu0 %v4724
        %5122 = vmatmul.mubr.f32.gmra.mxu0 %v4723
        %v5123 = vpop.f32.mrf.mxu0
        %v5124 = vadd.f32 %v4962, %v5123
        %v5125 = vpop.f32.mrf.mxu0
        %v5126 = vadd.f32 %v4966, %v5125
        %5127 = vdwg.mxu0
        %5128 = vmatprep.subr.mxu0 %v4835
        %5129 = vmatpush1.msra.mxu0 %v4834
        %5130 = vmatprep.subr.mxu0 %v4828
        %5131 = vmatpush1.msra.mxu0 %v4827
        %5132 = vmatprep.subr.mxu0 %v4821
        %5133 = vmatpush1.msra.mxu0 %v4820
        %5134 = vmatprep.subr.mxu0 %v4814
        %5135 = vmatpush1.msra.mxu0 %v4813
        %5136 = vmatprep.subr.mxu0 %v4807
        %5137 = vmatpush1.msra.mxu0 %v4806
        %5138 = vmatprep.subr.mxu0 %v4800
        %5139 = vmatpush1.msra.mxu0 %v4799
        %5140 = vmatprep.subr.mxu0 %v4793
        %5141 = vmatpush1.msra.mxu0 %v4792
        %5142 = vmatprep.subr.mxu0 %v4786
        %5143 = vmatpush1.msra.mxu0 %v4785
        %5144 = vmatprep.subr.mxu0 %v4779
        %5145 = vmatpush1.msra.mxu0 %v4778
        %5146 = vmatprep.subr.mxu0 %v4772
        %5147 = vmatpush1.msra.mxu0 %v4771
        %5148 = vmatprep.subr.mxu0 %v4765
        %5149 = vmatpush1.msra.mxu0 %v4764
        %5150 = vmatprep.subr.mxu0 %v4758
        %5151 = vmatpush1.msra.mxu0 %v4757
        %5152 = vmatprep.subr.mxu0 %v4751
        %5153 = vmatpush1.msra.mxu0 %v4750
        %5154 = vmatprep.subr.mxu0 %v4744
        %5155 = vmatpush1.msra.mxu0 %v4743
        %5156 = vmatprep.subr.mxu0 %v4737
        %5157 = vmatpush1.msra.mxu0 %v4736
        %5158 = vmatprep.subr.mxu0 %v4730
        %5159 = vmatpush1.msra.mxu0 %v4729
        %5160 = vmatprep.subr.mxu0 %v4947
        %5161 = vmatpush2.msra.mxu0 %v4946
        %5162 = vmatprep.subr.mxu0 %v4940
        %5163 = vmatpush2.msra.mxu0 %v4939
        %5164 = vmatprep.subr.mxu0 %v4933
        %5165 = vmatpush2.msra.mxu0 %v4932
        %5166 = vmatprep.subr.mxu0 %v4926
        %5167 = vmatpush2.msra.mxu0 %v4925
        %5168 = vmatprep.subr.mxu0 %v4919
        %5169 = vmatpush2.msra.mxu0 %v4918
        %5170 = vmatprep.subr.mxu0 %v4912
        %5171 = vmatpush2.msra.mxu0 %v4911
        %5172 = vmatprep.subr.mxu0 %v4905
        %5173 = vmatpush2.msra.mxu0 %v4904
        %5174 = vmatprep.subr.mxu0 %v4898
        %5175 = vmatpush2.msra.mxu0 %v4897
        %5176 = vmatprep.subr.mxu0 %v4891
        %5177 = vmatpush2.msra.mxu0 %v4890
        %5178 = vmatprep.subr.mxu0 %v4884
        %5179 = vmatpush2.msra.mxu0 %v4883
        %5180 = vmatprep.subr.mxu0 %v4877
        %5181 = vmatpush2.msra.mxu0 %v4876
        %5182 = vmatprep.subr.mxu0 %v4870
        %5183 = vmatpush2.msra.mxu0 %v4869
        %5184 = vmatprep.subr.mxu0 %v4863
        %5185 = vmatpush2.msra.mxu0 %v4862
        %5186 = vmatprep.subr.mxu0 %v4856
        %5187 = vmatpush2.msra.mxu0 %v4855
        %5188 = vmatprep.subr.mxu0 %v4849
        %5189 = vmatpush2.msra.mxu0 %v4848
        %5190 = vmatprep.subr.mxu0 %v4842
        %5191 = vmatpush2.msra.mxu0 %v4841
        %5192 = vmatprep.mubr.f32.mxu0 %v4724
        %5193 = vmatmul.mubr.f32.gmra.mxu0 %v4723
        %v5194 = vpop.f32.mrf.mxu0
        %v5195 = vadd.f32 %v4970, %v5194
        %v5196 = vpop.f32.mrf.mxu0
        %v5197 = vadd.f32 %v4974, %v5196
        %5198 = vdwg.mxu0
        %5199 = vmatprep.subr.mxu0 0.0
        %5200 = vmatpush1.msra.mxu0 %v4836
        %5201 = vmatprep.subr.mxu0 0.0
        %5202 = vmatpush1.msra.mxu0 %v4829
        %5203 = vmatprep.subr.mxu0 0.0
        %5204 = vmatpush1.msra.mxu0 %v4822
        %5205 = vmatprep.subr.mxu0 0.0
        %5206 = vmatpush1.msra.mxu0 %v4815
        %5207 = vmatprep.subr.mxu0 0.0
        %5208 = vmatpush1.msra.mxu0 %v4808
        %5209 = vmatprep.subr.mxu0 0.0
        %5210 = vmatpush1.msra.mxu0 %v4801
        %5211 = vmatprep.subr.mxu0 0.0
        %5212 = vmatpush1.msra.mxu0 %v4794
        %5213 = vmatprep.subr.mxu0 0.0
        %5214 = vmatpush1.msra.mxu0 %v4787
        %5215 = vmatprep.subr.mxu0 0.0
        %5216 = vmatpush1.msra.mxu0 %v4780
        %5217 = vmatprep.subr.mxu0 0.0
        %5218 = vmatpush1.msra.mxu0 %v4773
        %5219 = vmatprep.subr.mxu0 0.0
        %5220 = vmatpush1.msra.mxu0 %v4766
        %5221 = vmatprep.subr.mxu0 0.0
        %5222 = vmatpush1.msra.mxu0 %v4759
        %5223 = vmatprep.subr.mxu0 0.0
        %5224 = vmatpush1.msra.mxu0 %v4752
        %5225 = vmatprep.subr.mxu0 0.0
        %5226 = vmatpush1.msra.mxu0 %v4745
        %5227 = vmatprep.subr.mxu0 0.0
        %5228 = vmatpush1.msra.mxu0 %v4738
        %5229 = vmatprep.subr.mxu0 0.0
        %5230 = vmatpush1.msra.mxu0 %v4731
        %5231 = vmatprep.subr.mxu0 0.0
        %5232 = vmatpush2.msra.mxu0 %v4948
        %5233 = vmatprep.subr.mxu0 0.0
        %5234 = vmatpush2.msra.mxu0 %v4941
        %5235 = vmatprep.subr.mxu0 0.0
        %5236 = vmatpush2.msra.mxu0 %v4934
        %5237 = vmatprep.subr.mxu0 0.0
        %5238 = vmatpush2.msra.mxu0 %v4927
        %5239 = vmatprep.subr.mxu0 0.0
        %5240 = vmatpush2.msra.mxu0 %v4920
        %5241 = vmatprep.subr.mxu0 0.0
        %5242 = vmatpush2.msra.mxu0 %v4913
        %5243 = vmatprep.subr.mxu0 0.0
        %5244 = vmatpush2.msra.mxu0 %v4906
        %5245 = vmatprep.subr.mxu0 0.0
        %5246 = vmatpush2.msra.mxu0 %v4899
        %5247 = vmatprep.subr.mxu0 0.0
        %5248 = vmatpush2.msra.mxu0 %v4892
        %5249 = vmatprep.subr.mxu0 0.0
        %5250 = vmatpush2.msra.mxu0 %v4885
        %5251 = vmatprep.subr.mxu0 0.0
        %5252 = vmatpush2.msra.mxu0 %v4878
        %5253 = vmatprep.subr.mxu0 0.0
        %5254 = vmatpush2.msra.mxu0 %v4871
        %5255 = vmatprep.subr.mxu0 0.0
        %5256 = vmatpush2.msra.mxu0 %v4864
        %5257 = vmatprep.subr.mxu0 0.0
        %5258 = vmatpush2.msra.mxu0 %v4857
        %5259 = vmatprep.subr.mxu0 0.0
        %5260 = vmatpush2.msra.mxu0 %v4850
        %5261 = vmatprep.subr.mxu0 0.0
        %5262 = vmatpush2.msra.mxu0 %v4843
        %5263 = vmatprep.mubr.f32.mxu0 %v4724
        %5264 = vmatmul.mubr.f32.gmra.mxu0 %v4723
        %v5265 = vpop.f32.mrf.mxu0
        %v5266 = vadd.f32 %v4978, %v5265
        %v5267 = vpop.f32.mrf.mxu0
        %5268 = vdwg.mxu0
        %v5269 = vmul.f32 %v5053, 0.5
        %v5270 = vmul.f32 %v5055, 0.5
        %v5271 = vmul.f32 %v5124, 0.5
        %v5272 = vmul.f32 %v5126, 0.5
        %v5273 = vmul.f32 %v5195, 0.5
        %v5274 = vmul.f32 %v5197, 0.5
        %v5275 = vmul.f32 %v5266, 0.5
        %v5276 = vmul.f32 %v5053, 0.70710677
        %v5277 = vmul.f32 %v5055, 0.70710677
        %v5278 = vmul.f32 %v5124, 0.70710677
        %v5279 = vmul.f32 %v5126, 0.70710677
        %v5280 = vmul.f32 %v5195, 0.70710677
        %v5281 = vmul.f32 %v5197, 0.70710677
        %v5282 = vmul.f32 %v5266, 0.70710677
        %v5283 = vand.u32 2147483647, %v5276
        %v5284 = vand.u32 2147483647, %v5277
        %v5285 = vand.u32 2147483647, %v5278
        %v5286 = vand.u32 2147483647, %v5279
        %v5287 = vand.u32 2147483647, %v5280
        %v5288 = vand.u32 2147483647, %v5281
        %v5289 = vand.u32 2147483647, %v5282
        %v5290 = vmul.f32 %v5283, 0.3275911
        %v5291 = vmul.f32 %v5284, 0.3275911
        %v5292 = vmul.f32 %v5285, 0.3275911
        %v5293 = vmul.f32 %v5286, 0.3275911
        %v5294 = vmul.f32 %v5287, 0.3275911
        %v5295 = vmul.f32 %v5288, 0.3275911
        %v5296 = vmul.f32 %v5289, 0.3275911
        %v5297 = vadd.f32 %v5290, 1.0
        %v5298 = vadd.f32 %v5291, 1.0
        %v5299 = vadd.f32 %v5292, 1.0
        %v5300 = vadd.f32 %v5293, 1.0
        %v5301 = vadd.f32 %v5294, 1.0
        %v5302 = vadd.f32 %v5295, 1.0
        %v5303 = vadd.f32 %v5296, 1.0
        %v5304 = vrcp.pop %v5297
        %v5305 = vmul.f32 1.0, %v5304
        %v5306 = vrcp.pop %v5298
        %v5307 = vmul.f32 1.0, %v5306
        %v5308 = vrcp.pop %v5299
        %v5309 = vmul.f32 1.0, %v5308
        %v5310 = vrcp.pop %v5300
        %v5311 = vmul.f32 1.0, %v5310
        %v5312 = vrcp.pop %v5301
        %v5313 = vmul.f32 1.0, %v5312
        %v5314 = vrcp.pop %v5302
        %v5315 = vmul.f32 1.0, %v5314
        %v5316 = vrcp.pop %v5303
        %v5317 = vmul.f32 1.0, %v5316
        %v5318 = vmul.f32 %v5305, 1.0614054
        %v5319 = vmul.f32 %v5307, 1.0614054
        %v5320 = vmul.f32 %v5309, 1.0614054
        %v5321 = vmul.f32 %v5311, 1.0614054
        %v5322 = vmul.f32 %v5313, 1.0614054
        %v5323 = vmul.f32 %v5315, 1.0614054
        %v5324 = vmul.f32 %v5317, 1.0614054
        %v5325 = vadd.f32 %v5318, -1.4531521
        %v5326 = vadd.f32 %v5319, -1.4531521
        %v5327 = vadd.f32 %v5320, -1.4531521
        %v5328 = vadd.f32 %v5321, -1.4531521
        %v5329 = vadd.f32 %v5322, -1.4531521
        %v5330 = vadd.f32 %v5323, -1.4531521
        %v5331 = vadd.f32 %v5324, -1.4531521
        %v5332 = vmul.f32 %v5305, %v5325
        %v5333 = vmul.f32 %v5307, %v5326
        %v5334 = vmul.f32 %v5309, %v5327
        %v5335 = vmul.f32 %v5311, %v5328
        %v5336 = vmul.f32 %v5313, %v5329
        %v5337 = vmul.f32 %v5315, %v5330
        %v5338 = vmul.f32 %v5317, %v5331
        %v5339 = vadd.f32 %v5332, 1.4214138
        %v5340 = vadd.f32 %v5333, 1.4214138
        %v5341 = vadd.f32 %v5334, 1.4214138
        %v5342 = vadd.f32 %v5335, 1.4214138
        %v5343 = vadd.f32 %v5336, 1.4214138
        %v5344 = vadd.f32 %v5337, 1.4214138
        %v5345 = vadd.f32 %v5338, 1.4214138
        %v5346 = vmul.f32 %v5305, %v5339
        %v5347 = vmul.f32 %v5307, %v5340
        %v5348 = vmul.f32 %v5309, %v5341
        %v5349 = vmul.f32 %v5311, %v5342
        %v5350 = vmul.f32 %v5313, %v5343
        %v5351 = vmul.f32 %v5315, %v5344
        %v5352 = vmul.f32 %v5317, %v5345
        %v5353 = vadd.f32 %v5346, -0.28449672
        %v5354 = vadd.f32 %v5347, -0.28449672
        %v5355 = vadd.f32 %v5348, -0.28449672
        %v5356 = vadd.f32 %v5349, -0.28449672
        %v5357 = vadd.f32 %v5350, -0.28449672
        %v5358 = vadd.f32 %v5351, -0.28449672
        %v5359 = vadd.f32 %v5352, -0.28449672
        %v5360 = vmul.f32 %v5305, %v5353
        %v5361 = vmul.f32 %v5307, %v5354
        %v5362 = vmul.f32 %v5309, %v5355
        %v5363 = vmul.f32 %v5311, %v5356
        %v5364 = vmul.f32 %v5313, %v5357
        %v5365 = vmul.f32 %v5315, %v5358
        %v5366 = vmul.f32 %v5317, %v5359
        %v5367 = vadd.f32 %v5360, 0.2548296
        %v5368 = vadd.f32 %v5361, 0.2548296
        %v5369 = vadd.f32 %v5362, 0.2548296
        %v5370 = vadd.f32 %v5363, 0.2548296
        %v5371 = vadd.f32 %v5364, 0.2548296
        %v5372 = vadd.f32 %v5365, 0.2548296
        %v5373 = vadd.f32 %v5366, 0.2548296
        %v5374 = vmul.f32 %v5305, %v5367
        %v5375 = vmul.f32 %v5307, %v5368
        %v5376 = vmul.f32 %v5309, %v5369
        %v5377 = vmul.f32 %v5311, %v5370
        %v5378 = vmul.f32 %v5313, %v5371
        %v5379 = vmul.f32 %v5315, %v5372
        %v5380 = vmul.f32 %v5317, %v5373
        %v5381 = vsub.f32 0.0, %v5283
        %v5382 = vsub.f32 0.0, %v5284
        %v5383 = vsub.f32 0.0, %v5285
        %v5384 = vsub.f32 0.0, %v5286
        %v5385 = vsub.f32 0.0, %v5287
        %v5386 = vsub.f32 0.0, %v5288
        %v5387 = vsub.f32 0.0, %v5289
        %v5388 = vmul.f32 %v5381, %v5283
        %v5389 = vmul.f32 %v5382, %v5284
        %v5390 = vmul.f32 %v5383, %v5285
        %v5391 = vmul.f32 %v5384, %v5286
        %v5392 = vmul.f32 %v5385, %v5287
        %v5393 = vmul.f32 %v5386, %v5288
        %v5394 = vmul.f32 %v5387, %v5289
        %v5395 = vmul.f32 %v5388, 1.442695
        %v5396 = vpow.pop %v5395
        %v5397 = vmul.f32 %v5389, 1.442695
        %v5398 = vpow.pop %v5397
        %v5399 = vmul.f32 %v5390, 1.442695
        %v5400 = vpow.pop %v5399
        %v5401 = vmul.f32 %v5391, 1.442695
        %v5402 = vpow.pop %v5401
        %v5403 = vmul.f32 %v5392, 1.442695
        %v5404 = vpow.pop %v5403
        %v5405 = vmul.f32 %v5393, 1.442695
        %v5406 = vpow.pop %v5405
        %v5407 = vmul.f32 %v5394, 1.442695
        %v5408 = vpow.pop %v5407
        %v5409 = vmul.f32 %v5374, %v5396
        %v5410 = vmul.f32 %v5375, %v5398
        %v5411 = vmul.f32 %v5376, %v5400
        %v5412 = vmul.f32 %v5377, %v5402
        %v5413 = vmul.f32 %v5378, %v5404
        %v5414 = vmul.f32 %v5379, %v5406
        %v5415 = vmul.f32 %v5380, %v5408
        %v5416 = vsub.f32 1.0, %v5409
        %v5417 = vsub.f32 1.0, %v5410
        %v5418 = vsub.f32 1.0, %v5411
        %v5419 = vsub.f32 1.0, %v5412
        %v5420 = vsub.f32 1.0, %v5413
        %v5421 = vsub.f32 1.0, %v5414
        %v5422 = vsub.f32 1.0, %v5415
        %vm5423 = vcmp.lt.f32.partialorder %v5276, 0.0
        %vm5424 = vcmp.lt.f32.partialorder %v5277, 0.0
        %vm5425 = vcmp.lt.f32.partialorder %v5278, 0.0
        %vm5426 = vcmp.lt.f32.partialorder %v5279, 0.0
        %vm5427 = vcmp.lt.f32.partialorder %v5280, 0.0
        %vm5428 = vcmp.lt.f32.partialorder %v5281, 0.0
        %vm5429 = vcmp.lt.f32.partialorder %v5282, 0.0
        %v5430 = vsub.f32 0.0, %v5416
        %v5431 = vsub.f32 0.0, %v5417
        %v5432 = vsub.f32 0.0, %v5418
        %v5433 = vsub.f32 0.0, %v5419
        %v5434 = vsub.f32 0.0, %v5420
        %v5435 = vsub.f32 0.0, %v5421
        %v5436 = vsub.f32 0.0, %v5422
        %v5437 = vsel %vm5423, %v5430, %v5416
        %v5438 = vsel %vm5424, %v5431, %v5417
        %v5439 = vsel %vm5425, %v5432, %v5418
        %v5440 = vsel %vm5426, %v5433, %v5419
        %v5441 = vsel %vm5427, %v5434, %v5420
        %v5442 = vsel %vm5428, %v5435, %v5421
        %v5443 = vsel %vm5429, %v5436, %v5422
        %v5444 = vadd.f32 %v5437, 1.0
        %v5445 = vadd.f32 %v5438, 1.0
        %v5446 = vadd.f32 %v5439, 1.0
        %v5447 = vadd.f32 %v5440, 1.0
        %v5448 = vadd.f32 %v5441, 1.0
        %v5449 = vadd.f32 %v5442, 1.0
        %v5450 = vadd.f32 %v5443, 1.0
        %v5451 = vmul.f32 %v5269, %v5444
        %v5452 = vmul.f32 %v5270, %v5445
        %v5453 = vmul.f32 %v5271, %v5446
        %v5454 = vmul.f32 %v5272, %v5447
        %v5455 = vmul.f32 %v5273, %v5448
        %v5456 = vmul.f32 %v5274, %v5449
        %v5457 = vmul.f32 %v5275, %v5450
        %v5458 = vld [vmem:[%s652] sm:$0xff]
        %v5459 = vld [vmem:[%s652 + $0x8] sm:$0xff]
        %v5460 = vld [vmem:[%s652 + $0x10] sm:$0xff]
        %v5461 = vld [vmem:[%s652 + $0x18] sm:$0xff]
        %v5462 = vld [vmem:[%s652 + $0x20] sm:$0xff]
        %v5463 = vld [vmem:[%s652 + $0x28] sm:$0xff]
        %v5464 = vld [vmem:[%s652 + $0x30] sm:$0xff]
        %v5465 = vld [vmem:[%s652 + $0x38] sm:$0xff]
        %v5466 = vld [vmem:[%s652 + $0x40] sm:$0xff]
        %v5467 = vld [vmem:[%s652 + $0x48] sm:$0xff]
        %v5468 = vld [vmem:[%s652 + $0x50] sm:$0xff]
        %v5469 = vld [vmem:[%s652 + $0x58] sm:$0xff]
        %v5470 = vld [vmem:[%s652 + $0x60] sm:$0xff]
        %v5471 = vld [vmem:[%s652 + $0x68] sm:$0xff]
        %v5472 = vld [vmem:[%s652 + $0x70] sm:$0xff]
        %v5473 = vld [vmem:[%s652 + $0x78] sm:$0xff]
        %v5474 = vld [vmem:[%s652 + $0x80] sm:$0xff]
        %v5475 = vld [vmem:[%s652 + $0x88] sm:$0xff]
        %v5476 = vld [vmem:[%s652 + $0x90] sm:$0xff]
        %v5477 = vld [vmem:[%s652 + $0x98] sm:$0xff]
        %v5478 = vld [vmem:[%s652 + $0xa0] sm:$0xff]
        %v5479 = vld [vmem:[%s652 + $0xa8] sm:$0xff]
        %v5480 = vld [vmem:[%s652 + $0xb0] sm:$0xff]
        %v5481 = vld [vmem:[%s652 + $0xb8] sm:$0xff]
        %v5482 = vld [vmem:[%s652 + $0xc0] sm:$0xff]
        %v5483 = vld [vmem:[%s652 + $0xc8] sm:$0xff]
        %v5484 = vld [vmem:[%s652 + $0xd0] sm:$0xff]
        %v5485 = vld [vmem:[%s652 + $0xd8] sm:$0xff]
        %v5486 = vld [vmem:[%s652 + $0xe0] sm:$0xff]
        %v5487 = vld [vmem:[%s652 + $0xe8] sm:$0xff]
        %v5488 = vld [vmem:[%s652 + $0xf0] sm:$0xff]
        %v5489 = vld [vmem:[%s652 + $0xf8] sm:$0xff]
        %v5490 = vld [vmem:[%s652 + $0x100] sm:$0xff]
        %v5491 = vld [vmem:[%s652 + $0x108] sm:$0xff]
        %v5492 = vld [vmem:[%s652 + $0x110] sm:$0xff]
        %v5493 = vld [vmem:[%s652 + $0x118] sm:$0xff]
        %v5494 = vld [vmem:[%s652 + $0x120] sm:$0xff]
        %v5495 = vld [vmem:[%s652 + $0x128] sm:$0xff]
        %v5496 = vld [vmem:[%s652 + $0x130] sm:$0xff]
        %v5497 = vld [vmem:[%s652 + $0x138] sm:$0xff]
        %v5498 = vld [vmem:[%s652 + $0x140] sm:$0xff]
        %v5499 = vld [vmem:[%s652 + $0x148] sm:$0xff]
        %v5500 = vld [vmem:[%s652 + $0x150] sm:$0xff]
        %v5501 = vld [vmem:[%s652 + $0x158] sm:$0xff]
        %v5502 = vld [vmem:[%s652 + $0x160] sm:$0xff]
        %v5503 = vld [vmem:[%s652 + $0x168] sm:$0xff]
        %v5504 = vld [vmem:[%s652 + $0x170] sm:$0xff]
        %v5505 = vld [vmem:[%s652 + $0x178] sm:$0xff]
        %v5506 = vld [vmem:[%s652 + $0x180] sm:$0xff]
        %v5507 = vld [vmem:[%s652 + $0x188] sm:$0xff]
        %v5508 = vld [vmem:[%s652 + $0x190] sm:$0xff]
        %v5509 = vld [vmem:[%s652 + $0x198] sm:$0xff]
        %v5510 = vld [vmem:[%s652 + $0x1a0] sm:$0xff]
        %v5511 = vld [vmem:[%s652 + $0x1a8] sm:$0xff]
        %v5512 = vld [vmem:[%s652 + $0x1b0] sm:$0xff]
        %v5513 = vld [vmem:[%s652 + $0x1b8] sm:$0xff]
        %v5514 = vld [vmem:[%s652 + $0x1c0] sm:$0xff]
        %v5515 = vld [vmem:[%s652 + $0x1c8] sm:$0xff]
        %v5516 = vld [vmem:[%s652 + $0x1d0] sm:$0xff]
        %v5517 = vld [vmem:[%s652 + $0x1d8] sm:$0xff]
        %v5518 = vld [vmem:[%s652 + $0x1e0] sm:$0xff]
        %v5519 = vld [vmem:[%s652 + $0x1e8] sm:$0xff]
        %v5520 = vld [vmem:[%s652 + $0x1f0] sm:$0xff]
        %v5521 = vld [vmem:[%s652 + $0x1f8] sm:$0xff]
        %v5522 = vld [vmem:[%s652 + $0x200] sm:$0xff]
        %v5523 = vld [vmem:[%s652 + $0x208] sm:$0xff]
        %v5524 = vld [vmem:[%s652 + $0x210] sm:$0xff]
        %v5525 = vld [vmem:[%s652 + $0x218] sm:$0xff]
        %v5526 = vld [vmem:[%s652 + $0x220] sm:$0xff]
        %v5527 = vld [vmem:[%s652 + $0x228] sm:$0xff]
        %v5528 = vld [vmem:[%s652 + $0x230] sm:$0xff]
        %v5529 = vld [vmem:[%s652 + $0x238] sm:$0xff]
        %v5530 = vld [vmem:[%s652 + $0x240] sm:$0xff]
        %v5531 = vld [vmem:[%s652 + $0x248] sm:$0xff]
        %v5532 = vld [vmem:[%s652 + $0x250] sm:$0xff]
        %v5533 = vld [vmem:[%s652 + $0x258] sm:$0xff]
        %v5534 = vld [vmem:[%s652 + $0x260] sm:$0xff]
        %v5535 = vld [vmem:[%s652 + $0x268] sm:$0xff]
        %v5536 = vld [vmem:[%s652 + $0x270] sm:$0xff]
        %v5537 = vld [vmem:[%s652 + $0x278] sm:$0xff]
        %v5538 = vld [vmem:[%s652 + $0x280] sm:$0xff]
        %v5539 = vld [vmem:[%s652 + $0x288] sm:$0xff]
        %v5540 = vld [vmem:[%s652 + $0x290] sm:$0xff]
        %v5541 = vld [vmem:[%s652 + $0x298] sm:$0xff]
        %v5542 = vld [vmem:[%s652 + $0x2a0] sm:$0xff]
        %v5543 = vld [vmem:[%s652 + $0x2a8] sm:$0xff]
        %v5544 = vld [vmem:[%s652 + $0x2b0] sm:$0xff]
        %v5545 = vld [vmem:[%s652 + $0x2b8] sm:$0xff]
        %v5546 = vld [vmem:[%s652 + $0x2c0] sm:$0xff]
        %v5547 = vld [vmem:[%s652 + $0x2c8] sm:$0xff]
        %v5548 = vld [vmem:[%s652 + $0x2d0] sm:$0xff]
        %v5549 = vld [vmem:[%s652 + $0x2d8] sm:$0xff]
        %v5550 = vld [vmem:[%s652 + $0x2e0] sm:$0xff]
        %v5551 = vld [vmem:[%s652 + $0x2e8] sm:$0xff]
        %v5552 = vld [vmem:[%s652 + $0x2f0] sm:$0xff]
        %v5553 = vld [vmem:[%s652 + $0x2f8] sm:$0xff]
        %v5554 = vld [vmem:[%s652 + $0x300] sm:$0xff]
        %v5555 = vld [vmem:[%s652 + $0x308] sm:$0xff]
        %v5556 = vld [vmem:[%s652 + $0x310] sm:$0xff]
        %v5557 = vld [vmem:[%s652 + $0x318] sm:$0xff]
        %v5558 = vld [vmem:[%s652 + $0x320] sm:$0xff]
        %v5559 = vld [vmem:[%s652 + $0x328] sm:$0xff]
        %v5560 = vld [vmem:[%s652 + $0x330] sm:$0xff]
        %v5561 = vld [vmem:[%s652 + $0x338] sm:$0xff]
        %v5562 = vld [vmem:[%s652 + $0x340] sm:$0xff]
        %v5563 = vld [vmem:[%s652 + $0x348] sm:$0xff]
        %v5564 = vld [vmem:[%s652 + $0x350] sm:$0xff]
        %v5565 = vld [vmem:[%s652 + $0x358] sm:$0xff]
        %v5566 = vld [vmem:[%s652 + $0x360] sm:$0xff]
        %v5567 = vld [vmem:[%s652 + $0x368] sm:$0xff]
        %v5568 = vld [vmem:[%s652 + $0x370] sm:$0xff]
        %v5569 = vld [vmem:[%s652 + $0x378] sm:$0xff]
        %v5570 = vld [vmem:[%s652 + $0x380] sm:$0xff]
        %v5571 = vld [vmem:[%s652 + $0x388] sm:$0xff]
        %v5572 = vld [vmem:[%s652 + $0x390] sm:$0xff]
        %v5573 = vld [vmem:[%s652 + $0x398] sm:$0xff]
        %v5574 = vld [vmem:[%s652 + $0x3a0] sm:$0xff]
        %v5575 = vld [vmem:[%s652 + $0x3a8] sm:$0xff]
        %v5576 = vld [vmem:[%s652 + $0x3b0] sm:$0xff]
        %v5577 = vld [vmem:[%s652 + $0x3b8] sm:$0xff]
        %v5578 = vld [vmem:[%s652 + $0x3c0] sm:$0xff]
        %v5579 = vld [vmem:[%s652 + $0x3c8] sm:$0xff]
        %v5580 = vld [vmem:[%s652 + $0x3d0] sm:$0xff]
        %v5581 = vld [vmem:[%s652 + $0x3d8] sm:$0xff]
        %v5582 = vld [vmem:[%s652 + $0x3e0] sm:$0xff]
        %v5583 = vld [vmem:[%s652 + $0x3e8] sm:$0xff]
        %v5584 = vld [vmem:[%s652 + $0x3f0] sm:$0xff]
        %v5585 = vld [vmem:[%s652 + $0x3f8] sm:$0xff]
        %v5586 = vld [vmem:[%s652 + $0x400] sm:$0xff]
        %v5587 = vld [vmem:[%s652 + $0x408] sm:$0xff]
        %v5588 = vld [vmem:[%s652 + $0x410] sm:$0xff]
        %v5589 = vld [vmem:[%s652 + $0x418] sm:$0xff]
        %v5590 = vld [vmem:[%s652 + $0x420] sm:$0xff]
        %v5591 = vld [vmem:[%s652 + $0x428] sm:$0xff]
        %v5592 = vld [vmem:[%s652 + $0x430] sm:$0xff]
        %v5593 = vld [vmem:[%s652 + $0x438] sm:$0xff]
        %v5594 = vld [vmem:[%s652 + $0x440] sm:$0xff]
        %v5595 = vld [vmem:[%s652 + $0x448] sm:$0xff]
        %v5596 = vld [vmem:[%s652 + $0x450] sm:$0xff]
        %v5597 = vld [vmem:[%s652 + $0x458] sm:$0xff]
        %v5598 = vld [vmem:[%s652 + $0x460] sm:$0xff]
        %v5599 = vld [vmem:[%s652 + $0x468] sm:$0xff]
        %v5600 = vld [vmem:[%s652 + $0x470] sm:$0xff]
        %v5601 = vld [vmem:[%s652 + $0x478] sm:$0xff]
        %v5602 = vld [vmem:[%s652 + $0x480] sm:$0xff]
        %v5603 = vld [vmem:[%s652 + $0x488] sm:$0xff]
        %v5604 = vld [vmem:[%s652 + $0x490] sm:$0xff]
        %v5605 = vld [vmem:[%s652 + $0x498] sm:$0xff]
        %v5606 = vld [vmem:[%s652 + $0x4a0] sm:$0xff]
        %v5607 = vld [vmem:[%s652 + $0x4a8] sm:$0xff]
        %v5608 = vld [vmem:[%s652 + $0x4b0] sm:$0xff]
        %v5609 = vld [vmem:[%s652 + $0x4b8] sm:$0xff]
        %v5610 = vld [vmem:[%s652 + $0x4c0] sm:$0xff]
        %v5611 = vld [vmem:[%s652 + $0x4c8] sm:$0xff]
        %v5612 = vld [vmem:[%s652 + $0x4d0] sm:$0xff]
        %v5613 = vld [vmem:[%s652 + $0x4d8] sm:$0xff]
        %v5614 = vld [vmem:[%s652 + $0x4e0] sm:$0xff]
        %v5615 = vld [vmem:[%s652 + $0x4e8] sm:$0xff]
        %v5616 = vld [vmem:[%s652 + $0x4f0] sm:$0xff]
        %v5617 = vld [vmem:[%s652 + $0x4f8] sm:$0xff]
        %v5618 = vld [vmem:[%s652 + $0x500] sm:$0xff]
        %v5619 = vld [vmem:[%s652 + $0x508] sm:$0xff]
        %v5620 = vld [vmem:[%s652 + $0x510] sm:$0xff]
        %v5621 = vld [vmem:[%s652 + $0x518] sm:$0xff]
        %v5622 = vld [vmem:[%s652 + $0x520] sm:$0xff]
        %v5623 = vld [vmem:[%s652 + $0x528] sm:$0xff]
        %v5624 = vld [vmem:[%s652 + $0x530] sm:$0xff]
        %v5625 = vld [vmem:[%s652 + $0x538] sm:$0xff]
        %v5626 = vld [vmem:[%s652 + $0x540] sm:$0xff]
        %v5627 = vld [vmem:[%s652 + $0x548] sm:$0xff]
        %v5628 = vld [vmem:[%s652 + $0x550] sm:$0xff]
        %v5629 = vld [vmem:[%s652 + $0x558] sm:$0xff]
        %v5630 = vld [vmem:[%s652 + $0x560] sm:$0xff]
        %v5631 = vld [vmem:[%s652 + $0x568] sm:$0xff]
        %v5632 = vld [vmem:[%s652 + $0x570] sm:$0xff]
        %v5633 = vld [vmem:[%s652 + $0x578] sm:$0xff]
        %v5634 = vld [vmem:[%s652 + $0x580] sm:$0xff]
        %v5635 = vld [vmem:[%s652 + $0x588] sm:$0xff]
        %v5636 = vld [vmem:[%s652 + $0x590] sm:$0xff]
        %v5637 = vld [vmem:[%s652 + $0x598] sm:$0xff]
        %v5638 = vld [vmem:[%s652 + $0x5a0] sm:$0xff]
        %v5639 = vld [vmem:[%s652 + $0x5a8] sm:$0xff]
        %v5640 = vld [vmem:[%s652 + $0x5b0] sm:$0xff]
        %v5641 = vld [vmem:[%s652 + $0x5b8] sm:$0xff]
        %v5642 = vld [vmem:[%s652 + $0x5c0] sm:$0xff]
        %v5643 = vld [vmem:[%s652 + $0x5c8] sm:$0xff]
        %v5644 = vld [vmem:[%s652 + $0x5d0] sm:$0xff]
        %v5645 = vld [vmem:[%s652 + $0x5d8] sm:$0xff]
        %v5646 = vld [vmem:[%s652 + $0x5e0] sm:$0xff]
        %v5647 = vld [vmem:[%s652 + $0x5e8] sm:$0xff]
        %v5648 = vld [vmem:[%s652 + $0x5f0] sm:$0xff]
        %v5649 = vld [vmem:[%s652 + $0x5f8] sm:$0xff]
        %v5650 = vld [vmem:[%s652 + $0x600] sm:$0xff]
        %v5651 = vld [vmem:[%s652 + $0x608] sm:$0xff]
        %v5652 = vld [vmem:[%s652 + $0x610] sm:$0xff]
        %v5653 = vld [vmem:[%s652 + $0x618] sm:$0xff]
        %v5654 = vld [vmem:[%s652 + $0x620] sm:$0xff]
        %v5655 = vld [vmem:[%s652 + $0x628] sm:$0xff]
        %v5656 = vld [vmem:[%s652 + $0x630] sm:$0xff]
        %v5657 = vld [vmem:[%s652 + $0x638] sm:$0xff]
        %v5658 = vld [vmem:[%s652 + $0x640] sm:$0xff]
        %v5659 = vld [vmem:[%s652 + $0x648] sm:$0xff]
        %v5660 = vld [vmem:[%s652 + $0x650] sm:$0xff]
        %v5661 = vld [vmem:[%s652 + $0x658] sm:$0xff]
        %v5662 = vld [vmem:[%s652 + $0x660] sm:$0xff]
        %v5663 = vld [vmem:[%s652 + $0x668] sm:$0xff]
        %v5664 = vld [vmem:[%s652 + $0x670] sm:$0xff]
        %v5665 = vld [vmem:[%s652 + $0x678] sm:$0xff]
        %v5666 = vld [vmem:[%s652 + $0x680] sm:$0xff]
        %v5667 = vld [vmem:[%s652 + $0x688] sm:$0xff]
        %v5668 = vld [vmem:[%s652 + $0x690] sm:$0xff]
        %v5669 = vld [vmem:[%s652 + $0x698] sm:$0xff]
        %v5670 = vld [vmem:[%s652 + $0x6a0] sm:$0xff]
        %v5671 = vld [vmem:[%s652 + $0x6a8] sm:$0xff]
        %v5672 = vld [vmem:[%s652 + $0x6b0] sm:$0xff]
        %v5673 = vld [vmem:[%s652 + $0x6b8] sm:$0xff]
        %v5674 = vld [vmem:[%s652 + $0x6c0] sm:$0xff]
        %v5675 = vld [vmem:[%s652 + $0x6c8] sm:$0xff]
        %v5676 = vld [vmem:[%s652 + $0x6d0] sm:$0xff]
        %v5677 = vld [vmem:[%s652 + $0x6d8] sm:$0xff]
        %v5678 = vld [vmem:[%s652 + $0x6e0] sm:$0xff]
        %v5679 = vld [vmem:[%s652 + $0x6e8] sm:$0xff]
        %v5680 = vld [vmem:[%s652 + $0x6f0] sm:$0xff]
        %v5681 = vld [vmem:[%s652 + $0x6f8] sm:$0xff]
        %v5682 = vld [vmem:[%s656] sm:$0x3]
        %v5684 = vlaneseq
        %v5685 = vshrl.u32 %v5684, 7
        %v5686 = vsub.s32 0, %v5685
        %v5687 = vrot.slane %v5682, %v5686
        %v5688 = vlaneseq
        %v5689 = vshrl.u32 %v5688, 7
        %v5690 = vsub.s32 1, %v5689
        %v5691 = vrot.slane %v5682, %v5690
        %5694 = vmatprep.subr.mxu0 %v5489
        %5695 = vmatpush1.msra.mxu0 %v5488
        %5696 = vmatprep.subr.mxu0 %v5487
        %5697 = vmatpush1.msra.mxu0 %v5486
        %5698 = vmatprep.subr.mxu0 %v5485
        %5699 = vmatpush1.msra.mxu0 %v5484
        %5700 = vmatprep.subr.mxu0 %v5483
        %5701 = vmatpush1.msra.mxu0 %v5482
        %5702 = vmatprep.subr.mxu0 %v5481
        %5703 = vmatpush1.msra.mxu0 %v5480
        %5704 = vmatprep.subr.mxu0 %v5479
        %5705 = vmatpush1.msra.mxu0 %v5478
        %5706 = vmatprep.subr.mxu0 %v5477
        %5707 = vmatpush1.msra.mxu0 %v5476
        %5708 = vmatprep.subr.mxu0 %v5475
        %5709 = vmatpush1.msra.mxu0 %v5474
        %5710 = vmatprep.subr.mxu0 %v5473
        %5711 = vmatpush1.msra.mxu0 %v5472
        %5712 = vmatprep.subr.mxu0 %v5471
        %5713 = vmatpush1.msra.mxu0 %v5470
        %5714 = vmatprep.subr.mxu0 %v5469
        %5715 = vmatpush1.msra.mxu0 %v5468
        %5716 = vmatprep.subr.mxu0 %v5467
        %5717 = vmatpush1.msra.mxu0 %v5466
        %5718 = vmatprep.subr.mxu0 %v5465
        %5719 = vmatpush1.msra.mxu0 %v5464
        %5720 = vmatprep.subr.mxu0 %v5463
        %5721 = vmatpush1.msra.mxu0 %v5462
        %5722 = vmatprep.subr.mxu0 %v5461
        %5723 = vmatpush1.msra.mxu0 %v5460
        %5724 = vmatprep.subr.mxu0 %v5459
        %5725 = vmatpush1.msra.mxu0 %v5458
        %5726 = vmatprep.subr.mxu0 %v5521
        %5727 = vmatpush2.msra.mxu0 %v5520
        %5728 = vmatprep.subr.mxu0 %v5519
        %5729 = vmatpush2.msra.mxu0 %v5518
        %5730 = vmatprep.subr.mxu0 %v5517
        %5731 = vmatpush2.msra.mxu0 %v5516
        %5732 = vmatprep.subr.mxu0 %v5515
        %5733 = vmatpush2.msra.mxu0 %v5514
        %5734 = vmatprep.subr.mxu0 %v5513
        %5735 = vmatpush2.msra.mxu0 %v5512
        %5736 = vmatprep.subr.mxu0 %v5511
        %5737 = vmatpush2.msra.mxu0 %v5510
        %5738 = vmatprep.subr.mxu0 %v5509
        %5739 = vmatpush2.msra.mxu0 %v5508
        %5740 = vmatprep.subr.mxu0 %v5507
        %5741 = vmatpush2.msra.mxu0 %v5506
        %5742 = vmatprep.subr.mxu0 %v5505
        %5743 = vmatpush2.msra.mxu0 %v5504
        %5744 = vmatprep.subr.mxu0 %v5503
        %5745 = vmatpush2.msra.mxu0 %v5502
        %5746 = vmatprep.subr.mxu0 %v5501
        %5747 = vmatpush2.msra.mxu0 %v5500
        %5748 = vmatprep.subr.mxu0 %v5499
        %5749 = vmatpush2.msra.mxu0 %v5498
        %5750 = vmatprep.subr.mxu0 %v5497
        %5751 = vmatpush2.msra.mxu0 %v5496
        %5752 = vmatprep.subr.mxu0 %v5495
        %5753 = vmatpush2.msra.mxu0 %v5494
        %5754 = vmatprep.subr.mxu0 %v5493
        %5755 = vmatpush2.msra.mxu0 %v5492
        %5756 = vmatprep.subr.mxu0 %v5491
        %5757 = vmatpush2.msra.mxu0 %v5490
        %5758 = vmatprep.mubr.f32.mxu0 %v5452
        %5759 = vmatmul.mubr.f32.gmra.mxu0 %v5451
        %v5760 = vpop.f32.mrf.mxu0
        %v5761 = vadd.f32 %v5687, %v5760
        %v5762 = vpop.f32.mrf.mxu0
        %v5763 = vadd.f32 %v5691, %v5762
        %5764 = vdwg.mxu0
        %5765 = vmatprep.subr.mxu0 %v5553
        %5766 = vmatpush1.msra.mxu0 %v5552
        %5767 = vmatprep.subr.mxu0 %v5551
        %5768 = vmatpush1.msra.mxu0 %v5550
        %5769 = vmatprep.subr.mxu0 %v5549
        %5770 = vmatpush1.msra.mxu0 %v5548
        %5771 = vmatprep.subr.mxu0 %v5547
        %5772 = vmatpush1.msra.mxu0 %v5546
        %5773 = vmatprep.subr.mxu0 %v5545
        %5774 = vmatpush1.msra.mxu0 %v5544
        %5775 = vmatprep.subr.mxu0 %v5543
        %5776 = vmatpush1.msra.mxu0 %v5542
        %5777 = vmatprep.subr.mxu0 %v5541
        %5778 = vmatpush1.msra.mxu0 %v5540
        %5779 = vmatprep.subr.mxu0 %v5539
        %5780 = vmatpush1.msra.mxu0 %v5538
        %5781 = vmatprep.subr.mxu0 %v5537
        %5782 = vmatpush1.msra.mxu0 %v5536
        %5783 = vmatprep.subr.mxu0 %v5535
        %5784 = vmatpush1.msra.mxu0 %v5534
        %5785 = vmatprep.subr.mxu0 %v5533
        %5786 = vmatpush1.msra.mxu0 %v5532
        %5787 = vmatprep.subr.mxu0 %v5531
        %5788 = vmatpush1.msra.mxu0 %v5530
        %5789 = vmatprep.subr.mxu0 %v5529
        %5790 = vmatpush1.msra.mxu0 %v5528
        %5791 = vmatprep.subr.mxu0 %v5527
        %5792 = vmatpush1.msra.mxu0 %v5526
        %5793 = vmatprep.subr.mxu0 %v5525
        %5794 = vmatpush1.msra.mxu0 %v5524
        %5795 = vmatprep.subr.mxu0 %v5523
        %5796 = vmatpush1.msra.mxu0 %v5522
        %5797 = vmatprep.subr.mxu0 %v5585
        %5798 = vmatpush2.msra.mxu0 %v5584
        %5799 = vmatprep.subr.mxu0 %v5583
        %5800 = vmatpush2.msra.mxu0 %v5582
        %5801 = vmatprep.subr.mxu0 %v5581
        %5802 = vmatpush2.msra.mxu0 %v5580
        %5803 = vmatprep.subr.mxu0 %v5579
        %5804 = vmatpush2.msra.mxu0 %v5578
        %5805 = vmatprep.subr.mxu0 %v5577
        %5806 = vmatpush2.msra.mxu0 %v5576
        %5807 = vmatprep.subr.mxu0 %v5575
        %5808 = vmatpush2.msra.mxu0 %v5574
        %5809 = vmatprep.subr.mxu0 %v5573
        %5810 = vmatpush2.msra.mxu0 %v5572
        %5811 = vmatprep.subr.mxu0 %v5571
        %5812 = vmatpush2.msra.mxu0 %v5570
        %5813 = vmatprep.subr.mxu0 %v5569
        %5814 = vmatpush2.msra.mxu0 %v5568
        %5815 = vmatprep.subr.mxu0 %v5567
        %5816 = vmatpush2.msra.mxu0 %v5566
        %5817 = vmatprep.subr.mxu0 %v5565
        %5818 = vmatpush2.msra.mxu0 %v5564
        %5819 = vmatprep.subr.mxu0 %v5563
        %5820 = vmatpush2.msra.mxu0 %v5562
        %5821 = vmatprep.subr.mxu0 %v5561
        %5822 = vmatpush2.msra.mxu0 %v5560
        %5823 = vmatprep.subr.mxu0 %v5559
        %5824 = vmatpush2.msra.mxu0 %v5558
        %5825 = vmatprep.subr.mxu0 %v5557
        %5826 = vmatpush2.msra.mxu0 %v5556
        %5827 = vmatprep.subr.mxu0 %v5555
        %5828 = vmatpush2.msra.mxu0 %v5554
        %5829 = vmatprep.mubr.f32.mxu0 %v5454
        %5830 = vmatmul.mubr.f32.gmra.mxu0 %v5453
        %v5831 = vpop.f32.mrf.mxu0
        %v5832 = vadd.f32 %v5761, %v5831
        %v5833 = vpop.f32.mrf.mxu0
        %v5834 = vadd.f32 %v5763, %v5833
        %5835 = vdwg.mxu0
        %5836 = vmatprep.subr.mxu0 %v5617
        %5837 = vmatpush1.msra.mxu0 %v5616
        %5838 = vmatprep.subr.mxu0 %v5615
        %5839 = vmatpush1.msra.mxu0 %v5614
        %5840 = vmatprep.subr.mxu0 %v5613
        %5841 = vmatpush1.msra.mxu0 %v5612
        %5842 = vmatprep.subr.mxu0 %v5611
        %5843 = vmatpush1.msra.mxu0 %v5610
        %5844 = vmatprep.subr.mxu0 %v5609
        %5845 = vmatpush1.msra.mxu0 %v5608
        %5846 = vmatprep.subr.mxu0 %v5607
        %5847 = vmatpush1.msra.mxu0 %v5606
        %5848 = vmatprep.subr.mxu0 %v5605
        %5849 = vmatpush1.msra.mxu0 %v5604
        %5850 = vmatprep.subr.mxu0 %v5603
        %5851 = vmatpush1.msra.mxu0 %v5602
        %5852 = vmatprep.subr.mxu0 %v5601
        %5853 = vmatpush1.msra.mxu0 %v5600
        %5854 = vmatprep.subr.mxu0 %v5599
        %5855 = vmatpush1.msra.mxu0 %v5598
        %5856 = vmatprep.subr.mxu0 %v5597
        %5857 = vmatpush1.msra.mxu0 %v5596
        %5858 = vmatprep.subr.mxu0 %v5595
        %5859 = vmatpush1.msra.mxu0 %v5594
        %5860 = vmatprep.subr.mxu0 %v5593
        %5861 = vmatpush1.msra.mxu0 %v5592
        %5862 = vmatprep.subr.mxu0 %v5591
        %5863 = vmatpush1.msra.mxu0 %v5590
        %5864 = vmatprep.subr.mxu0 %v5589
        %5865 = vmatpush1.msra.mxu0 %v5588
        %5866 = vmatprep.subr.mxu0 %v5587
        %5867 = vmatpush1.msra.mxu0 %v5586
        %5868 = vmatprep.subr.mxu0 %v5649
        %5869 = vmatpush2.msra.mxu0 %v5648
        %5870 = vmatprep.subr.mxu0 %v5647
        %5871 = vmatpush2.msra.mxu0 %v5646
        %5872 = vmatprep.subr.mxu0 %v5645
        %5873 = vmatpush2.msra.mxu0 %v5644
        %5874 = vmatprep.subr.mxu0 %v5643
        %5875 = vmatpush2.msra.mxu0 %v5642
        %5876 = vmatprep.subr.mxu0 %v5641
        %5877 = vmatpush2.msra.mxu0 %v5640
        %5878 = vmatprep.subr.mxu0 %v5639
        %5879 = vmatpush2.msra.mxu0 %v5638
        %5880 = vmatprep.subr.mxu0 %v5637
        %5881 = vmatpush2.msra.mxu0 %v5636
        %5882 = vmatprep.subr.mxu0 %v5635
        %5883 = vmatpush2.msra.mxu0 %v5634
        %5884 = vmatprep.subr.mxu0 %v5633
        %5885 = vmatpush2.msra.mxu0 %v5632
        %5886 = vmatprep.subr.mxu0 %v5631
        %5887 = vmatpush2.msra.mxu0 %v5630
        %5888 = vmatprep.subr.mxu0 %v5629
        %5889 = vmatpush2.msra.mxu0 %v5628
        %5890 = vmatprep.subr.mxu0 %v5627
        %5891 = vmatpush2.msra.mxu0 %v5626
        %5892 = vmatprep.subr.mxu0 %v5625
        %5893 = vmatpush2.msra.mxu0 %v5624
        %5894 = vmatprep.subr.mxu0 %v5623
        %5895 = vmatpush2.msra.mxu0 %v5622
        %5896 = vmatprep.subr.mxu0 %v5621
        %5897 = vmatpush2.msra.mxu0 %v5620
        %5898 = vmatprep.subr.mxu0 %v5619
        %5899 = vmatpush2.msra.mxu0 %v5618
        %5900 = vmatprep.mubr.f32.mxu0 %v5456
        %5901 = vmatmul.mubr.f32.gmra.mxu0 %v5455
        %v5902 = vpop.f32.mrf.mxu0
        %v5903 = vadd.f32 %v5832, %v5902
        %v5904 = vpop.f32.mrf.mxu0
        %v5905 = vadd.f32 %v5834, %v5904
        %5906 = vdwg.mxu0
        %5907 = vmatprep.subr.mxu0 %v5681
        %5908 = vmatpush1.msra.mxu0 %v5680
        %5909 = vmatprep.subr.mxu0 %v5679
        %5910 = vmatpush1.msra.mxu0 %v5678
        %5911 = vmatprep.subr.mxu0 %v5677
        %5912 = vmatpush1.msra.mxu0 %v5676
        %5913 = vmatprep.subr.mxu0 %v5675
        %5914 = vmatpush1.msra.mxu0 %v5674
        %5915 = vmatprep.subr.mxu0 %v5673
        %5916 = vmatpush1.msra.mxu0 %v5672
        %5917 = vmatprep.subr.mxu0 %v5671
        %5918 = vmatpush1.msra.mxu0 %v5670
        %5919 = vmatprep.subr.mxu0 %v5669
        %5920 = vmatpush1.msra.mxu0 %v5668
        %5921 = vmatprep.subr.mxu0 %v5667
        %5922 = vmatpush1.msra.mxu0 %v5666
        %5923 = vmatprep.subr.mxu0 %v5665
        %5924 = vmatpush1.msra.mxu0 %v5664
        %5925 = vmatprep.subr.mxu0 %v5663
        %5926 = vmatpush1.msra.mxu0 %v5662
        %5927 = vmatprep.subr.mxu0 %v5661
        %5928 = vmatpush1.msra.mxu0 %v5660
        %5929 = vmatprep.subr.mxu0 %v5659
        %5930 = vmatpush1.msra.mxu0 %v5658
        %5931 = vmatprep.subr.mxu0 %v5657
        %5932 = vmatpush1.msra.mxu0 %v5656
        %5933 = vmatprep.subr.mxu0 %v5655
        %5934 = vmatpush1.msra.mxu0 %v5654
        %5935 = vmatprep.subr.mxu0 %v5653
        %5936 = vmatpush1.msra.mxu0 %v5652
        %5937 = vmatprep.subr.mxu0 %v5651
        %5938 = vmatpush1.msra.mxu0 %v5650
        %5939 = vmatprep.subr.mxu0 0.0
        %5940 = vmatpush2.msra.mxu0 0.0
        %5941 = vmatprep.subr.mxu0 0.0
        %5942 = vmatpush2.msra.mxu0 0.0
        %5943 = vmatprep.subr.mxu0 0.0
        %5944 = vmatpush2.msra.mxu0 0.0
        %5945 = vmatprep.subr.mxu0 0.0
        %5946 = vmatpush2.msra.mxu0 0.0
        %5947 = vmatprep.subr.mxu0 0.0
        %5948 = vmatpush2.msra.mxu0 0.0
        %5949 = vmatprep.subr.mxu0 0.0
        %5950 = vmatpush2.msra.mxu0 0.0
        %5951 = vmatprep.subr.mxu0 0.0
        %5952 = vmatpush2.msra.mxu0 0.0
        %5953 = vmatprep.subr.mxu0 0.0
        %5954 = vmatpush2.msra.mxu0 0.0
        %5955 = vmatprep.subr.mxu0 0.0
        %5956 = vmatpush2.msra.mxu0 0.0
        %5957 = vmatprep.subr.mxu0 0.0
        %5958 = vmatpush2.msra.mxu0 0.0
        %5959 = vmatprep.subr.mxu0 0.0
        %5960 = vmatpush2.msra.mxu0 0.0
        %5961 = vmatprep.subr.mxu0 0.0
        %5962 = vmatpush2.msra.mxu0 0.0
        %5963 = vmatprep.subr.mxu0 0.0
        %5964 = vmatpush2.msra.mxu0 0.0
        %5965 = vmatprep.subr.mxu0 0.0
        %5966 = vmatpush2.msra.mxu0 0.0
        %5967 = vmatprep.subr.mxu0 0.0
        %5968 = vmatpush2.msra.mxu0 0.0
        %5969 = vmatprep.subr.mxu0 0.0
        %5970 = vmatpush2.msra.mxu0 0.0
        %5971 = vmatprep.mubr.f32.mxu0 0.0
        %5972 = vmatmul.mubr.f32.gmra.mxu0 %v5457
        %v5973 = vpop.f32.mrf.mxu0
        %v5974 = vadd.f32 %v5903, %v5973
        %v5975 = vpop.f32.mrf.mxu0
        %v5976 = vadd.f32 %v5905, %v5975
        %5977 = vdwg.mxu0
        %v5978 = vadd.f32 %v4723, %v5974
        %v5979 = vadd.f32 %v4724, %v5976
        %v5980 = vld [vmem:[%s668] sm:$0x3]
        %v5981 = vld [vmem:[%s672] sm:$0x3]
        %v5982 = vmul.f32 %v5978, %v687
        %v5983 = vmul.f32 %v5979, %v688
        %v5984 = vsel %vm3449, %v5982, 0.0
        %v5985 = vsel %vm3449, %v5983, 0.0
        %v5986 = vadd.f32 %v5984, %v5985
        %5987 = vadd.xlane.f32.xlu0 %v5986
        %v5988 = vpop.xlane.xlu0 %5987
        %v5989 = vmul.f32 %v5988, 0.0051020407
        %v5990 = vsub.f32 %v5982, %v5989
        %v5991 = vsub.f32 %v5983, %v5989
        %v5992 = vmul.f32 %v5990, %v687
        %v5993 = vmul.f32 %v5991, %v688
        %v5994 = vmul.f32 %v5992, %v5992
        %v5995 = vmul.f32 %v5993, %v5993
        %v5996 = vsel %vm3449, %v5994, 0.0
        %v5997 = vsel %vm3449, %v5995, 0.0
        %v5998 = vadd.f32 %v5996, %v5997
        %5999 = vadd.xlane.f32.xlu0 %v5998
        %v6000 = vpop.xlane.xlu0 %5999
        %v6001 = vmul.f32 %v6000, 0.0051282053
        %v6002 = vrsqrt.pop %v6001
        %v6003 = vmul.f32 %v6001, %v6002
        %vm6004 = vcmp.eq.f32.partialorder %v6001, inf
        %v6005 = vsel %vm6004, %v6001, %v6003
        %vm6006 = vcmp.eq.f32.partialorder %v6001, 0.0
        %v6007 = vand.u32 %v6001, 2147483648
        %v6008 = vsel %vm6006, %v6007, %v6005
        %v6009 = vadd.f32 %v6008, 1e-06
        %v6010 = vrcp.pop %v6009
        %v6011 = vmul.f32 %v5992, %v6010
        %v6012 = vmul.f32 %v5993, %v6010
        %v6014 = vlaneseq
        %v6015 = vshrl.u32 %v6014, 7
        %v6016 = vsub.s32 0, %v6015
        %v6017 = vrot.slane %v5980, %v6016
        %v6018 = vlaneseq
        %v6019 = vshrl.u32 %v6018, 7
        %v6020 = vsub.s32 1, %v6019
        %v6021 = vrot.slane %v5980, %v6020
        %v6024 = vmul.f32 %v6017, %v6011
        %v6025 = vmul.f32 %v6021, %v6012
        %v6027 = vlaneseq
        %v6028 = vshrl.u32 %v6027, 7
        %v6029 = vsub.s32 0, %v6028
        %v6030 = vrot.slane %v5981, %v6029
        %v6031 = vlaneseq
        %v6032 = vshrl.u32 %v6031, 7
        %v6033 = vsub.s32 1, %v6032
        %v6034 = vrot.slane %v5981, %v6033
        %v6037 = vadd.f32 %v6024, %v6030
        %v6038 = vadd.f32 %v6025, %v6034
        %v6041 = vcombine.low %v6037, %v6038
        %6043 = vst [vmem:[#allocation2] sm:$0xff] %v6041
        %p6044 = scmp.eq.s32.totalorder %s26, 5
        // Predicated region
        $region81: #{tpu_custom_call.1} parent=75 // pred_check
          %p6045 = pneg %p6044
        $region82: #{tpu_custom_call.1} parent=75 // pred_check_branch
          %6047 = sbr.rel (%p6045) target = $region84
        $region83: #{tpu_custom_call.1} parent=75 // pred_region
          %6048 = vst [vmem:[#allocation3] sm:$0xff] %v6041
        $region84: #{tpu_custom_call.1} parent=75 // pred_fallthru
          _
        // Predicated region
        $region85: #{tpu_custom_call.1} parent=75 // pred_check
          %p6049 = pneg %p398
        $region86: #{tpu_custom_call.1} parent=75 // pred_check_branch
          %6051 = sbr.rel (%p6049) target = $region88
        $region87: #{tpu_custom_call.1} parent=75 // pred_region
          %s6053 = ssub.s32 128, 128
          %6054 = vsyncadd [#allocation4], %s6053
          %s6056 = sshll.u32 [#allocation3], 4
          %s6057 = int_to_ptr.vmem [resolvable:$true] %s6056
          %6059 = dma.vmem_to_hbm [thread:$0]  %s6057, 128, %s14, [#allocation4]
        $region88: #{tpu_custom_call.1} parent=75 // pred_fallthru
          _
        // Predicated region
        $region89: #{tpu_custom_call.1} parent=75 // pred_check
          %p6060 = pneg %p398
        $region90: #{tpu_custom_call.1} parent=75 // pred_check_branch
          %6062 = sbr.rel (%p6060) target = $region92
        $region91: #{tpu_custom_call.1} parent=75 // pred_region
          %6063 = dma.done [#allocation4], 128
        $region92: #{tpu_custom_call.1} parent=75 // pred_fallthru
          _
      $region76: #{tpu_custom_call.1} parent=5 // pred_fallthru
        _
      %p6064 = scmp.le.s32.totalorder 2, %s21
      // Predicated region
      $region93: #{tpu_custom_call.1} parent=5 // pred_check
        %p6065 = pneg %p6064
      $region94: #{tpu_custom_call.1} parent=5 // pred_check_branch
        %6067 = sbr.rel (%p6065) target = $region96
      $region95: #{tpu_custom_call.1} parent=5 // pred_region
        %s6068 = ssub.s32 %s21, 2
      $region96: #{tpu_custom_call.1} parent=5 // pred_fallthru
        _
    $region6: #{tpu_custom_call.1} parent=1 // loop_footer
      %s25 = sadd.s32 1, %s21
    $region7: #{tpu_custom_call.1} parent=1 // loop_footer_branch
      %20 = sbr.rel target = $region3
    $region8: #{tpu_custom_call.1} parent=1 // loop_exit
      _
    %6069 = vsyncpa [#allocation4], 1
    %s6070 = scalar_lea.sflag [#allocation4], 1
    %6071 = vsyncpa %s6070, 1

</llo_original>
